<compile_context>
chip_gen: v5e
topology: v5e:2x2
jax: 0.10.0
libtpu: 0.0.40
codegen_flags: <defaults>
</compile_context>

<pallas_src>
import math
from functools import partial

import jax
import jax.numpy as jnp
from jax.experimental import pallas as pl
from jax.experimental.pallas import tpu as pltpu


def _round_up(a, b):
    return (a + b - 1) // b * b


def _pick_tm(m):
    """Lane-tile size: multiple of 128, >=2 grid steps once M >= 256, capped at 2048."""
    mp128 = _round_up(m, 128)
    if mp128 <= 256:
        return mp128
    return min(2048, _round_up(mp128 // 2, 128))


# ----------------------------------------------------------------------------
# Pallas kernel: fused (transposed) conv-as-matmul + bias (+ ReLU)
# ----------------------------------------------------------------------------
def _convT_bias_act_kernel(x_ref, w_ref, b_ref, o_ref, *, apply_relu):
    # x_ref: (K, TM)    bf16  -- transposed channel-concat im2col (M on lanes)
    # w_ref: (Cout, K)  bf16  -- 3x3 weights, folded-BN scale pre-multiplied
    # b_ref: (Cout, 1)  f32   -- folded-BN shift / conv bias
    # o_ref: (Cout, TM)       -- lane-dense output tile
    y = jnp.dot(w_ref[...], x_ref[...], preferred_element_type=jnp.float32)
    y = y + b_ref[...]
    if apply_relu:
        y = jnp.maximum(y, 0.0)
    o_ref[...] = y.astype(o_ref.dtype)


# ----------------------------------------------------------------------------
# Wrapper (XLA glue: pad / transposed im2col / tiling; Pallas does the matmul)
# ----------------------------------------------------------------------------
def _im2col_T(x_cnhw, stride):
    """(C, N, H, W) -> ((9*C, N*Ho*Wo), Ho, Wo): transposed 3x3 im2col, padding=1.

    Row order is (ky, kx, cin), matching w.reshape(9*Cin, Cout).  CNHW layout means
    each tap reshapes contiguously to (C, M); no HBM transpose is ever needed.
    For stride=2 only even output positions are materialized (direct stride-2 conv).
    """
    C, N, H, W = x_cnhw.shape
    Ho = (H - 1) // stride + 1
    Wo = (W - 1) // stride + 1
    xp = jnp.pad(x_cnhw, ((0, 0), (0, 0), (1, 1), (1, 1)))
    taps = [
        xp[:, :, ky:ky + (Ho - 1) * stride + 1:stride,
                 kx:kx + (Wo - 1) * stride + 1:stride].reshape(C, N * Ho * Wo)
        for ky in range(3) for kx in range(3)
    ]
    return jnp.concatenate(taps, axis=0), Ho, Wo


def conv3x3(x_cnhw, w_t, bias, *, stride=1, relu=True, out_dtype=jnp.bfloat16):
    """3x3 conv (padding=1, stride 1 or 2) + bias + optional ReLU on CNHW activations.

    x_cnhw: (Cin, N, H, W); w_t: (Cout, 9*Cin) bf16 with BN scale folded in;
    bias: (Cout,) f32.  One fused transposed MXU matmul, grid over lane tiles of M.
    """
    Cout, K = w_t.shape
    N = x_cnhw.shape[1]

    cols, Ho, Wo = _im2col_T(x_cnhw.astype(jnp.bfloat16), stride)   # (K, M)
    M = N * Ho * Wo
    TM = _pick_tm(M)
    Mp = _round_up(M, TM)
    if Mp != M:
        cols = jnp.pad(cols, ((0, 0), (0, Mp - M)))

    b2 = bias.reshape(Cout, 1).astype(jnp.float32)

    out = pl.pallas_call(
        partial(_convT_bias_act_kernel, apply_relu=relu),
        out_shape=jax.ShapeDtypeStruct((Cout, Mp), out_dtype),
        grid=(Mp // TM,),
        in_specs=[
            pl.BlockSpec((K, TM), lambda i: (0, i)),
            pl.BlockSpec((Cout, K), lambda i: (0, 0)),
            pl.BlockSpec((Cout, 1), lambda i: (0, 0)),
        ],
        out_specs=pl.BlockSpec((Cout, TM), lambda i: (0, i)),
        compiler_params=pltpu.CompilerParams(
            dimension_semantics=("parallel",)),
    )(cols, w_t, b2)

    return out[:, :M].reshape(Cout, N, Ho, Wo)


# ----------------------------------------------------------------------------
# Parameter construction (deterministic, synthetic)
# ----------------------------------------------------------------------------
IN_CH = 3
ENCODER_CH = (8, 8, 16, 16, 32)          # levels 1..5, strides 2,4,8,16,32
DECODER_CH = (16, 16, 8, 8, 8)           # 5 UNet decoder blocks
BN_EPS = 1e-5


def _init_conv(key, cin, cout, *, with_bias):
    kw, kb = jax.random.split(key)
    std = math.sqrt(2.0 / (9.0 * cin))
    w = std * jax.random.normal(kw, (3, 3, cin, cout), jnp.float32)
    if with_bias:
        bias = 0.01 * jax.random.normal(kb, (cout,), jnp.float32)
        scale = jnp.ones((cout,), jnp.float32)
    else:
        # folded identity BatchNorm (gamma=1, beta=0, mean=0, var=1)
        scale = jnp.full((cout,), 1.0 / math.sqrt(1.0 + BN_EPS), jnp.float32)
        bias = jnp.zeros((cout,), jnp.float32)
    # fold BN scale into the weights; store pre-transposed (Cout, 9*Cin) in bf16
    w_t = (w.reshape(9 * cin, cout) * scale[None, :]).T.astype(jnp.bfloat16)
    return {"wT": w_t, "bias": bias}


def init_params(key):
    keys = iter(jax.random.split(key, 64))
    params = {"encoder": [], "decoder": [], "head": None}

    # encoder: 5 stride-2 conv-bn-relu stages
    cin = IN_CH
    for cout in ENCODER_CH:
        params["encoder"].append(_init_conv(next(keys), cin, cout, with_bias=False))
        cin = cout

    # decoder: 5 blocks, each: upsample, concat skip, 2x conv-bn-relu
    skip_ch = list(ENCODER_CH[:-1][::-1]) + [0]   # [16, 16, 8, 8, 0]
    cin = ENCODER_CH[-1]
    for cout, sc in zip(DECODER_CH, skip_ch):
        c1 = _init_conv(next(keys), cin + sc, cout, with_bias=False)
        c2 = _init_conv(next(keys), cout, cout, with_bias=False)
        params["decoder"].append((c1, c2))
        cin = cout

    # segmentation head: 3x3 conv -> 1 channel, with bias, no BN / activation
    params["head"] = _init_conv(next(keys), DECODER_CH[-1], 1, with_bias=True)
    return params


# ----------------------------------------------------------------------------
# Forward pass (mirrors SegmentationNet.forward: encoder -> decoder -> head)
# ----------------------------------------------------------------------------
def segmentation_net_forward(params, x_nchw):
    # NCHW -> CNHW (channel-first-of-all): keeps every im2col naturally transposed.
    x = jnp.transpose(x_nchw, (1, 0, 2, 3)).astype(jnp.bfloat16)

    # ---- encoder: stride-2 conv-bn-relu stages -> features at strides 2..32
    feats = []
    h = x
    for p in params["encoder"]:
        h = conv3x3(h, p["wT"], p["bias"], stride=2, relu=True)
        feats.append(h)

    # ---- UNet decoder: deepest feature up through skips back to full resolution
    skips = feats[:-1][::-1] + [None]
    h = feats[-1]
    for (c1, c2), skip in zip(params["decoder"], skips):
        h = jnp.repeat(jnp.repeat(h, 2, axis=2), 2, axis=3)   # nearest 2x upsample
        if skip is not None:
            h = jnp.concatenate([h, skip], axis=0)            # channel concat (CNHW)
        h = conv3x3(h, c1["wT"], c1["bias"], stride=1, relu=True)
        h = conv3x3(h, c2["wT"], c2["bias"], stride=1, relu=True)

    # ---- segmentation head: 3x3 conv, padding=1, 1 output channel (f32 logits)
    hp = params["head"]
    masks = conv3x3(h, hp["wT"], hp["bias"], stride=1, relu=False,
                    out_dtype=jnp.float32)                     # (1, N, H, W)
    return jnp.transpose(masks, (1, 0, 2, 3))                  # -> (N, 1, H, W)


# ----------------------------------------------------------------------------
if __name__ == "__main__":
    # 5 downsampling levels => spatial must be >= 32; use 64x64, batch=2, 3 channels.
    x = jax.random.normal(jax.random.PRNGKey(0), (2, IN_CH, 64, 64), jnp.float32)
    params = init_params(jax.random.PRNGKey(1))

    forward = jax.jit(segmentation_net_forward)
    masks = jax.block_until_ready(forward(params, x))

    assert masks.shape == (2, 1, 64, 64), masks.shape
    assert masks.dtype == jnp.float32, masks.dtype
    assert bool(jnp.all(jnp.isfinite(masks)))
    print("KERNEL_OK")
</pallas_src>

<mosaic_0001>
module attributes {stable_mosaic.version = 11 : i64} {
  func.func @_convT_bias_act_kernel(%arg0: i32, %arg1: memref<27x1024xbf16, #tpu.memory_space<vmem>>, %arg2: memref<8x27xbf16, #tpu.memory_space<vmem>>, %arg3: memref<8x1xf32, #tpu.memory_space<vmem>>, %arg4: memref<8x1024xbf16, #tpu.memory_space<vmem>>) attributes {dimension_semantics = [#tpu.dimension_semantics<parallel>], iteration_bounds = array<i64: 2>, scalar_prefetch = 0 : i64, scratch_operands = 0 : i64, tpu.core_type = #tpu.core_type<tc>, window_params = [{transform_indices = @transform_0, window_bounds = array<i64: 27, 1024>}, {pipeline_mode = #tpu.pipeline_mode<synchronous>, transform_indices = @transform_1, window_bounds = array<i64: 8, 27>}, {pipeline_mode = #tpu.pipeline_mode<synchronous>, transform_indices = @transform_2, window_bounds = array<i64: 8, 1>}, {transform_indices = @transform_3, window_bounds = array<i64: 8, 1024>}]} {
    %c0 = arith.constant 0 : index
    %c0_0 = arith.constant 0 : index
    %0 = vector.load %arg2[%c0, %c0_0] : memref<8x27xbf16, #tpu.memory_space<vmem>>, vector<8x27xbf16>
    %c0_1 = arith.constant 0 : index
    %c0_2 = arith.constant 0 : index
    %1 = vector.load %arg1[%c0_1, %c0_2] : memref<27x1024xbf16, #tpu.memory_space<vmem>>, vector<27x1024xbf16>
    %cst = arith.constant dense<0.000000e+00> : vector<8x1024xf32>
    %2 = tpu.matmul %0, %1, %cst {dimension_numbers = #tpu.dot_dimension_numbers<[1], [0], [0], [1], [0, 0, 1, 1], [], []>} : vector<8x27xbf16>, vector<27x1024xbf16>, vector<8x1024xf32> -> vector<8x1024xf32>
    %c0_3 = arith.constant 0 : index
    %c0_4 = arith.constant 0 : index
    %3 = vector.load %arg3[%c0_3, %c0_4] : memref<8x1xf32, #tpu.memory_space<vmem>>, vector<8x1xf32>
    %4 = vector.broadcast %3 : vector<8x1xf32> to vector<8x1024xf32>
    %5 = arith.addf %2, %4 : vector<8x1024xf32>
    %cst_5 = arith.constant 0.000000e+00 : f32
    %6 = vector.broadcast %cst_5 : f32 to vector<8x1024xf32>
    %7 = arith.maximumf %5, %6 : vector<8x1024xf32>
    %8 = arith.truncf %7 : vector<8x1024xf32> to vector<8x1024xbf16>
    %c0_6 = arith.constant 0 : index
    %c0_7 = arith.constant 0 : index
    %9 = vector.load %arg4[%c0_6, %c0_7] : memref<8x1024xbf16, #tpu.memory_space<vmem>>, vector<8x1024xbf16>
    tpu.vector_store %arg4[%c0_6, %c0_7], %8 {strides = array<i32>} : memref<8x1024xbf16, #tpu.memory_space<vmem>>, vector<8x1024xbf16>,
    return
  }
  func.func @transform_0(%arg0: i32) -> (i32, i32) {
    %c0_i32 = arith.constant 0 : i32
    %c0_i32_0 = arith.constant 0 : i32
    return %c0_i32, %arg0 : i32, i32
  }
  func.func @transform_1(%arg0: i32) -> (i32, i32) {
    %c0_i32 = arith.constant 0 : i32
    %c0_i32_0 = arith.constant 0 : i32
    %c0_i32_1 = arith.constant 0 : i32
    return %c0_i32, %c0_i32_0 : i32, i32
  }
  func.func @transform_2(%arg0: i32) -> (i32, i32) {
    %c0_i32 = arith.constant 0 : i32
    %c0_i32_0 = arith.constant 0 : i32
    %c0_i32_1 = arith.constant 0 : i32
    return %c0_i32, %c0_i32_0 : i32, i32
  }
  func.func @transform_3(%arg0: i32) -> (i32, i32) {
    %c0_i32 = arith.constant 0 : i32
    %c0_i32_0 = arith.constant 0 : i32
    return %c0_i32, %arg0 : i32, i32
  }
}

module attributes {stable_mosaic.version = 11 : i64} {
  func.func @_convT_bias_act_kernel(%arg0: i32, %arg1: memref<72x256xbf16, #tpu.memory_space<vmem>>, %arg2: memref<8x72xbf16, #tpu.memory_space<vmem>>, %arg3: memref<8x1xf32, #tpu.memory_space<vmem>>, %arg4: memref<8x256xbf16, #tpu.memory_space<vmem>>) attributes {dimension_semantics = [#tpu.dimension_semantics<parallel>], iteration_bounds = array<i64: 2>, scalar_prefetch = 0 : i64, scratch_operands = 0 : i64, tpu.core_type = #tpu.core_type<tc>, window_params = [{transform_indices = @transform_0, window_bounds = array<i64: 72, 256>}, {pipeline_mode = #tpu.pipeline_mode<synchronous>, transform_indices = @transform_1, window_bounds = array<i64: 8, 72>}, {pipeline_mode = #tpu.pipeline_mode<synchronous>, transform_indices = @transform_2, window_bounds = array<i64: 8, 1>}, {transform_indices = @transform_3, window_bounds = array<i64: 8, 256>}]} {
    %c0 = arith.constant 0 : index
    %c0_0 = arith.constant 0 : index
    %0 = vector.load %arg2[%c0, %c0_0] : memref<8x72xbf16, #tpu.memory_space<vmem>>, vector<8x72xbf16>
    %c0_1 = arith.constant 0 : index
    %c0_2 = arith.constant 0 : index
    %1 = vector.load %arg1[%c0_1, %c0_2] : memref<72x256xbf16, #tpu.memory_space<vmem>>, vector<72x256xbf16>
    %cst = arith.constant dense<0.000000e+00> : vector<8x256xf32>
    %2 = tpu.matmul %0, %1, %cst {dimension_numbers = #tpu.dot_dimension_numbers<[1], [0], [0], [1], [0, 0, 1, 1], [], []>} : vector<8x72xbf16>, vector<72x256xbf16>, vector<8x256xf32> -> vector<8x256xf32>
    %c0_3 = arith.constant 0 : index
    %c0_4 = arith.constant 0 : index
    %3 = vector.load %arg3[%c0_3, %c0_4] : memref<8x1xf32, #tpu.memory_space<vmem>>, vector<8x1xf32>
    %4 = vector.broadcast %3 : vector<8x1xf32> to vector<8x256xf32>
    %5 = arith.addf %2, %4 : vector<8x256xf32>
    %cst_5 = arith.constant 0.000000e+00 : f32
    %6 = vector.broadcast %cst_5 : f32 to vector<8x256xf32>
    %7 = arith.maximumf %5, %6 : vector<8x256xf32>
    %8 = arith.truncf %7 : vector<8x256xf32> to vector<8x256xbf16>
    %c0_6 = arith.constant 0 : index
    %c0_7 = arith.constant 0 : index
    %9 = vector.load %arg4[%c0_6, %c0_7] : memref<8x256xbf16, #tpu.memory_space<vmem>>, vector<8x256xbf16>
    tpu.vector_store %arg4[%c0_6, %c0_7], %8 {strides = array<i32>} : memref<8x256xbf16, #tpu.memory_space<vmem>>, vector<8x256xbf16>,
    return
  }
  func.func @transform_0(%arg0: i32) -> (i32, i32) {
    %c0_i32 = arith.constant 0 : i32
    %c0_i32_0 = arith.constant 0 : i32
    return %c0_i32, %arg0 : i32, i32
  }
  func.func @transform_1(%arg0: i32) -> (i32, i32) {
    %c0_i32 = arith.constant 0 : i32
    %c0_i32_0 = arith.constant 0 : i32
    %c0_i32_1 = arith.constant 0 : i32
    return %c0_i32, %c0_i32_0 : i32, i32
  }
  func.func @transform_2(%arg0: i32) -> (i32, i32) {
    %c0_i32 = arith.constant 0 : i32
    %c0_i32_0 = arith.constant 0 : i32
    %c0_i32_1 = arith.constant 0 : i32
    return %c0_i32, %c0_i32_0 : i32, i32
  }
  func.func @transform_3(%arg0: i32) -> (i32, i32) {
    %c0_i32 = arith.constant 0 : i32
    %c0_i32_0 = arith.constant 0 : i32
    return %c0_i32, %arg0 : i32, i32
  }
}

module attributes {stable_mosaic.version = 11 : i64} {
  func.func @_convT_bias_act_kernel(%arg0: i32, %arg1: memref<72x128xbf16, #tpu.memory_space<vmem>>, %arg2: memref<16x72xbf16, #tpu.memory_space<vmem>>, %arg3: memref<16x1xf32, #tpu.memory_space<vmem>>, %arg4: memref<16x128xbf16, #tpu.memory_space<vmem>>) attributes {dimension_semantics = [#tpu.dimension_semantics<parallel>], iteration_bounds = array<i64: 1>, scalar_prefetch = 0 : i64, scratch_operands = 0 : i64, tpu.core_type = #tpu.core_type<tc>, window_params = [{transform_indices = @transform_0, window_bounds = array<i64: 72, 128>}, {pipeline_mode = #tpu.pipeline_mode<synchronous>, transform_indices = @transform_1, window_bounds = array<i64: 16, 72>}, {pipeline_mode = #tpu.pipeline_mode<synchronous>, transform_indices = @transform_2, window_bounds = array<i64: 16, 1>}, {transform_indices = @transform_3, window_bounds = array<i64: 16, 128>}]} {
    %c0 = arith.constant 0 : index
    %c0_0 = arith.constant 0 : index
    %0 = vector.load %arg2[%c0, %c0_0] : memref<16x72xbf16, #tpu.memory_space<vmem>>, vector<16x72xbf16>
    %c0_1 = arith.constant 0 : index
    %c0_2 = arith.constant 0 : index
    %1 = vector.load %arg1[%c0_1, %c0_2] : memref<72x128xbf16, #tpu.memory_space<vmem>>, vector<72x128xbf16>
    %cst = arith.constant dense<0.000000e+00> : vector<16x128xf32>
    %2 = tpu.matmul %0, %1, %cst {dimension_numbers = #tpu.dot_dimension_numbers<[1], [0], [0], [1], [0, 0, 1, 1], [], []>} : vector<16x72xbf16>, vector<72x128xbf16>, vector<16x128xf32> -> vector<16x128xf32>
    %c0_3 = arith.constant 0 : index
    %c0_4 = arith.constant 0 : index
    %3 = vector.load %arg3[%c0_3, %c0_4] : memref<16x1xf32, #tpu.memory_space<vmem>>, vector<16x1xf32>
    %4 = vector.broadcast %3 : vector<16x1xf32> to vector<16x128xf32>
    %5 = arith.addf %2, %4 : vector<16x128xf32>
    %cst_5 = arith.constant 0.000000e+00 : f32
    %6 = vector.broadcast %cst_5 : f32 to vector<16x128xf32>
    %7 = arith.maximumf %5, %6 : vector<16x128xf32>
    %8 = arith.truncf %7 : vector<16x128xf32> to vector<16x128xbf16>
    %c0_6 = arith.constant 0 : index
    %c0_7 = arith.constant 0 : index
    %9 = vector.load %arg4[%c0_6, %c0_7] : memref<16x128xbf16, #tpu.memory_space<vmem>>, vector<16x128xbf16>
    tpu.vector_store %arg4[%c0_6, %c0_7], %8 {strides = array<i32>} : memref<16x128xbf16, #tpu.memory_space<vmem>>, vector<16x128xbf16>,
    return
  }
  func.func @transform_0(%arg0: i32) -> (i32, i32) {
    %c0_i32 = arith.constant 0 : i32
    %c0_i32_0 = arith.constant 0 : i32
    return %c0_i32, %arg0 : i32, i32
  }
  func.func @transform_1(%arg0: i32) -> (i32, i32) {
    %c0_i32 = arith.constant 0 : i32
    %c0_i32_0 = arith.constant 0 : i32
    %c0_i32_1 = arith.constant 0 : i32
    return %c0_i32, %c0_i32_0 : i32, i32
  }
  func.func @transform_2(%arg0: i32) -> (i32, i32) {
    %c0_i32 = arith.constant 0 : i32
    %c0_i32_0 = arith.constant 0 : i32
    %c0_i32_1 = arith.constant 0 : i32
    return %c0_i32, %c0_i32_0 : i32, i32
  }
  func.func @transform_3(%arg0: i32) -> (i32, i32) {
    %c0_i32 = arith.constant 0 : i32
    %c0_i32_0 = arith.constant 0 : i32
    return %c0_i32, %arg0 : i32, i32
  }
}

module attributes {stable_mosaic.version = 11 : i64} {
  func.func @_convT_bias_act_kernel(%arg0: i32, %arg1: memref<144x128xbf16, #tpu.memory_space<vmem>>, %arg2: memref<16x144xbf16, #tpu.memory_space<vmem>>, %arg3: memref<16x1xf32, #tpu.memory_space<vmem>>, %arg4: memref<16x128xbf16, #tpu.memory_space<vmem>>) attributes {dimension_semantics = [#tpu.dimension_semantics<parallel>], iteration_bounds = array<i64: 1>, scalar_prefetch = 0 : i64, scratch_operands = 0 : i64, tpu.core_type = #tpu.core_type<tc>, window_params = [{transform_indices = @transform_0, window_bounds = array<i64: 144, 128>}, {pipeline_mode = #tpu.pipeline_mode<synchronous>, transform_indices = @transform_1, window_bounds = array<i64: 16, 144>}, {pipeline_mode = #tpu.pipeline_mode<synchronous>, transform_indices = @transform_2, window_bounds = array<i64: 16, 1>}, {transform_indices = @transform_3, window_bounds = array<i64: 16, 128>}]} {
    %c0 = arith.constant 0 : index
    %c0_0 = arith.constant 0 : index
    %0 = vector.load %arg2[%c0, %c0_0] : memref<16x144xbf16, #tpu.memory_space<vmem>>, vector<16x144xbf16>
    %c0_1 = arith.constant 0 : index
    %c0_2 = arith.constant 0 : index
    %1 = vector.load %arg1[%c0_1, %c0_2] : memref<144x128xbf16, #tpu.memory_space<vmem>>, vector<144x128xbf16>
    %cst = arith.constant dense<0.000000e+00> : vector<16x128xf32>
    %2 = tpu.matmul %0, %1, %cst {dimension_numbers = #tpu.dot_dimension_numbers<[1], [0], [0], [1], [0, 0, 1, 1], [], []>} : vector<16x144xbf16>, vector<144x128xbf16>, vector<16x128xf32> -> vector<16x128xf32>
    %c0_3 = arith.constant 0 : index
    %c0_4 = arith.constant 0 : index
    %3 = vector.load %arg3[%c0_3, %c0_4] : memref<16x1xf32, #tpu.memory_space<vmem>>, vector<16x1xf32>
    %4 = vector.broadcast %3 : vector<16x1xf32> to vector<16x128xf32>
    %5 = arith.addf %2, %4 : vector<16x128xf32>
    %cst_5 = arith.constant 0.000000e+00 : f32
    %6 = vector.broadcast %cst_5 : f32 to vector<16x128xf32>
    %7 = arith.maximumf %5, %6 : vector<16x128xf32>
    %8 = arith.truncf %7 : vector<16x128xf32> to vector<16x128xbf16>
    %c0_6 = arith.constant 0 : index
    %c0_7 = arith.constant 0 : index
    %9 = vector.load %arg4[%c0_6, %c0_7] : memref<16x128xbf16, #tpu.memory_space<vmem>>, vector<16x128xbf16>
    tpu.vector_store %arg4[%c0_6, %c0_7], %8 {strides = array<i32>} : memref<16x128xbf16, #tpu.memory_space<vmem>>, vector<16x128xbf16>,
    return
  }
  func.func @transform_0(%arg0: i32) -> (i32, i32) {
    %c0_i32 = arith.constant 0 : i32
    %c0_i32_0 = arith.constant 0 : i32
    return %c0_i32, %arg0 : i32, i32
  }
  func.func @transform_1(%arg0: i32) -> (i32, i32) {
    %c0_i32 = arith.constant 0 : i32
    %c0_i32_0 = arith.constant 0 : i32
    %c0_i32_1 = arith.constant 0 : i32
    return %c0_i32, %c0_i32_0 : i32, i32
  }
  func.func @transform_2(%arg0: i32) -> (i32, i32) {
    %c0_i32 = arith.constant 0 : i32
    %c0_i32_0 = arith.constant 0 : i32
    %c0_i32_1 = arith.constant 0 : i32
    return %c0_i32, %c0_i32_0 : i32, i32
  }
  func.func @transform_3(%arg0: i32) -> (i32, i32) {
    %c0_i32 = arith.constant 0 : i32
    %c0_i32_0 = arith.constant 0 : i32
    return %c0_i32, %arg0 : i32, i32
  }
}

module attributes {stable_mosaic.version = 11 : i64} {
  func.func @_convT_bias_act_kernel(%arg0: i32, %arg1: memref<144x128xbf16, #tpu.memory_space<vmem>>, %arg2: memref<32x144xbf16, #tpu.memory_space<vmem>>, %arg3: memref<32x1xf32, #tpu.memory_space<vmem>>, %arg4: memref<32x128xbf16, #tpu.memory_space<vmem>>) attributes {dimension_semantics = [#tpu.dimension_semantics<parallel>], iteration_bounds = array<i64: 1>, scalar_prefetch = 0 : i64, scratch_operands = 0 : i64, tpu.core_type = #tpu.core_type<tc>, window_params = [{transform_indices = @transform_0, window_bounds = array<i64: 144, 128>}, {pipeline_mode = #tpu.pipeline_mode<synchronous>, transform_indices = @transform_1, window_bounds = array<i64: 32, 144>}, {pipeline_mode = #tpu.pipeline_mode<synchronous>, transform_indices = @transform_2, window_bounds = array<i64: 32, 1>}, {transform_indices = @transform_3, window_bounds = array<i64: 32, 128>}]} {
    %c0 = arith.constant 0 : index
    %c0_0 = arith.constant 0 : index
    %0 = vector.load %arg2[%c0, %c0_0] : memref<32x144xbf16, #tpu.memory_space<vmem>>, vector<32x144xbf16>
    %c0_1 = arith.constant 0 : index
    %c0_2 = arith.constant 0 : index
    %1 = vector.load %arg1[%c0_1, %c0_2] : memref<144x128xbf16, #tpu.memory_space<vmem>>, vector<144x128xbf16>
    %cst = arith.constant dense<0.000000e+00> : vector<32x128xf32>
    %2 = tpu.matmul %0, %1, %cst {dimension_numbers = #tpu.dot_dimension_numbers<[1], [0], [0], [1], [0, 0, 1, 1], [], []>} : vector<32x144xbf16>, vector<144x128xbf16>, vector<32x128xf32> -> vector<32x128xf32>
    %c0_3 = arith.constant 0 : index
    %c0_4 = arith.constant 0 : index
    %3 = vector.load %arg3[%c0_3, %c0_4] : memref<32x1xf32, #tpu.memory_space<vmem>>, vector<32x1xf32>
    %4 = vector.broadcast %3 : vector<32x1xf32> to vector<32x128xf32>
    %5 = arith.addf %2, %4 : vector<32x128xf32>
    %cst_5 = arith.constant 0.000000e+00 : f32
    %6 = vector.broadcast %cst_5 : f32 to vector<32x128xf32>
    %7 = arith.maximumf %5, %6 : vector<32x128xf32>
    %8 = arith.truncf %7 : vector<32x128xf32> to vector<32x128xbf16>
    %c0_6 = arith.constant 0 : index
    %c0_7 = arith.constant 0 : index
    %9 = vector.load %arg4[%c0_6, %c0_7] : memref<32x128xbf16, #tpu.memory_space<vmem>>, vector<32x128xbf16>
    tpu.vector_store %arg4[%c0_6, %c0_7], %8 {strides = array<i32>} : memref<32x128xbf16, #tpu.memory_space<vmem>>, vector<32x128xbf16>,
    return
  }
  func.func @transform_0(%arg0: i32) -> (i32, i32) {
    %c0_i32 = arith.constant 0 : i32
    %c0_i32_0 = arith.constant 0 : i32
    return %c0_i32, %arg0 : i32, i32
  }
  func.func @transform_1(%arg0: i32) -> (i32, i32) {
    %c0_i32 = arith.constant 0 : i32
    %c0_i32_0 = arith.constant 0 : i32
    %c0_i32_1 = arith.constant 0 : i32
    return %c0_i32, %c0_i32_0 : i32, i32
  }
  func.func @transform_2(%arg0: i32) -> (i32, i32) {
    %c0_i32 = arith.constant 0 : i32
    %c0_i32_0 = arith.constant 0 : i32
    %c0_i32_1 = arith.constant 0 : i32
    return %c0_i32, %c0_i32_0 : i32, i32
  }
  func.func @transform_3(%arg0: i32) -> (i32, i32) {
    %c0_i32 = arith.constant 0 : i32
    %c0_i32_0 = arith.constant 0 : i32
    return %c0_i32, %arg0 : i32, i32
  }
}

module attributes {stable_mosaic.version = 11 : i64} {
  func.func @_convT_bias_act_kernel(%arg0: i32, %arg1: memref<432x128xbf16, #tpu.memory_space<vmem>>, %arg2: memref<16x432xbf16, #tpu.memory_space<vmem>>, %arg3: memref<16x1xf32, #tpu.memory_space<vmem>>, %arg4: memref<16x128xbf16, #tpu.memory_space<vmem>>) attributes {dimension_semantics = [#tpu.dimension_semantics<parallel>], iteration_bounds = array<i64: 1>, scalar_prefetch = 0 : i64, scratch_operands = 0 : i64, tpu.core_type = #tpu.core_type<tc>, window_params = [{transform_indices = @transform_0, window_bounds = array<i64: 432, 128>}, {pipeline_mode = #tpu.pipeline_mode<synchronous>, transform_indices = @transform_1, window_bounds = array<i64: 16, 432>}, {pipeline_mode = #tpu.pipeline_mode<synchronous>, transform_indices = @transform_2, window_bounds = array<i64: 16, 1>}, {transform_indices = @transform_3, window_bounds = array<i64: 16, 128>}]} {
    %c0 = arith.constant 0 : index
    %c0_0 = arith.constant 0 : index
    %0 = vector.load %arg2[%c0, %c0_0] : memref<16x432xbf16, #tpu.memory_space<vmem>>, vector<16x432xbf16>
    %c0_1 = arith.constant 0 : index
    %c0_2 = arith.constant 0 : index
    %1 = vector.load %arg1[%c0_1, %c0_2] : memref<432x128xbf16, #tpu.memory_space<vmem>>, vector<432x128xbf16>
    %cst = arith.constant dense<0.000000e+00> : vector<16x128xf32>
    %2 = tpu.matmul %0, %1, %cst {dimension_numbers = #tpu.dot_dimension_numbers<[1], [0], [0], [1], [0, 0, 1, 1], [], []>} : vector<16x432xbf16>, vector<432x128xbf16>, vector<16x128xf32> -> vector<16x128xf32>
    %c0_3 = arith.constant 0 : index
    %c0_4 = arith.constant 0 : index
    %3 = vector.load %arg3[%c0_3, %c0_4] : memref<16x1xf32, #tpu.memory_space<vmem>>, vector<16x1xf32>
    %4 = vector.broadcast %3 : vector<16x1xf32> to vector<16x128xf32>
    %5 = arith.addf %2, %4 : vector<16x128xf32>
    %cst_5 = arith.constant 0.000000e+00 : f32
    %6 = vector.broadcast %cst_5 : f32 to vector<16x128xf32>
    %7 = arith.maximumf %5, %6 : vector<16x128xf32>
    %8 = arith.truncf %7 : vector<16x128xf32> to vector<16x128xbf16>
    %c0_6 = arith.constant 0 : index
    %c0_7 = arith.constant 0 : index
    %9 = vector.load %arg4[%c0_6, %c0_7] : memref<16x128xbf16, #tpu.memory_space<vmem>>, vector<16x128xbf16>
    tpu.vector_store %arg4[%c0_6, %c0_7], %8 {strides = array<i32>} : memref<16x128xbf16, #tpu.memory_space<vmem>>, vector<16x128xbf16>,
    return
  }
  func.func @transform_0(%arg0: i32) -> (i32, i32) {
    %c0_i32 = arith.constant 0 : i32
    %c0_i32_0 = arith.constant 0 : i32
    return %c0_i32, %arg0 : i32, i32
  }
  func.func @transform_1(%arg0: i32) -> (i32, i32) {
    %c0_i32 = arith.constant 0 : i32
    %c0_i32_0 = arith.constant 0 : i32
    %c0_i32_1 = arith.constant 0 : i32
    return %c0_i32, %c0_i32_0 : i32, i32
  }
  func.func @transform_2(%arg0: i32) -> (i32, i32) {
    %c0_i32 = arith.constant 0 : i32
    %c0_i32_0 = arith.constant 0 : i32
    %c0_i32_1 = arith.constant 0 : i32
    return %c0_i32, %c0_i32_0 : i32, i32
  }
  func.func @transform_3(%arg0: i32) -> (i32, i32) {
    %c0_i32 = arith.constant 0 : i32
    %c0_i32_0 = arith.constant 0 : i32
    return %c0_i32, %arg0 : i32, i32
  }
}

module attributes {stable_mosaic.version = 11 : i64} {
  func.func @_convT_bias_act_kernel(%arg0: i32, %arg1: memref<288x128xbf16, #tpu.memory_space<vmem>>, %arg2: memref<16x288xbf16, #tpu.memory_space<vmem>>, %arg3: memref<16x1xf32, #tpu.memory_space<vmem>>, %arg4: memref<16x128xbf16, #tpu.memory_space<vmem>>) attributes {dimension_semantics = [#tpu.dimension_semantics<parallel>], iteration_bounds = array<i64: 1>, scalar_prefetch = 0 : i64, scratch_operands = 0 : i64, tpu.core_type = #tpu.core_type<tc>, window_params = [{transform_indices = @transform_0, window_bounds = array<i64: 288, 128>}, {pipeline_mode = #tpu.pipeline_mode<synchronous>, transform_indices = @transform_1, window_bounds = array<i64: 16, 288>}, {pipeline_mode = #tpu.pipeline_mode<synchronous>, transform_indices = @transform_2, window_bounds = array<i64: 16, 1>}, {transform_indices = @transform_3, window_bounds = array<i64: 16, 128>}]} {
    %c0 = arith.constant 0 : index
    %c0_0 = arith.constant 0 : index
    %0 = vector.load %arg2[%c0, %c0_0] : memref<16x288xbf16, #tpu.memory_space<vmem>>, vector<16x288xbf16>
    %c0_1 = arith.constant 0 : index
    %c0_2 = arith.constant 0 : index
    %1 = vector.load %arg1[%c0_1, %c0_2] : memref<288x128xbf16, #tpu.memory_space<vmem>>, vector<288x128xbf16>
    %cst = arith.constant dense<0.000000e+00> : vector<16x128xf32>
    %2 = tpu.matmul %0, %1, %cst {dimension_numbers = #tpu.dot_dimension_numbers<[1], [0], [0], [1], [0, 0, 1, 1], [], []>} : vector<16x288xbf16>, vector<288x128xbf16>, vector<16x128xf32> -> vector<16x128xf32>
    %c0_3 = arith.constant 0 : index
    %c0_4 = arith.constant 0 : index
    %3 = vector.load %arg3[%c0_3, %c0_4] : memref<16x1xf32, #tpu.memory_space<vmem>>, vector<16x1xf32>
    %4 = vector.broadcast %3 : vector<16x1xf32> to vector<16x128xf32>
    %5 = arith.addf %2, %4 : vector<16x128xf32>
    %cst_5 = arith.constant 0.000000e+00 : f32
    %6 = vector.broadcast %cst_5 : f32 to vector<16x128xf32>
    %7 = arith.maximumf %5, %6 : vector<16x128xf32>
    %8 = arith.truncf %7 : vector<16x128xf32> to vector<16x128xbf16>
    %c0_6 = arith.constant 0 : index
    %c0_7 = arith.constant 0 : index
    %9 = vector.load %arg4[%c0_6, %c0_7] : memref<16x128xbf16, #tpu.memory_space<vmem>>, vector<16x128xbf16>
    tpu.vector_store %arg4[%c0_6, %c0_7], %8 {strides = array<i32>} : memref<16x128xbf16, #tpu.memory_space<vmem>>, vector<16x128xbf16>,
    return
  }
  func.func @transform_0(%arg0: i32) -> (i32, i32) {
    %c0_i32 = arith.constant 0 : i32
    %c0_i32_0 = arith.constant 0 : i32
    return %c0_i32, %arg0 : i32, i32
  }
  func.func @transform_1(%arg0: i32) -> (i32, i32) {
    %c0_i32 = arith.constant 0 : i32
    %c0_i32_0 = arith.constant 0 : i32
    %c0_i32_1 = arith.constant 0 : i32
    return %c0_i32, %c0_i32_0 : i32, i32
  }
  func.func @transform_2(%arg0: i32) -> (i32, i32) {
    %c0_i32 = arith.constant 0 : i32
    %c0_i32_0 = arith.constant 0 : i32
    %c0_i32_1 = arith.constant 0 : i32
    return %c0_i32, %c0_i32_0 : i32, i32
  }
  func.func @transform_3(%arg0: i32) -> (i32, i32) {
    %c0_i32 = arith.constant 0 : i32
    %c0_i32_0 = arith.constant 0 : i32
    return %c0_i32, %arg0 : i32, i32
  }
}

module attributes {stable_mosaic.version = 11 : i64} {
  func.func @_convT_bias_act_kernel(%arg0: i32, %arg1: memref<216x256xbf16, #tpu.memory_space<vmem>>, %arg2: memref<8x216xbf16, #tpu.memory_space<vmem>>, %arg3: memref<8x1xf32, #tpu.memory_space<vmem>>, %arg4: memref<8x256xbf16, #tpu.memory_space<vmem>>) attributes {dimension_semantics = [#tpu.dimension_semantics<parallel>], iteration_bounds = array<i64: 2>, scalar_prefetch = 0 : i64, scratch_operands = 0 : i64, tpu.core_type = #tpu.core_type<tc>, window_params = [{transform_indices = @transform_0, window_bounds = array<i64: 216, 256>}, {pipeline_mode = #tpu.pipeline_mode<synchronous>, transform_indices = @transform_1, window_bounds = array<i64: 8, 216>}, {pipeline_mode = #tpu.pipeline_mode<synchronous>, transform_indices = @transform_2, window_bounds = array<i64: 8, 1>}, {transform_indices = @transform_3, window_bounds = array<i64: 8, 256>}]} {
    %c0 = arith.constant 0 : index
    %c0_0 = arith.constant 0 : index
    %0 = vector.load %arg2[%c0, %c0_0] : memref<8x216xbf16, #tpu.memory_space<vmem>>, vector<8x216xbf16>
    %c0_1 = arith.constant 0 : index
    %c0_2 = arith.constant 0 : index
    %1 = vector.load %arg1[%c0_1, %c0_2] : memref<216x256xbf16, #tpu.memory_space<vmem>>, vector<216x256xbf16>
    %cst = arith.constant dense<0.000000e+00> : vector<8x256xf32>
    %2 = tpu.matmul %0, %1, %cst {dimension_numbers = #tpu.dot_dimension_numbers<[1], [0], [0], [1], [0, 0, 1, 1], [], []>} : vector<8x216xbf16>, vector<216x256xbf16>, vector<8x256xf32> -> vector<8x256xf32>
    %c0_3 = arith.constant 0 : index
    %c0_4 = arith.constant 0 : index
    %3 = vector.load %arg3[%c0_3, %c0_4] : memref<8x1xf32, #tpu.memory_space<vmem>>, vector<8x1xf32>
    %4 = vector.broadcast %3 : vector<8x1xf32> to vector<8x256xf32>
    %5 = arith.addf %2, %4 : vector<8x256xf32>
    %cst_5 = arith.constant 0.000000e+00 : f32
    %6 = vector.broadcast %cst_5 : f32 to vector<8x256xf32>
    %7 = arith.maximumf %5, %6 : vector<8x256xf32>
    %8 = arith.truncf %7 : vector<8x256xf32> to vector<8x256xbf16>
    %c0_6 = arith.constant 0 : index
    %c0_7 = arith.constant 0 : index
    %9 = vector.load %arg4[%c0_6, %c0_7] : memref<8x256xbf16, #tpu.memory_space<vmem>>, vector<8x256xbf16>
    tpu.vector_store %arg4[%c0_6, %c0_7], %8 {strides = array<i32>} : memref<8x256xbf16, #tpu.memory_space<vmem>>, vector<8x256xbf16>,
    return
  }
  func.func @transform_0(%arg0: i32) -> (i32, i32) {
    %c0_i32 = arith.constant 0 : i32
    %c0_i32_0 = arith.constant 0 : i32
    return %c0_i32, %arg0 : i32, i32
  }
  func.func @transform_1(%arg0: i32) -> (i32, i32) {
    %c0_i32 = arith.constant 0 : i32
    %c0_i32_0 = arith.constant 0 : i32
    %c0_i32_1 = arith.constant 0 : i32
    return %c0_i32, %c0_i32_0 : i32, i32
  }
  func.func @transform_2(%arg0: i32) -> (i32, i32) {
    %c0_i32 = arith.constant 0 : i32
    %c0_i32_0 = arith.constant 0 : i32
    %c0_i32_1 = arith.constant 0 : i32
    return %c0_i32, %c0_i32_0 : i32, i32
  }
  func.func @transform_3(%arg0: i32) -> (i32, i32) {
    %c0_i32 = arith.constant 0 : i32
    %c0_i32_0 = arith.constant 0 : i32
    return %c0_i32, %arg0 : i32, i32
  }
}

module attributes {stable_mosaic.version = 11 : i64} {
  func.func @_convT_bias_act_kernel(%arg0: i32, %arg1: memref<144x1024xbf16, #tpu.memory_space<vmem>>, %arg2: memref<8x144xbf16, #tpu.memory_space<vmem>>, %arg3: memref<8x1xf32, #tpu.memory_space<vmem>>, %arg4: memref<8x1024xbf16, #tpu.memory_space<vmem>>) attributes {dimension_semantics = [#tpu.dimension_semantics<parallel>], iteration_bounds = array<i64: 2>, scalar_prefetch = 0 : i64, scratch_operands = 0 : i64, tpu.core_type = #tpu.core_type<tc>, window_params = [{transform_indices = @transform_0, window_bounds = array<i64: 144, 1024>}, {pipeline_mode = #tpu.pipeline_mode<synchronous>, transform_indices = @transform_1, window_bounds = array<i64: 8, 144>}, {pipeline_mode = #tpu.pipeline_mode<synchronous>, transform_indices = @transform_2, window_bounds = array<i64: 8, 1>}, {transform_indices = @transform_3, window_bounds = array<i64: 8, 1024>}]} {
    %c0 = arith.constant 0 : index
    %c0_0 = arith.constant 0 : index
    %0 = vector.load %arg2[%c0, %c0_0] : memref<8x144xbf16, #tpu.memory_space<vmem>>, vector<8x144xbf16>
    %c0_1 = arith.constant 0 : index
    %c0_2 = arith.constant 0 : index
    %1 = vector.load %arg1[%c0_1, %c0_2] : memref<144x1024xbf16, #tpu.memory_space<vmem>>, vector<144x1024xbf16>
    %cst = arith.constant dense<0.000000e+00> : vector<8x1024xf32>
    %2 = tpu.matmul %0, %1, %cst {dimension_numbers = #tpu.dot_dimension_numbers<[1], [0], [0], [1], [0, 0, 1, 1], [], []>} : vector<8x144xbf16>, vector<144x1024xbf16>, vector<8x1024xf32> -> vector<8x1024xf32>
    %c0_3 = arith.constant 0 : index
    %c0_4 = arith.constant 0 : index
    %3 = vector.load %arg3[%c0_3, %c0_4] : memref<8x1xf32, #tpu.memory_space<vmem>>, vector<8x1xf32>
    %4 = vector.broadcast %3 : vector<8x1xf32> to vector<8x1024xf32>
    %5 = arith.addf %2, %4 : vector<8x1024xf32>
    %cst_5 = arith.constant 0.000000e+00 : f32
    %6 = vector.broadcast %cst_5 : f32 to vector<8x1024xf32>
    %7 = arith.maximumf %5, %6 : vector<8x1024xf32>
    %8 = arith.truncf %7 : vector<8x1024xf32> to vector<8x1024xbf16>
    %c0_6 = arith.constant 0 : index
    %c0_7 = arith.constant 0 : index
    %9 = vector.load %arg4[%c0_6, %c0_7] : memref<8x1024xbf16, #tpu.memory_space<vmem>>, vector<8x1024xbf16>
    tpu.vector_store %arg4[%c0_6, %c0_7], %8 {strides = array<i32>} : memref<8x1024xbf16, #tpu.memory_space<vmem>>, vector<8x1024xbf16>,
    return
  }
  func.func @transform_0(%arg0: i32) -> (i32, i32) {
    %c0_i32 = arith.constant 0 : i32
    %c0_i32_0 = arith.constant 0 : i32
    return %c0_i32, %arg0 : i32, i32
  }
  func.func @transform_1(%arg0: i32) -> (i32, i32) {
    %c0_i32 = arith.constant 0 : i32
    %c0_i32_0 = arith.constant 0 : i32
    %c0_i32_1 = arith.constant 0 : i32
    return %c0_i32, %c0_i32_0 : i32, i32
  }
  func.func @transform_2(%arg0: i32) -> (i32, i32) {
    %c0_i32 = arith.constant 0 : i32
    %c0_i32_0 = arith.constant 0 : i32
    %c0_i32_1 = arith.constant 0 : i32
    return %c0_i32, %c0_i32_0 : i32, i32
  }
  func.func @transform_3(%arg0: i32) -> (i32, i32) {
    %c0_i32 = arith.constant 0 : i32
    %c0_i32_0 = arith.constant 0 : i32
    return %c0_i32, %arg0 : i32, i32
  }
}

module attributes {stable_mosaic.version = 11 : i64} {
  func.func @_convT_bias_act_kernel(%arg0: i32, %arg1: memref<72x1024xbf16, #tpu.memory_space<vmem>>, %arg2: memref<8x72xbf16, #tpu.memory_space<vmem>>, %arg3: memref<8x1xf32, #tpu.memory_space<vmem>>, %arg4: memref<8x1024xbf16, #tpu.memory_space<vmem>>) attributes {dimension_semantics = [#tpu.dimension_semantics<parallel>], iteration_bounds = array<i64: 2>, scalar_prefetch = 0 : i64, scratch_operands = 0 : i64, tpu.core_type = #tpu.core_type<tc>, window_params = [{transform_indices = @transform_0, window_bounds = array<i64: 72, 1024>}, {pipeline_mode = #tpu.pipeline_mode<synchronous>, transform_indices = @transform_1, window_bounds = array<i64: 8, 72>}, {pipeline_mode = #tpu.pipeline_mode<synchronous>, transform_indices = @transform_2, window_bounds = array<i64: 8, 1>}, {transform_indices = @transform_3, window_bounds = array<i64: 8, 1024>}]} {
    %c0 = arith.constant 0 : index
    %c0_0 = arith.constant 0 : index
    %0 = vector.load %arg2[%c0, %c0_0] : memref<8x72xbf16, #tpu.memory_space<vmem>>, vector<8x72xbf16>
    %c0_1 = arith.constant 0 : index
    %c0_2 = arith.constant 0 : index
    %1 = vector.load %arg1[%c0_1, %c0_2] : memref<72x1024xbf16, #tpu.memory_space<vmem>>, vector<72x1024xbf16>
    %cst = arith.constant dense<0.000000e+00> : vector<8x1024xf32>
    %2 = tpu.matmul %0, %1, %cst {dimension_numbers = #tpu.dot_dimension_numbers<[1], [0], [0], [1], [0, 0, 1, 1], [], []>} : vector<8x72xbf16>, vector<72x1024xbf16>, vector<8x1024xf32> -> vector<8x1024xf32>
    %c0_3 = arith.constant 0 : index
    %c0_4 = arith.constant 0 : index
    %3 = vector.load %arg3[%c0_3, %c0_4] : memref<8x1xf32, #tpu.memory_space<vmem>>, vector<8x1xf32>
    %4 = vector.broadcast %3 : vector<8x1xf32> to vector<8x1024xf32>
    %5 = arith.addf %2, %4 : vector<8x1024xf32>
    %cst_5 = arith.constant 0.000000e+00 : f32
    %6 = vector.broadcast %cst_5 : f32 to vector<8x1024xf32>
    %7 = arith.maximumf %5, %6 : vector<8x1024xf32>
    %8 = arith.truncf %7 : vector<8x1024xf32> to vector<8x1024xbf16>
    %c0_6 = arith.constant 0 : index
    %c0_7 = arith.constant 0 : index
    %9 = vector.load %arg4[%c0_6, %c0_7] : memref<8x1024xbf16, #tpu.memory_space<vmem>>, vector<8x1024xbf16>
    tpu.vector_store %arg4[%c0_6, %c0_7], %8 {strides = array<i32>} : memref<8x1024xbf16, #tpu.memory_space<vmem>>, vector<8x1024xbf16>,
    return
  }
  func.func @transform_0(%arg0: i32) -> (i32, i32) {
    %c0_i32 = arith.constant 0 : i32
    %c0_i32_0 = arith.constant 0 : i32
    return %c0_i32, %arg0 : i32, i32
  }
  func.func @transform_1(%arg0: i32) -> (i32, i32) {
    %c0_i32 = arith.constant 0 : i32
    %c0_i32_0 = arith.constant 0 : i32
    %c0_i32_1 = arith.constant 0 : i32
    return %c0_i32, %c0_i32_0 : i32, i32
  }
  func.func @transform_2(%arg0: i32) -> (i32, i32) {
    %c0_i32 = arith.constant 0 : i32
    %c0_i32_0 = arith.constant 0 : i32
    %c0_i32_1 = arith.constant 0 : i32
    return %c0_i32, %c0_i32_0 : i32, i32
  }
  func.func @transform_3(%arg0: i32) -> (i32, i32) {
    %c0_i32 = arith.constant 0 : i32
    %c0_i32_0 = arith.constant 0 : i32
    return %c0_i32, %arg0 : i32, i32
  }
}

module attributes {stable_mosaic.version = 11 : i64} {
  func.func @_convT_bias_act_kernel(%arg0: i32, %arg1: memref<72x2048xbf16, #tpu.memory_space<vmem>>, %arg2: memref<8x72xbf16, #tpu.memory_space<vmem>>, %arg3: memref<8x1xf32, #tpu.memory_space<vmem>>, %arg4: memref<8x2048xbf16, #tpu.memory_space<vmem>>) attributes {dimension_semantics = [#tpu.dimension_semantics<parallel>], iteration_bounds = array<i64: 4>, scalar_prefetch = 0 : i64, scratch_operands = 0 : i64, tpu.core_type = #tpu.core_type<tc>, window_params = [{transform_indices = @transform_0, window_bounds = array<i64: 72, 2048>}, {pipeline_mode = #tpu.pipeline_mode<synchronous>, transform_indices = @transform_1, window_bounds = array<i64: 8, 72>}, {pipeline_mode = #tpu.pipeline_mode<synchronous>, transform_indices = @transform_2, window_bounds = array<i64: 8, 1>}, {transform_indices = @transform_3, window_bounds = array<i64: 8, 2048>}]} {
    %c0 = arith.constant 0 : index
    %c0_0 = arith.constant 0 : index
    %0 = vector.load %arg2[%c0, %c0_0] : memref<8x72xbf16, #tpu.memory_space<vmem>>, vector<8x72xbf16>
    %c0_1 = arith.constant 0 : index
    %c0_2 = arith.constant 0 : index
    %1 = vector.load %arg1[%c0_1, %c0_2] : memref<72x2048xbf16, #tpu.memory_space<vmem>>, vector<72x2048xbf16>
    %cst = arith.constant dense<0.000000e+00> : vector<8x2048xf32>
    %2 = tpu.matmul %0, %1, %cst {dimension_numbers = #tpu.dot_dimension_numbers<[1], [0], [0], [1], [0, 0, 1, 1], [], []>} : vector<8x72xbf16>, vector<72x2048xbf16>, vector<8x2048xf32> -> vector<8x2048xf32>
    %c0_3 = arith.constant 0 : index
    %c0_4 = arith.constant 0 : index
    %3 = vector.load %arg3[%c0_3, %c0_4] : memref<8x1xf32, #tpu.memory_space<vmem>>, vector<8x1xf32>
    %4 = vector.broadcast %3 : vector<8x1xf32> to vector<8x2048xf32>
    %5 = arith.addf %2, %4 : vector<8x2048xf32>
    %cst_5 = arith.constant 0.000000e+00 : f32
    %6 = vector.broadcast %cst_5 : f32 to vector<8x2048xf32>
    %7 = arith.maximumf %5, %6 : vector<8x2048xf32>
    %8 = arith.truncf %7 : vector<8x2048xf32> to vector<8x2048xbf16>
    %c0_6 = arith.constant 0 : index
    %c0_7 = arith.constant 0 : index
    %9 = vector.load %arg4[%c0_6, %c0_7] : memref<8x2048xbf16, #tpu.memory_space<vmem>>, vector<8x2048xbf16>
    tpu.vector_store %arg4[%c0_6, %c0_7], %8 {strides = array<i32>} : memref<8x2048xbf16, #tpu.memory_space<vmem>>, vector<8x2048xbf16>,
    return
  }
  func.func @transform_0(%arg0: i32) -> (i32, i32) {
    %c0_i32 = arith.constant 0 : i32
    %c0_i32_0 = arith.constant 0 : i32
    return %c0_i32, %arg0 : i32, i32
  }
  func.func @transform_1(%arg0: i32) -> (i32, i32) {
    %c0_i32 = arith.constant 0 : i32
    %c0_i32_0 = arith.constant 0 : i32
    %c0_i32_1 = arith.constant 0 : i32
    return %c0_i32, %c0_i32_0 : i32, i32
  }
  func.func @transform_2(%arg0: i32) -> (i32, i32) {
    %c0_i32 = arith.constant 0 : i32
    %c0_i32_0 = arith.constant 0 : i32
    %c0_i32_1 = arith.constant 0 : i32
    return %c0_i32, %c0_i32_0 : i32, i32
  }
  func.func @transform_3(%arg0: i32) -> (i32, i32) {
    %c0_i32 = arith.constant 0 : i32
    %c0_i32_0 = arith.constant 0 : i32
    return %c0_i32, %arg0 : i32, i32
  }
}

module attributes {stable_mosaic.version = 11 : i64} {
  func.func @_convT_bias_act_kernel(%arg0: i32, %arg1: memref<72x2048xbf16, #tpu.memory_space<vmem>>, %arg2: memref<1x72xbf16, #tpu.memory_space<vmem>>, %arg3: memref<1x1xf32, #tpu.memory_space<vmem>>, %arg4: memref<1x2048xf32, #tpu.memory_space<vmem>>) attributes {dimension_semantics = [#tpu.dimension_semantics<parallel>], iteration_bounds = array<i64: 4>, scalar_prefetch = 0 : i64, scratch_operands = 0 : i64, tpu.core_type = #tpu.core_type<tc>, window_params = [{transform_indices = @transform_0, window_bounds = array<i64: 72, 2048>}, {pipeline_mode = #tpu.pipeline_mode<synchronous>, transform_indices = @transform_1, window_bounds = array<i64: 1, 72>}, {pipeline_mode = #tpu.pipeline_mode<synchronous>, transform_indices = @transform_2, window_bounds = array<i64: 1, 1>}, {transform_indices = @transform_3, window_bounds = array<i64: 1, 2048>}]} {
    %c0 = arith.constant 0 : index
    %c0_0 = arith.constant 0 : index
    %0 = vector.load %arg2[%c0, %c0_0] : memref<1x72xbf16, #tpu.memory_space<vmem>>, vector<1x72xbf16>
    %c0_1 = arith.constant 0 : index
    %c0_2 = arith.constant 0 : index
    %1 = vector.load %arg1[%c0_1, %c0_2] : memref<72x2048xbf16, #tpu.memory_space<vmem>>, vector<72x2048xbf16>
    %cst = arith.constant dense<0.000000e+00> : vector<1x2048xf32>
    %2 = tpu.matmul %0, %1, %cst {dimension_numbers = #tpu.dot_dimension_numbers<[1], [0], [0], [1], [0, 0, 1, 1], [], []>} : vector<1x72xbf16>, vector<72x2048xbf16>, vector<1x2048xf32> -> vector<1x2048xf32>
    %c0_3 = arith.constant 0 : index
    %c0_4 = arith.constant 0 : index
    %3 = vector.load %arg3[%c0_3, %c0_4] : memref<1x1xf32, #tpu.memory_space<vmem>>, vector<1x1xf32>
    %4 = vector.broadcast %3 : vector<1x1xf32> to vector<1x2048xf32>
    %5 = arith.addf %2, %4 : vector<1x2048xf32>
    %c0_5 = arith.constant 0 : index
    %c0_6 = arith.constant 0 : index
    %6 = vector.load %arg4[%c0_5, %c0_6] : memref<1x2048xf32, #tpu.memory_space<vmem>>, vector<1x2048xf32>
    tpu.vector_store %arg4[%c0_5, %c0_6], %5 {strides = array<i32>} : memref<1x2048xf32, #tpu.memory_space<vmem>>, vector<1x2048xf32>,
    return
  }
  func.func @transform_0(%arg0: i32) -> (i32, i32) {
    %c0_i32 = arith.constant 0 : i32
    %c0_i32_0 = arith.constant 0 : i32
    return %c0_i32, %arg0 : i32, i32
  }
  func.func @transform_1(%arg0: i32) -> (i32, i32) {
    %c0_i32 = arith.constant 0 : i32
    %c0_i32_0 = arith.constant 0 : i32
    %c0_i32_1 = arith.constant 0 : i32
    return %c0_i32, %c0_i32_0 : i32, i32
  }
  func.func @transform_2(%arg0: i32) -> (i32, i32) {
    %c0_i32 = arith.constant 0 : i32
    %c0_i32_0 = arith.constant 0 : i32
    %c0_i32_1 = arith.constant 0 : i32
    return %c0_i32, %c0_i32_0 : i32, i32
  }
  func.func @transform_3(%arg0: i32) -> (i32, i32) {
    %c0_i32 = arith.constant 0 : i32
    %c0_i32_0 = arith.constant 0 : i32
    return %c0_i32, %arg0 : i32, i32
  }
}

</mosaic_0001>

<llo_original>
// kernel: segmentation_net_forward.16
$region0: #{segmentation_net_forward.16}
  #allocation0 [shape = 'u32[]', space=smem, size = 0x4, offset = 0x4, fixed_abs, tag = 'smem constant byte address 0x4 - core index']
  #allocation1 [shape = 'u32[72,128]{1,0:T(1,128)}', space=vmem, size = 0x9000, scoped, tag = 'internal scratch']
  %s0 = inlined_call_operand.vmem [shape: bf16[27,2048], index: 0, kind: input, shape index: {}]
  %s1 = inlined_call_operand.vmem [shape: bf16[8,27], index: 1, kind: input, shape index: {}]
  %s2 = inlined_call_operand.vmem [shape: f32[8,1], index: 2, kind: input, shape index: {}]
  %s3 = inlined_call_operand.vmem [shape: bf16[8,2048], index: 3, kind: output, shape index: {}]
  %s4 = sld [smem:[#allocation0]]
  $region68: #{segmentation_net_forward.16} parent=0
    _
  %s6 = ssub.s32 1, %s4
  %s7 = scalar_select 0, %s6, %s4
  $region1: #{segmentation_net_forward.16} parent=0
    #allocation2 [shape = 'u8[131072]{0}', space=vmem, size = 0x20000, scoped, tag = 'input window, operand 0']
    loop: start=0, step=1, limit=4
    $region2: #{segmentation_net_forward.16} parent=1 // loop_pre_header
      _
    $region3: #{segmentation_net_forward.16} parent=1 // loop_header
      %s9 = sphi 0, %s13
      %p10 = scmp.ge.s32.totalorder %s9, 4
      %s19 = sphi 0, %s21
      %s22 = sphi 0, %s19
      %s23 = sphi 0, %s22
      %s39 = sphi 0, %s23
      %s43 = sphi 0, %s43
      %s45 = sphi 0, %s43
      %s46 = sphi 0, %s45
      %s60 = sphi 0, %s46
      %s64 = sphi 0, %s64
      %s66 = sphi 0, %s64
      %s67 = sphi 0, %s66
      %s81 = sphi 0, %s67
      %s87 = sphi 0, %s89
      %s90 = sphi 0, %s87
      %s91 = sphi 0, %s90
      %s107 = sphi 0, %s91
    $region4: #{segmentation_net_forward.16} parent=1 // loop_header_branch
      %12 = sbr.rel (%p10) target = $region8
    $region5: #{segmentation_net_forward.16} parent=1 // loop_body
      %s14 = ssub.s32 %s9, 1
      %s15 = ssub.s32 %s9, 2
      %s16 = sadd.s32 %s9, 1
      %s17 = ssub.s32 %s9, %s16
      %p18 = scmp.eq.s32.totalorder %s17, 0
      %s20 = sadd.s32 %s19, 1
      %s21 = scalar_select %p18, %s19, %s20
      %p24 = pneg %p18
      %p25 = scmp.eq.s32.totalorder %s9, 1
      %p26 = por %p24, %p25
      %p27 = scmp.ne.s32.totalorder %s19, %s22
      %p28 = scmp.eq.s32.totalorder %s9, 0
      %p29 = por %p27, %p28
      %p30 = scmp.ne.s32.totalorder %s19, %s22
      %p31 = scmp.eq.s32.totalorder %s14, 1
      %p32 = por %p30, %p31
      %p33 = scmp.ne.s32.totalorder %s22, %s23
      %p34 = scmp.eq.s32.totalorder %s14, 0
      %p35 = por %p33, %p34
      %p36 = scmp.ne.s32.totalorder %s22, %s23
      %p37 = scmp.eq.s32.totalorder %s15, 1
      %p38 = por %p36, %p37
      %p40 = scmp.ne.s32.totalorder %s23, %s39
      %p41 = scmp.eq.s32.totalorder %s15, 0
      %p42 = por %p40, %p41
      %s44 = sadd.s32 %s43, 1
      %p47 = scmp.eq.s32.totalorder %s9, 1
      %p48 = scmp.ne.s32.totalorder %s43, %s45
      %p49 = scmp.eq.s32.totalorder %s9, 0
      %p50 = por %p48, %p49
      %p51 = scmp.ne.s32.totalorder %s43, %s45
      %p52 = scmp.eq.s32.totalorder %s14, 1
      %p53 = por %p51, %p52
      %p54 = scmp.ne.s32.totalorder %s45, %s46
      %p55 = scmp.eq.s32.totalorder %s14, 0
      %p56 = por %p54, %p55
      %p57 = scmp.ne.s32.totalorder %s45, %s46
      %p58 = scmp.eq.s32.totalorder %s15, 1
      %p59 = por %p57, %p58
      %p61 = scmp.ne.s32.totalorder %s46, %s60
      %p62 = scmp.eq.s32.totalorder %s15, 0
      %p63 = por %p61, %p62
      %s65 = sadd.s32 %s64, 1
      %p68 = scmp.eq.s32.totalorder %s9, 1
      %p69 = scmp.ne.s32.totalorder %s64, %s66
      %p70 = scmp.eq.s32.totalorder %s9, 0
      %p71 = por %p69, %p70
      %p72 = scmp.ne.s32.totalorder %s64, %s66
      %p73 = scmp.eq.s32.totalorder %s14, 1
      %p74 = por %p72, %p73
      %p75 = scmp.ne.s32.totalorder %s66, %s67
      %p76 = scmp.eq.s32.totalorder %s14, 0
      %p77 = por %p75, %p76
      %p78 = scmp.ne.s32.totalorder %s66, %s67
      %p79 = scmp.eq.s32.totalorder %s15, 1
      %p80 = por %p78, %p79
      %p82 = scmp.ne.s32.totalorder %s67, %s81
      %p83 = scmp.eq.s32.totalorder %s15, 0
      %p84 = por %p82, %p83
      %s85 = ssub.s32 %s9, %s16
      %p86 = scmp.eq.s32.totalorder %s85, 0
      %s88 = sadd.s32 %s87, 1
      %s89 = scalar_select %p86, %s87, %s88
      %p92 = pneg %p86
      %p93 = scmp.eq.s32.totalorder %s9, 1
      %p94 = por %p92, %p93
      %p95 = scmp.ne.s32.totalorder %s87, %s90
      %p96 = scmp.eq.s32.totalorder %s9, 0
      %p97 = por %p95, %p96
      %p98 = scmp.ne.s32.totalorder %s87, %s90
      %p99 = scmp.eq.s32.totalorder %s14, 1
      %p100 = por %p98, %p99
      %p101 = scmp.ne.s32.totalorder %s90, %s91
      %p102 = scmp.eq.s32.totalorder %s14, 0
      %p103 = por %p101, %p102
      %p104 = scmp.ne.s32.totalorder %s90, %s91
      %p105 = scmp.eq.s32.totalorder %s15, 1
      %p106 = por %p104, %p105
      %p108 = scmp.ne.s32.totalorder %s91, %s107
      %p109 = scmp.eq.s32.totalorder %s15, 0
      %p110 = por %p108, %p109
      %p111 = scmp.le.s32.totalorder 1, %s9
      %p112 = scmp.lt.s32.totalorder %s9, 3
      %p113 = pnand %p111, %p112
      %p114 = pneg %p113
      // Predicated region
      $region9: #{segmentation_net_forward.16} parent=5 // pred_check
        _
      $region10: #{segmentation_net_forward.16} parent=5 // pred_check_branch
        %116 = sbr.rel (%p113) target = $region12
      $region11: #{segmentation_net_forward.16} parent=5 // pred_region
        %s117 = ssub.s32 %s9, 1
        // Predicated region
        $region13: #{segmentation_net_forward.16} parent=11 // pred_check
          %p118 = pneg %p56
        $region14: #{segmentation_net_forward.16} parent=11 // pred_check_branch
          %120 = sbr.rel (%p118) target = $region16
        $region15: #{segmentation_net_forward.16} parent=11 // pred_region
          _
        $region16: #{segmentation_net_forward.16} parent=11 // pred_fallthru
          _
        // Predicated region
        $region17: #{segmentation_net_forward.16} parent=11 // pred_check
          %p121 = pneg %p77
        $region18: #{segmentation_net_forward.16} parent=11 // pred_check_branch
          %123 = sbr.rel (%p121) target = $region20
        $region19: #{segmentation_net_forward.16} parent=11 // pred_region
          _
        $region20: #{segmentation_net_forward.16} parent=11 // pred_fallthru
          _
      $region12: #{segmentation_net_forward.16} parent=5 // pred_fallthru
        _
      %p124 = scmp.lt.s32.totalorder %s9, 2
      // Predicated region
      $region21: #{segmentation_net_forward.16} parent=5 // pred_check
        %p125 = pneg %p124
      $region22: #{segmentation_net_forward.16} parent=5 // pred_check_branch
        %127 = sbr.rel (%p125) target = $region24
      $region23: #{segmentation_net_forward.16} parent=5 // pred_region
        // Predicated region
        $region25: #{segmentation_net_forward.16} parent=23 // pred_check
          %p128 = pneg %p29
        $region26: #{segmentation_net_forward.16} parent=23 // pred_check_branch
          %130 = sbr.rel (%p128) target = $region28
        $region27: #{segmentation_net_forward.16} parent=23 // pred_region
          %s131 = sand.u32 %s19, 1
          %s132 = sand.u32 %s19, 1
          %s133 = smul.addr %s132, 128
          %s134 = scalar_lea.vmem [#allocation2], %s133
          %s135 = smul.u32 8, %s9
          %s136 = smul.addr %s135, 4
          %s137 = scalar_lea.vmem %s0, %s136
          // Predicated region
          $region29: #{segmentation_net_forward.16} parent=27 // pred_check
            _
          $region30: #{segmentation_net_forward.16} parent=27 // pred_check_branch
            %139 = sbr.rel (0) target = $region32
          $region31: #{segmentation_net_forward.16} parent=27 // pred_region
            // Predicated region
            $region33: #{segmentation_net_forward.16} parent=31 // pred_check
              _
            $region34: #{segmentation_net_forward.16} parent=31 // pred_check_branch
              %141 = sbr.rel (0) target = $region36
            $region35: #{segmentation_net_forward.16} parent=31 // pred_region
              loop: start=0, step=1, limit=1
              $region37: #{segmentation_net_forward.16} parent=35 // loop_pre_header
                _
              $region38: #{segmentation_net_forward.16} parent=35 // loop_header
                %s143 = sphi 0, %s147
                %p144 = scmp.ge.s32.totalorder %s143, 1
                %s148 = sphi %s137, %s137
                %s149 = sphi %s134, %s134
              $region39: #{segmentation_net_forward.16} parent=35 // loop_header_branch
                %146 = sbr.rel (%p144) target = $region43
              $region40: #{segmentation_net_forward.16} parent=35 // loop_body
                %v150 = vld [vmem:[%s148] sm:$0xff]
                %151 = vst [vmem:[%s149] sm:$0xff] %v150
                %v152 = vld [vmem:[%s148 + $0x8] sm:$0xff]
                %153 = vst [vmem:[%s149 + $0x8] sm:$0xff] %v152
                %v154 = vld [vmem:[%s148 + $0x10] sm:$0xff]
                %155 = vst [vmem:[%s149 + $0x10] sm:$0xff] %v154
                %v156 = vld [vmem:[%s148 + $0x18] sm:$0xff]
                %157 = vst [vmem:[%s149 + $0x18] sm:$0xff] %v156
                %v158 = vld [vmem:[%s148 + $0x40] sm:$0xff]
                %159 = vst [vmem:[%s149 + $0x20] sm:$0xff] %v158
                %v160 = vld [vmem:[%s148 + $0x48] sm:$0xff]
                %161 = vst [vmem:[%s149 + $0x28] sm:$0xff] %v160
                %v162 = vld [vmem:[%s148 + $0x50] sm:$0xff]
                %163 = vst [vmem:[%s149 + $0x30] sm:$0xff] %v162
                %v164 = vld [vmem:[%s148 + $0x58] sm:$0xff]
                %165 = vst [vmem:[%s149 + $0x38] sm:$0xff] %v164
                %v166 = vld [vmem:[%s148 + $0x80] sm:$0xff]
                %167 = vst [vmem:[%s149 + $0x40] sm:$0xff] %v166
                %v168 = vld [vmem:[%s148 + $0x88] sm:$0xff]
                %169 = vst [vmem:[%s149 + $0x48] sm:$0xff] %v168
                %v170 = vld [vmem:[%s148 + $0x90] sm:$0xff]
                %171 = vst [vmem:[%s149 + $0x50] sm:$0xff] %v170
                %v172 = vld [vmem:[%s148 + $0x98] sm:$0xff]
                %173 = vst [vmem:[%s149 + $0x58] sm:$0xff] %v172
                %v174 = vld [vmem:[%s148 + $0xc0] sm:$0xff]
                %175 = vst [vmem:[%s149 + $0x60] sm:$0xff] %v174
                %v176 = vld [vmem:[%s148 + $0xc8] sm:$0xff]
                %177 = vst [vmem:[%s149 + $0x68] sm:$0xff] %v176
                %v178 = vld [vmem:[%s148 + $0xd0] sm:$0xff]
                %179 = vst [vmem:[%s149 + $0x70] sm:$0xff] %v178
                %v180 = vld [vmem:[%s148 + $0xd8] sm:$0xff]
                %181 = vst [vmem:[%s149 + $0x78] sm:$0xff] %v180
              $region41: #{segmentation_net_forward.16} parent=35 // loop_footer
                %s147 = sadd.s32 1, %s143
              $region42: #{segmentation_net_forward.16} parent=35 // loop_footer_branch
                %142 = sbr.rel target = $region38
              $region43: #{segmentation_net_forward.16} parent=35 // loop_exit
                _
            $region36: #{segmentation_net_forward.16} parent=31 // pred_fallthru
              _
            // Predicated region
            $region44: #{segmentation_net_forward.16} parent=31 // pred_check
              _
            $region45: #{segmentation_net_forward.16} parent=31 // pred_check_branch
              %183 = sbr.rel target = $region47
            $region46: #{segmentation_net_forward.16} parent=31 // pred_region
              _
            $region47: #{segmentation_net_forward.16} parent=31 // pred_fallthru
              _
          $region32: #{segmentation_net_forward.16} parent=27 // pred_fallthru
            _
          %184 = vnop
        $region28: #{segmentation_net_forward.16} parent=23 // pred_fallthru
          _
      $region24: #{segmentation_net_forward.16} parent=5 // pred_fallthru
        _
      %p185 = scmp.le.s32.totalorder 1, %s9
      %p186 = scmp.lt.s32.totalorder %s9, 3
      %p187 = pnand %p185, %p186
      %p188 = pneg %p187
      // Predicated region
      $region48: #{segmentation_net_forward.16} parent=5 // pred_check
        _
      $region49: #{segmentation_net_forward.16} parent=5 // pred_check_branch
        %190 = sbr.rel (%p187) target = $region51
      $region50: #{segmentation_net_forward.16} parent=5 // pred_region
        %s191 = ssub.s32 %s9, 1
        %s192 = sand.u32 %s22, 1
        %s193 = sand.u32 %s22, 1
        %s194 = smul.addr %s193, 128
        %s195 = scalar_lea.vmem [#allocation2], %s194
        // Predicated region
        $region52: #{segmentation_net_forward.16} parent=50 // pred_check
          %p196 = pneg %p35
        $region53: #{segmentation_net_forward.16} parent=50 // pred_check_branch
          %198 = sbr.rel (%p196) target = $region55
        $region54: #{segmentation_net_forward.16} parent=50 // pred_region
          _
        $region55: #{segmentation_net_forward.16} parent=50 // pred_fallthru
          _
        %s199 = sand.u32 %s22, 1
        %s200 = sand.u32 %s22, 1
        %s201 = smul.addr %s200, 128
        %s202 = scalar_lea.vmem [#allocation2], %s201
        %p203 = pneg %p35
        %p204 = pneg %p32
        %p205 = pneg %p56
        %p206 = pneg %p53
        %p207 = pneg %p77
        %p208 = pneg %p74
        %p209 = pneg %p103
        %p210 = pneg %p100
        %s211 = smul.u32 8, %s14
        %p212 = scmp.lt.s32.totalorder %s211, 15
        %s213 = scalar_select %p212, %s211, 15
        %s214 = smul.addr %s213, 4
        %s215 = scalar_lea.vmem %s3, %s214
        %s216 = smul.u32 8, %s14
        %s217 = smul.u32 8, %s14
        %p218 = scmp.lt.s32.totalorder %s217, 15
        %s219 = scalar_select %p218, %s217, 15
        %s220 = smul.addr %s219, 4
        %s221 = scalar_lea.vmem %s3, %s220
        %s222 = smul.u32 8, %s14
        %v224 = vld [vmem:[%s1] sm:$0xf]
        %v225 = vld [vmem:[%s195] sm:$0xff]
        %v226 = vld [vmem:[%s195 + $0x8] sm:$0xff]
        %v227 = vld [vmem:[%s195 + $0x10] sm:$0xff]
        %v228 = vld [vmem:[%s195 + $0x18] sm:$0xff]
        %v229 = vld [vmem:[%s195 + $0x20] sm:$0xff]
        %v230 = vld [vmem:[%s195 + $0x28] sm:$0xff]
        %v231 = vld [vmem:[%s195 + $0x30] sm:$0xff]
        %v232 = vld [vmem:[%s195 + $0x38] sm:$0xff]
        %v233 = vld [vmem:[%s195 + $0x40] sm:$0xff]
        %v234 = vld [vmem:[%s195 + $0x48] sm:$0xff]
        %v235 = vld [vmem:[%s195 + $0x50] sm:$0xff]
        %v236 = vld [vmem:[%s195 + $0x58] sm:$0xff]
        %v237 = vld [vmem:[%s195 + $0x60] sm:$0x33]
        %v238 = vld [vmem:[%s195 + $0x68] sm:$0x33]
        %v239 = vld [vmem:[%s195 + $0x70] sm:$0x33]
        %v240 = vld [vmem:[%s195 + $0x78] sm:$0x33]
        %v241 = vld [vmem:[%s2] sm:$0xff]
        %243 = vset.pattern.permute.xlu0 0
        %244 = vperm.xlu0 %243, %v241
        %v245 = vpop.permute.xlu0 %244
        %v263 = vunpack.c.l.b16 %v225
        %v264 = vunpack.c.h.b16 %v225
        %v265 = vunpack.c.l.b16 %v226
        %v266 = vunpack.c.h.b16 %v226
        %v267 = vunpack.c.l.b16 %v227
        %v268 = vunpack.c.h.b16 %v227
        %v269 = vunpack.c.l.b16 %v228
        %v270 = vunpack.c.h.b16 %v228
        %v271 = vunpack.c.l.b16 %v229
        %v272 = vunpack.c.h.b16 %v229
        %v273 = vunpack.c.l.b16 %v230
        %v274 = vunpack.c.h.b16 %v230
        %v275 = vunpack.c.l.b16 %v231
        %v276 = vunpack.c.h.b16 %v231
        %v277 = vunpack.c.l.b16 %v232
        %v278 = vunpack.c.h.b16 %v232
        %v279 = vunpack.c.l.b16 %v233
        %v280 = vunpack.c.h.b16 %v233
        %v281 = vunpack.c.l.b16 %v234
        %v282 = vunpack.c.h.b16 %v234
        %v283 = vunpack.c.l.b16 %v235
        %v284 = vunpack.c.h.b16 %v235
        %v285 = vunpack.c.l.b16 %v236
        %v286 = vunpack.c.h.b16 %v236
        %v287 = vunpack.c.l.b16 %v237
        %v288 = vunpack.c.h.b16 %v237
        %v289 = vunpack.c.l.b16 %v238
        %v290 = vunpack.c.h.b16 %v238
        %v291 = vunpack.c.l.b16 %v239
        %v292 = vunpack.c.h.b16 %v239
        %v293 = vunpack.c.l.b16 %v240
        %v294 = vunpack.c.h.b16 %v240
        %v295 = vpack.c.b16 %v271, %v263
        %v296 = vpack.c.b16 %v272, %v264
        %v297 = vpack.c.b16 %v273, %v265
        %v298 = vpack.c.b16 %v274, %v266
        %v299 = vpack.c.b16 %v275, %v267
        %v300 = vpack.c.b16 %v276, %v268
        %v301 = vpack.c.b16 %v277, %v269
        %v302 = vpack.c.b16 %v278, %v270
        %v303 = vpack.c.b16 %v287, %v279
        %v304 = vpack.c.b16 %v288, %v280
        %v305 = vpack.c.b16 %v289, %v281
        %v306 = vpack.c.b16 %v290, %v282
        %v307 = vpack.c.b16 %v291, %v283
        %v308 = vpack.c.b16 %v292, %v284
        %v309 = vpack.c.b16 %v293, %v285
        %v310 = vpack.c.b16 %v294, %v286
        %vm319 = vcmask 220160
        %v321 = vsel %vm319, %v224, 0
        %vm323 = vcmask 1044480
        %vm324 = vcmask 1045504
        %v325 = vsel %vm323, 4294967295, 65535
        %v326 = vsel %vm324, %v325, 0
        %v328 = vand.u32 %v303, %v326
        %v331 = vand.u32 %v304, %v326
        %v334 = vand.u32 %v305, %v326
        %v337 = vand.u32 %v306, %v326
        %v340 = vand.u32 %v307, %v326
        %v343 = vand.u32 %v308, %v326
        %v346 = vand.u32 %v309, %v326
        %v349 = vand.u32 %v310, %v326
        %351 = vmatpush.bf16.msra.mxu0 0
        %352 = vmatpush.bf16.msra.mxu0 0
        %353 = vmatpush.bf16.msra.mxu0 0
        %354 = vmatpush.bf16.msra.mxu0 0
        %355 = vmatpush.bf16.msra.mxu0 0
        %356 = vmatpush.bf16.msra.mxu0 0
        %357 = vmatpush.bf16.msra.mxu0 %v328
        %358 = vmatpush.bf16.msra.mxu0 %v295
        %359 = vmatmul.bf16.gmra.mxu0 %v321
        %v360 = vpop.f32.mrf.mxu0
        %v361 = vadd.f32 %v245, %v360
        %v362 = vpop.f32.mrf.mxu0
        %363 = vdwg.mxu0
        %364 = vmatpush.bf16.msra.mxu0 0
        %365 = vmatpush.bf16.msra.mxu0 0
        %366 = vmatpush.bf16.msra.mxu0 0
        %367 = vmatpush.bf16.msra.mxu0 0
        %368 = vmatpush.bf16.msra.mxu0 0
        %369 = vmatpush.bf16.msra.mxu0 0
        %370 = vmatpush.bf16.msra.mxu0 %v331
        %371 = vmatpush.bf16.msra.mxu0 %v296
        %372 = vmatmul.bf16.gmra.mxu0 %v321
        %v373 = vpop.f32.mrf.mxu0
        %v374 = vadd.f32 %v245, %v373
        %v375 = vpop.f32.mrf.mxu0
        %376 = vdwg.mxu0
        %377 = vmatpush.bf16.msra.mxu0 0
        %378 = vmatpush.bf16.msra.mxu0 0
        %379 = vmatpush.bf16.msra.mxu0 0
        %380 = vmatpush.bf16.msra.mxu0 0
        %381 = vmatpush.bf16.msra.mxu0 0
        %382 = vmatpush.bf16.msra.mxu0 0
        %383 = vmatpush.bf16.msra.mxu0 %v334
        %384 = vmatpush.bf16.msra.mxu0 %v297
        %385 = vmatmul.bf16.gmra.mxu0 %v321
        %v386 = vpop.f32.mrf.mxu0
        %v387 = vadd.f32 %v245, %v386
        %v388 = vpop.f32.mrf.mxu0
        %389 = vdwg.mxu0
        %390 = vmatpush.bf16.msra.mxu0 0
        %391 = vmatpush.bf16.msra.mxu0 0
        %392 = vmatpush.bf16.msra.mxu0 0
        %393 = vmatpush.bf16.msra.mxu0 0
        %394 = vmatpush.bf16.msra.mxu0 0
        %395 = vmatpush.bf16.msra.mxu0 0
        %396 = vmatpush.bf16.msra.mxu0 %v337
        %397 = vmatpush.bf16.msra.mxu0 %v298
        %398 = vmatmul.bf16.gmra.mxu0 %v321
        %v399 = vpop.f32.mrf.mxu0
        %v400 = vadd.f32 %v245, %v399
        %v401 = vpop.f32.mrf.mxu0
        %402 = vdwg.mxu0
        %403 = vmatpush.bf16.msra.mxu0 0
        %404 = vmatpush.bf16.msra.mxu0 0
        %405 = vmatpush.bf16.msra.mxu0 0
        %406 = vmatpush.bf16.msra.mxu0 0
        %407 = vmatpush.bf16.msra.mxu0 0
        %408 = vmatpush.bf16.msra.mxu0 0
        %409 = vmatpush.bf16.msra.mxu0 %v340
        %410 = vmatpush.bf16.msra.mxu0 %v299
        %411 = vmatmul.bf16.gmra.mxu0 %v321
        %v412 = vpop.f32.mrf.mxu0
        %v413 = vadd.f32 %v245, %v412
        %v414 = vpop.f32.mrf.mxu0
        %415 = vdwg.mxu0
        %416 = vmatpush.bf16.msra.mxu0 0
        %417 = vmatpush.bf16.msra.mxu0 0
        %418 = vmatpush.bf16.msra.mxu0 0
        %419 = vmatpush.bf16.msra.mxu0 0
        %420 = vmatpush.bf16.msra.mxu0 0
        %421 = vmatpush.bf16.msra.mxu0 0
        %422 = vmatpush.bf16.msra.mxu0 %v343
        %423 = vmatpush.bf16.msra.mxu0 %v300
        %424 = vmatmul.bf16.gmra.mxu0 %v321
        %v425 = vpop.f32.mrf.mxu0
        %v426 = vadd.f32 %v245, %v425
        %v427 = vpop.f32.mrf.mxu0
        %428 = vdwg.mxu0
        %429 = vmatpush.bf16.msra.mxu0 0
        %430 = vmatpush.bf16.msra.mxu0 0
        %431 = vmatpush.bf16.msra.mxu0 0
        %432 = vmatpush.bf16.msra.mxu0 0
        %433 = vmatpush.bf16.msra.mxu0 0
        %434 = vmatpush.bf16.msra.mxu0 0
        %435 = vmatpush.bf16.msra.mxu0 %v346
        %436 = vmatpush.bf16.msra.mxu0 %v301
        %437 = vmatmul.bf16.gmra.mxu0 %v321
        %v438 = vpop.f32.mrf.mxu0
        %v439 = vadd.f32 %v245, %v438
        %v440 = vpop.f32.mrf.mxu0
        %441 = vdwg.mxu0
        %442 = vmatpush.bf16.msra.mxu0 0
        %443 = vmatpush.bf16.msra.mxu0 0
        %444 = vmatpush.bf16.msra.mxu0 0
        %445 = vmatpush.bf16.msra.mxu0 0
        %446 = vmatpush.bf16.msra.mxu0 0
        %447 = vmatpush.bf16.msra.mxu0 0
        %448 = vmatpush.bf16.msra.mxu0 %v349
        %449 = vmatpush.bf16.msra.mxu0 %v302
        %450 = vmatmul.bf16.gmra.mxu0 %v321
        %v451 = vpop.f32.mrf.mxu0
        %v452 = vadd.f32 %v245, %v451
        %v453 = vpop.f32.mrf.mxu0
        %454 = vdwg.mxu0
        %v455 = vmax.f32 %v361, 0.0
        %v456 = vmax.f32 %v374, 0.0
        %v457 = vmax.f32 %v387, 0.0
        %v458 = vmax.f32 %v400, 0.0
        %v459 = vmax.f32 %v413, 0.0
        %v460 = vmax.f32 %v426, 0.0
        %v461 = vmax.f32 %v439, 0.0
        %v462 = vmax.f32 %v452, 0.0
        %v463 = vpack.c.bf16 %v456, %v455
        %v464 = vpack.c.bf16 %v458, %v457
        %v465 = vpack.c.bf16 %v460, %v459
        %v466 = vpack.c.bf16 %v462, %v461
        %467 = vst [vmem:[%s221] sm:$0xff] %v463
        %468 = vst [vmem:[%s221 + $0x8] sm:$0xff] %v464
        %469 = vst [vmem:[%s221 + $0x10] sm:$0xff] %v465
        %470 = vst [vmem:[%s221 + $0x18] sm:$0xff] %v466
        %s471 = smul.u32 8, %s14
        %p472 = scmp.lt.s32.totalorder %s471, 15
        %s473 = scalar_select %p472, %s471, 15
        %s474 = smul.addr %s473, 4
        %s475 = scalar_lea.vmem %s3, %s474
        // Predicated region
        $region56: #{segmentation_net_forward.16} parent=50 // pred_check
          %p476 = pneg %p100
        $region57: #{segmentation_net_forward.16} parent=50 // pred_check_branch
          %478 = sbr.rel (%p476) target = $region59
        $region58: #{segmentation_net_forward.16} parent=50 // pred_region
          %s479 = smul.u32 8, %s14
        $region59: #{segmentation_net_forward.16} parent=50 // pred_fallthru
          _
      $region51: #{segmentation_net_forward.16} parent=5 // pred_fallthru
        _
      %p480 = scmp.le.s32.totalorder 2, %s9
      // Predicated region
      $region60: #{segmentation_net_forward.16} parent=5 // pred_check
        %p481 = pneg %p480
      $region61: #{segmentation_net_forward.16} parent=5 // pred_check_branch
        %483 = sbr.rel (%p481) target = $region63
      $region62: #{segmentation_net_forward.16} parent=5 // pred_region
        %s484 = ssub.s32 %s9, 2
        // Predicated region
        $region64: #{segmentation_net_forward.16} parent=62 // pred_check
          %p485 = pneg %p106
        $region65: #{segmentation_net_forward.16} parent=62 // pred_check_branch
          %487 = sbr.rel (%p485) target = $region67
        $region66: #{segmentation_net_forward.16} parent=62 // pred_region
          %s488 = smul.u32 8, %s15
          %p489 = scmp.lt.s32.totalorder %s488, 15
          %s490 = scalar_select %p489, %s488, 15
          %s491 = smul.addr %s490, 4
          %s492 = scalar_lea.vmem %s3, %s491
        $region67: #{segmentation_net_forward.16} parent=62 // pred_fallthru
          _
      $region63: #{segmentation_net_forward.16} parent=5 // pred_fallthru
        _
    $region6: #{segmentation_net_forward.16} parent=1 // loop_footer
      %s13 = sadd.s32 1, %s9
    $region7: #{segmentation_net_forward.16} parent=1 // loop_footer_branch
      %8 = sbr.rel target = $region3
    $region8: #{segmentation_net_forward.16} parent=1 // loop_exit
      _

// kernel: segmentation_net_forward.17
$region0: #{segmentation_net_forward.17}
  #allocation0 [shape = 'u32[]', space=smem, size = 0x4, offset = 0x4, fixed_abs, tag = 'smem constant byte address 0x4 - core index']
  #allocation1 [shape = 'u32[72,128]{1,0:T(1,128)}', space=vmem, size = 0x9000, scoped, tag = 'internal scratch']
  %s0 = inlined_call_operand.vmem [shape: bf16[72,512], index: 0, kind: input, shape index: {}]
  %s1 = inlined_call_operand.vmem [shape: bf16[8,72], index: 1, kind: input, shape index: {}]
  %s2 = inlined_call_operand.vmem [shape: f32[8,1], index: 2, kind: input, shape index: {}]
  %s3 = inlined_call_operand.vmem [shape: bf16[8,512], index: 3, kind: output, shape index: {}]
  %s4 = sld [smem:[#allocation0]]
  $region83: #{segmentation_net_forward.17} parent=0
    _
  %s6 = ssub.s32 1, %s4
  %s7 = scalar_select 0, %s6, %s4
  $region1: #{segmentation_net_forward.17} parent=0
    #allocation2 [shape = 'u8[73728]{0}', space=vmem, size = 0x12000, scoped, tag = 'input window, operand 0']
    loop: start=0, step=1, limit=4
    $region2: #{segmentation_net_forward.17} parent=1 // loop_pre_header
      _
    $region3: #{segmentation_net_forward.17} parent=1 // loop_header
      %s9 = sphi 0, %s13
      %p10 = scmp.ge.s32.totalorder %s9, 4
      %s19 = sphi 0, %s21
      %s22 = sphi 0, %s19
      %s23 = sphi 0, %s22
      %s39 = sphi 0, %s23
      %s43 = sphi 0, %s43
      %s45 = sphi 0, %s43
      %s46 = sphi 0, %s45
      %s60 = sphi 0, %s46
      %s64 = sphi 0, %s64
      %s66 = sphi 0, %s64
      %s67 = sphi 0, %s66
      %s81 = sphi 0, %s67
      %s87 = sphi 0, %s89
      %s90 = sphi 0, %s87
      %s91 = sphi 0, %s90
      %s107 = sphi 0, %s91
    $region4: #{segmentation_net_forward.17} parent=1 // loop_header_branch
      %12 = sbr.rel (%p10) target = $region8
    $region5: #{segmentation_net_forward.17} parent=1 // loop_body
      %s14 = ssub.s32 %s9, 1
      %s15 = ssub.s32 %s9, 2
      %s16 = sadd.s32 %s9, 1
      %s17 = ssub.s32 %s9, %s16
      %p18 = scmp.eq.s32.totalorder %s17, 0
      %s20 = sadd.s32 %s19, 1
      %s21 = scalar_select %p18, %s19, %s20
      %p24 = pneg %p18
      %p25 = scmp.eq.s32.totalorder %s9, 1
      %p26 = por %p24, %p25
      %p27 = scmp.ne.s32.totalorder %s19, %s22
      %p28 = scmp.eq.s32.totalorder %s9, 0
      %p29 = por %p27, %p28
      %p30 = scmp.ne.s32.totalorder %s19, %s22
      %p31 = scmp.eq.s32.totalorder %s14, 1
      %p32 = por %p30, %p31
      %p33 = scmp.ne.s32.totalorder %s22, %s23
      %p34 = scmp.eq.s32.totalorder %s14, 0
      %p35 = por %p33, %p34
      %p36 = scmp.ne.s32.totalorder %s22, %s23
      %p37 = scmp.eq.s32.totalorder %s15, 1
      %p38 = por %p36, %p37
      %p40 = scmp.ne.s32.totalorder %s23, %s39
      %p41 = scmp.eq.s32.totalorder %s15, 0
      %p42 = por %p40, %p41
      %s44 = sadd.s32 %s43, 1
      %p47 = scmp.eq.s32.totalorder %s9, 1
      %p48 = scmp.ne.s32.totalorder %s43, %s45
      %p49 = scmp.eq.s32.totalorder %s9, 0
      %p50 = por %p48, %p49
      %p51 = scmp.ne.s32.totalorder %s43, %s45
      %p52 = scmp.eq.s32.totalorder %s14, 1
      %p53 = por %p51, %p52
      %p54 = scmp.ne.s32.totalorder %s45, %s46
      %p55 = scmp.eq.s32.totalorder %s14, 0
      %p56 = por %p54, %p55
      %p57 = scmp.ne.s32.totalorder %s45, %s46
      %p58 = scmp.eq.s32.totalorder %s15, 1
      %p59 = por %p57, %p58
      %p61 = scmp.ne.s32.totalorder %s46, %s60
      %p62 = scmp.eq.s32.totalorder %s15, 0
      %p63 = por %p61, %p62
      %s65 = sadd.s32 %s64, 1
      %p68 = scmp.eq.s32.totalorder %s9, 1
      %p69 = scmp.ne.s32.totalorder %s64, %s66
      %p70 = scmp.eq.s32.totalorder %s9, 0
      %p71 = por %p69, %p70
      %p72 = scmp.ne.s32.totalorder %s64, %s66
      %p73 = scmp.eq.s32.totalorder %s14, 1
      %p74 = por %p72, %p73
      %p75 = scmp.ne.s32.totalorder %s66, %s67
      %p76 = scmp.eq.s32.totalorder %s14, 0
      %p77 = por %p75, %p76
      %p78 = scmp.ne.s32.totalorder %s66, %s67
      %p79 = scmp.eq.s32.totalorder %s15, 1
      %p80 = por %p78, %p79
      %p82 = scmp.ne.s32.totalorder %s67, %s81
      %p83 = scmp.eq.s32.totalorder %s15, 0
      %p84 = por %p82, %p83
      %s85 = ssub.s32 %s9, %s16
      %p86 = scmp.eq.s32.totalorder %s85, 0
      %s88 = sadd.s32 %s87, 1
      %s89 = scalar_select %p86, %s87, %s88
      %p92 = pneg %p86
      %p93 = scmp.eq.s32.totalorder %s9, 1
      %p94 = por %p92, %p93
      %p95 = scmp.ne.s32.totalorder %s87, %s90
      %p96 = scmp.eq.s32.totalorder %s9, 0
      %p97 = por %p95, %p96
      %p98 = scmp.ne.s32.totalorder %s87, %s90
      %p99 = scmp.eq.s32.totalorder %s14, 1
      %p100 = por %p98, %p99
      %p101 = scmp.ne.s32.totalorder %s90, %s91
      %p102 = scmp.eq.s32.totalorder %s14, 0
      %p103 = por %p101, %p102
      %p104 = scmp.ne.s32.totalorder %s90, %s91
      %p105 = scmp.eq.s32.totalorder %s15, 1
      %p106 = por %p104, %p105
      %p108 = scmp.ne.s32.totalorder %s91, %s107
      %p109 = scmp.eq.s32.totalorder %s15, 0
      %p110 = por %p108, %p109
      %p111 = scmp.le.s32.totalorder 1, %s9
      %p112 = scmp.lt.s32.totalorder %s9, 3
      %p113 = pnand %p111, %p112
      %p114 = pneg %p113
      // Predicated region
      $region9: #{segmentation_net_forward.17} parent=5 // pred_check
        _
      $region10: #{segmentation_net_forward.17} parent=5 // pred_check_branch
        %116 = sbr.rel (%p113) target = $region12
      $region11: #{segmentation_net_forward.17} parent=5 // pred_region
        %s117 = ssub.s32 %s9, 1
        // Predicated region
        $region13: #{segmentation_net_forward.17} parent=11 // pred_check
          %p118 = pneg %p56
        $region14: #{segmentation_net_forward.17} parent=11 // pred_check_branch
          %120 = sbr.rel (%p118) target = $region16
        $region15: #{segmentation_net_forward.17} parent=11 // pred_region
          _
        $region16: #{segmentation_net_forward.17} parent=11 // pred_fallthru
          _
        // Predicated region
        $region17: #{segmentation_net_forward.17} parent=11 // pred_check
          %p121 = pneg %p77
        $region18: #{segmentation_net_forward.17} parent=11 // pred_check_branch
          %123 = sbr.rel (%p121) target = $region20
        $region19: #{segmentation_net_forward.17} parent=11 // pred_region
          _
        $region20: #{segmentation_net_forward.17} parent=11 // pred_fallthru
          _
      $region12: #{segmentation_net_forward.17} parent=5 // pred_fallthru
        _
      %p124 = scmp.lt.s32.totalorder %s9, 2
      // Predicated region
      $region21: #{segmentation_net_forward.17} parent=5 // pred_check
        %p125 = pneg %p124
      $region22: #{segmentation_net_forward.17} parent=5 // pred_check_branch
        %127 = sbr.rel (%p125) target = $region24
      $region23: #{segmentation_net_forward.17} parent=5 // pred_region
        // Predicated region
        $region25: #{segmentation_net_forward.17} parent=23 // pred_check
          %p128 = pneg %p29
        $region26: #{segmentation_net_forward.17} parent=23 // pred_check_branch
          %130 = sbr.rel (%p128) target = $region28
        $region27: #{segmentation_net_forward.17} parent=23 // pred_region
          %s131 = sand.u32 %s19, 1
          %s132 = sand.u32 %s19, 1
          %s133 = smul.addr %s132, 72
          %s134 = scalar_lea.vmem [#allocation2], %s133
          %s135 = smul.u32 2, %s9
          %s136 = smul.addr %s135, 4
          %s137 = scalar_lea.vmem %s0, %s136
          // Predicated region
          $region29: #{segmentation_net_forward.17} parent=27 // pred_check
            _
          $region30: #{segmentation_net_forward.17} parent=27 // pred_check_branch
            %139 = sbr.rel (0) target = $region32
          $region31: #{segmentation_net_forward.17} parent=27 // pred_region
            // Predicated region
            $region33: #{segmentation_net_forward.17} parent=31 // pred_check
              _
            $region34: #{segmentation_net_forward.17} parent=31 // pred_check_branch
              %141 = sbr.rel (0) target = $region36
            $region35: #{segmentation_net_forward.17} parent=31 // pred_region
              // Predicated region
              $region48: #{segmentation_net_forward.17} parent=35 // pred_check
                _
              $region49: #{segmentation_net_forward.17} parent=35 // pred_check_branch
                %173 = sbr.rel (0) target = $region51
              $region50: #{segmentation_net_forward.17} parent=35 // pred_region
                loop: start=0, step=1, limit=1
                $region52: #{segmentation_net_forward.17} parent=50 // loop_pre_header
                  _
                $region53: #{segmentation_net_forward.17} parent=50 // loop_header
                  %s175 = sphi 0, %s179
                  %p176 = scmp.ge.s32.totalorder %s175, 1
                  %s180 = sphi %s137, %s137
                  %s181 = sphi %s134, %s134
                $region54: #{segmentation_net_forward.17} parent=50 // loop_header_branch
                  %178 = sbr.rel (%p176) target = $region58
                $region55: #{segmentation_net_forward.17} parent=50 // loop_body
                  %v182 = vld [vmem:[%s180] sm:$0xff]
                  %183 = vst [vmem:[%s181] sm:$0xff] %v182
                  %v184 = vld [vmem:[%s180 + $0x10] sm:$0xff]
                  %185 = vst [vmem:[%s181 + $0x8] sm:$0xff] %v184
                  %v186 = vld [vmem:[%s180 + $0x20] sm:$0xff]
                  %187 = vst [vmem:[%s181 + $0x10] sm:$0xff] %v186
                  %v188 = vld [vmem:[%s180 + $0x30] sm:$0xff]
                  %189 = vst [vmem:[%s181 + $0x18] sm:$0xff] %v188
                  %v190 = vld [vmem:[%s180 + $0x40] sm:$0xff]
                  %191 = vst [vmem:[%s181 + $0x20] sm:$0xff] %v190
                  %v192 = vld [vmem:[%s180 + $0x50] sm:$0xff]
                  %193 = vst [vmem:[%s181 + $0x28] sm:$0xff] %v192
                  %v194 = vld [vmem:[%s180 + $0x60] sm:$0xff]
                  %195 = vst [vmem:[%s181 + $0x30] sm:$0xff] %v194
                  %v196 = vld [vmem:[%s180 + $0x70] sm:$0xff]
                  %197 = vst [vmem:[%s181 + $0x38] sm:$0xff] %v196
                  %v198 = vld [vmem:[%s180 + $0x80] sm:$0xff]
                  %199 = vst [vmem:[%s181 + $0x40] sm:$0xff] %v198
                $region56: #{segmentation_net_forward.17} parent=50 // loop_footer
                  %s179 = sadd.s32 1, %s175
                $region57: #{segmentation_net_forward.17} parent=50 // loop_footer_branch
                  %174 = sbr.rel target = $region53
                $region58: #{segmentation_net_forward.17} parent=50 // loop_exit
                  _
              $region51: #{segmentation_net_forward.17} parent=35 // pred_fallthru
                _
              // Predicated region
              $region59: #{segmentation_net_forward.17} parent=35 // pred_check
                _
              $region60: #{segmentation_net_forward.17} parent=35 // pred_check_branch
                %201 = sbr.rel target = $region62
              $region61: #{segmentation_net_forward.17} parent=35 // pred_region
                _
              $region62: #{segmentation_net_forward.17} parent=35 // pred_fallthru
                _
            $region36: #{segmentation_net_forward.17} parent=31 // pred_fallthru
              _
            // Predicated region
            $region37: #{segmentation_net_forward.17} parent=31 // pred_check
              _
            $region38: #{segmentation_net_forward.17} parent=31 // pred_check_branch
              %143 = sbr.rel target = $region40
            $region39: #{segmentation_net_forward.17} parent=31 // pred_region
              %s145 = ssub.s32 256, 1
              loop: start=0, step=1, limit=1
              $region41: #{segmentation_net_forward.17} parent=39 // loop_pre_header
                _
              $region42: #{segmentation_net_forward.17} parent=39 // loop_header
                %s147 = sphi 0, %s151
                %p148 = scmp.ge.s32.totalorder %s147, 1
                %s152 = sphi %s137, %s137
                %s153 = sphi %s134, %s134
              $region43: #{segmentation_net_forward.17} parent=39 // loop_header_branch
                %150 = sbr.rel (%p148) target = $region47
              $region44: #{segmentation_net_forward.17} parent=39 // loop_body
                %v154 = vld [vmem:[%s152] sm:%s145]
                %155 = vst [vmem:[%s153] sm:%s145] %v154
                %v156 = vld [vmem:[%s152 + $0x10] sm:%s145]
                %157 = vst [vmem:[%s153 + $0x8] sm:%s145] %v156
                %v158 = vld [vmem:[%s152 + $0x20] sm:%s145]
                %159 = vst [vmem:[%s153 + $0x10] sm:%s145] %v158
                %v160 = vld [vmem:[%s152 + $0x30] sm:%s145]
                %161 = vst [vmem:[%s153 + $0x18] sm:%s145] %v160
                %v162 = vld [vmem:[%s152 + $0x40] sm:%s145]
                %163 = vst [vmem:[%s153 + $0x20] sm:%s145] %v162
                %v164 = vld [vmem:[%s152 + $0x50] sm:%s145]
                %165 = vst [vmem:[%s153 + $0x28] sm:%s145] %v164
                %v166 = vld [vmem:[%s152 + $0x60] sm:%s145]
                %167 = vst [vmem:[%s153 + $0x30] sm:%s145] %v166
                %v168 = vld [vmem:[%s152 + $0x70] sm:%s145]
                %169 = vst [vmem:[%s153 + $0x38] sm:%s145] %v168
                %v170 = vld [vmem:[%s152 + $0x80] sm:%s145]
                %171 = vst [vmem:[%s153 + $0x40] sm:%s145] %v170
              $region45: #{segmentation_net_forward.17} parent=39 // loop_footer
                %s151 = sadd.s32 1, %s147
              $region46: #{segmentation_net_forward.17} parent=39 // loop_footer_branch
                %146 = sbr.rel target = $region42
              $region47: #{segmentation_net_forward.17} parent=39 // loop_exit
                _
            $region40: #{segmentation_net_forward.17} parent=31 // pred_fallthru
              _
          $region32: #{segmentation_net_forward.17} parent=27 // pred_fallthru
            _
          %202 = vnop
        $region28: #{segmentation_net_forward.17} parent=23 // pred_fallthru
          _
      $region24: #{segmentation_net_forward.17} parent=5 // pred_fallthru
        _
      %p203 = scmp.le.s32.totalorder 1, %s9
      %p204 = scmp.lt.s32.totalorder %s9, 3
      %p205 = pnand %p203, %p204
      %p206 = pneg %p205
      // Predicated region
      $region63: #{segmentation_net_forward.17} parent=5 // pred_check
        _
      $region64: #{segmentation_net_forward.17} parent=5 // pred_check_branch
        %208 = sbr.rel (%p205) target = $region66
      $region65: #{segmentation_net_forward.17} parent=5 // pred_region
        %s209 = ssub.s32 %s9, 1
        %s210 = sand.u32 %s22, 1
        %s211 = sand.u32 %s22, 1
        %s212 = smul.addr %s211, 72
        %s213 = scalar_lea.vmem [#allocation2], %s212
        // Predicated region
        $region67: #{segmentation_net_forward.17} parent=65 // pred_check
          %p214 = pneg %p35
        $region68: #{segmentation_net_forward.17} parent=65 // pred_check_branch
          %216 = sbr.rel (%p214) target = $region70
        $region69: #{segmentation_net_forward.17} parent=65 // pred_region
          _
        $region70: #{segmentation_net_forward.17} parent=65 // pred_fallthru
          _
        %s217 = sand.u32 %s22, 1
        %s218 = sand.u32 %s22, 1
        %s219 = smul.addr %s218, 72
        %s220 = scalar_lea.vmem [#allocation2], %s219
        %p221 = pneg %p35
        %p222 = pneg %p32
        %p223 = pneg %p56
        %p224 = pneg %p53
        %p225 = pneg %p77
        %p226 = pneg %p74
        %p227 = pneg %p103
        %p228 = pneg %p100
        %s229 = smul.u32 2, %s14
        %p230 = scmp.lt.s32.totalorder %s229, 3
        %s231 = scalar_select %p230, %s229, 3
        %s232 = smul.addr %s231, 4
        %s233 = scalar_lea.vmem %s3, %s232
        %s234 = smul.u32 2, %s14
        %s235 = smul.u32 2, %s14
        %p236 = scmp.lt.s32.totalorder %s235, 3
        %s237 = scalar_select %p236, %s235, 3
        %s238 = smul.addr %s237, 4
        %s239 = scalar_lea.vmem %s3, %s238
        %s240 = smul.u32 2, %s14
        %v242 = vld [vmem:[%s1] sm:$0xf]
        %v243 = vld [vmem:[%s213] sm:$0xff]
        %v244 = vld [vmem:[%s213 + $0x8] sm:$0xff]
        %v245 = vld [vmem:[%s213 + $0x10] sm:$0xff]
        %v246 = vld [vmem:[%s213 + $0x18] sm:$0xff]
        %v247 = vld [vmem:[%s213 + $0x20] sm:$0xff]
        %v248 = vld [vmem:[%s213 + $0x28] sm:$0xff]
        %v249 = vld [vmem:[%s213 + $0x30] sm:$0xff]
        %v250 = vld [vmem:[%s213 + $0x38] sm:$0xff]
        %v251 = vld [vmem:[%s213 + $0x40] sm:$0xff]
        %v252 = vld [vmem:[%s2] sm:$0xff]
        %254 = vset.pattern.permute.xlu0 0
        %255 = vperm.xlu0 %254, %v252
        %v256 = vpop.permute.xlu0 %255
        %v267 = vunpack.c.l.b16 %v243
        %v268 = vunpack.c.h.b16 %v243
        %v269 = vunpack.c.l.b16 %v244
        %v270 = vunpack.c.h.b16 %v244
        %v271 = vunpack.c.l.b16 %v245
        %v272 = vunpack.c.h.b16 %v245
        %v273 = vunpack.c.l.b16 %v246
        %v274 = vunpack.c.h.b16 %v246
        %v275 = vunpack.c.l.b16 %v247
        %v276 = vunpack.c.h.b16 %v247
        %v277 = vunpack.c.l.b16 %v248
        %v278 = vunpack.c.h.b16 %v248
        %v279 = vunpack.c.l.b16 %v249
        %v280 = vunpack.c.h.b16 %v249
        %v281 = vunpack.c.l.b16 %v250
        %v282 = vunpack.c.h.b16 %v250
        %v283 = vunpack.c.l.b16 %v251
        %v284 = vunpack.c.h.b16 %v251
        %v285 = vpack.c.b16 %v269, %v267
        %v286 = vpack.c.b16 %v270, %v268
        %v287 = vpack.c.b16 %v273, %v271
        %v288 = vpack.c.b16 %v274, %v272
        %v289 = vpack.c.b16 %v277, %v275
        %v290 = vpack.c.b16 %v278, %v276
        %v291 = vpack.c.b16 %v281, %v279
        %v292 = vpack.c.b16 %v282, %v280
        %v293 = vpack.c.b16 %v283, %v283
        %v294 = vpack.c.b16 %v284, %v284
        %vm303 = vcmask 588800
        %v305 = vsel %vm303, %v242, 0
        %vm307 = vcmask 1043456
        %v309 = vsel %vm307, %v293, 0
        %v312 = vsel %vm307, %v294, 0
        %314 = vmatpush.bf16.msra.mxu0 0
        %315 = vmatpush.bf16.msra.mxu0 0
        %316 = vmatpush.bf16.msra.mxu0 0
        %317 = vmatpush.bf16.msra.mxu0 %v309
        %318 = vmatpush.bf16.msra.mxu0 %v291
        %319 = vmatpush.bf16.msra.mxu0 %v289
        %320 = vmatpush.bf16.msra.mxu0 %v287
        %321 = vmatpush.bf16.msra.mxu0 %v285
        %322 = vmatmul.bf16.gmra.mxu0 %v305
        %v323 = vpop.f32.mrf.mxu0
        %v324 = vadd.f32 %v256, %v323
        %v325 = vpop.f32.mrf.mxu0
        %326 = vdwg.mxu0
        %327 = vmatpush.bf16.msra.mxu0 0
        %328 = vmatpush.bf16.msra.mxu0 0
        %329 = vmatpush.bf16.msra.mxu0 0
        %330 = vmatpush.bf16.msra.mxu0 %v312
        %331 = vmatpush.bf16.msra.mxu0 %v292
        %332 = vmatpush.bf16.msra.mxu0 %v290
        %333 = vmatpush.bf16.msra.mxu0 %v288
        %334 = vmatpush.bf16.msra.mxu0 %v286
        %335 = vmatmul.bf16.gmra.mxu0 %v305
        %v336 = vpop.f32.mrf.mxu0
        %v337 = vadd.f32 %v256, %v336
        %v338 = vpop.f32.mrf.mxu0
        %339 = vdwg.mxu0
        %v340 = vmax.f32 %v324, 0.0
        %v341 = vmax.f32 %v337, 0.0
        %v342 = vpack.c.bf16 %v341, %v340
        %343 = vst [vmem:[%s239] sm:$0xff] %v342
        %s344 = smul.u32 2, %s14
        %p345 = scmp.lt.s32.totalorder %s344, 3
        %s346 = scalar_select %p345, %s344, 3
        %s347 = smul.addr %s346, 4
        %s348 = scalar_lea.vmem %s3, %s347
        // Predicated region
        $region71: #{segmentation_net_forward.17} parent=65 // pred_check
          %p349 = pneg %p100
        $region72: #{segmentation_net_forward.17} parent=65 // pred_check_branch
          %351 = sbr.rel (%p349) target = $region74
        $region73: #{segmentation_net_forward.17} parent=65 // pred_region
          %s352 = smul.u32 2, %s14
        $region74: #{segmentation_net_forward.17} parent=65 // pred_fallthru
          _
      $region66: #{segmentation_net_forward.17} parent=5 // pred_fallthru
        _
      %p353 = scmp.le.s32.totalorder 2, %s9
      // Predicated region
      $region75: #{segmentation_net_forward.17} parent=5 // pred_check
        %p354 = pneg %p353
      $region76: #{segmentation_net_forward.17} parent=5 // pred_check_branch
        %356 = sbr.rel (%p354) target = $region78
      $region77: #{segmentation_net_forward.17} parent=5 // pred_region
        %s357 = ssub.s32 %s9, 2
        // Predicated region
        $region79: #{segmentation_net_forward.17} parent=77 // pred_check
          %p358 = pneg %p106
        $region80: #{segmentation_net_forward.17} parent=77 // pred_check_branch
          %360 = sbr.rel (%p358) target = $region82
        $region81: #{segmentation_net_forward.17} parent=77 // pred_region
          %s361 = smul.u32 2, %s15
          %p362 = scmp.lt.s32.totalorder %s361, 3
          %s363 = scalar_select %p362, %s361, 3
          %s364 = smul.addr %s363, 4
          %s365 = scalar_lea.vmem %s3, %s364
        $region82: #{segmentation_net_forward.17} parent=77 // pred_fallthru
          _
      $region78: #{segmentation_net_forward.17} parent=5 // pred_fallthru
        _
    $region6: #{segmentation_net_forward.17} parent=1 // loop_footer
      %s13 = sadd.s32 1, %s9
    $region7: #{segmentation_net_forward.17} parent=1 // loop_footer_branch
      %8 = sbr.rel target = $region3
    $region8: #{segmentation_net_forward.17} parent=1 // loop_exit
      _

// kernel: segmentation_net_forward.18
$region0: #{segmentation_net_forward.18}
  #allocation0 [shape = 'u32[]', space=smem, size = 0x4, offset = 0x4, fixed_abs, tag = 'smem constant byte address 0x4 - core index']
  #allocation1 [shape = 'u32[72,128]{1,0:T(1,128)}', space=vmem, size = 0x9000, scoped, tag = 'internal scratch']
  %s0 = inlined_call_operand.vmem [shape: bf16[72,128], index: 0, kind: input, shape index: {}]
  %s1 = inlined_call_operand.vmem [shape: bf16[16,72], index: 1, kind: input, shape index: {}]
  %s2 = inlined_call_operand.vmem [shape: f32[16,1], index: 2, kind: input, shape index: {}]
  %s3 = inlined_call_operand.vmem [shape: bf16[16,128], index: 3, kind: output, shape index: {}]
  %s4 = sld [smem:[#allocation0]]
  $region22: #{segmentation_net_forward.18} parent=0
    _
  %s6 = ssub.s32 1, %s4
  %s7 = scalar_select 0, %s6, %s4
  // Predicated region
  $region2: #{segmentation_net_forward.18} parent=0 // pred_check
    _
  $region3: #{segmentation_net_forward.18} parent=0 // pred_check_branch
    %9 = sbr.rel (0) target = $region5
  $region4: #{segmentation_net_forward.18} parent=0 // pred_region
    _
  $region5: #{segmentation_net_forward.18} parent=0 // pred_fallthru
    _
  // Predicated region
  $region6: #{segmentation_net_forward.18} parent=0 // pred_check
    _
  $region7: #{segmentation_net_forward.18} parent=0 // pred_check_branch
    %11 = sbr.rel (0) target = $region9
  $region8: #{segmentation_net_forward.18} parent=0 // pred_region
    _
  $region9: #{segmentation_net_forward.18} parent=0 // pred_fallthru
    _
  // Predicated region
  $region10: #{segmentation_net_forward.18} parent=0 // pred_check
    _
  $region11: #{segmentation_net_forward.18} parent=0 // pred_check_branch
    %13 = sbr.rel (0) target = $region13
  $region12: #{segmentation_net_forward.18} parent=0 // pred_region
    _
  $region13: #{segmentation_net_forward.18} parent=0 // pred_fallthru
    _
  %v15 = vld [vmem:[%s1] sm:$0xf]
  %v16 = vld [vmem:[%s1 + $0x4] sm:$0xf]
  %v17 = vld [vmem:[%s0] sm:$0xf]
  %v18 = vld [vmem:[%s0 + $0x4] sm:$0xf]
  %v19 = vld [vmem:[%s0 + $0x8] sm:$0xf]
  %v20 = vld [vmem:[%s0 + $0xc] sm:$0xf]
  %v21 = vld [vmem:[%s0 + $0x10] sm:$0xf]
  %v22 = vld [vmem:[%s0 + $0x14] sm:$0xf]
  %v23 = vld [vmem:[%s0 + $0x18] sm:$0xf]
  %v24 = vld [vmem:[%s0 + $0x1c] sm:$0xf]
  %v25 = vld [vmem:[%s0 + $0x20] sm:$0xf]
  %v26 = vld [vmem:[%s2] sm:$0xff]
  %v27 = vld [vmem:[%s2 + $0x8] sm:$0xff]
  %29 = vset.pattern.permute.xlu0 0
  %30 = vperm.xlu0 %29, %v26
  %v31 = vpop.permute.xlu0 %30
  %34 = vset.pattern.permute.xlu0 0
  %35 = vperm.xlu0 %34, %v27
  %v36 = vpop.permute.xlu0 %35
  %v40 = vunpack.c.l.b16 %v15
  %v41 = vunpack.c.l.b16 %v16
  %v42 = vpack.c.b16 %v41, %v40
  %v52 = vunpack.c.l.b16 %v17
  %v53 = vunpack.c.l.b16 %v18
  %v54 = vunpack.c.l.b16 %v19
  %v55 = vunpack.c.l.b16 %v20
  %v56 = vunpack.c.l.b16 %v21
  %v57 = vunpack.c.l.b16 %v22
  %v58 = vunpack.c.l.b16 %v23
  %v59 = vunpack.c.l.b16 %v24
  %v60 = vunpack.c.l.b16 %v25
  %v61 = vpack.c.b16 %v53, %v52
  %v62 = vpack.c.b16 %v55, %v54
  %v63 = vpack.c.b16 %v57, %v56
  %v64 = vpack.c.b16 %v59, %v58
  %v65 = vpack.c.b16 %v60, %v60
  %vm70 = vcmask 588800
  %v72 = vsel %vm70, %v42, 0
  %vm74 = vcmask 1043456
  %v76 = vsel %vm74, %v65, 0
  %78 = vmatpush.bf16.msra.mxu0 0
  %79 = vmatpush.bf16.msra.mxu0 0
  %80 = vmatpush.bf16.msra.mxu0 0
  %81 = vmatpush.bf16.msra.mxu0 %v76
  %82 = vmatpush.bf16.msra.mxu0 %v64
  %83 = vmatpush.bf16.msra.mxu0 %v63
  %84 = vmatpush.bf16.msra.mxu0 %v62
  %85 = vmatpush.bf16.msra.mxu0 %v61
  %86 = vmatmul.bf16.gmra.mxu0 %v72
  %v87 = vpop.f32.mrf.mxu0
  %v88 = vadd.f32 %v31, %v87
  %v89 = vpop.f32.mrf.mxu0
  %v90 = vadd.f32 %v36, %v89
  %91 = vdwg.mxu0
  %v92 = vmax.f32 %v88, 0.0
  %v93 = vmax.f32 %v90, 0.0
  %v94 = vpack.c.bf16 %v92, %v92
  %v95 = vpack.c.bf16 %v93, %v93
  %96 = vst [vmem:[%s3] sm:$0xf] %v94
  %97 = vst [vmem:[%s3 + $0x4] sm:$0xf] %v95
  // Predicated region
  $region14: #{segmentation_net_forward.18} parent=0 // pred_check
    _
  $region15: #{segmentation_net_forward.18} parent=0 // pred_check_branch
    %99 = sbr.rel (0) target = $region17
  $region16: #{segmentation_net_forward.18} parent=0 // pred_region
    _
  $region17: #{segmentation_net_forward.18} parent=0 // pred_fallthru
    _
  // Predicated region
  $region18: #{segmentation_net_forward.18} parent=0 // pred_check
    _
  $region19: #{segmentation_net_forward.18} parent=0 // pred_check_branch
    %101 = sbr.rel (0) target = $region21
  $region20: #{segmentation_net_forward.18} parent=0 // pred_region
    _
  $region21: #{segmentation_net_forward.18} parent=0 // pred_fallthru
    _

// kernel: segmentation_net_forward.19
$region0: #{segmentation_net_forward.19}
  #allocation0 [shape = 'u32[]', space=smem, size = 0x4, offset = 0x4, fixed_abs, tag = 'smem constant byte address 0x4 - core index']
  #allocation1 [shape = 'u32[72,128]{1,0:T(1,128)}', space=vmem, size = 0x9000, scoped, tag = 'internal scratch']
  %s0 = inlined_call_operand.vmem [shape: bf16[144,128], index: 0, kind: input, shape index: {}]
  %s1 = inlined_call_operand.vmem [shape: bf16[16,144], index: 1, kind: input, shape index: {}]
  %s2 = inlined_call_operand.vmem [shape: f32[16,1], index: 2, kind: input, shape index: {}]
  %s3 = inlined_call_operand.vmem [shape: bf16[16,128], index: 3, kind: output, shape index: {}]
  %s4 = sld [smem:[#allocation0]]
  $region22: #{segmentation_net_forward.19} parent=0
    _
  %s6 = ssub.s32 1, %s4
  %s7 = scalar_select 0, %s6, %s4
  // Predicated region
  $region2: #{segmentation_net_forward.19} parent=0 // pred_check
    _
  $region3: #{segmentation_net_forward.19} parent=0 // pred_check_branch
    %9 = sbr.rel (0) target = $region5
  $region4: #{segmentation_net_forward.19} parent=0 // pred_region
    _
  $region5: #{segmentation_net_forward.19} parent=0 // pred_fallthru
    _
  // Predicated region
  $region6: #{segmentation_net_forward.19} parent=0 // pred_check
    _
  $region7: #{segmentation_net_forward.19} parent=0 // pred_check_branch
    %11 = sbr.rel (0) target = $region9
  $region8: #{segmentation_net_forward.19} parent=0 // pred_region
    _
  $region9: #{segmentation_net_forward.19} parent=0 // pred_fallthru
    _
  // Predicated region
  $region10: #{segmentation_net_forward.19} parent=0 // pred_check
    _
  $region11: #{segmentation_net_forward.19} parent=0 // pred_check_branch
    %13 = sbr.rel (0) target = $region13
  $region12: #{segmentation_net_forward.19} parent=0 // pred_region
    _
  $region13: #{segmentation_net_forward.19} parent=0 // pred_fallthru
    _
  %v15 = vld [vmem:[%s1] sm:$0xff]
  %v16 = vld [vmem:[%s1 + $0x8] sm:$0xff]
  %v17 = vld [vmem:[%s0] sm:$0xf]
  %v18 = vld [vmem:[%s0 + $0x4] sm:$0xf]
  %v19 = vld [vmem:[%s0 + $0x8] sm:$0xf]
  %v20 = vld [vmem:[%s0 + $0xc] sm:$0xf]
  %v21 = vld [vmem:[%s0 + $0x10] sm:$0xf]
  %v22 = vld [vmem:[%s0 + $0x14] sm:$0xf]
  %v23 = vld [vmem:[%s0 + $0x18] sm:$0xf]
  %v24 = vld [vmem:[%s0 + $0x1c] sm:$0xf]
  %v25 = vld [vmem:[%s0 + $0x20] sm:$0xf]
  %v26 = vld [vmem:[%s0 + $0x24] sm:$0xf]
  %v27 = vld [vmem:[%s0 + $0x28] sm:$0xf]
  %v28 = vld [vmem:[%s0 + $0x2c] sm:$0xf]
  %v29 = vld [vmem:[%s0 + $0x30] sm:$0xf]
  %v30 = vld [vmem:[%s0 + $0x34] sm:$0xf]
  %v31 = vld [vmem:[%s0 + $0x38] sm:$0xf]
  %v32 = vld [vmem:[%s0 + $0x3c] sm:$0xf]
  %v33 = vld [vmem:[%s0 + $0x40] sm:$0xf]
  %v34 = vld [vmem:[%s0 + $0x44] sm:$0xf]
  %v35 = vld [vmem:[%s2] sm:$0xff]
  %v36 = vld [vmem:[%s2 + $0x8] sm:$0xff]
  %38 = vset.pattern.permute.xlu0 0
  %39 = vperm.xlu0 %38, %v35
  %v40 = vpop.permute.xlu0 %39
  %43 = vset.pattern.permute.xlu0 0
  %44 = vperm.xlu0 %43, %v36
  %v45 = vpop.permute.xlu0 %44
  %v49 = vunpack.c.l.b16 %v15
  %v50 = vunpack.c.h.b16 %v15
  %v51 = vunpack.c.l.b16 %v16
  %v52 = vunpack.c.h.b16 %v16
  %v53 = vpack.c.b16 %v51, %v49
  %v54 = vpack.c.b16 %v52, %v50
  %v74 = vunpack.c.l.b16 %v17
  %v75 = vunpack.c.l.b16 %v18
  %v76 = vunpack.c.l.b16 %v19
  %v77 = vunpack.c.l.b16 %v20
  %v78 = vunpack.c.l.b16 %v21
  %v79 = vunpack.c.l.b16 %v22
  %v80 = vunpack.c.l.b16 %v23
  %v81 = vunpack.c.l.b16 %v24
  %v82 = vunpack.c.l.b16 %v25
  %v83 = vunpack.c.l.b16 %v26
  %v84 = vunpack.c.l.b16 %v27
  %v85 = vunpack.c.l.b16 %v28
  %v86 = vunpack.c.l.b16 %v29
  %v87 = vunpack.c.l.b16 %v30
  %v88 = vunpack.c.l.b16 %v31
  %v89 = vunpack.c.l.b16 %v32
  %v90 = vunpack.c.l.b16 %v33
  %v91 = vunpack.c.l.b16 %v34
  %v92 = vpack.c.b16 %v75, %v74
  %v93 = vpack.c.b16 %v77, %v76
  %v94 = vpack.c.b16 %v79, %v78
  %v95 = vpack.c.b16 %v81, %v80
  %v96 = vpack.c.b16 %v83, %v82
  %v97 = vpack.c.b16 %v85, %v84
  %v98 = vpack.c.b16 %v87, %v86
  %v99 = vpack.c.b16 %v89, %v88
  %v100 = vpack.c.b16 %v91, %v90
  %vm110 = vcmask 130048
  %v112 = vsel %vm110, %v54, 0
  %114 = vmatpush.bf16.msra.mxu0 %v99
  %115 = vmatpush.bf16.msra.mxu0 %v98
  %116 = vmatpush.bf16.msra.mxu0 %v97
  %117 = vmatpush.bf16.msra.mxu0 %v96
  %118 = vmatpush.bf16.msra.mxu0 %v95
  %119 = vmatpush.bf16.msra.mxu0 %v94
  %120 = vmatpush.bf16.msra.mxu0 %v93
  %121 = vmatpush.bf16.msra.mxu0 %v92
  %122 = vmatmul.bf16.gmra.mxu0 %v53
  %v123 = vpop.f32.mrf.mxu0
  %v124 = vadd.f32 %v40, %v123
  %v125 = vpop.f32.mrf.mxu0
  %v126 = vadd.f32 %v45, %v125
  %127 = vdwg.mxu0
  %128 = vmatpush.bf16.msra.mxu0 0
  %129 = vmatpush.bf16.msra.mxu0 0
  %130 = vmatpush.bf16.msra.mxu0 0
  %131 = vmatpush.bf16.msra.mxu0 0
  %132 = vmatpush.bf16.msra.mxu0 0
  %133 = vmatpush.bf16.msra.mxu0 0
  %134 = vmatpush.bf16.msra.mxu0 0
  %135 = vmatpush.bf16.msra.mxu0 %v100
  %136 = vmatmul.bf16.gmra.mxu0 %v112
  %v137 = vpop.f32.mrf.mxu0
  %v138 = vadd.f32 %v124, %v137
  %v139 = vpop.f32.mrf.mxu0
  %v140 = vadd.f32 %v126, %v139
  %141 = vdwg.mxu0
  %v142 = vmax.f32 %v138, 0.0
  %v143 = vmax.f32 %v140, 0.0
  %v144 = vpack.c.bf16 %v142, %v142
  %v145 = vpack.c.bf16 %v143, %v143
  %146 = vst [vmem:[%s3] sm:$0xf] %v144
  %147 = vst [vmem:[%s3 + $0x4] sm:$0xf] %v145
  // Predicated region
  $region14: #{segmentation_net_forward.19} parent=0 // pred_check
    _
  $region15: #{segmentation_net_forward.19} parent=0 // pred_check_branch
    %149 = sbr.rel (0) target = $region17
  $region16: #{segmentation_net_forward.19} parent=0 // pred_region
    _
  $region17: #{segmentation_net_forward.19} parent=0 // pred_fallthru
    _
  // Predicated region
  $region18: #{segmentation_net_forward.19} parent=0 // pred_check
    _
  $region19: #{segmentation_net_forward.19} parent=0 // pred_check_branch
    %151 = sbr.rel (0) target = $region21
  $region20: #{segmentation_net_forward.19} parent=0 // pred_region
    _
  $region21: #{segmentation_net_forward.19} parent=0 // pred_fallthru
    _

// kernel: segmentation_net_forward.20
$region0: #{segmentation_net_forward.20}
  #allocation0 [shape = 'u32[]', space=smem, size = 0x4, offset = 0x4, fixed_abs, tag = 'smem constant byte address 0x4 - core index']
  #allocation1 [shape = 'u32[72,128]{1,0:T(1,128)}', space=vmem, size = 0x9000, scoped, tag = 'internal scratch']
  %s0 = inlined_call_operand.vmem [shape: bf16[144,128], index: 0, kind: input, shape index: {}]
  %s1 = inlined_call_operand.vmem [shape: bf16[32,144], index: 1, kind: input, shape index: {}]
  %s2 = inlined_call_operand.vmem [shape: f32[32,1], index: 2, kind: input, shape index: {}]
  %s3 = inlined_call_operand.vmem [shape: bf16[32,128], index: 3, kind: output, shape index: {}]
  %s4 = sld [smem:[#allocation0]]
  $region22: #{segmentation_net_forward.20} parent=0
    _
  %s6 = ssub.s32 1, %s4
  %s7 = scalar_select 0, %s6, %s4
  // Predicated region
  $region2: #{segmentation_net_forward.20} parent=0 // pred_check
    _
  $region3: #{segmentation_net_forward.20} parent=0 // pred_check_branch
    %9 = sbr.rel (0) target = $region5
  $region4: #{segmentation_net_forward.20} parent=0 // pred_region
    _
  $region5: #{segmentation_net_forward.20} parent=0 // pred_fallthru
    _
  // Predicated region
  $region6: #{segmentation_net_forward.20} parent=0 // pred_check
    _
  $region7: #{segmentation_net_forward.20} parent=0 // pred_check_branch
    %11 = sbr.rel (0) target = $region9
  $region8: #{segmentation_net_forward.20} parent=0 // pred_region
    _
  $region9: #{segmentation_net_forward.20} parent=0 // pred_fallthru
    _
  // Predicated region
  $region10: #{segmentation_net_forward.20} parent=0 // pred_check
    _
  $region11: #{segmentation_net_forward.20} parent=0 // pred_check_branch
    %13 = sbr.rel (0) target = $region13
  $region12: #{segmentation_net_forward.20} parent=0 // pred_region
    _
  $region13: #{segmentation_net_forward.20} parent=0 // pred_fallthru
    _
  %v15 = vld [vmem:[%s1] sm:$0xff]
  %v16 = vld [vmem:[%s1 + $0x8] sm:$0xff]
  %v17 = vld [vmem:[%s1 + $0x10] sm:$0xff]
  %v18 = vld [vmem:[%s1 + $0x18] sm:$0xff]
  %v19 = vld [vmem:[%s0] sm:$0xf]
  %v20 = vld [vmem:[%s0 + $0x4] sm:$0xf]
  %v21 = vld [vmem:[%s0 + $0x8] sm:$0xf]
  %v22 = vld [vmem:[%s0 + $0xc] sm:$0xf]
  %v23 = vld [vmem:[%s0 + $0x10] sm:$0xf]
  %v24 = vld [vmem:[%s0 + $0x14] sm:$0xf]
  %v25 = vld [vmem:[%s0 + $0x18] sm:$0xf]
  %v26 = vld [vmem:[%s0 + $0x1c] sm:$0xf]
  %v27 = vld [vmem:[%s0 + $0x20] sm:$0xf]
  %v28 = vld [vmem:[%s0 + $0x24] sm:$0xf]
  %v29 = vld [vmem:[%s0 + $0x28] sm:$0xf]
  %v30 = vld [vmem:[%s0 + $0x2c] sm:$0xf]
  %v31 = vld [vmem:[%s0 + $0x30] sm:$0xf]
  %v32 = vld [vmem:[%s0 + $0x34] sm:$0xf]
  %v33 = vld [vmem:[%s0 + $0x38] sm:$0xf]
  %v34 = vld [vmem:[%s0 + $0x3c] sm:$0xf]
  %v35 = vld [vmem:[%s0 + $0x40] sm:$0xf]
  %v36 = vld [vmem:[%s0 + $0x44] sm:$0xf]
  %v37 = vld [vmem:[%s2] sm:$0xff]
  %v38 = vld [vmem:[%s2 + $0x8] sm:$0xff]
  %v39 = vld [vmem:[%s2 + $0x10] sm:$0xff]
  %v40 = vld [vmem:[%s2 + $0x18] sm:$0xff]
  %42 = vset.pattern.permute.xlu0 0
  %43 = vperm.xlu0 %42, %v37
  %v44 = vpop.permute.xlu0 %43
  %47 = vset.pattern.permute.xlu0 0
  %48 = vperm.xlu0 %47, %v38
  %v49 = vpop.permute.xlu0 %48
  %52 = vset.pattern.permute.xlu0 0
  %53 = vperm.xlu0 %52, %v39
  %v54 = vpop.permute.xlu0 %53
  %57 = vset.pattern.permute.xlu0 0
  %58 = vperm.xlu0 %57, %v40
  %v59 = vpop.permute.xlu0 %58
  %v65 = vunpack.c.l.b16 %v15
  %v66 = vunpack.c.h.b16 %v15
  %v67 = vunpack.c.l.b16 %v16
  %v68 = vunpack.c.h.b16 %v16
  %v69 = vunpack.c.l.b16 %v17
  %v70 = vunpack.c.h.b16 %v17
  %v71 = vunpack.c.l.b16 %v18
  %v72 = vunpack.c.h.b16 %v18
  %v73 = vpack.c.b16 %v67, %v65
  %v74 = vpack.c.b16 %v68, %v66
  %v75 = vpack.c.b16 %v71, %v69
  %v76 = vpack.c.b16 %v72, %v70
  %v97 = vunpack.c.l.b16 %v19
  %v98 = vunpack.c.l.b16 %v20
  %v99 = vunpack.c.l.b16 %v21
  %v100 = vunpack.c.l.b16 %v22
  %v101 = vunpack.c.l.b16 %v23
  %v102 = vunpack.c.l.b16 %v24
  %v103 = vunpack.c.l.b16 %v25
  %v104 = vunpack.c.l.b16 %v26
  %v105 = vunpack.c.l.b16 %v27
  %v106 = vunpack.c.l.b16 %v28
  %v107 = vunpack.c.l.b16 %v29
  %v108 = vunpack.c.l.b16 %v30
  %v109 = vunpack.c.l.b16 %v31
  %v110 = vunpack.c.l.b16 %v32
  %v111 = vunpack.c.l.b16 %v33
  %v112 = vunpack.c.l.b16 %v34
  %v113 = vunpack.c.l.b16 %v35
  %v114 = vunpack.c.l.b16 %v36
  %v115 = vpack.c.b16 %v98, %v97
  %v116 = vpack.c.b16 %v100, %v99
  %v117 = vpack.c.b16 %v102, %v101
  %v118 = vpack.c.b16 %v104, %v103
  %v119 = vpack.c.b16 %v106, %v105
  %v120 = vpack.c.b16 %v108, %v107
  %v121 = vpack.c.b16 %v110, %v109
  %v122 = vpack.c.b16 %v112, %v111
  %v123 = vpack.c.b16 %v114, %v113
  %vm133 = vcmask 130048
  %v135 = vsel %vm133, %v74, 0
  %v138 = vsel %vm133, %v76, 0
  %140 = vmatpush.bf16.msra.mxu0 %v122
  %141 = vmatpush.bf16.msra.mxu0 %v121
  %142 = vmatpush.bf16.msra.mxu0 %v120
  %143 = vmatpush.bf16.msra.mxu0 %v119
  %144 = vmatpush.bf16.msra.mxu0 %v118
  %145 = vmatpush.bf16.msra.mxu0 %v117
  %146 = vmatpush.bf16.msra.mxu0 %v116
  %147 = vmatpush.bf16.msra.mxu0 %v115
  %148 = vmatmul.bf16.gmra.mxu0 %v73
  %v149 = vpop.f32.mrf.mxu0
  %v150 = vadd.f32 %v44, %v149
  %v151 = vpop.f32.mrf.mxu0
  %v152 = vadd.f32 %v49, %v151
  %153 = vmatmul.bf16.gmra.mxu0 %v75
  %v154 = vpop.f32.mrf.mxu0
  %v155 = vadd.f32 %v54, %v154
  %v156 = vpop.f32.mrf.mxu0
  %v157 = vadd.f32 %v59, %v156
  %158 = vdwg.mxu0
  %159 = vmatpush.bf16.msra.mxu0 0
  %160 = vmatpush.bf16.msra.mxu0 0
  %161 = vmatpush.bf16.msra.mxu0 0
  %162 = vmatpush.bf16.msra.mxu0 0
  %163 = vmatpush.bf16.msra.mxu0 0
  %164 = vmatpush.bf16.msra.mxu0 0
  %165 = vmatpush.bf16.msra.mxu0 0
  %166 = vmatpush.bf16.msra.mxu0 %v123
  %167 = vmatmul.bf16.gmra.mxu0 %v135
  %v168 = vpop.f32.mrf.mxu0
  %v169 = vadd.f32 %v150, %v168
  %v170 = vpop.f32.mrf.mxu0
  %v171 = vadd.f32 %v152, %v170
  %172 = vmatmul.bf16.gmra.mxu0 %v138
  %v173 = vpop.f32.mrf.mxu0
  %v174 = vadd.f32 %v155, %v173
  %v175 = vpop.f32.mrf.mxu0
  %v176 = vadd.f32 %v157, %v175
  %177 = vdwg.mxu0
  %v178 = vmax.f32 %v169, 0.0
  %v179 = vmax.f32 %v171, 0.0
  %v180 = vmax.f32 %v174, 0.0
  %v181 = vmax.f32 %v176, 0.0
  %v182 = vpack.c.bf16 %v178, %v178
  %v183 = vpack.c.bf16 %v179, %v179
  %v184 = vpack.c.bf16 %v180, %v180
  %v185 = vpack.c.bf16 %v181, %v181
  %186 = vst [vmem:[%s3] sm:$0xf] %v182
  %187 = vst [vmem:[%s3 + $0x4] sm:$0xf] %v183
  %188 = vst [vmem:[%s3 + $0x8] sm:$0xf] %v184
  %189 = vst [vmem:[%s3 + $0xc] sm:$0xf] %v185
  // Predicated region
  $region14: #{segmentation_net_forward.20} parent=0 // pred_check
    _
  $region15: #{segmentation_net_forward.20} parent=0 // pred_check_branch
    %191 = sbr.rel (0) target = $region17
  $region16: #{segmentation_net_forward.20} parent=0 // pred_region
    _
  $region17: #{segmentation_net_forward.20} parent=0 // pred_fallthru
    _
  // Predicated region
  $region18: #{segmentation_net_forward.20} parent=0 // pred_check
    _
  $region19: #{segmentation_net_forward.20} parent=0 // pred_check_branch
    %193 = sbr.rel (0) target = $region21
  $region20: #{segmentation_net_forward.20} parent=0 // pred_region
    _
  $region21: #{segmentation_net_forward.20} parent=0 // pred_fallthru
    _

// kernel: segmentation_net_forward.21
$region0: #{segmentation_net_forward.21}
  #allocation0 [shape = 'u32[]', space=smem, size = 0x4, offset = 0x4, fixed_abs, tag = 'smem constant byte address 0x4 - core index']
  #allocation1 [shape = 'u32[72,128]{1,0:T(1,128)}', space=vmem, size = 0x9000, scoped, tag = 'internal scratch']
  %s0 = inlined_call_operand.vmem [shape: bf16[432,128], index: 0, kind: input, shape index: {}]
  %s1 = inlined_call_operand.vmem [shape: bf16[16,432], index: 1, kind: input, shape index: {}]
  %s2 = inlined_call_operand.vmem [shape: f32[16,1], index: 2, kind: input, shape index: {}]
  %s3 = inlined_call_operand.vmem [shape: bf16[16,128], index: 3, kind: output, shape index: {}]
  %s4 = sld [smem:[#allocation0]]
  $region22: #{segmentation_net_forward.21} parent=0
    _
  %s6 = ssub.s32 1, %s4
  %s7 = scalar_select 0, %s6, %s4
  // Predicated region
  $region2: #{segmentation_net_forward.21} parent=0 // pred_check
    _
  $region3: #{segmentation_net_forward.21} parent=0 // pred_check_branch
    %9 = sbr.rel (0) target = $region5
  $region4: #{segmentation_net_forward.21} parent=0 // pred_region
    _
  $region5: #{segmentation_net_forward.21} parent=0 // pred_fallthru
    _
  // Predicated region
  $region6: #{segmentation_net_forward.21} parent=0 // pred_check
    _
  $region7: #{segmentation_net_forward.21} parent=0 // pred_check_branch
    %11 = sbr.rel (0) target = $region9
  $region8: #{segmentation_net_forward.21} parent=0 // pred_region
    _
  $region9: #{segmentation_net_forward.21} parent=0 // pred_fallthru
    _
  // Predicated region
  $region10: #{segmentation_net_forward.21} parent=0 // pred_check
    _
  $region11: #{segmentation_net_forward.21} parent=0 // pred_check_branch
    %13 = sbr.rel (0) target = $region13
  $region12: #{segmentation_net_forward.21} parent=0 // pred_region
    _
  $region13: #{segmentation_net_forward.21} parent=0 // pred_fallthru
    _
  %v15 = vld [vmem:[%s1] sm:$0xff]
  %v16 = vld [vmem:[%s1 + $0x8] sm:$0xff]
  %v17 = vld [vmem:[%s1 + $0x10] sm:$0xff]
  %v18 = vld [vmem:[%s1 + $0x18] sm:$0xff]
  %v19 = vld [vmem:[%s0] sm:$0xf]
  %v20 = vld [vmem:[%s0 + $0x4] sm:$0xf]
  %v21 = vld [vmem:[%s0 + $0x8] sm:$0xf]
  %v22 = vld [vmem:[%s0 + $0xc] sm:$0xf]
  %v23 = vld [vmem:[%s0 + $0x10] sm:$0xf]
  %v24 = vld [vmem:[%s0 + $0x14] sm:$0xf]
  %v25 = vld [vmem:[%s0 + $0x18] sm:$0xf]
  %v26 = vld [vmem:[%s0 + $0x1c] sm:$0xf]
  %v27 = vld [vmem:[%s0 + $0x20] sm:$0xf]
  %v28 = vld [vmem:[%s0 + $0x24] sm:$0xf]
  %v29 = vld [vmem:[%s0 + $0x28] sm:$0xf]
  %v30 = vld [vmem:[%s0 + $0x2c] sm:$0xf]
  %v31 = vld [vmem:[%s0 + $0x30] sm:$0xf]
  %v32 = vld [vmem:[%s0 + $0x34] sm:$0xf]
  %v33 = vld [vmem:[%s0 + $0x38] sm:$0xf]
  %v34 = vld [vmem:[%s0 + $0x3c] sm:$0xf]
  %v35 = vld [vmem:[%s0 + $0x40] sm:$0xf]
  %v36 = vld [vmem:[%s0 + $0x44] sm:$0xf]
  %v37 = vld [vmem:[%s0 + $0x48] sm:$0xf]
  %v38 = vld [vmem:[%s0 + $0x4c] sm:$0xf]
  %v39 = vld [vmem:[%s0 + $0x50] sm:$0xf]
  %v40 = vld [vmem:[%s0 + $0x54] sm:$0xf]
  %v41 = vld [vmem:[%s0 + $0x58] sm:$0xf]
  %v42 = vld [vmem:[%s0 + $0x5c] sm:$0xf]
  %v43 = vld [vmem:[%s0 + $0x60] sm:$0xf]
  %v44 = vld [vmem:[%s0 + $0x64] sm:$0xf]
  %v45 = vld [vmem:[%s0 + $0x68] sm:$0xf]
  %v46 = vld [vmem:[%s0 + $0x6c] sm:$0xf]
  %v47 = vld [vmem:[%s0 + $0x70] sm:$0xf]
  %v48 = vld [vmem:[%s0 + $0x74] sm:$0xf]
  %v49 = vld [vmem:[%s0 + $0x78] sm:$0xf]
  %v50 = vld [vmem:[%s0 + $0x7c] sm:$0xf]
  %v51 = vld [vmem:[%s0 + $0x80] sm:$0xf]
  %v52 = vld [vmem:[%s0 + $0x84] sm:$0xf]
  %v53 = vld [vmem:[%s0 + $0x88] sm:$0xf]
  %v54 = vld [vmem:[%s0 + $0x8c] sm:$0xf]
  %v55 = vld [vmem:[%s0 + $0x90] sm:$0xf]
  %v56 = vld [vmem:[%s0 + $0x94] sm:$0xf]
  %v57 = vld [vmem:[%s0 + $0x98] sm:$0xf]
  %v58 = vld [vmem:[%s0 + $0x9c] sm:$0xf]
  %v59 = vld [vmem:[%s0 + $0xa0] sm:$0xf]
  %v60 = vld [vmem:[%s0 + $0xa4] sm:$0xf]
  %v61 = vld [vmem:[%s0 + $0xa8] sm:$0xf]
  %v62 = vld [vmem:[%s0 + $0xac] sm:$0xf]
  %v63 = vld [vmem:[%s0 + $0xb0] sm:$0xf]
  %v64 = vld [vmem:[%s0 + $0xb4] sm:$0xf]
  %v65 = vld [vmem:[%s0 + $0xb8] sm:$0xf]
  %v66 = vld [vmem:[%s0 + $0xbc] sm:$0xf]
  %v67 = vld [vmem:[%s0 + $0xc0] sm:$0xf]
  %v68 = vld [vmem:[%s0 + $0xc4] sm:$0xf]
  %v69 = vld [vmem:[%s0 + $0xc8] sm:$0xf]
  %v70 = vld [vmem:[%s0 + $0xcc] sm:$0xf]
  %v71 = vld [vmem:[%s0 + $0xd0] sm:$0xf]
  %v72 = vld [vmem:[%s0 + $0xd4] sm:$0xf]
  %v73 = vld [vmem:[%s2] sm:$0xff]
  %v74 = vld [vmem:[%s2 + $0x8] sm:$0xff]
  %76 = vset.pattern.permute.xlu0 0
  %77 = vperm.xlu0 %76, %v73
  %v78 = vpop.permute.xlu0 %77
  %81 = vset.pattern.permute.xlu0 0
  %82 = vperm.xlu0 %81, %v74
  %v83 = vpop.permute.xlu0 %82
  %v89 = vunpack.c.l.b16 %v15
  %v90 = vunpack.c.h.b16 %v15
  %v91 = vunpack.c.l.b16 %v16
  %v92 = vunpack.c.h.b16 %v16
  %v93 = vunpack.c.l.b16 %v17
  %v94 = vunpack.c.h.b16 %v17
  %v95 = vunpack.c.l.b16 %v18
  %v96 = vunpack.c.h.b16 %v18
  %v97 = vpack.c.b16 %v93, %v89
  %v98 = vpack.c.b16 %v94, %v90
  %v99 = vpack.c.b16 %v95, %v91
  %v100 = vpack.c.b16 %v96, %v92
  %v158 = vunpack.c.l.b16 %v19
  %v159 = vunpack.c.l.b16 %v20
  %v160 = vunpack.c.l.b16 %v21
  %v161 = vunpack.c.l.b16 %v22
  %v162 = vunpack.c.l.b16 %v23
  %v163 = vunpack.c.l.b16 %v24
  %v164 = vunpack.c.l.b16 %v25
  %v165 = vunpack.c.l.b16 %v26
  %v166 = vunpack.c.l.b16 %v27
  %v167 = vunpack.c.l.b16 %v28
  %v168 = vunpack.c.l.b16 %v29
  %v169 = vunpack.c.l.b16 %v30
  %v170 = vunpack.c.l.b16 %v31
  %v171 = vunpack.c.l.b16 %v32
  %v172 = vunpack.c.l.b16 %v33
  %v173 = vunpack.c.l.b16 %v34
  %v174 = vunpack.c.l.b16 %v35
  %v175 = vunpack.c.l.b16 %v36
  %v176 = vunpack.c.l.b16 %v37
  %v177 = vunpack.c.l.b16 %v38
  %v178 = vunpack.c.l.b16 %v39
  %v179 = vunpack.c.l.b16 %v40
  %v180 = vunpack.c.l.b16 %v41
  %v181 = vunpack.c.l.b16 %v42
  %v182 = vunpack.c.l.b16 %v43
  %v183 = vunpack.c.l.b16 %v44
  %v184 = vunpack.c.l.b16 %v45
  %v185 = vunpack.c.l.b16 %v46
  %v186 = vunpack.c.l.b16 %v47
  %v187 = vunpack.c.l.b16 %v48
  %v188 = vunpack.c.l.b16 %v49
  %v189 = vunpack.c.l.b16 %v50
  %v190 = vunpack.c.l.b16 %v51
  %v191 = vunpack.c.l.b16 %v52
  %v192 = vunpack.c.l.b16 %v53
  %v193 = vunpack.c.l.b16 %v54
  %v194 = vunpack.c.l.b16 %v55
  %v195 = vunpack.c.l.b16 %v56
  %v196 = vunpack.c.l.b16 %v57
  %v197 = vunpack.c.l.b16 %v58
  %v198 = vunpack.c.l.b16 %v59
  %v199 = vunpack.c.l.b16 %v60
  %v200 = vunpack.c.l.b16 %v61
  %v201 = vunpack.c.l.b16 %v62
  %v202 = vunpack.c.l.b16 %v63
  %v203 = vunpack.c.l.b16 %v64
  %v204 = vunpack.c.l.b16 %v65
  %v205 = vunpack.c.l.b16 %v66
  %v206 = vunpack.c.l.b16 %v67
  %v207 = vunpack.c.l.b16 %v68
  %v208 = vunpack.c.l.b16 %v69
  %v209 = vunpack.c.l.b16 %v70
  %v210 = vunpack.c.l.b16 %v71
  %v211 = vunpack.c.l.b16 %v72
  %v212 = vpack.c.b16 %v159, %v158
  %v213 = vpack.c.b16 %v161, %v160
  %v214 = vpack.c.b16 %v163, %v162
  %v215 = vpack.c.b16 %v165, %v164
  %v216 = vpack.c.b16 %v167, %v166
  %v217 = vpack.c.b16 %v169, %v168
  %v218 = vpack.c.b16 %v171, %v170
  %v219 = vpack.c.b16 %v173, %v172
  %v220 = vpack.c.b16 %v175, %v174
  %v221 = vpack.c.b16 %v177, %v176
  %v222 = vpack.c.b16 %v179, %v178
  %v223 = vpack.c.b16 %v181, %v180
  %v224 = vpack.c.b16 %v183, %v182
  %v225 = vpack.c.b16 %v185, %v184
  %v226 = vpack.c.b16 %v187, %v186
  %v227 = vpack.c.b16 %v189, %v188
  %v228 = vpack.c.b16 %v191, %v190
  %v229 = vpack.c.b16 %v193, %v192
  %v230 = vpack.c.b16 %v195, %v194
  %v231 = vpack.c.b16 %v197, %v196
  %v232 = vpack.c.b16 %v199, %v198
  %v233 = vpack.c.b16 %v201, %v200
  %v234 = vpack.c.b16 %v203, %v202
  %v235 = vpack.c.b16 %v205, %v204
  %v236 = vpack.c.b16 %v207, %v206
  %v237 = vpack.c.b16 %v209, %v208
  %v238 = vpack.c.b16 %v211, %v210
  %vm266 = vcmask 392192
  %v268 = vsel %vm266, %v100, 0
  %270 = vmatpush.bf16.msra.mxu0 %v219
  %271 = vmatpush.bf16.msra.mxu0 %v218
  %272 = vmatpush.bf16.msra.mxu0 %v217
  %273 = vmatpush.bf16.msra.mxu0 %v216
  %274 = vmatpush.bf16.msra.mxu0 %v215
  %275 = vmatpush.bf16.msra.mxu0 %v214
  %276 = vmatpush.bf16.msra.mxu0 %v213
  %277 = vmatpush.bf16.msra.mxu0 %v212
  %278 = vmatmul.bf16.gmra.mxu0 %v97
  %v279 = vpop.f32.mrf.mxu0
  %v280 = vadd.f32 %v78, %v279
  %v281 = vpop.f32.mrf.mxu0
  %v282 = vadd.f32 %v83, %v281
  %283 = vdwg.mxu0
  %284 = vmatpush.bf16.msra.mxu0 %v227
  %285 = vmatpush.bf16.msra.mxu0 %v226
  %286 = vmatpush.bf16.msra.mxu0 %v225
  %287 = vmatpush.bf16.msra.mxu0 %v224
  %288 = vmatpush.bf16.msra.mxu0 %v223
  %289 = vmatpush.bf16.msra.mxu0 %v222
  %290 = vmatpush.bf16.msra.mxu0 %v221
  %291 = vmatpush.bf16.msra.mxu0 %v220
  %292 = vmatmul.bf16.gmra.mxu0 %v98
  %v293 = vpop.f32.mrf.mxu0
  %v294 = vadd.f32 %v280, %v293
  %v295 = vpop.f32.mrf.mxu0
  %v296 = vadd.f32 %v282, %v295
  %297 = vdwg.mxu0
  %298 = vmatpush.bf16.msra.mxu0 %v235
  %299 = vmatpush.bf16.msra.mxu0 %v234
  %300 = vmatpush.bf16.msra.mxu0 %v233
  %301 = vmatpush.bf16.msra.mxu0 %v232
  %302 = vmatpush.bf16.msra.mxu0 %v231
  %303 = vmatpush.bf16.msra.mxu0 %v230
  %304 = vmatpush.bf16.msra.mxu0 %v229
  %305 = vmatpush.bf16.msra.mxu0 %v228
  %306 = vmatmul.bf16.gmra.mxu0 %v99
  %v307 = vpop.f32.mrf.mxu0
  %v308 = vadd.f32 %v294, %v307
  %v309 = vpop.f32.mrf.mxu0
  %v310 = vadd.f32 %v296, %v309
  %311 = vdwg.mxu0
  %312 = vmatpush.bf16.msra.mxu0 0
  %313 = vmatpush.bf16.msra.mxu0 0
  %314 = vmatpush.bf16.msra.mxu0 0
  %315 = vmatpush.bf16.msra.mxu0 0
  %316 = vmatpush.bf16.msra.mxu0 0
  %317 = vmatpush.bf16.msra.mxu0 %v238
  %318 = vmatpush.bf16.msra.mxu0 %v237
  %319 = vmatpush.bf16.msra.mxu0 %v236
  %320 = vmatmul.bf16.gmra.mxu0 %v268
  %v321 = vpop.f32.mrf.mxu0
  %v322 = vadd.f32 %v308, %v321
  %v323 = vpop.f32.mrf.mxu0
  %v324 = vadd.f32 %v310, %v323
  %325 = vdwg.mxu0
  %v326 = vmax.f32 %v322, 0.0
  %v327 = vmax.f32 %v324, 0.0
  %v328 = vpack.c.bf16 %v326, %v326
  %v329 = vpack.c.bf16 %v327, %v327
  %330 = vst [vmem:[%s3] sm:$0xf] %v328
  %331 = vst [vmem:[%s3 + $0x4] sm:$0xf] %v329
  // Predicated region
  $region14: #{segmentation_net_forward.21} parent=0 // pred_check
    _
  $region15: #{segmentation_net_forward.21} parent=0 // pred_check_branch
    %333 = sbr.rel (0) target = $region17
  $region16: #{segmentation_net_forward.21} parent=0 // pred_region
    _
  $region17: #{segmentation_net_forward.21} parent=0 // pred_fallthru
    _
  // Predicated region
  $region18: #{segmentation_net_forward.21} parent=0 // pred_check
    _
  $region19: #{segmentation_net_forward.21} parent=0 // pred_check_branch
    %335 = sbr.rel (0) target = $region21
  $region20: #{segmentation_net_forward.21} parent=0 // pred_region
    _
  $region21: #{segmentation_net_forward.21} parent=0 // pred_fallthru
    _

// kernel: segmentation_net_forward.23
$region0: #{segmentation_net_forward.23}
  #allocation0 [shape = 'u32[]', space=smem, size = 0x4, offset = 0x4, fixed_abs, tag = 'smem constant byte address 0x4 - core index']
  #allocation1 [shape = 'u32[72,128]{1,0:T(1,128)}', space=vmem, size = 0x9000, scoped, tag = 'internal scratch']
  %s0 = inlined_call_operand.vmem [shape: bf16[288,128], index: 0, kind: input, shape index: {}]
  %s1 = inlined_call_operand.vmem [shape: bf16[16,288], index: 1, kind: input, shape index: {}]
  %s2 = inlined_call_operand.vmem [shape: f32[16,1], index: 2, kind: input, shape index: {}]
  %s3 = inlined_call_operand.vmem [shape: bf16[16,128], index: 3, kind: output, shape index: {}]
  %s4 = sld [smem:[#allocation0]]
  $region22: #{segmentation_net_forward.23} parent=0
    _
  %s6 = ssub.s32 1, %s4
  %s7 = scalar_select 0, %s6, %s4
  // Predicated region
  $region2: #{segmentation_net_forward.23} parent=0 // pred_check
    _
  $region3: #{segmentation_net_forward.23} parent=0 // pred_check_branch
    %9 = sbr.rel (0) target = $region5
  $region4: #{segmentation_net_forward.23} parent=0 // pred_region
    _
  $region5: #{segmentation_net_forward.23} parent=0 // pred_fallthru
    _
  // Predicated region
  $region6: #{segmentation_net_forward.23} parent=0 // pred_check
    _
  $region7: #{segmentation_net_forward.23} parent=0 // pred_check_branch
    %11 = sbr.rel (0) target = $region9
  $region8: #{segmentation_net_forward.23} parent=0 // pred_region
    _
  $region9: #{segmentation_net_forward.23} parent=0 // pred_fallthru
    _
  // Predicated region
  $region10: #{segmentation_net_forward.23} parent=0 // pred_check
    _
  $region11: #{segmentation_net_forward.23} parent=0 // pred_check_branch
    %13 = sbr.rel (0) target = $region13
  $region12: #{segmentation_net_forward.23} parent=0 // pred_region
    _
  $region13: #{segmentation_net_forward.23} parent=0 // pred_fallthru
    _
  %v15 = vld [vmem:[%s1] sm:$0xff]
  %v16 = vld [vmem:[%s1 + $0x8] sm:$0xf]
  %v17 = vld [vmem:[%s1 + $0xc] sm:$0xff]
  %v18 = vld [vmem:[%s1 + $0x14] sm:$0xf]
  %v19 = vld [vmem:[%s0] sm:$0xf]
  %v20 = vld [vmem:[%s0 + $0x4] sm:$0xf]
  %v21 = vld [vmem:[%s0 + $0x8] sm:$0xf]
  %v22 = vld [vmem:[%s0 + $0xc] sm:$0xf]
  %v23 = vld [vmem:[%s0 + $0x10] sm:$0xf]
  %v24 = vld [vmem:[%s0 + $0x14] sm:$0xf]
  %v25 = vld [vmem:[%s0 + $0x18] sm:$0xf]
  %v26 = vld [vmem:[%s0 + $0x1c] sm:$0xf]
  %v27 = vld [vmem:[%s0 + $0x20] sm:$0xf]
  %v28 = vld [vmem:[%s0 + $0x24] sm:$0xf]
  %v29 = vld [vmem:[%s0 + $0x28] sm:$0xf]
  %v30 = vld [vmem:[%s0 + $0x2c] sm:$0xf]
  %v31 = vld [vmem:[%s0 + $0x30] sm:$0xf]
  %v32 = vld [vmem:[%s0 + $0x34] sm:$0xf]
  %v33 = vld [vmem:[%s0 + $0x38] sm:$0xf]
  %v34 = vld [vmem:[%s0 + $0x3c] sm:$0xf]
  %v35 = vld [vmem:[%s0 + $0x40] sm:$0xf]
  %v36 = vld [vmem:[%s0 + $0x44] sm:$0xf]
  %v37 = vld [vmem:[%s0 + $0x48] sm:$0xf]
  %v38 = vld [vmem:[%s0 + $0x4c] sm:$0xf]
  %v39 = vld [vmem:[%s0 + $0x50] sm:$0xf]
  %v40 = vld [vmem:[%s0 + $0x54] sm:$0xf]
  %v41 = vld [vmem:[%s0 + $0x58] sm:$0xf]
  %v42 = vld [vmem:[%s0 + $0x5c] sm:$0xf]
  %v43 = vld [vmem:[%s0 + $0x60] sm:$0xf]
  %v44 = vld [vmem:[%s0 + $0x64] sm:$0xf]
  %v45 = vld [vmem:[%s0 + $0x68] sm:$0xf]
  %v46 = vld [vmem:[%s0 + $0x6c] sm:$0xf]
  %v47 = vld [vmem:[%s0 + $0x70] sm:$0xf]
  %v48 = vld [vmem:[%s0 + $0x74] sm:$0xf]
  %v49 = vld [vmem:[%s0 + $0x78] sm:$0xf]
  %v50 = vld [vmem:[%s0 + $0x7c] sm:$0xf]
  %v51 = vld [vmem:[%s0 + $0x80] sm:$0xf]
  %v52 = vld [vmem:[%s0 + $0x84] sm:$0xf]
  %v53 = vld [vmem:[%s0 + $0x88] sm:$0xf]
  %v54 = vld [vmem:[%s0 + $0x8c] sm:$0xf]
  %v55 = vld [vmem:[%s2] sm:$0xff]
  %v56 = vld [vmem:[%s2 + $0x8] sm:$0xff]
  %58 = vset.pattern.permute.xlu0 0
  %59 = vperm.xlu0 %58, %v55
  %v60 = vpop.permute.xlu0 %59
  %63 = vset.pattern.permute.xlu0 0
  %64 = vperm.xlu0 %63, %v56
  %v65 = vpop.permute.xlu0 %64
  %v71 = vunpack.c.l.b16 %v15
  %v72 = vunpack.c.h.b16 %v15
  %v73 = vunpack.c.l.b16 %v16
  %v74 = vunpack.c.l.b16 %v17
  %v75 = vunpack.c.h.b16 %v17
  %v76 = vunpack.c.l.b16 %v18
  %v77 = vpack.c.b16 %v74, %v71
  %v78 = vpack.c.b16 %v75, %v72
  %v79 = vpack.c.b16 %v76, %v73
  %v118 = vunpack.c.l.b16 %v19
  %v119 = vunpack.c.l.b16 %v20
  %v120 = vunpack.c.l.b16 %v21
  %v121 = vunpack.c.l.b16 %v22
  %v122 = vunpack.c.l.b16 %v23
  %v123 = vunpack.c.l.b16 %v24
  %v124 = vunpack.c.l.b16 %v25
  %v125 = vunpack.c.l.b16 %v26
  %v126 = vunpack.c.l.b16 %v27
  %v127 = vunpack.c.l.b16 %v28
  %v128 = vunpack.c.l.b16 %v29
  %v129 = vunpack.c.l.b16 %v30
  %v130 = vunpack.c.l.b16 %v31
  %v131 = vunpack.c.l.b16 %v32
  %v132 = vunpack.c.l.b16 %v33
  %v133 = vunpack.c.l.b16 %v34
  %v134 = vunpack.c.l.b16 %v35
  %v135 = vunpack.c.l.b16 %v36
  %v136 = vunpack.c.l.b16 %v37
  %v137 = vunpack.c.l.b16 %v38
  %v138 = vunpack.c.l.b16 %v39
  %v139 = vunpack.c.l.b16 %v40
  %v140 = vunpack.c.l.b16 %v41
  %v141 = vunpack.c.l.b16 %v42
  %v142 = vunpack.c.l.b16 %v43
  %v143 = vunpack.c.l.b16 %v44
  %v144 = vunpack.c.l.b16 %v45
  %v145 = vunpack.c.l.b16 %v46
  %v146 = vunpack.c.l.b16 %v47
  %v147 = vunpack.c.l.b16 %v48
  %v148 = vunpack.c.l.b16 %v49
  %v149 = vunpack.c.l.b16 %v50
  %v150 = vunpack.c.l.b16 %v51
  %v151 = vunpack.c.l.b16 %v52
  %v152 = vunpack.c.l.b16 %v53
  %v153 = vunpack.c.l.b16 %v54
  %v154 = vpack.c.b16 %v119, %v118
  %v155 = vpack.c.b16 %v121, %v120
  %v156 = vpack.c.b16 %v123, %v122
  %v157 = vpack.c.b16 %v125, %v124
  %v158 = vpack.c.b16 %v127, %v126
  %v159 = vpack.c.b16 %v129, %v128
  %v160 = vpack.c.b16 %v131, %v130
  %v161 = vpack.c.b16 %v133, %v132
  %v162 = vpack.c.b16 %v135, %v134
  %v163 = vpack.c.b16 %v137, %v136
  %v164 = vpack.c.b16 %v139, %v138
  %v165 = vpack.c.b16 %v141, %v140
  %v166 = vpack.c.b16 %v143, %v142
  %v167 = vpack.c.b16 %v145, %v144
  %v168 = vpack.c.b16 %v147, %v146
  %v169 = vpack.c.b16 %v149, %v148
  %v170 = vpack.c.b16 %v151, %v150
  %v171 = vpack.c.b16 %v153, %v152
  %vm190 = vcmask 261120
  %v192 = vsel %vm190, %v79, 0
  %194 = vmatpush.bf16.msra.mxu0 %v161
  %195 = vmatpush.bf16.msra.mxu0 %v160
  %196 = vmatpush.bf16.msra.mxu0 %v159
  %197 = vmatpush.bf16.msra.mxu0 %v158
  %198 = vmatpush.bf16.msra.mxu0 %v157
  %199 = vmatpush.bf16.msra.mxu0 %v156
  %200 = vmatpush.bf16.msra.mxu0 %v155
  %201 = vmatpush.bf16.msra.mxu0 %v154
  %202 = vmatmul.bf16.gmra.mxu0 %v77
  %v203 = vpop.f32.mrf.mxu0
  %v204 = vadd.f32 %v60, %v203
  %v205 = vpop.f32.mrf.mxu0
  %v206 = vadd.f32 %v65, %v205
  %207 = vdwg.mxu0
  %208 = vmatpush.bf16.msra.mxu0 %v169
  %209 = vmatpush.bf16.msra.mxu0 %v168
  %210 = vmatpush.bf16.msra.mxu0 %v167
  %211 = vmatpush.bf16.msra.mxu0 %v166
  %212 = vmatpush.bf16.msra.mxu0 %v165
  %213 = vmatpush.bf16.msra.mxu0 %v164
  %214 = vmatpush.bf16.msra.mxu0 %v163
  %215 = vmatpush.bf16.msra.mxu0 %v162
  %216 = vmatmul.bf16.gmra.mxu0 %v78
  %v217 = vpop.f32.mrf.mxu0
  %v218 = vadd.f32 %v204, %v217
  %v219 = vpop.f32.mrf.mxu0
  %v220 = vadd.f32 %v206, %v219
  %221 = vdwg.mxu0
  %222 = vmatpush.bf16.msra.mxu0 0
  %223 = vmatpush.bf16.msra.mxu0 0
  %224 = vmatpush.bf16.msra.mxu0 0
  %225 = vmatpush.bf16.msra.mxu0 0
  %226 = vmatpush.bf16.msra.mxu0 0
  %227 = vmatpush.bf16.msra.mxu0 0
  %228 = vmatpush.bf16.msra.mxu0 %v171
  %229 = vmatpush.bf16.msra.mxu0 %v170
  %230 = vmatmul.bf16.gmra.mxu0 %v192
  %v231 = vpop.f32.mrf.mxu0
  %v232 = vadd.f32 %v218, %v231
  %v233 = vpop.f32.mrf.mxu0
  %v234 = vadd.f32 %v220, %v233
  %235 = vdwg.mxu0
  %v236 = vmax.f32 %v232, 0.0
  %v237 = vmax.f32 %v234, 0.0
  %v238 = vpack.c.bf16 %v236, %v236
  %v239 = vpack.c.bf16 %v237, %v237
  %240 = vst [vmem:[%s3] sm:$0xf] %v238
  %241 = vst [vmem:[%s3 + $0x4] sm:$0xf] %v239
  // Predicated region
  $region14: #{segmentation_net_forward.23} parent=0 // pred_check
    _
  $region15: #{segmentation_net_forward.23} parent=0 // pred_check_branch
    %243 = sbr.rel (0) target = $region17
  $region16: #{segmentation_net_forward.23} parent=0 // pred_region
    _
  $region17: #{segmentation_net_forward.23} parent=0 // pred_fallthru
    _
  // Predicated region
  $region18: #{segmentation_net_forward.23} parent=0 // pred_check
    _
  $region19: #{segmentation_net_forward.23} parent=0 // pred_check_branch
    %245 = sbr.rel (0) target = $region21
  $region20: #{segmentation_net_forward.23} parent=0 // pred_region
    _
  $region21: #{segmentation_net_forward.23} parent=0 // pred_fallthru
    _

// kernel: segmentation_net_forward.25
$region0: #{segmentation_net_forward.25}
  #allocation0 [shape = 'u32[]', space=smem, size = 0x4, offset = 0x4, fixed_abs, tag = 'smem constant byte address 0x4 - core index']
  #allocation1 [shape = 'u32[72,128]{1,0:T(1,128)}', space=vmem, size = 0x9000, scoped, tag = 'internal scratch']
  %s0 = inlined_call_operand.vmem [shape: bf16[216,512], index: 0, kind: input, shape index: {}]
  %s1 = inlined_call_operand.vmem [shape: bf16[8,216], index: 1, kind: input, shape index: {}]
  %s2 = inlined_call_operand.vmem [shape: f32[8,1], index: 2, kind: input, shape index: {}]
  %s3 = inlined_call_operand.vmem [shape: bf16[8,512], index: 3, kind: output, shape index: {}]
  %s4 = sld [smem:[#allocation0]]
  $region83: #{segmentation_net_forward.25} parent=0
    _
  %s6 = ssub.s32 1, %s4
  %s7 = scalar_select 0, %s6, %s4
  $region1: #{segmentation_net_forward.25} parent=0
    #allocation2 [shape = 'u8[221184]{0}', space=vmem, size = 0x36000, scoped, tag = 'input window, operand 0']
    loop: start=0, step=1, limit=4
    $region2: #{segmentation_net_forward.25} parent=1 // loop_pre_header
      _
    $region3: #{segmentation_net_forward.25} parent=1 // loop_header
      %s9 = sphi 0, %s13
      %p10 = scmp.ge.s32.totalorder %s9, 4
      %s19 = sphi 0, %s21
      %s22 = sphi 0, %s19
      %s23 = sphi 0, %s22
      %s39 = sphi 0, %s23
      %s43 = sphi 0, %s43
      %s45 = sphi 0, %s43
      %s46 = sphi 0, %s45
      %s60 = sphi 0, %s46
      %s64 = sphi 0, %s64
      %s66 = sphi 0, %s64
      %s67 = sphi 0, %s66
      %s81 = sphi 0, %s67
      %s87 = sphi 0, %s89
      %s90 = sphi 0, %s87
      %s91 = sphi 0, %s90
      %s107 = sphi 0, %s91
    $region4: #{segmentation_net_forward.25} parent=1 // loop_header_branch
      %12 = sbr.rel (%p10) target = $region8
    $region5: #{segmentation_net_forward.25} parent=1 // loop_body
      %s14 = ssub.s32 %s9, 1
      %s15 = ssub.s32 %s9, 2
      %s16 = sadd.s32 %s9, 1
      %s17 = ssub.s32 %s9, %s16
      %p18 = scmp.eq.s32.totalorder %s17, 0
      %s20 = sadd.s32 %s19, 1
      %s21 = scalar_select %p18, %s19, %s20
      %p24 = pneg %p18
      %p25 = scmp.eq.s32.totalorder %s9, 1
      %p26 = por %p24, %p25
      %p27 = scmp.ne.s32.totalorder %s19, %s22
      %p28 = scmp.eq.s32.totalorder %s9, 0
      %p29 = por %p27, %p28
      %p30 = scmp.ne.s32.totalorder %s19, %s22
      %p31 = scmp.eq.s32.totalorder %s14, 1
      %p32 = por %p30, %p31
      %p33 = scmp.ne.s32.totalorder %s22, %s23
      %p34 = scmp.eq.s32.totalorder %s14, 0
      %p35 = por %p33, %p34
      %p36 = scmp.ne.s32.totalorder %s22, %s23
      %p37 = scmp.eq.s32.totalorder %s15, 1
      %p38 = por %p36, %p37
      %p40 = scmp.ne.s32.totalorder %s23, %s39
      %p41 = scmp.eq.s32.totalorder %s15, 0
      %p42 = por %p40, %p41
      %s44 = sadd.s32 %s43, 1
      %p47 = scmp.eq.s32.totalorder %s9, 1
      %p48 = scmp.ne.s32.totalorder %s43, %s45
      %p49 = scmp.eq.s32.totalorder %s9, 0
      %p50 = por %p48, %p49
      %p51 = scmp.ne.s32.totalorder %s43, %s45
      %p52 = scmp.eq.s32.totalorder %s14, 1
      %p53 = por %p51, %p52
      %p54 = scmp.ne.s32.totalorder %s45, %s46
      %p55 = scmp.eq.s32.totalorder %s14, 0
      %p56 = por %p54, %p55
      %p57 = scmp.ne.s32.totalorder %s45, %s46
      %p58 = scmp.eq.s32.totalorder %s15, 1
      %p59 = por %p57, %p58
      %p61 = scmp.ne.s32.totalorder %s46, %s60
      %p62 = scmp.eq.s32.totalorder %s15, 0
      %p63 = por %p61, %p62
      %s65 = sadd.s32 %s64, 1
      %p68 = scmp.eq.s32.totalorder %s9, 1
      %p69 = scmp.ne.s32.totalorder %s64, %s66
      %p70 = scmp.eq.s32.totalorder %s9, 0
      %p71 = por %p69, %p70
      %p72 = scmp.ne.s32.totalorder %s64, %s66
      %p73 = scmp.eq.s32.totalorder %s14, 1
      %p74 = por %p72, %p73
      %p75 = scmp.ne.s32.totalorder %s66, %s67
      %p76 = scmp.eq.s32.totalorder %s14, 0
      %p77 = por %p75, %p76
      %p78 = scmp.ne.s32.totalorder %s66, %s67
      %p79 = scmp.eq.s32.totalorder %s15, 1
      %p80 = por %p78, %p79
      %p82 = scmp.ne.s32.totalorder %s67, %s81
      %p83 = scmp.eq.s32.totalorder %s15, 0
      %p84 = por %p82, %p83
      %s85 = ssub.s32 %s9, %s16
      %p86 = scmp.eq.s32.totalorder %s85, 0
      %s88 = sadd.s32 %s87, 1
      %s89 = scalar_select %p86, %s87, %s88
      %p92 = pneg %p86
      %p93 = scmp.eq.s32.totalorder %s9, 1
      %p94 = por %p92, %p93
      %p95 = scmp.ne.s32.totalorder %s87, %s90
      %p96 = scmp.eq.s32.totalorder %s9, 0
      %p97 = por %p95, %p96
      %p98 = scmp.ne.s32.totalorder %s87, %s90
      %p99 = scmp.eq.s32.totalorder %s14, 1
      %p100 = por %p98, %p99
      %p101 = scmp.ne.s32.totalorder %s90, %s91
      %p102 = scmp.eq.s32.totalorder %s14, 0
      %p103 = por %p101, %p102
      %p104 = scmp.ne.s32.totalorder %s90, %s91
      %p105 = scmp.eq.s32.totalorder %s15, 1
      %p106 = por %p104, %p105
      %p108 = scmp.ne.s32.totalorder %s91, %s107
      %p109 = scmp.eq.s32.totalorder %s15, 0
      %p110 = por %p108, %p109
      %p111 = scmp.le.s32.totalorder 1, %s9
      %p112 = scmp.lt.s32.totalorder %s9, 3
      %p113 = pnand %p111, %p112
      %p114 = pneg %p113
      // Predicated region
      $region9: #{segmentation_net_forward.25} parent=5 // pred_check
        _
      $region10: #{segmentation_net_forward.25} parent=5 // pred_check_branch
        %116 = sbr.rel (%p113) target = $region12
      $region11: #{segmentation_net_forward.25} parent=5 // pred_region
        %s117 = ssub.s32 %s9, 1
        // Predicated region
        $region13: #{segmentation_net_forward.25} parent=11 // pred_check
          %p118 = pneg %p56
        $region14: #{segmentation_net_forward.25} parent=11 // pred_check_branch
          %120 = sbr.rel (%p118) target = $region16
        $region15: #{segmentation_net_forward.25} parent=11 // pred_region
          _
        $region16: #{segmentation_net_forward.25} parent=11 // pred_fallthru
          _
        // Predicated region
        $region17: #{segmentation_net_forward.25} parent=11 // pred_check
          %p121 = pneg %p77
        $region18: #{segmentation_net_forward.25} parent=11 // pred_check_branch
          %123 = sbr.rel (%p121) target = $region20
        $region19: #{segmentation_net_forward.25} parent=11 // pred_region
          _
        $region20: #{segmentation_net_forward.25} parent=11 // pred_fallthru
          _
      $region12: #{segmentation_net_forward.25} parent=5 // pred_fallthru
        _
      %p124 = scmp.lt.s32.totalorder %s9, 2
      // Predicated region
      $region21: #{segmentation_net_forward.25} parent=5 // pred_check
        %p125 = pneg %p124
      $region22: #{segmentation_net_forward.25} parent=5 // pred_check_branch
        %127 = sbr.rel (%p125) target = $region24
      $region23: #{segmentation_net_forward.25} parent=5 // pred_region
        // Predicated region
        $region25: #{segmentation_net_forward.25} parent=23 // pred_check
          %p128 = pneg %p29
        $region26: #{segmentation_net_forward.25} parent=23 // pred_check_branch
          %130 = sbr.rel (%p128) target = $region28
        $region27: #{segmentation_net_forward.25} parent=23 // pred_region
          %s131 = sand.u32 %s19, 1
          %s132 = sand.u32 %s19, 1
          %s133 = smul.addr %s132, 216
          %s134 = scalar_lea.vmem [#allocation2], %s133
          %s135 = smul.u32 2, %s9
          %s136 = smul.addr %s135, 4
          %s137 = scalar_lea.vmem %s0, %s136
          // Predicated region
          $region29: #{segmentation_net_forward.25} parent=27 // pred_check
            _
          $region30: #{segmentation_net_forward.25} parent=27 // pred_check_branch
            %139 = sbr.rel (0) target = $region32
          $region31: #{segmentation_net_forward.25} parent=27 // pred_region
            // Predicated region
            $region33: #{segmentation_net_forward.25} parent=31 // pred_check
              _
            $region34: #{segmentation_net_forward.25} parent=31 // pred_check_branch
              %141 = sbr.rel (0) target = $region36
            $region35: #{segmentation_net_forward.25} parent=31 // pred_region
              // Predicated region
              $region48: #{segmentation_net_forward.25} parent=35 // pred_check
                _
              $region49: #{segmentation_net_forward.25} parent=35 // pred_check_branch
                %209 = sbr.rel (0) target = $region51
              $region50: #{segmentation_net_forward.25} parent=35 // pred_region
                loop: start=0, step=1, limit=1
                $region52: #{segmentation_net_forward.25} parent=50 // loop_pre_header
                  _
                $region53: #{segmentation_net_forward.25} parent=50 // loop_header
                  %s211 = sphi 0, %s215
                  %p212 = scmp.ge.s32.totalorder %s211, 1
                  %s216 = sphi %s137, %s137
                  %s217 = sphi %s134, %s134
                $region54: #{segmentation_net_forward.25} parent=50 // loop_header_branch
                  %214 = sbr.rel (%p212) target = $region58
                $region55: #{segmentation_net_forward.25} parent=50 // loop_body
                  %v218 = vld [vmem:[%s216] sm:$0xff]
                  %219 = vst [vmem:[%s217] sm:$0xff] %v218
                  %v220 = vld [vmem:[%s216 + $0x10] sm:$0xff]
                  %221 = vst [vmem:[%s217 + $0x8] sm:$0xff] %v220
                  %v222 = vld [vmem:[%s216 + $0x20] sm:$0xff]
                  %223 = vst [vmem:[%s217 + $0x10] sm:$0xff] %v222
                  %v224 = vld [vmem:[%s216 + $0x30] sm:$0xff]
                  %225 = vst [vmem:[%s217 + $0x18] sm:$0xff] %v224
                  %v226 = vld [vmem:[%s216 + $0x40] sm:$0xff]
                  %227 = vst [vmem:[%s217 + $0x20] sm:$0xff] %v226
                  %v228 = vld [vmem:[%s216 + $0x50] sm:$0xff]
                  %229 = vst [vmem:[%s217 + $0x28] sm:$0xff] %v228
                  %v230 = vld [vmem:[%s216 + $0x60] sm:$0xff]
                  %231 = vst [vmem:[%s217 + $0x30] sm:$0xff] %v230
                  %v232 = vld [vmem:[%s216 + $0x70] sm:$0xff]
                  %233 = vst [vmem:[%s217 + $0x38] sm:$0xff] %v232
                  %v234 = vld [vmem:[%s216 + $0x80] sm:$0xff]
                  %235 = vst [vmem:[%s217 + $0x40] sm:$0xff] %v234
                  %v236 = vld [vmem:[%s216 + $0x90] sm:$0xff]
                  %237 = vst [vmem:[%s217 + $0x48] sm:$0xff] %v236
                  %v238 = vld [vmem:[%s216 + $0xa0] sm:$0xff]
                  %239 = vst [vmem:[%s217 + $0x50] sm:$0xff] %v238
                  %v240 = vld [vmem:[%s216 + $0xb0] sm:$0xff]
                  %241 = vst [vmem:[%s217 + $0x58] sm:$0xff] %v240
                  %v242 = vld [vmem:[%s216 + $0xc0] sm:$0xff]
                  %243 = vst [vmem:[%s217 + $0x60] sm:$0xff] %v242
                  %v244 = vld [vmem:[%s216 + $0xd0] sm:$0xff]
                  %245 = vst [vmem:[%s217 + $0x68] sm:$0xff] %v244
                  %v246 = vld [vmem:[%s216 + $0xe0] sm:$0xff]
                  %247 = vst [vmem:[%s217 + $0x70] sm:$0xff] %v246
                  %v248 = vld [vmem:[%s216 + $0xf0] sm:$0xff]
                  %249 = vst [vmem:[%s217 + $0x78] sm:$0xff] %v248
                  %v250 = vld [vmem:[%s216 + $0x100] sm:$0xff]
                  %251 = vst [vmem:[%s217 + $0x80] sm:$0xff] %v250
                  %v252 = vld [vmem:[%s216 + $0x110] sm:$0xff]
                  %253 = vst [vmem:[%s217 + $0x88] sm:$0xff] %v252
                  %v254 = vld [vmem:[%s216 + $0x120] sm:$0xff]
                  %255 = vst [vmem:[%s217 + $0x90] sm:$0xff] %v254
                  %v256 = vld [vmem:[%s216 + $0x130] sm:$0xff]
                  %257 = vst [vmem:[%s217 + $0x98] sm:$0xff] %v256
                  %v258 = vld [vmem:[%s216 + $0x140] sm:$0xff]
                  %259 = vst [vmem:[%s217 + $0xa0] sm:$0xff] %v258
                  %v260 = vld [vmem:[%s216 + $0x150] sm:$0xff]
                  %261 = vst [vmem:[%s217 + $0xa8] sm:$0xff] %v260
                  %v262 = vld [vmem:[%s216 + $0x160] sm:$0xff]
                  %263 = vst [vmem:[%s217 + $0xb0] sm:$0xff] %v262
                  %v264 = vld [vmem:[%s216 + $0x170] sm:$0xff]
                  %265 = vst [vmem:[%s217 + $0xb8] sm:$0xff] %v264
                  %v266 = vld [vmem:[%s216 + $0x180] sm:$0xff]
                  %267 = vst [vmem:[%s217 + $0xc0] sm:$0xff] %v266
                  %v268 = vld [vmem:[%s216 + $0x190] sm:$0xff]
                  %269 = vst [vmem:[%s217 + $0xc8] sm:$0xff] %v268
                  %v270 = vld [vmem:[%s216 + $0x1a0] sm:$0xff]
                  %271 = vst [vmem:[%s217 + $0xd0] sm:$0xff] %v270
                $region56: #{segmentation_net_forward.25} parent=50 // loop_footer
                  %s215 = sadd.s32 1, %s211
                $region57: #{segmentation_net_forward.25} parent=50 // loop_footer_branch
                  %210 = sbr.rel target = $region53
                $region58: #{segmentation_net_forward.25} parent=50 // loop_exit
                  _
              $region51: #{segmentation_net_forward.25} parent=35 // pred_fallthru
                _
              // Predicated region
              $region59: #{segmentation_net_forward.25} parent=35 // pred_check
                _
              $region60: #{segmentation_net_forward.25} parent=35 // pred_check_branch
                %273 = sbr.rel target = $region62
              $region61: #{segmentation_net_forward.25} parent=35 // pred_region
                _
              $region62: #{segmentation_net_forward.25} parent=35 // pred_fallthru
                _
            $region36: #{segmentation_net_forward.25} parent=31 // pred_fallthru
              _
            // Predicated region
            $region37: #{segmentation_net_forward.25} parent=31 // pred_check
              _
            $region38: #{segmentation_net_forward.25} parent=31 // pred_check_branch
              %143 = sbr.rel target = $region40
            $region39: #{segmentation_net_forward.25} parent=31 // pred_region
              %s145 = ssub.s32 256, 1
              loop: start=0, step=1, limit=1
              $region41: #{segmentation_net_forward.25} parent=39 // loop_pre_header
                _
              $region42: #{segmentation_net_forward.25} parent=39 // loop_header
                %s147 = sphi 0, %s151
                %p148 = scmp.ge.s32.totalorder %s147, 1
                %s152 = sphi %s137, %s137
                %s153 = sphi %s134, %s134
              $region43: #{segmentation_net_forward.25} parent=39 // loop_header_branch
                %150 = sbr.rel (%p148) target = $region47
              $region44: #{segmentation_net_forward.25} parent=39 // loop_body
                %v154 = vld [vmem:[%s152] sm:%s145]
                %155 = vst [vmem:[%s153] sm:%s145] %v154
                %v156 = vld [vmem:[%s152 + $0x10] sm:%s145]
                %157 = vst [vmem:[%s153 + $0x8] sm:%s145] %v156
                %v158 = vld [vmem:[%s152 + $0x20] sm:%s145]
                %159 = vst [vmem:[%s153 + $0x10] sm:%s145] %v158
                %v160 = vld [vmem:[%s152 + $0x30] sm:%s145]
                %161 = vst [vmem:[%s153 + $0x18] sm:%s145] %v160
                %v162 = vld [vmem:[%s152 + $0x40] sm:%s145]
                %163 = vst [vmem:[%s153 + $0x20] sm:%s145] %v162
                %v164 = vld [vmem:[%s152 + $0x50] sm:%s145]
                %165 = vst [vmem:[%s153 + $0x28] sm:%s145] %v164
                %v166 = vld [vmem:[%s152 + $0x60] sm:%s145]
                %167 = vst [vmem:[%s153 + $0x30] sm:%s145] %v166
                %v168 = vld [vmem:[%s152 + $0x70] sm:%s145]
                %169 = vst [vmem:[%s153 + $0x38] sm:%s145] %v168
                %v170 = vld [vmem:[%s152 + $0x80] sm:%s145]
                %171 = vst [vmem:[%s153 + $0x40] sm:%s145] %v170
                %v172 = vld [vmem:[%s152 + $0x90] sm:%s145]
                %173 = vst [vmem:[%s153 + $0x48] sm:%s145] %v172
                %v174 = vld [vmem:[%s152 + $0xa0] sm:%s145]
                %175 = vst [vmem:[%s153 + $0x50] sm:%s145] %v174
                %v176 = vld [vmem:[%s152 + $0xb0] sm:%s145]
                %177 = vst [vmem:[%s153 + $0x58] sm:%s145] %v176
                %v178 = vld [vmem:[%s152 + $0xc0] sm:%s145]
                %179 = vst [vmem:[%s153 + $0x60] sm:%s145] %v178
                %v180 = vld [vmem:[%s152 + $0xd0] sm:%s145]
                %181 = vst [vmem:[%s153 + $0x68] sm:%s145] %v180
                %v182 = vld [vmem:[%s152 + $0xe0] sm:%s145]
                %183 = vst [vmem:[%s153 + $0x70] sm:%s145] %v182
                %v184 = vld [vmem:[%s152 + $0xf0] sm:%s145]
                %185 = vst [vmem:[%s153 + $0x78] sm:%s145] %v184
                %v186 = vld [vmem:[%s152 + $0x100] sm:%s145]
                %187 = vst [vmem:[%s153 + $0x80] sm:%s145] %v186
                %v188 = vld [vmem:[%s152 + $0x110] sm:%s145]
                %189 = vst [vmem:[%s153 + $0x88] sm:%s145] %v188
                %v190 = vld [vmem:[%s152 + $0x120] sm:%s145]
                %191 = vst [vmem:[%s153 + $0x90] sm:%s145] %v190
                %v192 = vld [vmem:[%s152 + $0x130] sm:%s145]
                %193 = vst [vmem:[%s153 + $0x98] sm:%s145] %v192
                %v194 = vld [vmem:[%s152 + $0x140] sm:%s145]
                %195 = vst [vmem:[%s153 + $0xa0] sm:%s145] %v194
                %v196 = vld [vmem:[%s152 + $0x150] sm:%s145]
                %197 = vst [vmem:[%s153 + $0xa8] sm:%s145] %v196
                %v198 = vld [vmem:[%s152 + $0x160] sm:%s145]
                %199 = vst [vmem:[%s153 + $0xb0] sm:%s145] %v198
                %v200 = vld [vmem:[%s152 + $0x170] sm:%s145]
                %201 = vst [vmem:[%s153 + $0xb8] sm:%s145] %v200
                %v202 = vld [vmem:[%s152 + $0x180] sm:%s145]
                %203 = vst [vmem:[%s153 + $0xc0] sm:%s145] %v202
                %v204 = vld [vmem:[%s152 + $0x190] sm:%s145]
                %205 = vst [vmem:[%s153 + $0xc8] sm:%s145] %v204
                %v206 = vld [vmem:[%s152 + $0x1a0] sm:%s145]
                %207 = vst [vmem:[%s153 + $0xd0] sm:%s145] %v206
              $region45: #{segmentation_net_forward.25} parent=39 // loop_footer
                %s151 = sadd.s32 1, %s147
              $region46: #{segmentation_net_forward.25} parent=39 // loop_footer_branch
                %146 = sbr.rel target = $region42
              $region47: #{segmentation_net_forward.25} parent=39 // loop_exit
                _
            $region40: #{segmentation_net_forward.25} parent=31 // pred_fallthru
              _
          $region32: #{segmentation_net_forward.25} parent=27 // pred_fallthru
            _
          %274 = vnop
        $region28: #{segmentation_net_forward.25} parent=23 // pred_fallthru
          _
      $region24: #{segmentation_net_forward.25} parent=5 // pred_fallthru
        _
      %p275 = scmp.le.s32.totalorder 1, %s9
      %p276 = scmp.lt.s32.totalorder %s9, 3
      %p277 = pnand %p275, %p276
      %p278 = pneg %p277
      // Predicated region
      $region63: #{segmentation_net_forward.25} parent=5 // pred_check
        _
      $region64: #{segmentation_net_forward.25} parent=5 // pred_check_branch
        %280 = sbr.rel (%p277) target = $region66
      $region65: #{segmentation_net_forward.25} parent=5 // pred_region
        %s281 = ssub.s32 %s9, 1
        %s282 = sand.u32 %s22, 1
        %s283 = sand.u32 %s22, 1
        %s284 = smul.addr %s283, 216
        %s285 = scalar_lea.vmem [#allocation2], %s284
        // Predicated region
        $region67: #{segmentation_net_forward.25} parent=65 // pred_check
          %p286 = pneg %p35
        $region68: #{segmentation_net_forward.25} parent=65 // pred_check_branch
          %288 = sbr.rel (%p286) target = $region70
        $region69: #{segmentation_net_forward.25} parent=65 // pred_region
          _
        $region70: #{segmentation_net_forward.25} parent=65 // pred_fallthru
          _
        %s289 = sand.u32 %s22, 1
        %s290 = sand.u32 %s22, 1
        %s291 = smul.addr %s290, 216
        %s292 = scalar_lea.vmem [#allocation2], %s291
        %p293 = pneg %p35
        %p294 = pneg %p32
        %p295 = pneg %p56
        %p296 = pneg %p53
        %p297 = pneg %p77
        %p298 = pneg %p74
        %p299 = pneg %p103
        %p300 = pneg %p100
        %s301 = smul.u32 2, %s14
        %p302 = scmp.lt.s32.totalorder %s301, 3
        %s303 = scalar_select %p302, %s301, 3
        %s304 = smul.addr %s303, 4
        %s305 = scalar_lea.vmem %s3, %s304
        %s306 = smul.u32 2, %s14
        %s307 = smul.u32 2, %s14
        %p308 = scmp.lt.s32.totalorder %s307, 3
        %s309 = scalar_select %p308, %s307, 3
        %s310 = smul.addr %s309, 4
        %s311 = scalar_lea.vmem %s3, %s310
        %s312 = smul.u32 2, %s14
        %v314 = vld [vmem:[%s1] sm:$0xff]
        %v315 = vld [vmem:[%s285] sm:$0xff]
        %v316 = vld [vmem:[%s285 + $0x8] sm:$0xff]
        %v317 = vld [vmem:[%s285 + $0x10] sm:$0xff]
        %v318 = vld [vmem:[%s285 + $0x18] sm:$0xff]
        %v319 = vld [vmem:[%s285 + $0x20] sm:$0xff]
        %v320 = vld [vmem:[%s285 + $0x28] sm:$0xff]
        %v321 = vld [vmem:[%s285 + $0x30] sm:$0xff]
        %v322 = vld [vmem:[%s285 + $0x38] sm:$0xff]
        %v323 = vld [vmem:[%s285 + $0x40] sm:$0xff]
        %v324 = vld [vmem:[%s285 + $0x48] sm:$0xff]
        %v325 = vld [vmem:[%s285 + $0x50] sm:$0xff]
        %v326 = vld [vmem:[%s285 + $0x58] sm:$0xff]
        %v327 = vld [vmem:[%s285 + $0x60] sm:$0xff]
        %v328 = vld [vmem:[%s285 + $0x68] sm:$0xff]
        %v329 = vld [vmem:[%s285 + $0x70] sm:$0xff]
        %v330 = vld [vmem:[%s285 + $0x78] sm:$0xff]
        %v331 = vld [vmem:[%s285 + $0x80] sm:$0xff]
        %v332 = vld [vmem:[%s285 + $0x88] sm:$0xff]
        %v333 = vld [vmem:[%s285 + $0x90] sm:$0xff]
        %v334 = vld [vmem:[%s285 + $0x98] sm:$0xff]
        %v335 = vld [vmem:[%s285 + $0xa0] sm:$0xff]
        %v336 = vld [vmem:[%s285 + $0xa8] sm:$0xff]
        %v337 = vld [vmem:[%s285 + $0xb0] sm:$0xff]
        %v338 = vld [vmem:[%s285 + $0xb8] sm:$0xff]
        %v339 = vld [vmem:[%s285 + $0xc0] sm:$0xff]
        %v340 = vld [vmem:[%s285 + $0xc8] sm:$0xff]
        %v341 = vld [vmem:[%s285 + $0xd0] sm:$0xff]
        %v342 = vld [vmem:[%s2] sm:$0xff]
        %344 = vset.pattern.permute.xlu0 0
        %345 = vperm.xlu0 %344, %v342
        %v346 = vpop.permute.xlu0 %345
        %v349 = vunpack.c.l.b16 %v314
        %v350 = vunpack.c.h.b16 %v314
        %v351 = vpack.c.b16 %v349, %v349
        %v352 = vpack.c.b16 %v350, %v350
        %v381 = vunpack.c.l.b16 %v315
        %v382 = vunpack.c.h.b16 %v315
        %v383 = vunpack.c.l.b16 %v316
        %v384 = vunpack.c.h.b16 %v316
        %v385 = vunpack.c.l.b16 %v317
        %v386 = vunpack.c.h.b16 %v317
        %v387 = vunpack.c.l.b16 %v318
        %v388 = vunpack.c.h.b16 %v318
        %v389 = vunpack.c.l.b16 %v319
        %v390 = vunpack.c.h.b16 %v319
        %v391 = vunpack.c.l.b16 %v320
        %v392 = vunpack.c.h.b16 %v320
        %v393 = vunpack.c.l.b16 %v321
        %v394 = vunpack.c.h.b16 %v321
        %v395 = vunpack.c.l.b16 %v322
        %v396 = vunpack.c.h.b16 %v322
        %v397 = vunpack.c.l.b16 %v323
        %v398 = vunpack.c.h.b16 %v323
        %v399 = vunpack.c.l.b16 %v324
        %v400 = vunpack.c.h.b16 %v324
        %v401 = vunpack.c.l.b16 %v325
        %v402 = vunpack.c.h.b16 %v325
        %v403 = vunpack.c.l.b16 %v326
        %v404 = vunpack.c.h.b16 %v326
        %v405 = vunpack.c.l.b16 %v327
        %v406 = vunpack.c.h.b16 %v327
        %v407 = vunpack.c.l.b16 %v328
        %v408 = vunpack.c.h.b16 %v328
        %v409 = vunpack.c.l.b16 %v329
        %v410 = vunpack.c.h.b16 %v329
        %v411 = vunpack.c.l.b16 %v330
        %v412 = vunpack.c.h.b16 %v330
        %v413 = vunpack.c.l.b16 %v331
        %v414 = vunpack.c.h.b16 %v331
        %v415 = vunpack.c.l.b16 %v332
        %v416 = vunpack.c.h.b16 %v332
        %v417 = vunpack.c.l.b16 %v333
        %v418 = vunpack.c.h.b16 %v333
        %v419 = vunpack.c.l.b16 %v334
        %v420 = vunpack.c.h.b16 %v334
        %v421 = vunpack.c.l.b16 %v335
        %v422 = vunpack.c.h.b16 %v335
        %v423 = vunpack.c.l.b16 %v336
        %v424 = vunpack.c.h.b16 %v336
        %v425 = vunpack.c.l.b16 %v337
        %v426 = vunpack.c.h.b16 %v337
        %v427 = vunpack.c.l.b16 %v338
        %v428 = vunpack.c.h.b16 %v338
        %v429 = vunpack.c.l.b16 %v339
        %v430 = vunpack.c.h.b16 %v339
        %v431 = vunpack.c.l.b16 %v340
        %v432 = vunpack.c.h.b16 %v340
        %v433 = vunpack.c.l.b16 %v341
        %v434 = vunpack.c.h.b16 %v341
        %v435 = vpack.c.b16 %v383, %v381
        %v436 = vpack.c.b16 %v384, %v382
        %v437 = vpack.c.b16 %v387, %v385
        %v438 = vpack.c.b16 %v388, %v386
        %v439 = vpack.c.b16 %v391, %v389
        %v440 = vpack.c.b16 %v392, %v390
        %v441 = vpack.c.b16 %v395, %v393
        %v442 = vpack.c.b16 %v396, %v394
        %v443 = vpack.c.b16 %v399, %v397
        %v444 = vpack.c.b16 %v400, %v398
        %v445 = vpack.c.b16 %v403, %v401
        %v446 = vpack.c.b16 %v404, %v402
        %v447 = vpack.c.b16 %v407, %v405
        %v448 = vpack.c.b16 %v408, %v406
        %v449 = vpack.c.b16 %v411, %v409
        %v450 = vpack.c.b16 %v412, %v410
        %v451 = vpack.c.b16 %v415, %v413
        %v452 = vpack.c.b16 %v416, %v414
        %v453 = vpack.c.b16 %v419, %v417
        %v454 = vpack.c.b16 %v420, %v418
        %v455 = vpack.c.b16 %v423, %v421
        %v456 = vpack.c.b16 %v424, %v422
        %v457 = vpack.c.b16 %v427, %v425
        %v458 = vpack.c.b16 %v428, %v426
        %v459 = vpack.c.b16 %v431, %v429
        %v460 = vpack.c.b16 %v432, %v430
        %v461 = vpack.c.b16 %v433, %v433
        %v462 = vpack.c.b16 %v434, %v434
        %vm489 = vcmask 719872
        %v491 = vsel %vm489, %v352, 0
        %vm493 = vcmask 1043456
        %v495 = vsel %vm493, %v461, 0
        %v498 = vsel %vm493, %v462, 0
        %500 = vmatpush.bf16.msra.mxu0 %v449
        %501 = vmatpush.bf16.msra.mxu0 %v447
        %502 = vmatpush.bf16.msra.mxu0 %v445
        %503 = vmatpush.bf16.msra.mxu0 %v443
        %504 = vmatpush.bf16.msra.mxu0 %v441
        %505 = vmatpush.bf16.msra.mxu0 %v439
        %506 = vmatpush.bf16.msra.mxu0 %v437
        %507 = vmatpush.bf16.msra.mxu0 %v435
        %508 = vmatmul.bf16.gmra.mxu0 %v351
        %v509 = vpop.f32.mrf.mxu0
        %v510 = vadd.f32 %v346, %v509
        %v511 = vpop.f32.mrf.mxu0
        %512 = vdwg.mxu0
        %513 = vmatpush.bf16.msra.mxu0 0
        %514 = vmatpush.bf16.msra.mxu0 0
        %515 = vmatpush.bf16.msra.mxu0 %v495
        %516 = vmatpush.bf16.msra.mxu0 %v459
        %517 = vmatpush.bf16.msra.mxu0 %v457
        %518 = vmatpush.bf16.msra.mxu0 %v455
        %519 = vmatpush.bf16.msra.mxu0 %v453
        %520 = vmatpush.bf16.msra.mxu0 %v451
        %521 = vmatmul.bf16.gmra.mxu0 %v491
        %v522 = vpop.f32.mrf.mxu0
        %v523 = vadd.f32 %v510, %v522
        %v524 = vpop.f32.mrf.mxu0
        %525 = vdwg.mxu0
        %526 = vmatpush.bf16.msra.mxu0 %v450
        %527 = vmatpush.bf16.msra.mxu0 %v448
        %528 = vmatpush.bf16.msra.mxu0 %v446
        %529 = vmatpush.bf16.msra.mxu0 %v444
        %530 = vmatpush.bf16.msra.mxu0 %v442
        %531 = vmatpush.bf16.msra.mxu0 %v440
        %532 = vmatpush.bf16.msra.mxu0 %v438
        %533 = vmatpush.bf16.msra.mxu0 %v436
        %534 = vmatmul.bf16.gmra.mxu0 %v351
        %v535 = vpop.f32.mrf.mxu0
        %v536 = vadd.f32 %v346, %v535
        %v537 = vpop.f32.mrf.mxu0
        %538 = vdwg.mxu0
        %539 = vmatpush.bf16.msra.mxu0 0
        %540 = vmatpush.bf16.msra.mxu0 0
        %541 = vmatpush.bf16.msra.mxu0 %v498
        %542 = vmatpush.bf16.msra.mxu0 %v460
        %543 = vmatpush.bf16.msra.mxu0 %v458
        %544 = vmatpush.bf16.msra.mxu0 %v456
        %545 = vmatpush.bf16.msra.mxu0 %v454
        %546 = vmatpush.bf16.msra.mxu0 %v452
        %547 = vmatmul.bf16.gmra.mxu0 %v491
        %v548 = vpop.f32.mrf.mxu0
        %v549 = vadd.f32 %v536, %v548
        %v550 = vpop.f32.mrf.mxu0
        %551 = vdwg.mxu0
        %v552 = vmax.f32 %v523, 0.0
        %v553 = vmax.f32 %v549, 0.0
        %v554 = vpack.c.bf16 %v553, %v552
        %555 = vst [vmem:[%s311] sm:$0xff] %v554
        %s556 = smul.u32 2, %s14
        %p557 = scmp.lt.s32.totalorder %s556, 3
        %s558 = scalar_select %p557, %s556, 3
        %s559 = smul.addr %s558, 4
        %s560 = scalar_lea.vmem %s3, %s559
        // Predicated region
        $region71: #{segmentation_net_forward.25} parent=65 // pred_check
          %p561 = pneg %p100
        $region72: #{segmentation_net_forward.25} parent=65 // pred_check_branch
          %563 = sbr.rel (%p561) target = $region74
        $region73: #{segmentation_net_forward.25} parent=65 // pred_region
          %s564 = smul.u32 2, %s14
        $region74: #{segmentation_net_forward.25} parent=65 // pred_fallthru
          _
      $region66: #{segmentation_net_forward.25} parent=5 // pred_fallthru
        _
      %p565 = scmp.le.s32.totalorder 2, %s9
      // Predicated region
      $region75: #{segmentation_net_forward.25} parent=5 // pred_check
        %p566 = pneg %p565
      $region76: #{segmentation_net_forward.25} parent=5 // pred_check_branch
        %568 = sbr.rel (%p566) target = $region78
      $region77: #{segmentation_net_forward.25} parent=5 // pred_region
        %s569 = ssub.s32 %s9, 2
        // Predicated region
        $region79: #{segmentation_net_forward.25} parent=77 // pred_check
          %p570 = pneg %p106
        $region80: #{segmentation_net_forward.25} parent=77 // pred_check_branch
          %572 = sbr.rel (%p570) target = $region82
        $region81: #{segmentation_net_forward.25} parent=77 // pred_region
          %s573 = smul.u32 2, %s15
          %p574 = scmp.lt.s32.totalorder %s573, 3
          %s575 = scalar_select %p574, %s573, 3
          %s576 = smul.addr %s575, 4
          %s577 = scalar_lea.vmem %s3, %s576
        $region82: #{segmentation_net_forward.25} parent=77 // pred_fallthru
          _
      $region78: #{segmentation_net_forward.25} parent=5 // pred_fallthru
        _
    $region6: #{segmentation_net_forward.25} parent=1 // loop_footer
      %s13 = sadd.s32 1, %s9
    $region7: #{segmentation_net_forward.25} parent=1 // loop_footer_branch
      %8 = sbr.rel target = $region3
    $region8: #{segmentation_net_forward.25} parent=1 // loop_exit
      _

// kernel: segmentation_net_forward.27
$region0: #{segmentation_net_forward.27}
  #allocation0 [shape = 'u32[]', space=smem, size = 0x4, offset = 0x4, fixed_abs, tag = 'smem constant byte address 0x4 - core index']
  #allocation1 [shape = 'u32[72,128]{1,0:T(1,128)}', space=vmem, size = 0x9000, scoped, tag = 'internal scratch']
  %s0 = inlined_call_operand.vmem [shape: bf16[144,2048], index: 0, kind: input, shape index: {}]
  %s1 = inlined_call_operand.vmem [shape: bf16[8,144], index: 1, kind: input, shape index: {}]
  %s2 = inlined_call_operand.vmem [shape: f32[8,1], index: 2, kind: input, shape index: {}]
  %s3 = inlined_call_operand.vmem [shape: bf16[8,2048], index: 3, kind: output, shape index: {}]
  %s4 = sld [smem:[#allocation0]]
  $region68: #{segmentation_net_forward.27} parent=0
    _
  %s6 = ssub.s32 1, %s4
  %s7 = scalar_select 0, %s6, %s4
  $region1: #{segmentation_net_forward.27} parent=0
    #allocation2 [shape = 'u8[589824]{0}', space=vmem, size = 0x90000, scoped, tag = 'input window, operand 0']
    loop: start=0, step=1, limit=4
    $region2: #{segmentation_net_forward.27} parent=1 // loop_pre_header
      _
    $region3: #{segmentation_net_forward.27} parent=1 // loop_header
      %s9 = sphi 0, %s13
      %p10 = scmp.ge.s32.totalorder %s9, 4
      %s19 = sphi 0, %s21
      %s22 = sphi 0, %s19
      %s23 = sphi 0, %s22
      %s39 = sphi 0, %s23
      %s43 = sphi 0, %s43
      %s45 = sphi 0, %s43
      %s46 = sphi 0, %s45
      %s60 = sphi 0, %s46
      %s64 = sphi 0, %s64
      %s66 = sphi 0, %s64
      %s67 = sphi 0, %s66
      %s81 = sphi 0, %s67
      %s87 = sphi 0, %s89
      %s90 = sphi 0, %s87
      %s91 = sphi 0, %s90
      %s107 = sphi 0, %s91
    $region4: #{segmentation_net_forward.27} parent=1 // loop_header_branch
      %12 = sbr.rel (%p10) target = $region8
    $region5: #{segmentation_net_forward.27} parent=1 // loop_body
      %s14 = ssub.s32 %s9, 1
      %s15 = ssub.s32 %s9, 2
      %s16 = sadd.s32 %s9, 1
      %s17 = ssub.s32 %s9, %s16
      %p18 = scmp.eq.s32.totalorder %s17, 0
      %s20 = sadd.s32 %s19, 1
      %s21 = scalar_select %p18, %s19, %s20
      %p24 = pneg %p18
      %p25 = scmp.eq.s32.totalorder %s9, 1
      %p26 = por %p24, %p25
      %p27 = scmp.ne.s32.totalorder %s19, %s22
      %p28 = scmp.eq.s32.totalorder %s9, 0
      %p29 = por %p27, %p28
      %p30 = scmp.ne.s32.totalorder %s19, %s22
      %p31 = scmp.eq.s32.totalorder %s14, 1
      %p32 = por %p30, %p31
      %p33 = scmp.ne.s32.totalorder %s22, %s23
      %p34 = scmp.eq.s32.totalorder %s14, 0
      %p35 = por %p33, %p34
      %p36 = scmp.ne.s32.totalorder %s22, %s23
      %p37 = scmp.eq.s32.totalorder %s15, 1
      %p38 = por %p36, %p37
      %p40 = scmp.ne.s32.totalorder %s23, %s39
      %p41 = scmp.eq.s32.totalorder %s15, 0
      %p42 = por %p40, %p41
      %s44 = sadd.s32 %s43, 1
      %p47 = scmp.eq.s32.totalorder %s9, 1
      %p48 = scmp.ne.s32.totalorder %s43, %s45
      %p49 = scmp.eq.s32.totalorder %s9, 0
      %p50 = por %p48, %p49
      %p51 = scmp.ne.s32.totalorder %s43, %s45
      %p52 = scmp.eq.s32.totalorder %s14, 1
      %p53 = por %p51, %p52
      %p54 = scmp.ne.s32.totalorder %s45, %s46
      %p55 = scmp.eq.s32.totalorder %s14, 0
      %p56 = por %p54, %p55
      %p57 = scmp.ne.s32.totalorder %s45, %s46
      %p58 = scmp.eq.s32.totalorder %s15, 1
      %p59 = por %p57, %p58
      %p61 = scmp.ne.s32.totalorder %s46, %s60
      %p62 = scmp.eq.s32.totalorder %s15, 0
      %p63 = por %p61, %p62
      %s65 = sadd.s32 %s64, 1
      %p68 = scmp.eq.s32.totalorder %s9, 1
      %p69 = scmp.ne.s32.totalorder %s64, %s66
      %p70 = scmp.eq.s32.totalorder %s9, 0
      %p71 = por %p69, %p70
      %p72 = scmp.ne.s32.totalorder %s64, %s66
      %p73 = scmp.eq.s32.totalorder %s14, 1
      %p74 = por %p72, %p73
      %p75 = scmp.ne.s32.totalorder %s66, %s67
      %p76 = scmp.eq.s32.totalorder %s14, 0
      %p77 = por %p75, %p76
      %p78 = scmp.ne.s32.totalorder %s66, %s67
      %p79 = scmp.eq.s32.totalorder %s15, 1
      %p80 = por %p78, %p79
      %p82 = scmp.ne.s32.totalorder %s67, %s81
      %p83 = scmp.eq.s32.totalorder %s15, 0
      %p84 = por %p82, %p83
      %s85 = ssub.s32 %s9, %s16
      %p86 = scmp.eq.s32.totalorder %s85, 0
      %s88 = sadd.s32 %s87, 1
      %s89 = scalar_select %p86, %s87, %s88
      %p92 = pneg %p86
      %p93 = scmp.eq.s32.totalorder %s9, 1
      %p94 = por %p92, %p93
      %p95 = scmp.ne.s32.totalorder %s87, %s90
      %p96 = scmp.eq.s32.totalorder %s9, 0
      %p97 = por %p95, %p96
      %p98 = scmp.ne.s32.totalorder %s87, %s90
      %p99 = scmp.eq.s32.totalorder %s14, 1
      %p100 = por %p98, %p99
      %p101 = scmp.ne.s32.totalorder %s90, %s91
      %p102 = scmp.eq.s32.totalorder %s14, 0
      %p103 = por %p101, %p102
      %p104 = scmp.ne.s32.totalorder %s90, %s91
      %p105 = scmp.eq.s32.totalorder %s15, 1
      %p106 = por %p104, %p105
      %p108 = scmp.ne.s32.totalorder %s91, %s107
      %p109 = scmp.eq.s32.totalorder %s15, 0
      %p110 = por %p108, %p109
      %p111 = scmp.le.s32.totalorder 1, %s9
      %p112 = scmp.lt.s32.totalorder %s9, 3
      %p113 = pnand %p111, %p112
      %p114 = pneg %p113
      // Predicated region
      $region9: #{segmentation_net_forward.27} parent=5 // pred_check
        _
      $region10: #{segmentation_net_forward.27} parent=5 // pred_check_branch
        %116 = sbr.rel (%p113) target = $region12
      $region11: #{segmentation_net_forward.27} parent=5 // pred_region
        %s117 = ssub.s32 %s9, 1
        // Predicated region
        $region13: #{segmentation_net_forward.27} parent=11 // pred_check
          %p118 = pneg %p56
        $region14: #{segmentation_net_forward.27} parent=11 // pred_check_branch
          %120 = sbr.rel (%p118) target = $region16
        $region15: #{segmentation_net_forward.27} parent=11 // pred_region
          _
        $region16: #{segmentation_net_forward.27} parent=11 // pred_fallthru
          _
        // Predicated region
        $region17: #{segmentation_net_forward.27} parent=11 // pred_check
          %p121 = pneg %p77
        $region18: #{segmentation_net_forward.27} parent=11 // pred_check_branch
          %123 = sbr.rel (%p121) target = $region20
        $region19: #{segmentation_net_forward.27} parent=11 // pred_region
          _
        $region20: #{segmentation_net_forward.27} parent=11 // pred_fallthru
          _
      $region12: #{segmentation_net_forward.27} parent=5 // pred_fallthru
        _
      %p124 = scmp.lt.s32.totalorder %s9, 2
      // Predicated region
      $region21: #{segmentation_net_forward.27} parent=5 // pred_check
        %p125 = pneg %p124
      $region22: #{segmentation_net_forward.27} parent=5 // pred_check_branch
        %127 = sbr.rel (%p125) target = $region24
      $region23: #{segmentation_net_forward.27} parent=5 // pred_region
        // Predicated region
        $region25: #{segmentation_net_forward.27} parent=23 // pred_check
          %p128 = pneg %p29
        $region26: #{segmentation_net_forward.27} parent=23 // pred_check_branch
          %130 = sbr.rel (%p128) target = $region28
        $region27: #{segmentation_net_forward.27} parent=23 // pred_region
          %s131 = sand.u32 %s19, 1
          %s132 = sand.u32 %s19, 1
          %s133 = smul.addr %s132, 576
          %s134 = scalar_lea.vmem [#allocation2], %s133
          %s135 = smul.u32 8, %s9
          %s136 = smul.addr %s135, 4
          %s137 = scalar_lea.vmem %s0, %s136
          // Predicated region
          $region29: #{segmentation_net_forward.27} parent=27 // pred_check
            _
          $region30: #{segmentation_net_forward.27} parent=27 // pred_check_branch
            %139 = sbr.rel (0) target = $region32
          $region31: #{segmentation_net_forward.27} parent=27 // pred_region
            // Predicated region
            $region33: #{segmentation_net_forward.27} parent=31 // pred_check
              _
            $region34: #{segmentation_net_forward.27} parent=31 // pred_check_branch
              %141 = sbr.rel (0) target = $region36
            $region35: #{segmentation_net_forward.27} parent=31 // pred_region
              loop: start=0, step=1, limit=1
              $region37: #{segmentation_net_forward.27} parent=35 // loop_pre_header
                _
              $region38: #{segmentation_net_forward.27} parent=35 // loop_header
                %s143 = sphi 0, %s147
                %p144 = scmp.ge.s32.totalorder %s143, 1
                %s148 = sphi %s137, %s137
                %s149 = sphi %s134, %s134
              $region39: #{segmentation_net_forward.27} parent=35 // loop_header_branch
                %146 = sbr.rel (%p144) target = $region43
              $region40: #{segmentation_net_forward.27} parent=35 // loop_body
                %v150 = vld [vmem:[%s148] sm:$0xff]
                %151 = vst [vmem:[%s149] sm:$0xff] %v150
                %v152 = vld [vmem:[%s148 + $0x8] sm:$0xff]
                %153 = vst [vmem:[%s149 + $0x8] sm:$0xff] %v152
                %v154 = vld [vmem:[%s148 + $0x10] sm:$0xff]
                %155 = vst [vmem:[%s149 + $0x10] sm:$0xff] %v154
                %v156 = vld [vmem:[%s148 + $0x18] sm:$0xff]
                %157 = vst [vmem:[%s149 + $0x18] sm:$0xff] %v156
                %v158 = vld [vmem:[%s148 + $0x40] sm:$0xff]
                %159 = vst [vmem:[%s149 + $0x20] sm:$0xff] %v158
                %v160 = vld [vmem:[%s148 + $0x48] sm:$0xff]
                %161 = vst [vmem:[%s149 + $0x28] sm:$0xff] %v160
                %v162 = vld [vmem:[%s148 + $0x50] sm:$0xff]
                %163 = vst [vmem:[%s149 + $0x30] sm:$0xff] %v162
                %v164 = vld [vmem:[%s148 + $0x58] sm:$0xff]
                %165 = vst [vmem:[%s149 + $0x38] sm:$0xff] %v164
                %v166 = vld [vmem:[%s148 + $0x80] sm:$0xff]
                %167 = vst [vmem:[%s149 + $0x40] sm:$0xff] %v166
                %v168 = vld [vmem:[%s148 + $0x88] sm:$0xff]
                %169 = vst [vmem:[%s149 + $0x48] sm:$0xff] %v168
                %v170 = vld [vmem:[%s148 + $0x90] sm:$0xff]
                %171 = vst [vmem:[%s149 + $0x50] sm:$0xff] %v170
                %v172 = vld [vmem:[%s148 + $0x98] sm:$0xff]
                %173 = vst [vmem:[%s149 + $0x58] sm:$0xff] %v172
                %v174 = vld [vmem:[%s148 + $0xc0] sm:$0xff]
                %175 = vst [vmem:[%s149 + $0x60] sm:$0xff] %v174
                %v176 = vld [vmem:[%s148 + $0xc8] sm:$0xff]
                %177 = vst [vmem:[%s149 + $0x68] sm:$0xff] %v176
                %v178 = vld [vmem:[%s148 + $0xd0] sm:$0xff]
                %179 = vst [vmem:[%s149 + $0x70] sm:$0xff] %v178
                %v180 = vld [vmem:[%s148 + $0xd8] sm:$0xff]
                %181 = vst [vmem:[%s149 + $0x78] sm:$0xff] %v180
                %v182 = vld [vmem:[%s148 + $0x100] sm:$0xff]
                %183 = vst [vmem:[%s149 + $0x80] sm:$0xff] %v182
                %v184 = vld [vmem:[%s148 + $0x108] sm:$0xff]
                %185 = vst [vmem:[%s149 + $0x88] sm:$0xff] %v184
                %v186 = vld [vmem:[%s148 + $0x110] sm:$0xff]
                %187 = vst [vmem:[%s149 + $0x90] sm:$0xff] %v186
                %v188 = vld [vmem:[%s148 + $0x118] sm:$0xff]
                %189 = vst [vmem:[%s149 + $0x98] sm:$0xff] %v188
                %v190 = vld [vmem:[%s148 + $0x140] sm:$0xff]
                %191 = vst [vmem:[%s149 + $0xa0] sm:$0xff] %v190
                %v192 = vld [vmem:[%s148 + $0x148] sm:$0xff]
                %193 = vst [vmem:[%s149 + $0xa8] sm:$0xff] %v192
                %v194 = vld [vmem:[%s148 + $0x150] sm:$0xff]
                %195 = vst [vmem:[%s149 + $0xb0] sm:$0xff] %v194
                %v196 = vld [vmem:[%s148 + $0x158] sm:$0xff]
                %197 = vst [vmem:[%s149 + $0xb8] sm:$0xff] %v196
                %v198 = vld [vmem:[%s148 + $0x180] sm:$0xff]
                %199 = vst [vmem:[%s149 + $0xc0] sm:$0xff] %v198
                %v200 = vld [vmem:[%s148 + $0x188] sm:$0xff]
                %201 = vst [vmem:[%s149 + $0xc8] sm:$0xff] %v200
                %v202 = vld [vmem:[%s148 + $0x190] sm:$0xff]
                %203 = vst [vmem:[%s149 + $0xd0] sm:$0xff] %v202
                %v204 = vld [vmem:[%s148 + $0x198] sm:$0xff]
                %205 = vst [vmem:[%s149 + $0xd8] sm:$0xff] %v204
                %v206 = vld [vmem:[%s148 + $0x1c0] sm:$0xff]
                %207 = vst [vmem:[%s149 + $0xe0] sm:$0xff] %v206
                %v208 = vld [vmem:[%s148 + $0x1c8] sm:$0xff]
                %209 = vst [vmem:[%s149 + $0xe8] sm:$0xff] %v208
                %v210 = vld [vmem:[%s148 + $0x1d0] sm:$0xff]
                %211 = vst [vmem:[%s149 + $0xf0] sm:$0xff] %v210
                %v212 = vld [vmem:[%s148 + $0x1d8] sm:$0xff]
                %213 = vst [vmem:[%s149 + $0xf8] sm:$0xff] %v212
                %v214 = vld [vmem:[%s148 + $0x200] sm:$0xff]
                %215 = vst [vmem:[%s149 + $0x100] sm:$0xff] %v214
                %v216 = vld [vmem:[%s148 + $0x208] sm:$0xff]
                %217 = vst [vmem:[%s149 + $0x108] sm:$0xff] %v216
                %v218 = vld [vmem:[%s148 + $0x210] sm:$0xff]
                %219 = vst [vmem:[%s149 + $0x110] sm:$0xff] %v218
                %v220 = vld [vmem:[%s148 + $0x218] sm:$0xff]
                %221 = vst [vmem:[%s149 + $0x118] sm:$0xff] %v220
                %v222 = vld [vmem:[%s148 + $0x240] sm:$0xff]
                %223 = vst [vmem:[%s149 + $0x120] sm:$0xff] %v222
                %v224 = vld [vmem:[%s148 + $0x248] sm:$0xff]
                %225 = vst [vmem:[%s149 + $0x128] sm:$0xff] %v224
                %v226 = vld [vmem:[%s148 + $0x250] sm:$0xff]
                %227 = vst [vmem:[%s149 + $0x130] sm:$0xff] %v226
                %v228 = vld [vmem:[%s148 + $0x258] sm:$0xff]
                %229 = vst [vmem:[%s149 + $0x138] sm:$0xff] %v228
                %v230 = vld [vmem:[%s148 + $0x280] sm:$0xff]
                %231 = vst [vmem:[%s149 + $0x140] sm:$0xff] %v230
                %v232 = vld [vmem:[%s148 + $0x288] sm:$0xff]
                %233 = vst [vmem:[%s149 + $0x148] sm:$0xff] %v232
                %v234 = vld [vmem:[%s148 + $0x290] sm:$0xff]
                %235 = vst [vmem:[%s149 + $0x150] sm:$0xff] %v234
                %v236 = vld [vmem:[%s148 + $0x298] sm:$0xff]
                %237 = vst [vmem:[%s149 + $0x158] sm:$0xff] %v236
                %v238 = vld [vmem:[%s148 + $0x2c0] sm:$0xff]
                %239 = vst [vmem:[%s149 + $0x160] sm:$0xff] %v238
                %v240 = vld [vmem:[%s148 + $0x2c8] sm:$0xff]
                %241 = vst [vmem:[%s149 + $0x168] sm:$0xff] %v240
                %v242 = vld [vmem:[%s148 + $0x2d0] sm:$0xff]
                %243 = vst [vmem:[%s149 + $0x170] sm:$0xff] %v242
                %v244 = vld [vmem:[%s148 + $0x2d8] sm:$0xff]
                %245 = vst [vmem:[%s149 + $0x178] sm:$0xff] %v244
                %v246 = vld [vmem:[%s148 + $0x300] sm:$0xff]
                %247 = vst [vmem:[%s149 + $0x180] sm:$0xff] %v246
                %v248 = vld [vmem:[%s148 + $0x308] sm:$0xff]
                %249 = vst [vmem:[%s149 + $0x188] sm:$0xff] %v248
                %v250 = vld [vmem:[%s148 + $0x310] sm:$0xff]
                %251 = vst [vmem:[%s149 + $0x190] sm:$0xff] %v250
                %v252 = vld [vmem:[%s148 + $0x318] sm:$0xff]
                %253 = vst [vmem:[%s149 + $0x198] sm:$0xff] %v252
                %v254 = vld [vmem:[%s148 + $0x340] sm:$0xff]
                %255 = vst [vmem:[%s149 + $0x1a0] sm:$0xff] %v254
                %v256 = vld [vmem:[%s148 + $0x348] sm:$0xff]
                %257 = vst [vmem:[%s149 + $0x1a8] sm:$0xff] %v256
                %v258 = vld [vmem:[%s148 + $0x350] sm:$0xff]
                %259 = vst [vmem:[%s149 + $0x1b0] sm:$0xff] %v258
                %v260 = vld [vmem:[%s148 + $0x358] sm:$0xff]
                %261 = vst [vmem:[%s149 + $0x1b8] sm:$0xff] %v260
                %v262 = vld [vmem:[%s148 + $0x380] sm:$0xff]
                %263 = vst [vmem:[%s149 + $0x1c0] sm:$0xff] %v262
                %v264 = vld [vmem:[%s148 + $0x388] sm:$0xff]
                %265 = vst [vmem:[%s149 + $0x1c8] sm:$0xff] %v264
                %v266 = vld [vmem:[%s148 + $0x390] sm:$0xff]
                %267 = vst [vmem:[%s149 + $0x1d0] sm:$0xff] %v266
                %v268 = vld [vmem:[%s148 + $0x398] sm:$0xff]
                %269 = vst [vmem:[%s149 + $0x1d8] sm:$0xff] %v268
                %v270 = vld [vmem:[%s148 + $0x3c0] sm:$0xff]
                %271 = vst [vmem:[%s149 + $0x1e0] sm:$0xff] %v270
                %v272 = vld [vmem:[%s148 + $0x3c8] sm:$0xff]
                %273 = vst [vmem:[%s149 + $0x1e8] sm:$0xff] %v272
                %v274 = vld [vmem:[%s148 + $0x3d0] sm:$0xff]
                %275 = vst [vmem:[%s149 + $0x1f0] sm:$0xff] %v274
                %v276 = vld [vmem:[%s148 + $0x3d8] sm:$0xff]
                %277 = vst [vmem:[%s149 + $0x1f8] sm:$0xff] %v276
                %v278 = vld [vmem:[%s148 + $0x400] sm:$0xff]
                %279 = vst [vmem:[%s149 + $0x200] sm:$0xff] %v278
                %v280 = vld [vmem:[%s148 + $0x408] sm:$0xff]
                %281 = vst [vmem:[%s149 + $0x208] sm:$0xff] %v280
                %v282 = vld [vmem:[%s148 + $0x410] sm:$0xff]
                %283 = vst [vmem:[%s149 + $0x210] sm:$0xff] %v282
                %v284 = vld [vmem:[%s148 + $0x418] sm:$0xff]
                %285 = vst [vmem:[%s149 + $0x218] sm:$0xff] %v284
                %v286 = vld [vmem:[%s148 + $0x440] sm:$0xff]
                %287 = vst [vmem:[%s149 + $0x220] sm:$0xff] %v286
                %v288 = vld [vmem:[%s148 + $0x448] sm:$0xff]
                %289 = vst [vmem:[%s149 + $0x228] sm:$0xff] %v288
                %v290 = vld [vmem:[%s148 + $0x450] sm:$0xff]
                %291 = vst [vmem:[%s149 + $0x230] sm:$0xff] %v290
                %v292 = vld [vmem:[%s148 + $0x458] sm:$0xff]
                %293 = vst [vmem:[%s149 + $0x238] sm:$0xff] %v292
              $region41: #{segmentation_net_forward.27} parent=35 // loop_footer
                %s147 = sadd.s32 1, %s143
              $region42: #{segmentation_net_forward.27} parent=35 // loop_footer_branch
                %142 = sbr.rel target = $region38
              $region43: #{segmentation_net_forward.27} parent=35 // loop_exit
                _
            $region36: #{segmentation_net_forward.27} parent=31 // pred_fallthru
              _
            // Predicated region
            $region44: #{segmentation_net_forward.27} parent=31 // pred_check
              _
            $region45: #{segmentation_net_forward.27} parent=31 // pred_check_branch
              %295 = sbr.rel target = $region47
            $region46: #{segmentation_net_forward.27} parent=31 // pred_region
              _
            $region47: #{segmentation_net_forward.27} parent=31 // pred_fallthru
              _
          $region32: #{segmentation_net_forward.27} parent=27 // pred_fallthru
            _
          %296 = vnop
        $region28: #{segmentation_net_forward.27} parent=23 // pred_fallthru
          _
      $region24: #{segmentation_net_forward.27} parent=5 // pred_fallthru
        _
      %p297 = scmp.le.s32.totalorder 1, %s9
      %p298 = scmp.lt.s32.totalorder %s9, 3
      %p299 = pnand %p297, %p298
      %p300 = pneg %p299
      // Predicated region
      $region48: #{segmentation_net_forward.27} parent=5 // pred_check
        _
      $region49: #{segmentation_net_forward.27} parent=5 // pred_check_branch
        %302 = sbr.rel (%p299) target = $region51
      $region50: #{segmentation_net_forward.27} parent=5 // pred_region
        %s303 = ssub.s32 %s9, 1
        %s304 = sand.u32 %s22, 1
        %s305 = sand.u32 %s22, 1
        %s306 = smul.addr %s305, 576
        %s307 = scalar_lea.vmem [#allocation2], %s306
        // Predicated region
        $region52: #{segmentation_net_forward.27} parent=50 // pred_check
          %p308 = pneg %p35
        $region53: #{segmentation_net_forward.27} parent=50 // pred_check_branch
          %310 = sbr.rel (%p308) target = $region55
        $region54: #{segmentation_net_forward.27} parent=50 // pred_region
          _
        $region55: #{segmentation_net_forward.27} parent=50 // pred_fallthru
          _
        %s311 = sand.u32 %s22, 1
        %s312 = sand.u32 %s22, 1
        %s313 = smul.addr %s312, 576
        %s314 = scalar_lea.vmem [#allocation2], %s313
        %p315 = pneg %p35
        %p316 = pneg %p32
        %p317 = pneg %p56
        %p318 = pneg %p53
        %p319 = pneg %p77
        %p320 = pneg %p74
        %p321 = pneg %p103
        %p322 = pneg %p100
        %s323 = smul.u32 8, %s14
        %p324 = scmp.lt.s32.totalorder %s323, 15
        %s325 = scalar_select %p324, %s323, 15
        %s326 = smul.addr %s325, 4
        %s327 = scalar_lea.vmem %s3, %s326
        %s328 = smul.u32 8, %s14
        %s329 = smul.u32 8, %s14
        %p330 = scmp.lt.s32.totalorder %s329, 15
        %s331 = scalar_select %p330, %s329, 15
        %s332 = smul.addr %s331, 4
        %s333 = scalar_lea.vmem %s3, %s332
        %s334 = smul.u32 8, %s14
        %v336 = vld [vmem:[%s1] sm:$0xff]
        %v337 = vld [vmem:[%s307] sm:$0xff]
        %v338 = vld [vmem:[%s307 + $0x8] sm:$0xff]
        %v339 = vld [vmem:[%s307 + $0x10] sm:$0xff]
        %v340 = vld [vmem:[%s307 + $0x18] sm:$0xff]
        %v341 = vld [vmem:[%s307 + $0x20] sm:$0xff]
        %v342 = vld [vmem:[%s307 + $0x28] sm:$0xff]
        %v343 = vld [vmem:[%s307 + $0x30] sm:$0xff]
        %v344 = vld [vmem:[%s307 + $0x38] sm:$0xff]
        %v345 = vld [vmem:[%s307 + $0x40] sm:$0xff]
        %v346 = vld [vmem:[%s307 + $0x48] sm:$0xff]
        %v347 = vld [vmem:[%s307 + $0x50] sm:$0xff]
        %v348 = vld [vmem:[%s307 + $0x58] sm:$0xff]
        %v349 = vld [vmem:[%s307 + $0x60] sm:$0xff]
        %v350 = vld [vmem:[%s307 + $0x68] sm:$0xff]
        %v351 = vld [vmem:[%s307 + $0x70] sm:$0xff]
        %v352 = vld [vmem:[%s307 + $0x78] sm:$0xff]
        %v353 = vld [vmem:[%s307 + $0x80] sm:$0xff]
        %v354 = vld [vmem:[%s307 + $0x88] sm:$0xff]
        %v355 = vld [vmem:[%s307 + $0x90] sm:$0xff]
        %v356 = vld [vmem:[%s307 + $0x98] sm:$0xff]
        %v357 = vld [vmem:[%s307 + $0xa0] sm:$0xff]
        %v358 = vld [vmem:[%s307 + $0xa8] sm:$0xff]
        %v359 = vld [vmem:[%s307 + $0xb0] sm:$0xff]
        %v360 = vld [vmem:[%s307 + $0xb8] sm:$0xff]
        %v361 = vld [vmem:[%s307 + $0xc0] sm:$0xff]
        %v362 = vld [vmem:[%s307 + $0xc8] sm:$0xff]
        %v363 = vld [vmem:[%s307 + $0xd0] sm:$0xff]
        %v364 = vld [vmem:[%s307 + $0xd8] sm:$0xff]
        %v365 = vld [vmem:[%s307 + $0xe0] sm:$0xff]
        %v366 = vld [vmem:[%s307 + $0xe8] sm:$0xff]
        %v367 = vld [vmem:[%s307 + $0xf0] sm:$0xff]
        %v368 = vld [vmem:[%s307 + $0xf8] sm:$0xff]
        %v369 = vld [vmem:[%s307 + $0x100] sm:$0xff]
        %v370 = vld [vmem:[%s307 + $0x108] sm:$0xff]
        %v371 = vld [vmem:[%s307 + $0x110] sm:$0xff]
        %v372 = vld [vmem:[%s307 + $0x118] sm:$0xff]
        %v373 = vld [vmem:[%s307 + $0x120] sm:$0xff]
        %v374 = vld [vmem:[%s307 + $0x128] sm:$0xff]
        %v375 = vld [vmem:[%s307 + $0x130] sm:$0xff]
        %v376 = vld [vmem:[%s307 + $0x138] sm:$0xff]
        %v377 = vld [vmem:[%s307 + $0x140] sm:$0xff]
        %v378 = vld [vmem:[%s307 + $0x148] sm:$0xff]
        %v379 = vld [vmem:[%s307 + $0x150] sm:$0xff]
        %v380 = vld [vmem:[%s307 + $0x158] sm:$0xff]
        %v381 = vld [vmem:[%s307 + $0x160] sm:$0xff]
        %v382 = vld [vmem:[%s307 + $0x168] sm:$0xff]
        %v383 = vld [vmem:[%s307 + $0x170] sm:$0xff]
        %v384 = vld [vmem:[%s307 + $0x178] sm:$0xff]
        %v385 = vld [vmem:[%s307 + $0x180] sm:$0xff]
        %v386 = vld [vmem:[%s307 + $0x188] sm:$0xff]
        %v387 = vld [vmem:[%s307 + $0x190] sm:$0xff]
        %v388 = vld [vmem:[%s307 + $0x198] sm:$0xff]
        %v389 = vld [vmem:[%s307 + $0x1a0] sm:$0xff]
        %v390 = vld [vmem:[%s307 + $0x1a8] sm:$0xff]
        %v391 = vld [vmem:[%s307 + $0x1b0] sm:$0xff]
        %v392 = vld [vmem:[%s307 + $0x1b8] sm:$0xff]
        %v393 = vld [vmem:[%s307 + $0x1c0] sm:$0xff]
        %v394 = vld [vmem:[%s307 + $0x1c8] sm:$0xff]
        %v395 = vld [vmem:[%s307 + $0x1d0] sm:$0xff]
        %v396 = vld [vmem:[%s307 + $0x1d8] sm:$0xff]
        %v397 = vld [vmem:[%s307 + $0x1e0] sm:$0xff]
        %v398 = vld [vmem:[%s307 + $0x1e8] sm:$0xff]
        %v399 = vld [vmem:[%s307 + $0x1f0] sm:$0xff]
        %v400 = vld [vmem:[%s307 + $0x1f8] sm:$0xff]
        %v401 = vld [vmem:[%s307 + $0x200] sm:$0xff]
        %v402 = vld [vmem:[%s307 + $0x208] sm:$0xff]
        %v403 = vld [vmem:[%s307 + $0x210] sm:$0xff]
        %v404 = vld [vmem:[%s307 + $0x218] sm:$0xff]
        %v405 = vld [vmem:[%s307 + $0x220] sm:$0xff]
        %v406 = vld [vmem:[%s307 + $0x228] sm:$0xff]
        %v407 = vld [vmem:[%s307 + $0x230] sm:$0xff]
        %v408 = vld [vmem:[%s307 + $0x238] sm:$0xff]
        %v409 = vld [vmem:[%s2] sm:$0xff]
        %411 = vset.pattern.permute.xlu0 0
        %412 = vperm.xlu0 %411, %v409
        %v413 = vpop.permute.xlu0 %412
        %v416 = vunpack.c.l.b16 %v336
        %v417 = vunpack.c.h.b16 %v336
        %v418 = vpack.c.b16 %v416, %v416
        %v419 = vpack.c.b16 %v417, %v417
        %v493 = vunpack.c.l.b16 %v337
        %v494 = vunpack.c.h.b16 %v337
        %v495 = vunpack.c.l.b16 %v338
        %v496 = vunpack.c.h.b16 %v338
        %v497 = vunpack.c.l.b16 %v339
        %v498 = vunpack.c.h.b16 %v339
        %v499 = vunpack.c.l.b16 %v340
        %v500 = vunpack.c.h.b16 %v340
        %v501 = vunpack.c.l.b16 %v341
        %v502 = vunpack.c.h.b16 %v341
        %v503 = vunpack.c.l.b16 %v342
        %v504 = vunpack.c.h.b16 %v342
        %v505 = vunpack.c.l.b16 %v343
        %v506 = vunpack.c.h.b16 %v343
        %v507 = vunpack.c.l.b16 %v344
        %v508 = vunpack.c.h.b16 %v344
        %v509 = vunpack.c.l.b16 %v345
        %v510 = vunpack.c.h.b16 %v345
        %v511 = vunpack.c.l.b16 %v346
        %v512 = vunpack.c.h.b16 %v346
        %v513 = vunpack.c.l.b16 %v347
        %v514 = vunpack.c.h.b16 %v347
        %v515 = vunpack.c.l.b16 %v348
        %v516 = vunpack.c.h.b16 %v348
        %v517 = vunpack.c.l.b16 %v349
        %v518 = vunpack.c.h.b16 %v349
        %v519 = vunpack.c.l.b16 %v350
        %v520 = vunpack.c.h.b16 %v350
        %v521 = vunpack.c.l.b16 %v351
        %v522 = vunpack.c.h.b16 %v351
        %v523 = vunpack.c.l.b16 %v352
        %v524 = vunpack.c.h.b16 %v352
        %v525 = vunpack.c.l.b16 %v353
        %v526 = vunpack.c.h.b16 %v353
        %v527 = vunpack.c.l.b16 %v354
        %v528 = vunpack.c.h.b16 %v354
        %v529 = vunpack.c.l.b16 %v355
        %v530 = vunpack.c.h.b16 %v355
        %v531 = vunpack.c.l.b16 %v356
        %v532 = vunpack.c.h.b16 %v356
        %v533 = vunpack.c.l.b16 %v357
        %v534 = vunpack.c.h.b16 %v357
        %v535 = vunpack.c.l.b16 %v358
        %v536 = vunpack.c.h.b16 %v358
        %v537 = vunpack.c.l.b16 %v359
        %v538 = vunpack.c.h.b16 %v359
        %v539 = vunpack.c.l.b16 %v360
        %v540 = vunpack.c.h.b16 %v360
        %v541 = vunpack.c.l.b16 %v361
        %v542 = vunpack.c.h.b16 %v361
        %v543 = vunpack.c.l.b16 %v362
        %v544 = vunpack.c.h.b16 %v362
        %v545 = vunpack.c.l.b16 %v363
        %v546 = vunpack.c.h.b16 %v363
        %v547 = vunpack.c.l.b16 %v364
        %v548 = vunpack.c.h.b16 %v364
        %v549 = vunpack.c.l.b16 %v365
        %v550 = vunpack.c.h.b16 %v365
        %v551 = vunpack.c.l.b16 %v366
        %v552 = vunpack.c.h.b16 %v366
        %v553 = vunpack.c.l.b16 %v367
        %v554 = vunpack.c.h.b16 %v367
        %v555 = vunpack.c.l.b16 %v368
        %v556 = vunpack.c.h.b16 %v368
        %v557 = vunpack.c.l.b16 %v369
        %v558 = vunpack.c.h.b16 %v369
        %v559 = vunpack.c.l.b16 %v370
        %v560 = vunpack.c.h.b16 %v370
        %v561 = vunpack.c.l.b16 %v371
        %v562 = vunpack.c.h.b16 %v371
        %v563 = vunpack.c.l.b16 %v372
        %v564 = vunpack.c.h.b16 %v372
        %v565 = vunpack.c.l.b16 %v373
        %v566 = vunpack.c.h.b16 %v373
        %v567 = vunpack.c.l.b16 %v374
        %v568 = vunpack.c.h.b16 %v374
        %v569 = vunpack.c.l.b16 %v375
        %v570 = vunpack.c.h.b16 %v375
        %v571 = vunpack.c.l.b16 %v376
        %v572 = vunpack.c.h.b16 %v376
        %v573 = vunpack.c.l.b16 %v377
        %v574 = vunpack.c.h.b16 %v377
        %v575 = vunpack.c.l.b16 %v378
        %v576 = vunpack.c.h.b16 %v378
        %v577 = vunpack.c.l.b16 %v379
        %v578 = vunpack.c.h.b16 %v379
        %v579 = vunpack.c.l.b16 %v380
        %v580 = vunpack.c.h.b16 %v380
        %v581 = vunpack.c.l.b16 %v381
        %v582 = vunpack.c.h.b16 %v381
        %v583 = vunpack.c.l.b16 %v382
        %v584 = vunpack.c.h.b16 %v382
        %v585 = vunpack.c.l.b16 %v383
        %v586 = vunpack.c.h.b16 %v383
        %v587 = vunpack.c.l.b16 %v384
        %v588 = vunpack.c.h.b16 %v384
        %v589 = vunpack.c.l.b16 %v385
        %v590 = vunpack.c.h.b16 %v385
        %v591 = vunpack.c.l.b16 %v386
        %v592 = vunpack.c.h.b16 %v386
        %v593 = vunpack.c.l.b16 %v387
        %v594 = vunpack.c.h.b16 %v387
        %v595 = vunpack.c.l.b16 %v388
        %v596 = vunpack.c.h.b16 %v388
        %v597 = vunpack.c.l.b16 %v389
        %v598 = vunpack.c.h.b16 %v389
        %v599 = vunpack.c.l.b16 %v390
        %v600 = vunpack.c.h.b16 %v390
        %v601 = vunpack.c.l.b16 %v391
        %v602 = vunpack.c.h.b16 %v391
        %v603 = vunpack.c.l.b16 %v392
        %v604 = vunpack.c.h.b16 %v392
        %v605 = vunpack.c.l.b16 %v393
        %v606 = vunpack.c.h.b16 %v393
        %v607 = vunpack.c.l.b16 %v394
        %v608 = vunpack.c.h.b16 %v394
        %v609 = vunpack.c.l.b16 %v395
        %v610 = vunpack.c.h.b16 %v395
        %v611 = vunpack.c.l.b16 %v396
        %v612 = vunpack.c.h.b16 %v396
        %v613 = vunpack.c.l.b16 %v397
        %v614 = vunpack.c.h.b16 %v397
        %v615 = vunpack.c.l.b16 %v398
        %v616 = vunpack.c.h.b16 %v398
        %v617 = vunpack.c.l.b16 %v399
        %v618 = vunpack.c.h.b16 %v399
        %v619 = vunpack.c.l.b16 %v400
        %v620 = vunpack.c.h.b16 %v400
        %v621 = vunpack.c.l.b16 %v401
        %v622 = vunpack.c.h.b16 %v401
        %v623 = vunpack.c.l.b16 %v402
        %v624 = vunpack.c.h.b16 %v402
        %v625 = vunpack.c.l.b16 %v403
        %v626 = vunpack.c.h.b16 %v403
        %v627 = vunpack.c.l.b16 %v404
        %v628 = vunpack.c.h.b16 %v404
        %v629 = vunpack.c.l.b16 %v405
        %v630 = vunpack.c.h.b16 %v405
        %v631 = vunpack.c.l.b16 %v406
        %v632 = vunpack.c.h.b16 %v406
        %v633 = vunpack.c.l.b16 %v407
        %v634 = vunpack.c.h.b16 %v407
        %v635 = vunpack.c.l.b16 %v408
        %v636 = vunpack.c.h.b16 %v408
        %v637 = vpack.c.b16 %v501, %v493
        %v638 = vpack.c.b16 %v502, %v494
        %v639 = vpack.c.b16 %v503, %v495
        %v640 = vpack.c.b16 %v504, %v496
        %v641 = vpack.c.b16 %v505, %v497
        %v642 = vpack.c.b16 %v506, %v498
        %v643 = vpack.c.b16 %v507, %v499
        %v644 = vpack.c.b16 %v508, %v500
        %v645 = vpack.c.b16 %v517, %v509
        %v646 = vpack.c.b16 %v518, %v510
        %v647 = vpack.c.b16 %v519, %v511
        %v648 = vpack.c.b16 %v520, %v512
        %v649 = vpack.c.b16 %v521, %v513
        %v650 = vpack.c.b16 %v522, %v514
        %v651 = vpack.c.b16 %v523, %v515
        %v652 = vpack.c.b16 %v524, %v516
        %v653 = vpack.c.b16 %v533, %v525
        %v654 = vpack.c.b16 %v534, %v526
        %v655 = vpack.c.b16 %v535, %v527
        %v656 = vpack.c.b16 %v536, %v528
        %v657 = vpack.c.b16 %v537, %v529
        %v658 = vpack.c.b16 %v538, %v530
        %v659 = vpack.c.b16 %v539, %v531
        %v660 = vpack.c.b16 %v540, %v532
        %v661 = vpack.c.b16 %v549, %v541
        %v662 = vpack.c.b16 %v550, %v542
        %v663 = vpack.c.b16 %v551, %v543
        %v664 = vpack.c.b16 %v552, %v544
        %v665 = vpack.c.b16 %v553, %v545
        %v666 = vpack.c.b16 %v554, %v546
        %v667 = vpack.c.b16 %v555, %v547
        %v668 = vpack.c.b16 %v556, %v548
        %v669 = vpack.c.b16 %v565, %v557
        %v670 = vpack.c.b16 %v566, %v558
        %v671 = vpack.c.b16 %v567, %v559
        %v672 = vpack.c.b16 %v568, %v560
        %v673 = vpack.c.b16 %v569, %v561
        %v674 = vpack.c.b16 %v570, %v562
        %v675 = vpack.c.b16 %v571, %v563
        %v676 = vpack.c.b16 %v572, %v564
        %v677 = vpack.c.b16 %v581, %v573
        %v678 = vpack.c.b16 %v582, %v574
        %v679 = vpack.c.b16 %v583, %v575
        %v680 = vpack.c.b16 %v584, %v576
        %v681 = vpack.c.b16 %v585, %v577
        %v682 = vpack.c.b16 %v586, %v578
        %v683 = vpack.c.b16 %v587, %v579
        %v684 = vpack.c.b16 %v588, %v580
        %v685 = vpack.c.b16 %v597, %v589
        %v686 = vpack.c.b16 %v598, %v590
        %v687 = vpack.c.b16 %v599, %v591
        %v688 = vpack.c.b16 %v600, %v592
        %v689 = vpack.c.b16 %v601, %v593
        %v690 = vpack.c.b16 %v602, %v594
        %v691 = vpack.c.b16 %v603, %v595
        %v692 = vpack.c.b16 %v604, %v596
        %v693 = vpack.c.b16 %v613, %v605
        %v694 = vpack.c.b16 %v614, %v606
        %v695 = vpack.c.b16 %v615, %v607
        %v696 = vpack.c.b16 %v616, %v608
        %v697 = vpack.c.b16 %v617, %v609
        %v698 = vpack.c.b16 %v618, %v610
        %v699 = vpack.c.b16 %v619, %v611
        %v700 = vpack.c.b16 %v620, %v612
        %v701 = vpack.c.b16 %v629, %v621
        %v702 = vpack.c.b16 %v630, %v622
        %v703 = vpack.c.b16 %v631, %v623
        %v704 = vpack.c.b16 %v632, %v624
        %v705 = vpack.c.b16 %v633, %v625
        %v706 = vpack.c.b16 %v634, %v626
        %v707 = vpack.c.b16 %v635, %v627
        %v708 = vpack.c.b16 %v636, %v628
        %vm781 = vcmask 130048
        %v783 = vsel %vm781, %v419, 0
        %785 = vmatpush.bf16.msra.mxu0 %v693
        %786 = vmatpush.bf16.msra.mxu0 %v685
        %787 = vmatpush.bf16.msra.mxu0 %v677
        %788 = vmatpush.bf16.msra.mxu0 %v669
        %789 = vmatpush.bf16.msra.mxu0 %v661
        %790 = vmatpush.bf16.msra.mxu0 %v653
        %791 = vmatpush.bf16.msra.mxu0 %v645
        %792 = vmatpush.bf16.msra.mxu0 %v637
        %793 = vmatmul.bf16.gmra.mxu0 %v418
        %v794 = vpop.f32.mrf.mxu0
        %v795 = vadd.f32 %v413, %v794
        %v796 = vpop.f32.mrf.mxu0
        %797 = vdwg.mxu0
        %798 = vmatpush.bf16.msra.mxu0 0
        %799 = vmatpush.bf16.msra.mxu0 0
        %800 = vmatpush.bf16.msra.mxu0 0
        %801 = vmatpush.bf16.msra.mxu0 0
        %802 = vmatpush.bf16.msra.mxu0 0
        %803 = vmatpush.bf16.msra.mxu0 0
        %804 = vmatpush.bf16.msra.mxu0 0
        %805 = vmatpush.bf16.msra.mxu0 %v701
        %806 = vmatmul.bf16.gmra.mxu0 %v783
        %v807 = vpop.f32.mrf.mxu0
        %v808 = vadd.f32 %v795, %v807
        %v809 = vpop.f32.mrf.mxu0
        %810 = vdwg.mxu0
        %811 = vmatpush.bf16.msra.mxu0 %v694
        %812 = vmatpush.bf16.msra.mxu0 %v686
        %813 = vmatpush.bf16.msra.mxu0 %v678
        %814 = vmatpush.bf16.msra.mxu0 %v670
        %815 = vmatpush.bf16.msra.mxu0 %v662
        %816 = vmatpush.bf16.msra.mxu0 %v654
        %817 = vmatpush.bf16.msra.mxu0 %v646
        %818 = vmatpush.bf16.msra.mxu0 %v638
        %819 = vmatmul.bf16.gmra.mxu0 %v418
        %v820 = vpop.f32.mrf.mxu0
        %v821 = vadd.f32 %v413, %v820
        %v822 = vpop.f32.mrf.mxu0
        %823 = vdwg.mxu0
        %824 = vmatpush.bf16.msra.mxu0 0
        %825 = vmatpush.bf16.msra.mxu0 0
        %826 = vmatpush.bf16.msra.mxu0 0
        %827 = vmatpush.bf16.msra.mxu0 0
        %828 = vmatpush.bf16.msra.mxu0 0
        %829 = vmatpush.bf16.msra.mxu0 0
        %830 = vmatpush.bf16.msra.mxu0 0
        %831 = vmatpush.bf16.msra.mxu0 %v702
        %832 = vmatmul.bf16.gmra.mxu0 %v783
        %v833 = vpop.f32.mrf.mxu0
        %v834 = vadd.f32 %v821, %v833
        %v835 = vpop.f32.mrf.mxu0
        %836 = vdwg.mxu0
        %837 = vmatpush.bf16.msra.mxu0 %v695
        %838 = vmatpush.bf16.msra.mxu0 %v687
        %839 = vmatpush.bf16.msra.mxu0 %v679
        %840 = vmatpush.bf16.msra.mxu0 %v671
        %841 = vmatpush.bf16.msra.mxu0 %v663
        %842 = vmatpush.bf16.msra.mxu0 %v655
        %843 = vmatpush.bf16.msra.mxu0 %v647
        %844 = vmatpush.bf16.msra.mxu0 %v639
        %845 = vmatmul.bf16.gmra.mxu0 %v418
        %v846 = vpop.f32.mrf.mxu0
        %v847 = vadd.f32 %v413, %v846
        %v848 = vpop.f32.mrf.mxu0
        %849 = vdwg.mxu0
        %850 = vmatpush.bf16.msra.mxu0 0
        %851 = vmatpush.bf16.msra.mxu0 0
        %852 = vmatpush.bf16.msra.mxu0 0
        %853 = vmatpush.bf16.msra.mxu0 0
        %854 = vmatpush.bf16.msra.mxu0 0
        %855 = vmatpush.bf16.msra.mxu0 0
        %856 = vmatpush.bf16.msra.mxu0 0
        %857 = vmatpush.bf16.msra.mxu0 %v703
        %858 = vmatmul.bf16.gmra.mxu0 %v783
        %v859 = vpop.f32.mrf.mxu0
        %v860 = vadd.f32 %v847, %v859
        %v861 = vpop.f32.mrf.mxu0
        %862 = vdwg.mxu0
        %863 = vmatpush.bf16.msra.mxu0 %v696
        %864 = vmatpush.bf16.msra.mxu0 %v688
        %865 = vmatpush.bf16.msra.mxu0 %v680
        %866 = vmatpush.bf16.msra.mxu0 %v672
        %867 = vmatpush.bf16.msra.mxu0 %v664
        %868 = vmatpush.bf16.msra.mxu0 %v656
        %869 = vmatpush.bf16.msra.mxu0 %v648
        %870 = vmatpush.bf16.msra.mxu0 %v640
        %871 = vmatmul.bf16.gmra.mxu0 %v418
        %v872 = vpop.f32.mrf.mxu0
        %v873 = vadd.f32 %v413, %v872
        %v874 = vpop.f32.mrf.mxu0
        %875 = vdwg.mxu0
        %876 = vmatpush.bf16.msra.mxu0 0
        %877 = vmatpush.bf16.msra.mxu0 0
        %878 = vmatpush.bf16.msra.mxu0 0
        %879 = vmatpush.bf16.msra.mxu0 0
        %880 = vmatpush.bf16.msra.mxu0 0
        %881 = vmatpush.bf16.msra.mxu0 0
        %882 = vmatpush.bf16.msra.mxu0 0
        %883 = vmatpush.bf16.msra.mxu0 %v704
        %884 = vmatmul.bf16.gmra.mxu0 %v783
        %v885 = vpop.f32.mrf.mxu0
        %v886 = vadd.f32 %v873, %v885
        %v887 = vpop.f32.mrf.mxu0
        %888 = vdwg.mxu0
        %889 = vmatpush.bf16.msra.mxu0 %v697
        %890 = vmatpush.bf16.msra.mxu0 %v689
        %891 = vmatpush.bf16.msra.mxu0 %v681
        %892 = vmatpush.bf16.msra.mxu0 %v673
        %893 = vmatpush.bf16.msra.mxu0 %v665
        %894 = vmatpush.bf16.msra.mxu0 %v657
        %895 = vmatpush.bf16.msra.mxu0 %v649
        %896 = vmatpush.bf16.msra.mxu0 %v641
        %897 = vmatmul.bf16.gmra.mxu0 %v418
        %v898 = vpop.f32.mrf.mxu0
        %v899 = vadd.f32 %v413, %v898
        %v900 = vpop.f32.mrf.mxu0
        %901 = vdwg.mxu0
        %902 = vmatpush.bf16.msra.mxu0 0
        %903 = vmatpush.bf16.msra.mxu0 0
        %904 = vmatpush.bf16.msra.mxu0 0
        %905 = vmatpush.bf16.msra.mxu0 0
        %906 = vmatpush.bf16.msra.mxu0 0
        %907 = vmatpush.bf16.msra.mxu0 0
        %908 = vmatpush.bf16.msra.mxu0 0
        %909 = vmatpush.bf16.msra.mxu0 %v705
        %910 = vmatmul.bf16.gmra.mxu0 %v783
        %v911 = vpop.f32.mrf.mxu0
        %v912 = vadd.f32 %v899, %v911
        %v913 = vpop.f32.mrf.mxu0
        %914 = vdwg.mxu0
        %915 = vmatpush.bf16.msra.mxu0 %v698
        %916 = vmatpush.bf16.msra.mxu0 %v690
        %917 = vmatpush.bf16.msra.mxu0 %v682
        %918 = vmatpush.bf16.msra.mxu0 %v674
        %919 = vmatpush.bf16.msra.mxu0 %v666
        %920 = vmatpush.bf16.msra.mxu0 %v658
        %921 = vmatpush.bf16.msra.mxu0 %v650
        %922 = vmatpush.bf16.msra.mxu0 %v642
        %923 = vmatmul.bf16.gmra.mxu0 %v418
        %v924 = vpop.f32.mrf.mxu0
        %v925 = vadd.f32 %v413, %v924
        %v926 = vpop.f32.mrf.mxu0
        %927 = vdwg.mxu0
        %928 = vmatpush.bf16.msra.mxu0 0
        %929 = vmatpush.bf16.msra.mxu0 0
        %930 = vmatpush.bf16.msra.mxu0 0
        %931 = vmatpush.bf16.msra.mxu0 0
        %932 = vmatpush.bf16.msra.mxu0 0
        %933 = vmatpush.bf16.msra.mxu0 0
        %934 = vmatpush.bf16.msra.mxu0 0
        %935 = vmatpush.bf16.msra.mxu0 %v706
        %936 = vmatmul.bf16.gmra.mxu0 %v783
        %v937 = vpop.f32.mrf.mxu0
        %v938 = vadd.f32 %v925, %v937
        %v939 = vpop.f32.mrf.mxu0
        %940 = vdwg.mxu0
        %941 = vmatpush.bf16.msra.mxu0 %v699
        %942 = vmatpush.bf16.msra.mxu0 %v691
        %943 = vmatpush.bf16.msra.mxu0 %v683
        %944 = vmatpush.bf16.msra.mxu0 %v675
        %945 = vmatpush.bf16.msra.mxu0 %v667
        %946 = vmatpush.bf16.msra.mxu0 %v659
        %947 = vmatpush.bf16.msra.mxu0 %v651
        %948 = vmatpush.bf16.msra.mxu0 %v643
        %949 = vmatmul.bf16.gmra.mxu0 %v418
        %v950 = vpop.f32.mrf.mxu0
        %v951 = vadd.f32 %v413, %v950
        %v952 = vpop.f32.mrf.mxu0
        %953 = vdwg.mxu0
        %954 = vmatpush.bf16.msra.mxu0 0
        %955 = vmatpush.bf16.msra.mxu0 0
        %956 = vmatpush.bf16.msra.mxu0 0
        %957 = vmatpush.bf16.msra.mxu0 0
        %958 = vmatpush.bf16.msra.mxu0 0
        %959 = vmatpush.bf16.msra.mxu0 0
        %960 = vmatpush.bf16.msra.mxu0 0
        %961 = vmatpush.bf16.msra.mxu0 %v707
        %962 = vmatmul.bf16.gmra.mxu0 %v783
        %v963 = vpop.f32.mrf.mxu0
        %v964 = vadd.f32 %v951, %v963
        %v965 = vpop.f32.mrf.mxu0
        %966 = vdwg.mxu0
        %967 = vmatpush.bf16.msra.mxu0 %v700
        %968 = vmatpush.bf16.msra.mxu0 %v692
        %969 = vmatpush.bf16.msra.mxu0 %v684
        %970 = vmatpush.bf16.msra.mxu0 %v676
        %971 = vmatpush.bf16.msra.mxu0 %v668
        %972 = vmatpush.bf16.msra.mxu0 %v660
        %973 = vmatpush.bf16.msra.mxu0 %v652
        %974 = vmatpush.bf16.msra.mxu0 %v644
        %975 = vmatmul.bf16.gmra.mxu0 %v418
        %v976 = vpop.f32.mrf.mxu0
        %v977 = vadd.f32 %v413, %v976
        %v978 = vpop.f32.mrf.mxu0
        %979 = vdwg.mxu0
        %980 = vmatpush.bf16.msra.mxu0 0
        %981 = vmatpush.bf16.msra.mxu0 0
        %982 = vmatpush.bf16.msra.mxu0 0
        %983 = vmatpush.bf16.msra.mxu0 0
        %984 = vmatpush.bf16.msra.mxu0 0
        %985 = vmatpush.bf16.msra.mxu0 0
        %986 = vmatpush.bf16.msra.mxu0 0
        %987 = vmatpush.bf16.msra.mxu0 %v708
        %988 = vmatmul.bf16.gmra.mxu0 %v783
        %v989 = vpop.f32.mrf.mxu0
        %v990 = vadd.f32 %v977, %v989
        %v991 = vpop.f32.mrf.mxu0
        %992 = vdwg.mxu0
        %v993 = vmax.f32 %v808, 0.0
        %v994 = vmax.f32 %v834, 0.0
        %v995 = vmax.f32 %v860, 0.0
        %v996 = vmax.f32 %v886, 0.0
        %v997 = vmax.f32 %v912, 0.0
        %v998 = vmax.f32 %v938, 0.0
        %v999 = vmax.f32 %v964, 0.0
        %v1000 = vmax.f32 %v990, 0.0
        %v1001 = vpack.c.bf16 %v994, %v993
        %v1002 = vpack.c.bf16 %v996, %v995
        %v1003 = vpack.c.bf16 %v998, %v997
        %v1004 = vpack.c.bf16 %v1000, %v999
        %1005 = vst [vmem:[%s333] sm:$0xff] %v1001
        %1006 = vst [vmem:[%s333 + $0x8] sm:$0xff] %v1002
        %1007 = vst [vmem:[%s333 + $0x10] sm:$0xff] %v1003
        %1008 = vst [vmem:[%s333 + $0x18] sm:$0xff] %v1004
        %s1009 = smul.u32 8, %s14
        %p1010 = scmp.lt.s32.totalorder %s1009, 15
        %s1011 = scalar_select %p1010, %s1009, 15
        %s1012 = smul.addr %s1011, 4
        %s1013 = scalar_lea.vmem %s3, %s1012
        // Predicated region
        $region56: #{segmentation_net_forward.27} parent=50 // pred_check
          %p1014 = pneg %p100
        $region57: #{segmentation_net_forward.27} parent=50 // pred_check_branch
          %1016 = sbr.rel (%p1014) target = $region59
        $region58: #{segmentation_net_forward.27} parent=50 // pred_region
          %s1017 = smul.u32 8, %s14
        $region59: #{segmentation_net_forward.27} parent=50 // pred_fallthru
          _
      $region51: #{segmentation_net_forward.27} parent=5 // pred_fallthru
        _
      %p1018 = scmp.le.s32.totalorder 2, %s9
      // Predicated region
      $region60: #{segmentation_net_forward.27} parent=5 // pred_check
        %p1019 = pneg %p1018
      $region61: #{segmentation_net_forward.27} parent=5 // pred_check_branch
        %1021 = sbr.rel (%p1019) target = $region63
      $region62: #{segmentation_net_forward.27} parent=5 // pred_region
        %s1022 = ssub.s32 %s9, 2
        // Predicated region
        $region64: #{segmentation_net_forward.27} parent=62 // pred_check
          %p1023 = pneg %p106
        $region65: #{segmentation_net_forward.27} parent=62 // pred_check_branch
          %1025 = sbr.rel (%p1023) target = $region67
        $region66: #{segmentation_net_forward.27} parent=62 // pred_region
          %s1026 = smul.u32 8, %s15
          %p1027 = scmp.lt.s32.totalorder %s1026, 15
          %s1028 = scalar_select %p1027, %s1026, 15
          %s1029 = smul.addr %s1028, 4
          %s1030 = scalar_lea.vmem %s3, %s1029
        $region67: #{segmentation_net_forward.27} parent=62 // pred_fallthru
          _
      $region63: #{segmentation_net_forward.27} parent=5 // pred_fallthru
        _
    $region6: #{segmentation_net_forward.27} parent=1 // loop_footer
      %s13 = sadd.s32 1, %s9
    $region7: #{segmentation_net_forward.27} parent=1 // loop_footer_branch
      %8 = sbr.rel target = $region3
    $region8: #{segmentation_net_forward.27} parent=1 // loop_exit
      _

// kernel: segmentation_net_forward.28
$region0: #{segmentation_net_forward.28}
  #allocation0 [shape = 'u32[]', space=smem, size = 0x4, offset = 0x4, fixed_abs, tag = 'smem constant byte address 0x4 - core index']
  #allocation1 [shape = 'u32[72,128]{1,0:T(1,128)}', space=vmem, size = 0x9000, scoped, tag = 'internal scratch']
  %s0 = inlined_call_operand.vmem [shape: bf16[72,2048], index: 0, kind: input, shape index: {}]
  %s1 = inlined_call_operand.vmem [shape: bf16[8,72], index: 1, kind: input, shape index: {}]
  %s2 = inlined_call_operand.vmem [shape: f32[8,1], index: 2, kind: input, shape index: {}]
  %s3 = inlined_call_operand.vmem [shape: bf16[8,2048], index: 3, kind: output, shape index: {}]
  %s4 = sld [smem:[#allocation0]]
  $region68: #{segmentation_net_forward.28} parent=0
    _
  %s6 = ssub.s32 1, %s4
  %s7 = scalar_select 0, %s6, %s4
  $region1: #{segmentation_net_forward.28} parent=0
    #allocation2 [shape = 'u8[294912]{0}', space=vmem, size = 0x48000, scoped, tag = 'input window, operand 0']
    loop: start=0, step=1, limit=4
    $region2: #{segmentation_net_forward.28} parent=1 // loop_pre_header
      _
    $region3: #{segmentation_net_forward.28} parent=1 // loop_header
      %s9 = sphi 0, %s13
      %p10 = scmp.ge.s32.totalorder %s9, 4
      %s19 = sphi 0, %s21
      %s22 = sphi 0, %s19
      %s23 = sphi 0, %s22
      %s39 = sphi 0, %s23
      %s43 = sphi 0, %s43
      %s45 = sphi 0, %s43
      %s46 = sphi 0, %s45
      %s60 = sphi 0, %s46
      %s64 = sphi 0, %s64
      %s66 = sphi 0, %s64
      %s67 = sphi 0, %s66
      %s81 = sphi 0, %s67
      %s87 = sphi 0, %s89
      %s90 = sphi 0, %s87
      %s91 = sphi 0, %s90
      %s107 = sphi 0, %s91
    $region4: #{segmentation_net_forward.28} parent=1 // loop_header_branch
      %12 = sbr.rel (%p10) target = $region8
    $region5: #{segmentation_net_forward.28} parent=1 // loop_body
      %s14 = ssub.s32 %s9, 1
      %s15 = ssub.s32 %s9, 2
      %s16 = sadd.s32 %s9, 1
      %s17 = ssub.s32 %s9, %s16
      %p18 = scmp.eq.s32.totalorder %s17, 0
      %s20 = sadd.s32 %s19, 1
      %s21 = scalar_select %p18, %s19, %s20
      %p24 = pneg %p18
      %p25 = scmp.eq.s32.totalorder %s9, 1
      %p26 = por %p24, %p25
      %p27 = scmp.ne.s32.totalorder %s19, %s22
      %p28 = scmp.eq.s32.totalorder %s9, 0
      %p29 = por %p27, %p28
      %p30 = scmp.ne.s32.totalorder %s19, %s22
      %p31 = scmp.eq.s32.totalorder %s14, 1
      %p32 = por %p30, %p31
      %p33 = scmp.ne.s32.totalorder %s22, %s23
      %p34 = scmp.eq.s32.totalorder %s14, 0
      %p35 = por %p33, %p34
      %p36 = scmp.ne.s32.totalorder %s22, %s23
      %p37 = scmp.eq.s32.totalorder %s15, 1
      %p38 = por %p36, %p37
      %p40 = scmp.ne.s32.totalorder %s23, %s39
      %p41 = scmp.eq.s32.totalorder %s15, 0
      %p42 = por %p40, %p41
      %s44 = sadd.s32 %s43, 1
      %p47 = scmp.eq.s32.totalorder %s9, 1
      %p48 = scmp.ne.s32.totalorder %s43, %s45
      %p49 = scmp.eq.s32.totalorder %s9, 0
      %p50 = por %p48, %p49
      %p51 = scmp.ne.s32.totalorder %s43, %s45
      %p52 = scmp.eq.s32.totalorder %s14, 1
      %p53 = por %p51, %p52
      %p54 = scmp.ne.s32.totalorder %s45, %s46
      %p55 = scmp.eq.s32.totalorder %s14, 0
      %p56 = por %p54, %p55
      %p57 = scmp.ne.s32.totalorder %s45, %s46
      %p58 = scmp.eq.s32.totalorder %s15, 1
      %p59 = por %p57, %p58
      %p61 = scmp.ne.s32.totalorder %s46, %s60
      %p62 = scmp.eq.s32.totalorder %s15, 0
      %p63 = por %p61, %p62
      %s65 = sadd.s32 %s64, 1
      %p68 = scmp.eq.s32.totalorder %s9, 1
      %p69 = scmp.ne.s32.totalorder %s64, %s66
      %p70 = scmp.eq.s32.totalorder %s9, 0
      %p71 = por %p69, %p70
      %p72 = scmp.ne.s32.totalorder %s64, %s66
      %p73 = scmp.eq.s32.totalorder %s14, 1
      %p74 = por %p72, %p73
      %p75 = scmp.ne.s32.totalorder %s66, %s67
      %p76 = scmp.eq.s32.totalorder %s14, 0
      %p77 = por %p75, %p76
      %p78 = scmp.ne.s32.totalorder %s66, %s67
      %p79 = scmp.eq.s32.totalorder %s15, 1
      %p80 = por %p78, %p79
      %p82 = scmp.ne.s32.totalorder %s67, %s81
      %p83 = scmp.eq.s32.totalorder %s15, 0
      %p84 = por %p82, %p83
      %s85 = ssub.s32 %s9, %s16
      %p86 = scmp.eq.s32.totalorder %s85, 0
      %s88 = sadd.s32 %s87, 1
      %s89 = scalar_select %p86, %s87, %s88
      %p92 = pneg %p86
      %p93 = scmp.eq.s32.totalorder %s9, 1
      %p94 = por %p92, %p93
      %p95 = scmp.ne.s32.totalorder %s87, %s90
      %p96 = scmp.eq.s32.totalorder %s9, 0
      %p97 = por %p95, %p96
      %p98 = scmp.ne.s32.totalorder %s87, %s90
      %p99 = scmp.eq.s32.totalorder %s14, 1
      %p100 = por %p98, %p99
      %p101 = scmp.ne.s32.totalorder %s90, %s91
      %p102 = scmp.eq.s32.totalorder %s14, 0
      %p103 = por %p101, %p102
      %p104 = scmp.ne.s32.totalorder %s90, %s91
      %p105 = scmp.eq.s32.totalorder %s15, 1
      %p106 = por %p104, %p105
      %p108 = scmp.ne.s32.totalorder %s91, %s107
      %p109 = scmp.eq.s32.totalorder %s15, 0
      %p110 = por %p108, %p109
      %p111 = scmp.le.s32.totalorder 1, %s9
      %p112 = scmp.lt.s32.totalorder %s9, 3
      %p113 = pnand %p111, %p112
      %p114 = pneg %p113
      // Predicated region
      $region9: #{segmentation_net_forward.28} parent=5 // pred_check
        _
      $region10: #{segmentation_net_forward.28} parent=5 // pred_check_branch
        %116 = sbr.rel (%p113) target = $region12
      $region11: #{segmentation_net_forward.28} parent=5 // pred_region
        %s117 = ssub.s32 %s9, 1
        // Predicated region
        $region13: #{segmentation_net_forward.28} parent=11 // pred_check
          %p118 = pneg %p56
        $region14: #{segmentation_net_forward.28} parent=11 // pred_check_branch
          %120 = sbr.rel (%p118) target = $region16
        $region15: #{segmentation_net_forward.28} parent=11 // pred_region
          _
        $region16: #{segmentation_net_forward.28} parent=11 // pred_fallthru
          _
        // Predicated region
        $region17: #{segmentation_net_forward.28} parent=11 // pred_check
          %p121 = pneg %p77
        $region18: #{segmentation_net_forward.28} parent=11 // pred_check_branch
          %123 = sbr.rel (%p121) target = $region20
        $region19: #{segmentation_net_forward.28} parent=11 // pred_region
          _
        $region20: #{segmentation_net_forward.28} parent=11 // pred_fallthru
          _
      $region12: #{segmentation_net_forward.28} parent=5 // pred_fallthru
        _
      %p124 = scmp.lt.s32.totalorder %s9, 2
      // Predicated region
      $region21: #{segmentation_net_forward.28} parent=5 // pred_check
        %p125 = pneg %p124
      $region22: #{segmentation_net_forward.28} parent=5 // pred_check_branch
        %127 = sbr.rel (%p125) target = $region24
      $region23: #{segmentation_net_forward.28} parent=5 // pred_region
        // Predicated region
        $region25: #{segmentation_net_forward.28} parent=23 // pred_check
          %p128 = pneg %p29
        $region26: #{segmentation_net_forward.28} parent=23 // pred_check_branch
          %130 = sbr.rel (%p128) target = $region28
        $region27: #{segmentation_net_forward.28} parent=23 // pred_region
          %s131 = sand.u32 %s19, 1
          %s132 = sand.u32 %s19, 1
          %s133 = smul.addr %s132, 288
          %s134 = scalar_lea.vmem [#allocation2], %s133
          %s135 = smul.u32 8, %s9
          %s136 = smul.addr %s135, 4
          %s137 = scalar_lea.vmem %s0, %s136
          // Predicated region
          $region29: #{segmentation_net_forward.28} parent=27 // pred_check
            _
          $region30: #{segmentation_net_forward.28} parent=27 // pred_check_branch
            %139 = sbr.rel (0) target = $region32
          $region31: #{segmentation_net_forward.28} parent=27 // pred_region
            // Predicated region
            $region33: #{segmentation_net_forward.28} parent=31 // pred_check
              _
            $region34: #{segmentation_net_forward.28} parent=31 // pred_check_branch
              %141 = sbr.rel (0) target = $region36
            $region35: #{segmentation_net_forward.28} parent=31 // pred_region
              loop: start=0, step=1, limit=1
              $region37: #{segmentation_net_forward.28} parent=35 // loop_pre_header
                _
              $region38: #{segmentation_net_forward.28} parent=35 // loop_header
                %s143 = sphi 0, %s147
                %p144 = scmp.ge.s32.totalorder %s143, 1
                %s148 = sphi %s137, %s137
                %s149 = sphi %s134, %s134
              $region39: #{segmentation_net_forward.28} parent=35 // loop_header_branch
                %146 = sbr.rel (%p144) target = $region43
              $region40: #{segmentation_net_forward.28} parent=35 // loop_body
                %v150 = vld [vmem:[%s148] sm:$0xff]
                %151 = vst [vmem:[%s149] sm:$0xff] %v150
                %v152 = vld [vmem:[%s148 + $0x8] sm:$0xff]
                %153 = vst [vmem:[%s149 + $0x8] sm:$0xff] %v152
                %v154 = vld [vmem:[%s148 + $0x10] sm:$0xff]
                %155 = vst [vmem:[%s149 + $0x10] sm:$0xff] %v154
                %v156 = vld [vmem:[%s148 + $0x18] sm:$0xff]
                %157 = vst [vmem:[%s149 + $0x18] sm:$0xff] %v156
                %v158 = vld [vmem:[%s148 + $0x40] sm:$0xff]
                %159 = vst [vmem:[%s149 + $0x20] sm:$0xff] %v158
                %v160 = vld [vmem:[%s148 + $0x48] sm:$0xff]
                %161 = vst [vmem:[%s149 + $0x28] sm:$0xff] %v160
                %v162 = vld [vmem:[%s148 + $0x50] sm:$0xff]
                %163 = vst [vmem:[%s149 + $0x30] sm:$0xff] %v162
                %v164 = vld [vmem:[%s148 + $0x58] sm:$0xff]
                %165 = vst [vmem:[%s149 + $0x38] sm:$0xff] %v164
                %v166 = vld [vmem:[%s148 + $0x80] sm:$0xff]
                %167 = vst [vmem:[%s149 + $0x40] sm:$0xff] %v166
                %v168 = vld [vmem:[%s148 + $0x88] sm:$0xff]
                %169 = vst [vmem:[%s149 + $0x48] sm:$0xff] %v168
                %v170 = vld [vmem:[%s148 + $0x90] sm:$0xff]
                %171 = vst [vmem:[%s149 + $0x50] sm:$0xff] %v170
                %v172 = vld [vmem:[%s148 + $0x98] sm:$0xff]
                %173 = vst [vmem:[%s149 + $0x58] sm:$0xff] %v172
                %v174 = vld [vmem:[%s148 + $0xc0] sm:$0xff]
                %175 = vst [vmem:[%s149 + $0x60] sm:$0xff] %v174
                %v176 = vld [vmem:[%s148 + $0xc8] sm:$0xff]
                %177 = vst [vmem:[%s149 + $0x68] sm:$0xff] %v176
                %v178 = vld [vmem:[%s148 + $0xd0] sm:$0xff]
                %179 = vst [vmem:[%s149 + $0x70] sm:$0xff] %v178
                %v180 = vld [vmem:[%s148 + $0xd8] sm:$0xff]
                %181 = vst [vmem:[%s149 + $0x78] sm:$0xff] %v180
                %v182 = vld [vmem:[%s148 + $0x100] sm:$0xff]
                %183 = vst [vmem:[%s149 + $0x80] sm:$0xff] %v182
                %v184 = vld [vmem:[%s148 + $0x108] sm:$0xff]
                %185 = vst [vmem:[%s149 + $0x88] sm:$0xff] %v184
                %v186 = vld [vmem:[%s148 + $0x110] sm:$0xff]
                %187 = vst [vmem:[%s149 + $0x90] sm:$0xff] %v186
                %v188 = vld [vmem:[%s148 + $0x118] sm:$0xff]
                %189 = vst [vmem:[%s149 + $0x98] sm:$0xff] %v188
                %v190 = vld [vmem:[%s148 + $0x140] sm:$0xff]
                %191 = vst [vmem:[%s149 + $0xa0] sm:$0xff] %v190
                %v192 = vld [vmem:[%s148 + $0x148] sm:$0xff]
                %193 = vst [vmem:[%s149 + $0xa8] sm:$0xff] %v192
                %v194 = vld [vmem:[%s148 + $0x150] sm:$0xff]
                %195 = vst [vmem:[%s149 + $0xb0] sm:$0xff] %v194
                %v196 = vld [vmem:[%s148 + $0x158] sm:$0xff]
                %197 = vst [vmem:[%s149 + $0xb8] sm:$0xff] %v196
                %v198 = vld [vmem:[%s148 + $0x180] sm:$0xff]
                %199 = vst [vmem:[%s149 + $0xc0] sm:$0xff] %v198
                %v200 = vld [vmem:[%s148 + $0x188] sm:$0xff]
                %201 = vst [vmem:[%s149 + $0xc8] sm:$0xff] %v200
                %v202 = vld [vmem:[%s148 + $0x190] sm:$0xff]
                %203 = vst [vmem:[%s149 + $0xd0] sm:$0xff] %v202
                %v204 = vld [vmem:[%s148 + $0x198] sm:$0xff]
                %205 = vst [vmem:[%s149 + $0xd8] sm:$0xff] %v204
                %v206 = vld [vmem:[%s148 + $0x1c0] sm:$0xff]
                %207 = vst [vmem:[%s149 + $0xe0] sm:$0xff] %v206
                %v208 = vld [vmem:[%s148 + $0x1c8] sm:$0xff]
                %209 = vst [vmem:[%s149 + $0xe8] sm:$0xff] %v208
                %v210 = vld [vmem:[%s148 + $0x1d0] sm:$0xff]
                %211 = vst [vmem:[%s149 + $0xf0] sm:$0xff] %v210
                %v212 = vld [vmem:[%s148 + $0x1d8] sm:$0xff]
                %213 = vst [vmem:[%s149 + $0xf8] sm:$0xff] %v212
                %v214 = vld [vmem:[%s148 + $0x200] sm:$0xff]
                %215 = vst [vmem:[%s149 + $0x100] sm:$0xff] %v214
                %v216 = vld [vmem:[%s148 + $0x208] sm:$0xff]
                %217 = vst [vmem:[%s149 + $0x108] sm:$0xff] %v216
                %v218 = vld [vmem:[%s148 + $0x210] sm:$0xff]
                %219 = vst [vmem:[%s149 + $0x110] sm:$0xff] %v218
                %v220 = vld [vmem:[%s148 + $0x218] sm:$0xff]
                %221 = vst [vmem:[%s149 + $0x118] sm:$0xff] %v220
              $region41: #{segmentation_net_forward.28} parent=35 // loop_footer
                %s147 = sadd.s32 1, %s143
              $region42: #{segmentation_net_forward.28} parent=35 // loop_footer_branch
                %142 = sbr.rel target = $region38
              $region43: #{segmentation_net_forward.28} parent=35 // loop_exit
                _
            $region36: #{segmentation_net_forward.28} parent=31 // pred_fallthru
              _
            // Predicated region
            $region44: #{segmentation_net_forward.28} parent=31 // pred_check
              _
            $region45: #{segmentation_net_forward.28} parent=31 // pred_check_branch
              %223 = sbr.rel target = $region47
            $region46: #{segmentation_net_forward.28} parent=31 // pred_region
              _
            $region47: #{segmentation_net_forward.28} parent=31 // pred_fallthru
              _
          $region32: #{segmentation_net_forward.28} parent=27 // pred_fallthru
            _
          %224 = vnop
        $region28: #{segmentation_net_forward.28} parent=23 // pred_fallthru
          _
      $region24: #{segmentation_net_forward.28} parent=5 // pred_fallthru
        _
      %p225 = scmp.le.s32.totalorder 1, %s9
      %p226 = scmp.lt.s32.totalorder %s9, 3
      %p227 = pnand %p225, %p226
      %p228 = pneg %p227
      // Predicated region
      $region48: #{segmentation_net_forward.28} parent=5 // pred_check
        _
      $region49: #{segmentation_net_forward.28} parent=5 // pred_check_branch
        %230 = sbr.rel (%p227) target = $region51
      $region50: #{segmentation_net_forward.28} parent=5 // pred_region
        %s231 = ssub.s32 %s9, 1
        %s232 = sand.u32 %s22, 1
        %s233 = sand.u32 %s22, 1
        %s234 = smul.addr %s233, 288
        %s235 = scalar_lea.vmem [#allocation2], %s234
        // Predicated region
        $region52: #{segmentation_net_forward.28} parent=50 // pred_check
          %p236 = pneg %p35
        $region53: #{segmentation_net_forward.28} parent=50 // pred_check_branch
          %238 = sbr.rel (%p236) target = $region55
        $region54: #{segmentation_net_forward.28} parent=50 // pred_region
          _
        $region55: #{segmentation_net_forward.28} parent=50 // pred_fallthru
          _
        %s239 = sand.u32 %s22, 1
        %s240 = sand.u32 %s22, 1
        %s241 = smul.addr %s240, 288
        %s242 = scalar_lea.vmem [#allocation2], %s241
        %p243 = pneg %p35
        %p244 = pneg %p32
        %p245 = pneg %p56
        %p246 = pneg %p53
        %p247 = pneg %p77
        %p248 = pneg %p74
        %p249 = pneg %p103
        %p250 = pneg %p100
        %s251 = smul.u32 8, %s14
        %p252 = scmp.lt.s32.totalorder %s251, 15
        %s253 = scalar_select %p252, %s251, 15
        %s254 = smul.addr %s253, 4
        %s255 = scalar_lea.vmem %s3, %s254
        %s256 = smul.u32 8, %s14
        %s257 = smul.u32 8, %s14
        %p258 = scmp.lt.s32.totalorder %s257, 15
        %s259 = scalar_select %p258, %s257, 15
        %s260 = smul.addr %s259, 4
        %s261 = scalar_lea.vmem %s3, %s260
        %s262 = smul.u32 8, %s14
        %v264 = vld [vmem:[%s1] sm:$0xf]
        %v265 = vld [vmem:[%s235] sm:$0xff]
        %v266 = vld [vmem:[%s235 + $0x8] sm:$0xff]
        %v267 = vld [vmem:[%s235 + $0x10] sm:$0xff]
        %v268 = vld [vmem:[%s235 + $0x18] sm:$0xff]
        %v269 = vld [vmem:[%s235 + $0x20] sm:$0xff]
        %v270 = vld [vmem:[%s235 + $0x28] sm:$0xff]
        %v271 = vld [vmem:[%s235 + $0x30] sm:$0xff]
        %v272 = vld [vmem:[%s235 + $0x38] sm:$0xff]
        %v273 = vld [vmem:[%s235 + $0x40] sm:$0xff]
        %v274 = vld [vmem:[%s235 + $0x48] sm:$0xff]
        %v275 = vld [vmem:[%s235 + $0x50] sm:$0xff]
        %v276 = vld [vmem:[%s235 + $0x58] sm:$0xff]
        %v277 = vld [vmem:[%s235 + $0x60] sm:$0xff]
        %v278 = vld [vmem:[%s235 + $0x68] sm:$0xff]
        %v279 = vld [vmem:[%s235 + $0x70] sm:$0xff]
        %v280 = vld [vmem:[%s235 + $0x78] sm:$0xff]
        %v281 = vld [vmem:[%s235 + $0x80] sm:$0xff]
        %v282 = vld [vmem:[%s235 + $0x88] sm:$0xff]
        %v283 = vld [vmem:[%s235 + $0x90] sm:$0xff]
        %v284 = vld [vmem:[%s235 + $0x98] sm:$0xff]
        %v285 = vld [vmem:[%s235 + $0xa0] sm:$0xff]
        %v286 = vld [vmem:[%s235 + $0xa8] sm:$0xff]
        %v287 = vld [vmem:[%s235 + $0xb0] sm:$0xff]
        %v288 = vld [vmem:[%s235 + $0xb8] sm:$0xff]
        %v289 = vld [vmem:[%s235 + $0xc0] sm:$0xff]
        %v290 = vld [vmem:[%s235 + $0xc8] sm:$0xff]
        %v291 = vld [vmem:[%s235 + $0xd0] sm:$0xff]
        %v292 = vld [vmem:[%s235 + $0xd8] sm:$0xff]
        %v293 = vld [vmem:[%s235 + $0xe0] sm:$0xff]
        %v294 = vld [vmem:[%s235 + $0xe8] sm:$0xff]
        %v295 = vld [vmem:[%s235 + $0xf0] sm:$0xff]
        %v296 = vld [vmem:[%s235 + $0xf8] sm:$0xff]
        %v297 = vld [vmem:[%s235 + $0x100] sm:$0xff]
        %v298 = vld [vmem:[%s235 + $0x108] sm:$0xff]
        %v299 = vld [vmem:[%s235 + $0x110] sm:$0xff]
        %v300 = vld [vmem:[%s235 + $0x118] sm:$0xff]
        %v301 = vld [vmem:[%s2] sm:$0xff]
        %303 = vset.pattern.permute.xlu0 0
        %304 = vperm.xlu0 %303, %v301
        %v305 = vpop.permute.xlu0 %304
        %v343 = vunpack.c.l.b16 %v265
        %v344 = vunpack.c.h.b16 %v265
        %v345 = vunpack.c.l.b16 %v266
        %v346 = vunpack.c.h.b16 %v266
        %v347 = vunpack.c.l.b16 %v267
        %v348 = vunpack.c.h.b16 %v267
        %v349 = vunpack.c.l.b16 %v268
        %v350 = vunpack.c.h.b16 %v268
        %v351 = vunpack.c.l.b16 %v269
        %v352 = vunpack.c.h.b16 %v269
        %v353 = vunpack.c.l.b16 %v270
        %v354 = vunpack.c.h.b16 %v270
        %v355 = vunpack.c.l.b16 %v271
        %v356 = vunpack.c.h.b16 %v271
        %v357 = vunpack.c.l.b16 %v272
        %v358 = vunpack.c.h.b16 %v272
        %v359 = vunpack.c.l.b16 %v273
        %v360 = vunpack.c.h.b16 %v273
        %v361 = vunpack.c.l.b16 %v274
        %v362 = vunpack.c.h.b16 %v274
        %v363 = vunpack.c.l.b16 %v275
        %v364 = vunpack.c.h.b16 %v275
        %v365 = vunpack.c.l.b16 %v276
        %v366 = vunpack.c.h.b16 %v276
        %v367 = vunpack.c.l.b16 %v277
        %v368 = vunpack.c.h.b16 %v277
        %v369 = vunpack.c.l.b16 %v278
        %v370 = vunpack.c.h.b16 %v278
        %v371 = vunpack.c.l.b16 %v279
        %v372 = vunpack.c.h.b16 %v279
        %v373 = vunpack.c.l.b16 %v280
        %v374 = vunpack.c.h.b16 %v280
        %v375 = vunpack.c.l.b16 %v281
        %v376 = vunpack.c.h.b16 %v281
        %v377 = vunpack.c.l.b16 %v282
        %v378 = vunpack.c.h.b16 %v282
        %v379 = vunpack.c.l.b16 %v283
        %v380 = vunpack.c.h.b16 %v283
        %v381 = vunpack.c.l.b16 %v284
        %v382 = vunpack.c.h.b16 %v284
        %v383 = vunpack.c.l.b16 %v285
        %v384 = vunpack.c.h.b16 %v285
        %v385 = vunpack.c.l.b16 %v286
        %v386 = vunpack.c.h.b16 %v286
        %v387 = vunpack.c.l.b16 %v287
        %v388 = vunpack.c.h.b16 %v287
        %v389 = vunpack.c.l.b16 %v288
        %v390 = vunpack.c.h.b16 %v288
        %v391 = vunpack.c.l.b16 %v289
        %v392 = vunpack.c.h.b16 %v289
        %v393 = vunpack.c.l.b16 %v290
        %v394 = vunpack.c.h.b16 %v290
        %v395 = vunpack.c.l.b16 %v291
        %v396 = vunpack.c.h.b16 %v291
        %v397 = vunpack.c.l.b16 %v292
        %v398 = vunpack.c.h.b16 %v292
        %v399 = vunpack.c.l.b16 %v293
        %v400 = vunpack.c.h.b16 %v293
        %v401 = vunpack.c.l.b16 %v294
        %v402 = vunpack.c.h.b16 %v294
        %v403 = vunpack.c.l.b16 %v295
        %v404 = vunpack.c.h.b16 %v295
        %v405 = vunpack.c.l.b16 %v296
        %v406 = vunpack.c.h.b16 %v296
        %v407 = vunpack.c.l.b16 %v297
        %v408 = vunpack.c.h.b16 %v297
        %v409 = vunpack.c.l.b16 %v298
        %v410 = vunpack.c.h.b16 %v298
        %v411 = vunpack.c.l.b16 %v299
        %v412 = vunpack.c.h.b16 %v299
        %v413 = vunpack.c.l.b16 %v300
        %v414 = vunpack.c.h.b16 %v300
        %v415 = vpack.c.b16 %v351, %v343
        %v416 = vpack.c.b16 %v352, %v344
        %v417 = vpack.c.b16 %v353, %v345
        %v418 = vpack.c.b16 %v354, %v346
        %v419 = vpack.c.b16 %v355, %v347
        %v420 = vpack.c.b16 %v356, %v348
        %v421 = vpack.c.b16 %v357, %v349
        %v422 = vpack.c.b16 %v358, %v350
        %v423 = vpack.c.b16 %v367, %v359
        %v424 = vpack.c.b16 %v368, %v360
        %v425 = vpack.c.b16 %v369, %v361
        %v426 = vpack.c.b16 %v370, %v362
        %v427 = vpack.c.b16 %v371, %v363
        %v428 = vpack.c.b16 %v372, %v364
        %v429 = vpack.c.b16 %v373, %v365
        %v430 = vpack.c.b16 %v374, %v366
        %v431 = vpack.c.b16 %v383, %v375
        %v432 = vpack.c.b16 %v384, %v376
        %v433 = vpack.c.b16 %v385, %v377
        %v434 = vpack.c.b16 %v386, %v378
        %v435 = vpack.c.b16 %v387, %v379
        %v436 = vpack.c.b16 %v388, %v380
        %v437 = vpack.c.b16 %v389, %v381
        %v438 = vpack.c.b16 %v390, %v382
        %v439 = vpack.c.b16 %v399, %v391
        %v440 = vpack.c.b16 %v400, %v392
        %v441 = vpack.c.b16 %v401, %v393
        %v442 = vpack.c.b16 %v402, %v394
        %v443 = vpack.c.b16 %v403, %v395
        %v444 = vpack.c.b16 %v404, %v396
        %v445 = vpack.c.b16 %v405, %v397
        %v446 = vpack.c.b16 %v406, %v398
        %v447 = vpack.c.b16 %v407, %v407
        %v448 = vpack.c.b16 %v408, %v408
        %v449 = vpack.c.b16 %v409, %v409
        %v450 = vpack.c.b16 %v410, %v410
        %v451 = vpack.c.b16 %v411, %v411
        %v452 = vpack.c.b16 %v412, %v412
        %v453 = vpack.c.b16 %v413, %v413
        %v454 = vpack.c.b16 %v414, %v414
        %vm487 = vcmask 588800
        %v489 = vsel %vm487, %v264, 0
        %vm491 = vcmask 1043456
        %v493 = vsel %vm491, %v447, 0
        %v496 = vsel %vm491, %v448, 0
        %v499 = vsel %vm491, %v449, 0
        %v502 = vsel %vm491, %v450, 0
        %v505 = vsel %vm491, %v451, 0
        %v508 = vsel %vm491, %v452, 0
        %v511 = vsel %vm491, %v453, 0
        %v514 = vsel %vm491, %v454, 0
        %516 = vmatpush.bf16.msra.mxu0 0
        %517 = vmatpush.bf16.msra.mxu0 0
        %518 = vmatpush.bf16.msra.mxu0 0
        %519 = vmatpush.bf16.msra.mxu0 %v493
        %520 = vmatpush.bf16.msra.mxu0 %v439
        %521 = vmatpush.bf16.msra.mxu0 %v431
        %522 = vmatpush.bf16.msra.mxu0 %v423
        %523 = vmatpush.bf16.msra.mxu0 %v415
        %524 = vmatmul.bf16.gmra.mxu0 %v489
        %v525 = vpop.f32.mrf.mxu0
        %v526 = vadd.f32 %v305, %v525
        %v527 = vpop.f32.mrf.mxu0
        %528 = vdwg.mxu0
        %529 = vmatpush.bf16.msra.mxu0 0
        %530 = vmatpush.bf16.msra.mxu0 0
        %531 = vmatpush.bf16.msra.mxu0 0
        %532 = vmatpush.bf16.msra.mxu0 %v496
        %533 = vmatpush.bf16.msra.mxu0 %v440
        %534 = vmatpush.bf16.msra.mxu0 %v432
        %535 = vmatpush.bf16.msra.mxu0 %v424
        %536 = vmatpush.bf16.msra.mxu0 %v416
        %537 = vmatmul.bf16.gmra.mxu0 %v489
        %v538 = vpop.f32.mrf.mxu0
        %v539 = vadd.f32 %v305, %v538
        %v540 = vpop.f32.mrf.mxu0
        %541 = vdwg.mxu0
        %542 = vmatpush.bf16.msra.mxu0 0
        %543 = vmatpush.bf16.msra.mxu0 0
        %544 = vmatpush.bf16.msra.mxu0 0
        %545 = vmatpush.bf16.msra.mxu0 %v499
        %546 = vmatpush.bf16.msra.mxu0 %v441
        %547 = vmatpush.bf16.msra.mxu0 %v433
        %548 = vmatpush.bf16.msra.mxu0 %v425
        %549 = vmatpush.bf16.msra.mxu0 %v417
        %550 = vmatmul.bf16.gmra.mxu0 %v489
        %v551 = vpop.f32.mrf.mxu0
        %v552 = vadd.f32 %v305, %v551
        %v553 = vpop.f32.mrf.mxu0
        %554 = vdwg.mxu0
        %555 = vmatpush.bf16.msra.mxu0 0
        %556 = vmatpush.bf16.msra.mxu0 0
        %557 = vmatpush.bf16.msra.mxu0 0
        %558 = vmatpush.bf16.msra.mxu0 %v502
        %559 = vmatpush.bf16.msra.mxu0 %v442
        %560 = vmatpush.bf16.msra.mxu0 %v434
        %561 = vmatpush.bf16.msra.mxu0 %v426
        %562 = vmatpush.bf16.msra.mxu0 %v418
        %563 = vmatmul.bf16.gmra.mxu0 %v489
        %v564 = vpop.f32.mrf.mxu0
        %v565 = vadd.f32 %v305, %v564
        %v566 = vpop.f32.mrf.mxu0
        %567 = vdwg.mxu0
        %568 = vmatpush.bf16.msra.mxu0 0
        %569 = vmatpush.bf16.msra.mxu0 0
        %570 = vmatpush.bf16.msra.mxu0 0
        %571 = vmatpush.bf16.msra.mxu0 %v505
        %572 = vmatpush.bf16.msra.mxu0 %v443
        %573 = vmatpush.bf16.msra.mxu0 %v435
        %574 = vmatpush.bf16.msra.mxu0 %v427
        %575 = vmatpush.bf16.msra.mxu0 %v419
        %576 = vmatmul.bf16.gmra.mxu0 %v489
        %v577 = vpop.f32.mrf.mxu0
        %v578 = vadd.f32 %v305, %v577
        %v579 = vpop.f32.mrf.mxu0
        %580 = vdwg.mxu0
        %581 = vmatpush.bf16.msra.mxu0 0
        %582 = vmatpush.bf16.msra.mxu0 0
        %583 = vmatpush.bf16.msra.mxu0 0
        %584 = vmatpush.bf16.msra.mxu0 %v508
        %585 = vmatpush.bf16.msra.mxu0 %v444
        %586 = vmatpush.bf16.msra.mxu0 %v436
        %587 = vmatpush.bf16.msra.mxu0 %v428
        %588 = vmatpush.bf16.msra.mxu0 %v420
        %589 = vmatmul.bf16.gmra.mxu0 %v489
        %v590 = vpop.f32.mrf.mxu0
        %v591 = vadd.f32 %v305, %v590
        %v592 = vpop.f32.mrf.mxu0
        %593 = vdwg.mxu0
        %594 = vmatpush.bf16.msra.mxu0 0
        %595 = vmatpush.bf16.msra.mxu0 0
        %596 = vmatpush.bf16.msra.mxu0 0
        %597 = vmatpush.bf16.msra.mxu0 %v511
        %598 = vmatpush.bf16.msra.mxu0 %v445
        %599 = vmatpush.bf16.msra.mxu0 %v437
        %600 = vmatpush.bf16.msra.mxu0 %v429
        %601 = vmatpush.bf16.msra.mxu0 %v421
        %602 = vmatmul.bf16.gmra.mxu0 %v489
        %v603 = vpop.f32.mrf.mxu0
        %v604 = vadd.f32 %v305, %v603
        %v605 = vpop.f32.mrf.mxu0
        %606 = vdwg.mxu0
        %607 = vmatpush.bf16.msra.mxu0 0
        %608 = vmatpush.bf16.msra.mxu0 0
        %609 = vmatpush.bf16.msra.mxu0 0
        %610 = vmatpush.bf16.msra.mxu0 %v514
        %611 = vmatpush.bf16.msra.mxu0 %v446
        %612 = vmatpush.bf16.msra.mxu0 %v438
        %613 = vmatpush.bf16.msra.mxu0 %v430
        %614 = vmatpush.bf16.msra.mxu0 %v422
        %615 = vmatmul.bf16.gmra.mxu0 %v489
        %v616 = vpop.f32.mrf.mxu0
        %v617 = vadd.f32 %v305, %v616
        %v618 = vpop.f32.mrf.mxu0
        %619 = vdwg.mxu0
        %v620 = vmax.f32 %v526, 0.0
        %v621 = vmax.f32 %v539, 0.0
        %v622 = vmax.f32 %v552, 0.0
        %v623 = vmax.f32 %v565, 0.0
        %v624 = vmax.f32 %v578, 0.0
        %v625 = vmax.f32 %v591, 0.0
        %v626 = vmax.f32 %v604, 0.0
        %v627 = vmax.f32 %v617, 0.0
        %v628 = vpack.c.bf16 %v621, %v620
        %v629 = vpack.c.bf16 %v623, %v622
        %v630 = vpack.c.bf16 %v625, %v624
        %v631 = vpack.c.bf16 %v627, %v626
        %632 = vst [vmem:[%s261] sm:$0xff] %v628
        %633 = vst [vmem:[%s261 + $0x8] sm:$0xff] %v629
        %634 = vst [vmem:[%s261 + $0x10] sm:$0xff] %v630
        %635 = vst [vmem:[%s261 + $0x18] sm:$0xff] %v631
        %s636 = smul.u32 8, %s14
        %p637 = scmp.lt.s32.totalorder %s636, 15
        %s638 = scalar_select %p637, %s636, 15
        %s639 = smul.addr %s638, 4
        %s640 = scalar_lea.vmem %s3, %s639
        // Predicated region
        $region56: #{segmentation_net_forward.28} parent=50 // pred_check
          %p641 = pneg %p100
        $region57: #{segmentation_net_forward.28} parent=50 // pred_check_branch
          %643 = sbr.rel (%p641) target = $region59
        $region58: #{segmentation_net_forward.28} parent=50 // pred_region
          %s644 = smul.u32 8, %s14
        $region59: #{segmentation_net_forward.28} parent=50 // pred_fallthru
          _
      $region51: #{segmentation_net_forward.28} parent=5 // pred_fallthru
        _
      %p645 = scmp.le.s32.totalorder 2, %s9
      // Predicated region
      $region60: #{segmentation_net_forward.28} parent=5 // pred_check
        %p646 = pneg %p645
      $region61: #{segmentation_net_forward.28} parent=5 // pred_check_branch
        %648 = sbr.rel (%p646) target = $region63
      $region62: #{segmentation_net_forward.28} parent=5 // pred_region
        %s649 = ssub.s32 %s9, 2
        // Predicated region
        $region64: #{segmentation_net_forward.28} parent=62 // pred_check
          %p650 = pneg %p106
        $region65: #{segmentation_net_forward.28} parent=62 // pred_check_branch
          %652 = sbr.rel (%p650) target = $region67
        $region66: #{segmentation_net_forward.28} parent=62 // pred_region
          %s653 = smul.u32 8, %s15
          %p654 = scmp.lt.s32.totalorder %s653, 15
          %s655 = scalar_select %p654, %s653, 15
          %s656 = smul.addr %s655, 4
          %s657 = scalar_lea.vmem %s3, %s656
        $region67: #{segmentation_net_forward.28} parent=62 // pred_fallthru
          _
      $region63: #{segmentation_net_forward.28} parent=5 // pred_fallthru
        _
    $region6: #{segmentation_net_forward.28} parent=1 // loop_footer
      %s13 = sadd.s32 1, %s9
    $region7: #{segmentation_net_forward.28} parent=1 // loop_footer_branch
      %8 = sbr.rel target = $region3
    $region8: #{segmentation_net_forward.28} parent=1 // loop_exit
      _

// kernel: segmentation_net_forward.29
$region0: #{segmentation_net_forward.29}
  #allocation0 [shape = 'u32[]', space=smem, size = 0x4, offset = 0x4, fixed_abs, tag = 'smem constant byte address 0x4 - core index']
  #allocation1 [shape = 'u32[72,128]{1,0:T(1,128)}', space=vmem, size = 0x9000, scoped, tag = 'internal scratch']
  %s0 = inlined_call_operand.vmem [shape: bf16[72,8192], index: 0, kind: input, shape index: {}]
  %s1 = inlined_call_operand.vmem [shape: bf16[8,72], index: 1, kind: input, shape index: {}]
  %s2 = inlined_call_operand.vmem [shape: f32[8,1], index: 2, kind: input, shape index: {}]
  %s3 = inlined_call_operand.vmem [shape: bf16[8,8192], index: 3, kind: output, shape index: {}]
  %s4 = sld [smem:[#allocation0]]
  $region68: #{segmentation_net_forward.29} parent=0
    _
  %s6 = ssub.s32 1, %s4
  %s7 = scalar_select 0, %s6, %s4
  $region1: #{segmentation_net_forward.29} parent=0
    #allocation2 [shape = 'u8[589824]{0}', space=vmem, size = 0x90000, scoped, tag = 'input window, operand 0']
    loop: start=0, step=1, limit=6
    $region2: #{segmentation_net_forward.29} parent=1 // loop_pre_header
      _
    $region3: #{segmentation_net_forward.29} parent=1 // loop_header
      %s9 = sphi 0, %s13
      %p10 = scmp.ge.s32.totalorder %s9, 6
      %s19 = sphi 0, %s21
      %s22 = sphi 0, %s19
      %s23 = sphi 0, %s22
      %s39 = sphi 0, %s23
      %s43 = sphi 0, %s43
      %s45 = sphi 0, %s43
      %s46 = sphi 0, %s45
      %s60 = sphi 0, %s46
      %s64 = sphi 0, %s64
      %s66 = sphi 0, %s64
      %s67 = sphi 0, %s66
      %s81 = sphi 0, %s67
      %s87 = sphi 0, %s89
      %s90 = sphi 0, %s87
      %s91 = sphi 0, %s90
      %s107 = sphi 0, %s91
    $region4: #{segmentation_net_forward.29} parent=1 // loop_header_branch
      %12 = sbr.rel (%p10) target = $region8
    $region5: #{segmentation_net_forward.29} parent=1 // loop_body
      %s14 = ssub.s32 %s9, 1
      %s15 = ssub.s32 %s9, 2
      %s16 = sadd.s32 %s9, 1
      %s17 = ssub.s32 %s9, %s16
      %p18 = scmp.eq.s32.totalorder %s17, 0
      %s20 = sadd.s32 %s19, 1
      %s21 = scalar_select %p18, %s19, %s20
      %p24 = pneg %p18
      %p25 = scmp.eq.s32.totalorder %s9, 3
      %p26 = por %p24, %p25
      %p27 = scmp.ne.s32.totalorder %s19, %s22
      %p28 = scmp.eq.s32.totalorder %s9, 0
      %p29 = por %p27, %p28
      %p30 = scmp.ne.s32.totalorder %s19, %s22
      %p31 = scmp.eq.s32.totalorder %s14, 3
      %p32 = por %p30, %p31
      %p33 = scmp.ne.s32.totalorder %s22, %s23
      %p34 = scmp.eq.s32.totalorder %s14, 0
      %p35 = por %p33, %p34
      %p36 = scmp.ne.s32.totalorder %s22, %s23
      %p37 = scmp.eq.s32.totalorder %s15, 3
      %p38 = por %p36, %p37
      %p40 = scmp.ne.s32.totalorder %s23, %s39
      %p41 = scmp.eq.s32.totalorder %s15, 0
      %p42 = por %p40, %p41
      %s44 = sadd.s32 %s43, 1
      %p47 = scmp.eq.s32.totalorder %s9, 3
      %p48 = scmp.ne.s32.totalorder %s43, %s45
      %p49 = scmp.eq.s32.totalorder %s9, 0
      %p50 = por %p48, %p49
      %p51 = scmp.ne.s32.totalorder %s43, %s45
      %p52 = scmp.eq.s32.totalorder %s14, 3
      %p53 = por %p51, %p52
      %p54 = scmp.ne.s32.totalorder %s45, %s46
      %p55 = scmp.eq.s32.totalorder %s14, 0
      %p56 = por %p54, %p55
      %p57 = scmp.ne.s32.totalorder %s45, %s46
      %p58 = scmp.eq.s32.totalorder %s15, 3
      %p59 = por %p57, %p58
      %p61 = scmp.ne.s32.totalorder %s46, %s60
      %p62 = scmp.eq.s32.totalorder %s15, 0
      %p63 = por %p61, %p62
      %s65 = sadd.s32 %s64, 1
      %p68 = scmp.eq.s32.totalorder %s9, 3
      %p69 = scmp.ne.s32.totalorder %s64, %s66
      %p70 = scmp.eq.s32.totalorder %s9, 0
      %p71 = por %p69, %p70
      %p72 = scmp.ne.s32.totalorder %s64, %s66
      %p73 = scmp.eq.s32.totalorder %s14, 3
      %p74 = por %p72, %p73
      %p75 = scmp.ne.s32.totalorder %s66, %s67
      %p76 = scmp.eq.s32.totalorder %s14, 0
      %p77 = por %p75, %p76
      %p78 = scmp.ne.s32.totalorder %s66, %s67
      %p79 = scmp.eq.s32.totalorder %s15, 3
      %p80 = por %p78, %p79
      %p82 = scmp.ne.s32.totalorder %s67, %s81
      %p83 = scmp.eq.s32.totalorder %s15, 0
      %p84 = por %p82, %p83
      %s85 = ssub.s32 %s9, %s16
      %p86 = scmp.eq.s32.totalorder %s85, 0
      %s88 = sadd.s32 %s87, 1
      %s89 = scalar_select %p86, %s87, %s88
      %p92 = pneg %p86
      %p93 = scmp.eq.s32.totalorder %s9, 3
      %p94 = por %p92, %p93
      %p95 = scmp.ne.s32.totalorder %s87, %s90
      %p96 = scmp.eq.s32.totalorder %s9, 0
      %p97 = por %p95, %p96
      %p98 = scmp.ne.s32.totalorder %s87, %s90
      %p99 = scmp.eq.s32.totalorder %s14, 3
      %p100 = por %p98, %p99
      %p101 = scmp.ne.s32.totalorder %s90, %s91
      %p102 = scmp.eq.s32.totalorder %s14, 0
      %p103 = por %p101, %p102
      %p104 = scmp.ne.s32.totalorder %s90, %s91
      %p105 = scmp.eq.s32.totalorder %s15, 3
      %p106 = por %p104, %p105
      %p108 = scmp.ne.s32.totalorder %s91, %s107
      %p109 = scmp.eq.s32.totalorder %s15, 0
      %p110 = por %p108, %p109
      %p111 = scmp.le.s32.totalorder 1, %s9
      %p112 = scmp.lt.s32.totalorder %s9, 5
      %p113 = pnand %p111, %p112
      %p114 = pneg %p113
      // Predicated region
      $region9: #{segmentation_net_forward.29} parent=5 // pred_check
        _
      $region10: #{segmentation_net_forward.29} parent=5 // pred_check_branch
        %116 = sbr.rel (%p113) target = $region12
      $region11: #{segmentation_net_forward.29} parent=5 // pred_region
        %s117 = ssub.s32 %s9, 1
        // Predicated region
        $region13: #{segmentation_net_forward.29} parent=11 // pred_check
          %p118 = pneg %p56
        $region14: #{segmentation_net_forward.29} parent=11 // pred_check_branch
          %120 = sbr.rel (%p118) target = $region16
        $region15: #{segmentation_net_forward.29} parent=11 // pred_region
          _
        $region16: #{segmentation_net_forward.29} parent=11 // pred_fallthru
          _
        // Predicated region
        $region17: #{segmentation_net_forward.29} parent=11 // pred_check
          %p121 = pneg %p77
        $region18: #{segmentation_net_forward.29} parent=11 // pred_check_branch
          %123 = sbr.rel (%p121) target = $region20
        $region19: #{segmentation_net_forward.29} parent=11 // pred_region
          _
        $region20: #{segmentation_net_forward.29} parent=11 // pred_fallthru
          _
      $region12: #{segmentation_net_forward.29} parent=5 // pred_fallthru
        _
      %p124 = scmp.lt.s32.totalorder %s9, 4
      // Predicated region
      $region21: #{segmentation_net_forward.29} parent=5 // pred_check
        %p125 = pneg %p124
      $region22: #{segmentation_net_forward.29} parent=5 // pred_check_branch
        %127 = sbr.rel (%p125) target = $region24
      $region23: #{segmentation_net_forward.29} parent=5 // pred_region
        // Predicated region
        $region25: #{segmentation_net_forward.29} parent=23 // pred_check
          %p128 = pneg %p29
        $region26: #{segmentation_net_forward.29} parent=23 // pred_check_branch
          %130 = sbr.rel (%p128) target = $region28
        $region27: #{segmentation_net_forward.29} parent=23 // pred_region
          %s131 = sand.u32 %s19, 1
          %s132 = sand.u32 %s19, 1
          %s133 = smul.addr %s132, 576
          %s134 = scalar_lea.vmem [#allocation2], %s133
          %s135 = smul.u32 16, %s9
          %s136 = smul.addr %s135, 4
          %s137 = scalar_lea.vmem %s0, %s136
          // Predicated region
          $region29: #{segmentation_net_forward.29} parent=27 // pred_check
            _
          $region30: #{segmentation_net_forward.29} parent=27 // pred_check_branch
            %139 = sbr.rel (0) target = $region32
          $region31: #{segmentation_net_forward.29} parent=27 // pred_region
            // Predicated region
            $region33: #{segmentation_net_forward.29} parent=31 // pred_check
              _
            $region34: #{segmentation_net_forward.29} parent=31 // pred_check_branch
              %141 = sbr.rel (0) target = $region36
            $region35: #{segmentation_net_forward.29} parent=31 // pred_region
              loop: start=0, step=1, limit=1
              $region37: #{segmentation_net_forward.29} parent=35 // loop_pre_header
                _
              $region38: #{segmentation_net_forward.29} parent=35 // loop_header
                %s143 = sphi 0, %s147
                %p144 = scmp.ge.s32.totalorder %s143, 1
                %s148 = sphi %s137, %s137
                %s149 = sphi %s134, %s134
              $region39: #{segmentation_net_forward.29} parent=35 // loop_header_branch
                %146 = sbr.rel (%p144) target = $region43
              $region40: #{segmentation_net_forward.29} parent=35 // loop_body
                %v150 = vld [vmem:[%s148] sm:$0xff]
                %151 = vst [vmem:[%s149] sm:$0xff] %v150
                %v152 = vld [vmem:[%s148 + $0x8] sm:$0xff]
                %153 = vst [vmem:[%s149 + $0x8] sm:$0xff] %v152
                %v154 = vld [vmem:[%s148 + $0x10] sm:$0xff]
                %155 = vst [vmem:[%s149 + $0x10] sm:$0xff] %v154
                %v156 = vld [vmem:[%s148 + $0x18] sm:$0xff]
                %157 = vst [vmem:[%s149 + $0x18] sm:$0xff] %v156
                %v158 = vld [vmem:[%s148 + $0x20] sm:$0xff]
                %159 = vst [vmem:[%s149 + $0x20] sm:$0xff] %v158
                %v160 = vld [vmem:[%s148 + $0x28] sm:$0xff]
                %161 = vst [vmem:[%s149 + $0x28] sm:$0xff] %v160
                %v162 = vld [vmem:[%s148 + $0x30] sm:$0xff]
                %163 = vst [vmem:[%s149 + $0x30] sm:$0xff] %v162
                %v164 = vld [vmem:[%s148 + $0x38] sm:$0xff]
                %165 = vst [vmem:[%s149 + $0x38] sm:$0xff] %v164
                %v166 = vld [vmem:[%s148 + $0x100] sm:$0xff]
                %167 = vst [vmem:[%s149 + $0x40] sm:$0xff] %v166
                %v168 = vld [vmem:[%s148 + $0x108] sm:$0xff]
                %169 = vst [vmem:[%s149 + $0x48] sm:$0xff] %v168
                %v170 = vld [vmem:[%s148 + $0x110] sm:$0xff]
                %171 = vst [vmem:[%s149 + $0x50] sm:$0xff] %v170
                %v172 = vld [vmem:[%s148 + $0x118] sm:$0xff]
                %173 = vst [vmem:[%s149 + $0x58] sm:$0xff] %v172
                %v174 = vld [vmem:[%s148 + $0x120] sm:$0xff]
                %175 = vst [vmem:[%s149 + $0x60] sm:$0xff] %v174
                %v176 = vld [vmem:[%s148 + $0x128] sm:$0xff]
                %177 = vst [vmem:[%s149 + $0x68] sm:$0xff] %v176
                %v178 = vld [vmem:[%s148 + $0x130] sm:$0xff]
                %179 = vst [vmem:[%s149 + $0x70] sm:$0xff] %v178
                %v180 = vld [vmem:[%s148 + $0x138] sm:$0xff]
                %181 = vst [vmem:[%s149 + $0x78] sm:$0xff] %v180
                %v182 = vld [vmem:[%s148 + $0x200] sm:$0xff]
                %183 = vst [vmem:[%s149 + $0x80] sm:$0xff] %v182
                %v184 = vld [vmem:[%s148 + $0x208] sm:$0xff]
                %185 = vst [vmem:[%s149 + $0x88] sm:$0xff] %v184
                %v186 = vld [vmem:[%s148 + $0x210] sm:$0xff]
                %187 = vst [vmem:[%s149 + $0x90] sm:$0xff] %v186
                %v188 = vld [vmem:[%s148 + $0x218] sm:$0xff]
                %189 = vst [vmem:[%s149 + $0x98] sm:$0xff] %v188
                %v190 = vld [vmem:[%s148 + $0x220] sm:$0xff]
                %191 = vst [vmem:[%s149 + $0xa0] sm:$0xff] %v190
                %v192 = vld [vmem:[%s148 + $0x228] sm:$0xff]
                %193 = vst [vmem:[%s149 + $0xa8] sm:$0xff] %v192
                %v194 = vld [vmem:[%s148 + $0x230] sm:$0xff]
                %195 = vst [vmem:[%s149 + $0xb0] sm:$0xff] %v194
                %v196 = vld [vmem:[%s148 + $0x238] sm:$0xff]
                %197 = vst [vmem:[%s149 + $0xb8] sm:$0xff] %v196
                %v198 = vld [vmem:[%s148 + $0x300] sm:$0xff]
                %199 = vst [vmem:[%s149 + $0xc0] sm:$0xff] %v198
                %v200 = vld [vmem:[%s148 + $0x308] sm:$0xff]
                %201 = vst [vmem:[%s149 + $0xc8] sm:$0xff] %v200
                %v202 = vld [vmem:[%s148 + $0x310] sm:$0xff]
                %203 = vst [vmem:[%s149 + $0xd0] sm:$0xff] %v202
                %v204 = vld [vmem:[%s148 + $0x318] sm:$0xff]
                %205 = vst [vmem:[%s149 + $0xd8] sm:$0xff] %v204
                %v206 = vld [vmem:[%s148 + $0x320] sm:$0xff]
                %207 = vst [vmem:[%s149 + $0xe0] sm:$0xff] %v206
                %v208 = vld [vmem:[%s148 + $0x328] sm:$0xff]
                %209 = vst [vmem:[%s149 + $0xe8] sm:$0xff] %v208
                %v210 = vld [vmem:[%s148 + $0x330] sm:$0xff]
                %211 = vst [vmem:[%s149 + $0xf0] sm:$0xff] %v210
                %v212 = vld [vmem:[%s148 + $0x338] sm:$0xff]
                %213 = vst [vmem:[%s149 + $0xf8] sm:$0xff] %v212
                %v214 = vld [vmem:[%s148 + $0x400] sm:$0xff]
                %215 = vst [vmem:[%s149 + $0x100] sm:$0xff] %v214
                %v216 = vld [vmem:[%s148 + $0x408] sm:$0xff]
                %217 = vst [vmem:[%s149 + $0x108] sm:$0xff] %v216
                %v218 = vld [vmem:[%s148 + $0x410] sm:$0xff]
                %219 = vst [vmem:[%s149 + $0x110] sm:$0xff] %v218
                %v220 = vld [vmem:[%s148 + $0x418] sm:$0xff]
                %221 = vst [vmem:[%s149 + $0x118] sm:$0xff] %v220
                %v222 = vld [vmem:[%s148 + $0x420] sm:$0xff]
                %223 = vst [vmem:[%s149 + $0x120] sm:$0xff] %v222
                %v224 = vld [vmem:[%s148 + $0x428] sm:$0xff]
                %225 = vst [vmem:[%s149 + $0x128] sm:$0xff] %v224
                %v226 = vld [vmem:[%s148 + $0x430] sm:$0xff]
                %227 = vst [vmem:[%s149 + $0x130] sm:$0xff] %v226
                %v228 = vld [vmem:[%s148 + $0x438] sm:$0xff]
                %229 = vst [vmem:[%s149 + $0x138] sm:$0xff] %v228
                %v230 = vld [vmem:[%s148 + $0x500] sm:$0xff]
                %231 = vst [vmem:[%s149 + $0x140] sm:$0xff] %v230
                %v232 = vld [vmem:[%s148 + $0x508] sm:$0xff]
                %233 = vst [vmem:[%s149 + $0x148] sm:$0xff] %v232
                %v234 = vld [vmem:[%s148 + $0x510] sm:$0xff]
                %235 = vst [vmem:[%s149 + $0x150] sm:$0xff] %v234
                %v236 = vld [vmem:[%s148 + $0x518] sm:$0xff]
                %237 = vst [vmem:[%s149 + $0x158] sm:$0xff] %v236
                %v238 = vld [vmem:[%s148 + $0x520] sm:$0xff]
                %239 = vst [vmem:[%s149 + $0x160] sm:$0xff] %v238
                %v240 = vld [vmem:[%s148 + $0x528] sm:$0xff]
                %241 = vst [vmem:[%s149 + $0x168] sm:$0xff] %v240
                %v242 = vld [vmem:[%s148 + $0x530] sm:$0xff]
                %243 = vst [vmem:[%s149 + $0x170] sm:$0xff] %v242
                %v244 = vld [vmem:[%s148 + $0x538] sm:$0xff]
                %245 = vst [vmem:[%s149 + $0x178] sm:$0xff] %v244
                %v246 = vld [vmem:[%s148 + $0x600] sm:$0xff]
                %247 = vst [vmem:[%s149 + $0x180] sm:$0xff] %v246
                %v248 = vld [vmem:[%s148 + $0x608] sm:$0xff]
                %249 = vst [vmem:[%s149 + $0x188] sm:$0xff] %v248
                %v250 = vld [vmem:[%s148 + $0x610] sm:$0xff]
                %251 = vst [vmem:[%s149 + $0x190] sm:$0xff] %v250
                %v252 = vld [vmem:[%s148 + $0x618] sm:$0xff]
                %253 = vst [vmem:[%s149 + $0x198] sm:$0xff] %v252
                %v254 = vld [vmem:[%s148 + $0x620] sm:$0xff]
                %255 = vst [vmem:[%s149 + $0x1a0] sm:$0xff] %v254
                %v256 = vld [vmem:[%s148 + $0x628] sm:$0xff]
                %257 = vst [vmem:[%s149 + $0x1a8] sm:$0xff] %v256
                %v258 = vld [vmem:[%s148 + $0x630] sm:$0xff]
                %259 = vst [vmem:[%s149 + $0x1b0] sm:$0xff] %v258
                %v260 = vld [vmem:[%s148 + $0x638] sm:$0xff]
                %261 = vst [vmem:[%s149 + $0x1b8] sm:$0xff] %v260
                %v262 = vld [vmem:[%s148 + $0x700] sm:$0xff]
                %263 = vst [vmem:[%s149 + $0x1c0] sm:$0xff] %v262
                %v264 = vld [vmem:[%s148 + $0x708] sm:$0xff]
                %265 = vst [vmem:[%s149 + $0x1c8] sm:$0xff] %v264
                %v266 = vld [vmem:[%s148 + $0x710] sm:$0xff]
                %267 = vst [vmem:[%s149 + $0x1d0] sm:$0xff] %v266
                %v268 = vld [vmem:[%s148 + $0x718] sm:$0xff]
                %269 = vst [vmem:[%s149 + $0x1d8] sm:$0xff] %v268
                %v270 = vld [vmem:[%s148 + $0x720] sm:$0xff]
                %271 = vst [vmem:[%s149 + $0x1e0] sm:$0xff] %v270
                %v272 = vld [vmem:[%s148 + $0x728] sm:$0xff]
                %273 = vst [vmem:[%s149 + $0x1e8] sm:$0xff] %v272
                %v274 = vld [vmem:[%s148 + $0x730] sm:$0xff]
                %275 = vst [vmem:[%s149 + $0x1f0] sm:$0xff] %v274
                %v276 = vld [vmem:[%s148 + $0x738] sm:$0xff]
                %277 = vst [vmem:[%s149 + $0x1f8] sm:$0xff] %v276
                %v278 = vld [vmem:[%s148 + $0x800] sm:$0xff]
                %279 = vst [vmem:[%s149 + $0x200] sm:$0xff] %v278
                %v280 = vld [vmem:[%s148 + $0x808] sm:$0xff]
                %281 = vst [vmem:[%s149 + $0x208] sm:$0xff] %v280
                %v282 = vld [vmem:[%s148 + $0x810] sm:$0xff]
                %283 = vst [vmem:[%s149 + $0x210] sm:$0xff] %v282
                %v284 = vld [vmem:[%s148 + $0x818] sm:$0xff]
                %285 = vst [vmem:[%s149 + $0x218] sm:$0xff] %v284
                %v286 = vld [vmem:[%s148 + $0x820] sm:$0xff]
                %287 = vst [vmem:[%s149 + $0x220] sm:$0xff] %v286
                %v288 = vld [vmem:[%s148 + $0x828] sm:$0xff]
                %289 = vst [vmem:[%s149 + $0x228] sm:$0xff] %v288
                %v290 = vld [vmem:[%s148 + $0x830] sm:$0xff]
                %291 = vst [vmem:[%s149 + $0x230] sm:$0xff] %v290
                %v292 = vld [vmem:[%s148 + $0x838] sm:$0xff]
                %293 = vst [vmem:[%s149 + $0x238] sm:$0xff] %v292
              $region41: #{segmentation_net_forward.29} parent=35 // loop_footer
                %s147 = sadd.s32 1, %s143
              $region42: #{segmentation_net_forward.29} parent=35 // loop_footer_branch
                %142 = sbr.rel target = $region38
              $region43: #{segmentation_net_forward.29} parent=35 // loop_exit
                _
            $region36: #{segmentation_net_forward.29} parent=31 // pred_fallthru
              _
            // Predicated region
            $region44: #{segmentation_net_forward.29} parent=31 // pred_check
              _
            $region45: #{segmentation_net_forward.29} parent=31 // pred_check_branch
              %295 = sbr.rel target = $region47
            $region46: #{segmentation_net_forward.29} parent=31 // pred_region
              _
            $region47: #{segmentation_net_forward.29} parent=31 // pred_fallthru
              _
          $region32: #{segmentation_net_forward.29} parent=27 // pred_fallthru
            _
          %296 = vnop
        $region28: #{segmentation_net_forward.29} parent=23 // pred_fallthru
          _
      $region24: #{segmentation_net_forward.29} parent=5 // pred_fallthru
        _
      %p297 = scmp.le.s32.totalorder 1, %s9
      %p298 = scmp.lt.s32.totalorder %s9, 5
      %p299 = pnand %p297, %p298
      %p300 = pneg %p299
      // Predicated region
      $region48: #{segmentation_net_forward.29} parent=5 // pred_check
        _
      $region49: #{segmentation_net_forward.29} parent=5 // pred_check_branch
        %302 = sbr.rel (%p299) target = $region51
      $region50: #{segmentation_net_forward.29} parent=5 // pred_region
        %s303 = ssub.s32 %s9, 1
        %s304 = sand.u32 %s22, 1
        %s305 = sand.u32 %s22, 1
        %s306 = smul.addr %s305, 576
        %s307 = scalar_lea.vmem [#allocation2], %s306
        // Predicated region
        $region52: #{segmentation_net_forward.29} parent=50 // pred_check
          %p308 = pneg %p35
        $region53: #{segmentation_net_forward.29} parent=50 // pred_check_branch
          %310 = sbr.rel (%p308) target = $region55
        $region54: #{segmentation_net_forward.29} parent=50 // pred_region
          _
        $region55: #{segmentation_net_forward.29} parent=50 // pred_fallthru
          _
        %s311 = sand.u32 %s22, 1
        %s312 = sand.u32 %s22, 1
        %s313 = smul.addr %s312, 576
        %s314 = scalar_lea.vmem [#allocation2], %s313
        %p315 = pneg %p35
        %p316 = pneg %p32
        %p317 = pneg %p56
        %p318 = pneg %p53
        %p319 = pneg %p77
        %p320 = pneg %p74
        %p321 = pneg %p103
        %p322 = pneg %p100
        %s323 = smul.u32 16, %s14
        %p324 = scmp.lt.s32.totalorder %s323, 63
        %s325 = scalar_select %p324, %s323, 63
        %s326 = smul.addr %s325, 4
        %s327 = scalar_lea.vmem %s3, %s326
        %s328 = smul.u32 16, %s14
        %s329 = smul.u32 16, %s14
        %p330 = scmp.lt.s32.totalorder %s329, 63
        %s331 = scalar_select %p330, %s329, 63
        %s332 = smul.addr %s331, 4
        %s333 = scalar_lea.vmem %s3, %s332
        %s334 = smul.u32 16, %s14
        %v336 = vld [vmem:[%s1] sm:$0xf]
        %v337 = vld [vmem:[%s307] sm:$0xff]
        %v338 = vld [vmem:[%s307 + $0x8] sm:$0xff]
        %v339 = vld [vmem:[%s307 + $0x10] sm:$0xff]
        %v340 = vld [vmem:[%s307 + $0x18] sm:$0xff]
        %v341 = vld [vmem:[%s307 + $0x20] sm:$0xff]
        %v342 = vld [vmem:[%s307 + $0x28] sm:$0xff]
        %v343 = vld [vmem:[%s307 + $0x30] sm:$0xff]
        %v344 = vld [vmem:[%s307 + $0x38] sm:$0xff]
        %v345 = vld [vmem:[%s307 + $0x40] sm:$0xff]
        %v346 = vld [vmem:[%s307 + $0x48] sm:$0xff]
        %v347 = vld [vmem:[%s307 + $0x50] sm:$0xff]
        %v348 = vld [vmem:[%s307 + $0x58] sm:$0xff]
        %v349 = vld [vmem:[%s307 + $0x60] sm:$0xff]
        %v350 = vld [vmem:[%s307 + $0x68] sm:$0xff]
        %v351 = vld [vmem:[%s307 + $0x70] sm:$0xff]
        %v352 = vld [vmem:[%s307 + $0x78] sm:$0xff]
        %v353 = vld [vmem:[%s307 + $0x80] sm:$0xff]
        %v354 = vld [vmem:[%s307 + $0x88] sm:$0xff]
        %v355 = vld [vmem:[%s307 + $0x90] sm:$0xff]
        %v356 = vld [vmem:[%s307 + $0x98] sm:$0xff]
        %v357 = vld [vmem:[%s307 + $0xa0] sm:$0xff]
        %v358 = vld [vmem:[%s307 + $0xa8] sm:$0xff]
        %v359 = vld [vmem:[%s307 + $0xb0] sm:$0xff]
        %v360 = vld [vmem:[%s307 + $0xb8] sm:$0xff]
        %v361 = vld [vmem:[%s307 + $0xc0] sm:$0xff]
        %v362 = vld [vmem:[%s307 + $0xc8] sm:$0xff]
        %v363 = vld [vmem:[%s307 + $0xd0] sm:$0xff]
        %v364 = vld [vmem:[%s307 + $0xd8] sm:$0xff]
        %v365 = vld [vmem:[%s307 + $0xe0] sm:$0xff]
        %v366 = vld [vmem:[%s307 + $0xe8] sm:$0xff]
        %v367 = vld [vmem:[%s307 + $0xf0] sm:$0xff]
        %v368 = vld [vmem:[%s307 + $0xf8] sm:$0xff]
        %v369 = vld [vmem:[%s307 + $0x100] sm:$0xff]
        %v370 = vld [vmem:[%s307 + $0x108] sm:$0xff]
        %v371 = vld [vmem:[%s307 + $0x110] sm:$0xff]
        %v372 = vld [vmem:[%s307 + $0x118] sm:$0xff]
        %v373 = vld [vmem:[%s307 + $0x120] sm:$0xff]
        %v374 = vld [vmem:[%s307 + $0x128] sm:$0xff]
        %v375 = vld [vmem:[%s307 + $0x130] sm:$0xff]
        %v376 = vld [vmem:[%s307 + $0x138] sm:$0xff]
        %v377 = vld [vmem:[%s307 + $0x140] sm:$0xff]
        %v378 = vld [vmem:[%s307 + $0x148] sm:$0xff]
        %v379 = vld [vmem:[%s307 + $0x150] sm:$0xff]
        %v380 = vld [vmem:[%s307 + $0x158] sm:$0xff]
        %v381 = vld [vmem:[%s307 + $0x160] sm:$0xff]
        %v382 = vld [vmem:[%s307 + $0x168] sm:$0xff]
        %v383 = vld [vmem:[%s307 + $0x170] sm:$0xff]
        %v384 = vld [vmem:[%s307 + $0x178] sm:$0xff]
        %v385 = vld [vmem:[%s307 + $0x180] sm:$0xff]
        %v386 = vld [vmem:[%s307 + $0x188] sm:$0xff]
        %v387 = vld [vmem:[%s307 + $0x190] sm:$0xff]
        %v388 = vld [vmem:[%s307 + $0x198] sm:$0xff]
        %v389 = vld [vmem:[%s307 + $0x1a0] sm:$0xff]
        %v390 = vld [vmem:[%s307 + $0x1a8] sm:$0xff]
        %v391 = vld [vmem:[%s307 + $0x1b0] sm:$0xff]
        %v392 = vld [vmem:[%s307 + $0x1b8] sm:$0xff]
        %v393 = vld [vmem:[%s307 + $0x1c0] sm:$0xff]
        %v394 = vld [vmem:[%s307 + $0x1c8] sm:$0xff]
        %v395 = vld [vmem:[%s307 + $0x1d0] sm:$0xff]
        %v396 = vld [vmem:[%s307 + $0x1d8] sm:$0xff]
        %v397 = vld [vmem:[%s307 + $0x1e0] sm:$0xff]
        %v398 = vld [vmem:[%s307 + $0x1e8] sm:$0xff]
        %v399 = vld [vmem:[%s307 + $0x1f0] sm:$0xff]
        %v400 = vld [vmem:[%s307 + $0x1f8] sm:$0xff]
        %v401 = vld [vmem:[%s307 + $0x200] sm:$0xff]
        %v402 = vld [vmem:[%s307 + $0x208] sm:$0xff]
        %v403 = vld [vmem:[%s307 + $0x210] sm:$0xff]
        %v404 = vld [vmem:[%s307 + $0x218] sm:$0xff]
        %v405 = vld [vmem:[%s307 + $0x220] sm:$0xff]
        %v406 = vld [vmem:[%s307 + $0x228] sm:$0xff]
        %v407 = vld [vmem:[%s307 + $0x230] sm:$0xff]
        %v408 = vld [vmem:[%s307 + $0x238] sm:$0xff]
        %v409 = vld [vmem:[%s2] sm:$0xff]
        %411 = vset.pattern.permute.xlu0 0
        %412 = vperm.xlu0 %411, %v409
        %v413 = vpop.permute.xlu0 %412
        %v487 = vunpack.c.l.b16 %v337
        %v488 = vunpack.c.h.b16 %v337
        %v489 = vunpack.c.l.b16 %v338
        %v490 = vunpack.c.h.b16 %v338
        %v491 = vunpack.c.l.b16 %v339
        %v492 = vunpack.c.h.b16 %v339
        %v493 = vunpack.c.l.b16 %v340
        %v494 = vunpack.c.h.b16 %v340
        %v495 = vunpack.c.l.b16 %v341
        %v496 = vunpack.c.h.b16 %v341
        %v497 = vunpack.c.l.b16 %v342
        %v498 = vunpack.c.h.b16 %v342
        %v499 = vunpack.c.l.b16 %v343
        %v500 = vunpack.c.h.b16 %v343
        %v501 = vunpack.c.l.b16 %v344
        %v502 = vunpack.c.h.b16 %v344
        %v503 = vunpack.c.l.b16 %v345
        %v504 = vunpack.c.h.b16 %v345
        %v505 = vunpack.c.l.b16 %v346
        %v506 = vunpack.c.h.b16 %v346
        %v507 = vunpack.c.l.b16 %v347
        %v508 = vunpack.c.h.b16 %v347
        %v509 = vunpack.c.l.b16 %v348
        %v510 = vunpack.c.h.b16 %v348
        %v511 = vunpack.c.l.b16 %v349
        %v512 = vunpack.c.h.b16 %v349
        %v513 = vunpack.c.l.b16 %v350
        %v514 = vunpack.c.h.b16 %v350
        %v515 = vunpack.c.l.b16 %v351
        %v516 = vunpack.c.h.b16 %v351
        %v517 = vunpack.c.l.b16 %v352
        %v518 = vunpack.c.h.b16 %v352
        %v519 = vunpack.c.l.b16 %v353
        %v520 = vunpack.c.h.b16 %v353
        %v521 = vunpack.c.l.b16 %v354
        %v522 = vunpack.c.h.b16 %v354
        %v523 = vunpack.c.l.b16 %v355
        %v524 = vunpack.c.h.b16 %v355
        %v525 = vunpack.c.l.b16 %v356
        %v526 = vunpack.c.h.b16 %v356
        %v527 = vunpack.c.l.b16 %v357
        %v528 = vunpack.c.h.b16 %v357
        %v529 = vunpack.c.l.b16 %v358
        %v530 = vunpack.c.h.b16 %v358
        %v531 = vunpack.c.l.b16 %v359
        %v532 = vunpack.c.h.b16 %v359
        %v533 = vunpack.c.l.b16 %v360
        %v534 = vunpack.c.h.b16 %v360
        %v535 = vunpack.c.l.b16 %v361
        %v536 = vunpack.c.h.b16 %v361
        %v537 = vunpack.c.l.b16 %v362
        %v538 = vunpack.c.h.b16 %v362
        %v539 = vunpack.c.l.b16 %v363
        %v540 = vunpack.c.h.b16 %v363
        %v541 = vunpack.c.l.b16 %v364
        %v542 = vunpack.c.h.b16 %v364
        %v543 = vunpack.c.l.b16 %v365
        %v544 = vunpack.c.h.b16 %v365
        %v545 = vunpack.c.l.b16 %v366
        %v546 = vunpack.c.h.b16 %v366
        %v547 = vunpack.c.l.b16 %v367
        %v548 = vunpack.c.h.b16 %v367
        %v549 = vunpack.c.l.b16 %v368
        %v550 = vunpack.c.h.b16 %v368
        %v551 = vunpack.c.l.b16 %v369
        %v552 = vunpack.c.h.b16 %v369
        %v553 = vunpack.c.l.b16 %v370
        %v554 = vunpack.c.h.b16 %v370
        %v555 = vunpack.c.l.b16 %v371
        %v556 = vunpack.c.h.b16 %v371
        %v557 = vunpack.c.l.b16 %v372
        %v558 = vunpack.c.h.b16 %v372
        %v559 = vunpack.c.l.b16 %v373
        %v560 = vunpack.c.h.b16 %v373
        %v561 = vunpack.c.l.b16 %v374
        %v562 = vunpack.c.h.b16 %v374
        %v563 = vunpack.c.l.b16 %v375
        %v564 = vunpack.c.h.b16 %v375
        %v565 = vunpack.c.l.b16 %v376
        %v566 = vunpack.c.h.b16 %v376
        %v567 = vunpack.c.l.b16 %v377
        %v568 = vunpack.c.h.b16 %v377
        %v569 = vunpack.c.l.b16 %v378
        %v570 = vunpack.c.h.b16 %v378
        %v571 = vunpack.c.l.b16 %v379
        %v572 = vunpack.c.h.b16 %v379
        %v573 = vunpack.c.l.b16 %v380
        %v574 = vunpack.c.h.b16 %v380
        %v575 = vunpack.c.l.b16 %v381
        %v576 = vunpack.c.h.b16 %v381
        %v577 = vunpack.c.l.b16 %v382
        %v578 = vunpack.c.h.b16 %v382
        %v579 = vunpack.c.l.b16 %v383
        %v580 = vunpack.c.h.b16 %v383
        %v581 = vunpack.c.l.b16 %v384
        %v582 = vunpack.c.h.b16 %v384
        %v583 = vunpack.c.l.b16 %v385
        %v584 = vunpack.c.h.b16 %v385
        %v585 = vunpack.c.l.b16 %v386
        %v586 = vunpack.c.h.b16 %v386
        %v587 = vunpack.c.l.b16 %v387
        %v588 = vunpack.c.h.b16 %v387
        %v589 = vunpack.c.l.b16 %v388
        %v590 = vunpack.c.h.b16 %v388
        %v591 = vunpack.c.l.b16 %v389
        %v592 = vunpack.c.h.b16 %v389
        %v593 = vunpack.c.l.b16 %v390
        %v594 = vunpack.c.h.b16 %v390
        %v595 = vunpack.c.l.b16 %v391
        %v596 = vunpack.c.h.b16 %v391
        %v597 = vunpack.c.l.b16 %v392
        %v598 = vunpack.c.h.b16 %v392
        %v599 = vunpack.c.l.b16 %v393
        %v600 = vunpack.c.h.b16 %v393
        %v601 = vunpack.c.l.b16 %v394
        %v602 = vunpack.c.h.b16 %v394
        %v603 = vunpack.c.l.b16 %v395
        %v604 = vunpack.c.h.b16 %v395
        %v605 = vunpack.c.l.b16 %v396
        %v606 = vunpack.c.h.b16 %v396
        %v607 = vunpack.c.l.b16 %v397
        %v608 = vunpack.c.h.b16 %v397
        %v609 = vunpack.c.l.b16 %v398
        %v610 = vunpack.c.h.b16 %v398
        %v611 = vunpack.c.l.b16 %v399
        %v612 = vunpack.c.h.b16 %v399
        %v613 = vunpack.c.l.b16 %v400
        %v614 = vunpack.c.h.b16 %v400
        %v615 = vunpack.c.l.b16 %v401
        %v616 = vunpack.c.h.b16 %v401
        %v617 = vunpack.c.l.b16 %v402
        %v618 = vunpack.c.h.b16 %v402
        %v619 = vunpack.c.l.b16 %v403
        %v620 = vunpack.c.h.b16 %v403
        %v621 = vunpack.c.l.b16 %v404
        %v622 = vunpack.c.h.b16 %v404
        %v623 = vunpack.c.l.b16 %v405
        %v624 = vunpack.c.h.b16 %v405
        %v625 = vunpack.c.l.b16 %v406
        %v626 = vunpack.c.h.b16 %v406
        %v627 = vunpack.c.l.b16 %v407
        %v628 = vunpack.c.h.b16 %v407
        %v629 = vunpack.c.l.b16 %v408
        %v630 = vunpack.c.h.b16 %v408
        %v631 = vpack.c.b16 %v503, %v487
        %v632 = vpack.c.b16 %v504, %v488
        %v633 = vpack.c.b16 %v505, %v489
        %v634 = vpack.c.b16 %v506, %v490
        %v635 = vpack.c.b16 %v507, %v491
        %v636 = vpack.c.b16 %v508, %v492
        %v637 = vpack.c.b16 %v509, %v493
        %v638 = vpack.c.b16 %v510, %v494
        %v639 = vpack.c.b16 %v511, %v495
        %v640 = vpack.c.b16 %v512, %v496
        %v641 = vpack.c.b16 %v513, %v497
        %v642 = vpack.c.b16 %v514, %v498
        %v643 = vpack.c.b16 %v515, %v499
        %v644 = vpack.c.b16 %v516, %v500
        %v645 = vpack.c.b16 %v517, %v501
        %v646 = vpack.c.b16 %v518, %v502
        %v647 = vpack.c.b16 %v535, %v519
        %v648 = vpack.c.b16 %v536, %v520
        %v649 = vpack.c.b16 %v537, %v521
        %v650 = vpack.c.b16 %v538, %v522
        %v651 = vpack.c.b16 %v539, %v523
        %v652 = vpack.c.b16 %v540, %v524
        %v653 = vpack.c.b16 %v541, %v525
        %v654 = vpack.c.b16 %v542, %v526
        %v655 = vpack.c.b16 %v543, %v527
        %v656 = vpack.c.b16 %v544, %v528
        %v657 = vpack.c.b16 %v545, %v529
        %v658 = vpack.c.b16 %v546, %v530
        %v659 = vpack.c.b16 %v547, %v531
        %v660 = vpack.c.b16 %v548, %v532
        %v661 = vpack.c.b16 %v549, %v533
        %v662 = vpack.c.b16 %v550, %v534
        %v663 = vpack.c.b16 %v567, %v551
        %v664 = vpack.c.b16 %v568, %v552
        %v665 = vpack.c.b16 %v569, %v553
        %v666 = vpack.c.b16 %v570, %v554
        %v667 = vpack.c.b16 %v571, %v555
        %v668 = vpack.c.b16 %v572, %v556
        %v669 = vpack.c.b16 %v573, %v557
        %v670 = vpack.c.b16 %v574, %v558
        %v671 = vpack.c.b16 %v575, %v559
        %v672 = vpack.c.b16 %v576, %v560
        %v673 = vpack.c.b16 %v577, %v561
        %v674 = vpack.c.b16 %v578, %v562
        %v675 = vpack.c.b16 %v579, %v563
        %v676 = vpack.c.b16 %v580, %v564
        %v677 = vpack.c.b16 %v581, %v565
        %v678 = vpack.c.b16 %v582, %v566
        %v679 = vpack.c.b16 %v599, %v583
        %v680 = vpack.c.b16 %v600, %v584
        %v681 = vpack.c.b16 %v601, %v585
        %v682 = vpack.c.b16 %v602, %v586
        %v683 = vpack.c.b16 %v603, %v587
        %v684 = vpack.c.b16 %v604, %v588
        %v685 = vpack.c.b16 %v605, %v589
        %v686 = vpack.c.b16 %v606, %v590
        %v687 = vpack.c.b16 %v607, %v591
        %v688 = vpack.c.b16 %v608, %v592
        %v689 = vpack.c.b16 %v609, %v593
        %v690 = vpack.c.b16 %v610, %v594
        %v691 = vpack.c.b16 %v611, %v595
        %v692 = vpack.c.b16 %v612, %v596
        %v693 = vpack.c.b16 %v613, %v597
        %v694 = vpack.c.b16 %v614, %v598
        %v695 = vpack.c.b16 %v615, %v615
        %v696 = vpack.c.b16 %v616, %v616
        %v697 = vpack.c.b16 %v617, %v617
        %v698 = vpack.c.b16 %v618, %v618
        %v699 = vpack.c.b16 %v619, %v619
        %v700 = vpack.c.b16 %v620, %v620
        %v701 = vpack.c.b16 %v621, %v621
        %v702 = vpack.c.b16 %v622, %v622
        %v703 = vpack.c.b16 %v623, %v623
        %v704 = vpack.c.b16 %v624, %v624
        %v705 = vpack.c.b16 %v625, %v625
        %v706 = vpack.c.b16 %v626, %v626
        %v707 = vpack.c.b16 %v627, %v627
        %v708 = vpack.c.b16 %v628, %v628
        %v709 = vpack.c.b16 %v629, %v629
        %v710 = vpack.c.b16 %v630, %v630
        %vm775 = vcmask 588800
        %v777 = vsel %vm775, %v336, 0
        %vm779 = vcmask 1043456
        %v781 = vsel %vm779, %v695, 0
        %v784 = vsel %vm779, %v696, 0
        %v787 = vsel %vm779, %v697, 0
        %v790 = vsel %vm779, %v698, 0
        %v793 = vsel %vm779, %v699, 0
        %v796 = vsel %vm779, %v700, 0
        %v799 = vsel %vm779, %v701, 0
        %v802 = vsel %vm779, %v702, 0
        %v805 = vsel %vm779, %v703, 0
        %v808 = vsel %vm779, %v704, 0
        %v811 = vsel %vm779, %v705, 0
        %v814 = vsel %vm779, %v706, 0
        %v817 = vsel %vm779, %v707, 0
        %v820 = vsel %vm779, %v708, 0
        %v823 = vsel %vm779, %v709, 0
        %v826 = vsel %vm779, %v710, 0
        %828 = vmatpush.bf16.msra.mxu0 0
        %829 = vmatpush.bf16.msra.mxu0 0
        %830 = vmatpush.bf16.msra.mxu0 0
        %831 = vmatpush.bf16.msra.mxu0 %v781
        %832 = vmatpush.bf16.msra.mxu0 %v679
        %833 = vmatpush.bf16.msra.mxu0 %v663
        %834 = vmatpush.bf16.msra.mxu0 %v647
        %835 = vmatpush.bf16.msra.mxu0 %v631
        %836 = vmatmul.bf16.gmra.mxu0 %v777
        %v837 = vpop.f32.mrf.mxu0
        %v838 = vadd.f32 %v413, %v837
        %v839 = vpop.f32.mrf.mxu0
        %840 = vdwg.mxu0
        %841 = vmatpush.bf16.msra.mxu0 0
        %842 = vmatpush.bf16.msra.mxu0 0
        %843 = vmatpush.bf16.msra.mxu0 0
        %844 = vmatpush.bf16.msra.mxu0 %v784
        %845 = vmatpush.bf16.msra.mxu0 %v680
        %846 = vmatpush.bf16.msra.mxu0 %v664
        %847 = vmatpush.bf16.msra.mxu0 %v648
        %848 = vmatpush.bf16.msra.mxu0 %v632
        %849 = vmatmul.bf16.gmra.mxu0 %v777
        %v850 = vpop.f32.mrf.mxu0
        %v851 = vadd.f32 %v413, %v850
        %v852 = vpop.f32.mrf.mxu0
        %853 = vdwg.mxu0
        %854 = vmatpush.bf16.msra.mxu0 0
        %855 = vmatpush.bf16.msra.mxu0 0
        %856 = vmatpush.bf16.msra.mxu0 0
        %857 = vmatpush.bf16.msra.mxu0 %v787
        %858 = vmatpush.bf16.msra.mxu0 %v681
        %859 = vmatpush.bf16.msra.mxu0 %v665
        %860 = vmatpush.bf16.msra.mxu0 %v649
        %861 = vmatpush.bf16.msra.mxu0 %v633
        %862 = vmatmul.bf16.gmra.mxu0 %v777
        %v863 = vpop.f32.mrf.mxu0
        %v864 = vadd.f32 %v413, %v863
        %v865 = vpop.f32.mrf.mxu0
        %866 = vdwg.mxu0
        %867 = vmatpush.bf16.msra.mxu0 0
        %868 = vmatpush.bf16.msra.mxu0 0
        %869 = vmatpush.bf16.msra.mxu0 0
        %870 = vmatpush.bf16.msra.mxu0 %v790
        %871 = vmatpush.bf16.msra.mxu0 %v682
        %872 = vmatpush.bf16.msra.mxu0 %v666
        %873 = vmatpush.bf16.msra.mxu0 %v650
        %874 = vmatpush.bf16.msra.mxu0 %v634
        %875 = vmatmul.bf16.gmra.mxu0 %v777
        %v876 = vpop.f32.mrf.mxu0
        %v877 = vadd.f32 %v413, %v876
        %v878 = vpop.f32.mrf.mxu0
        %879 = vdwg.mxu0
        %880 = vmatpush.bf16.msra.mxu0 0
        %881 = vmatpush.bf16.msra.mxu0 0
        %882 = vmatpush.bf16.msra.mxu0 0
        %883 = vmatpush.bf16.msra.mxu0 %v793
        %884 = vmatpush.bf16.msra.mxu0 %v683
        %885 = vmatpush.bf16.msra.mxu0 %v667
        %886 = vmatpush.bf16.msra.mxu0 %v651
        %887 = vmatpush.bf16.msra.mxu0 %v635
        %888 = vmatmul.bf16.gmra.mxu0 %v777
        %v889 = vpop.f32.mrf.mxu0
        %v890 = vadd.f32 %v413, %v889
        %v891 = vpop.f32.mrf.mxu0
        %892 = vdwg.mxu0
        %893 = vmatpush.bf16.msra.mxu0 0
        %894 = vmatpush.bf16.msra.mxu0 0
        %895 = vmatpush.bf16.msra.mxu0 0
        %896 = vmatpush.bf16.msra.mxu0 %v796
        %897 = vmatpush.bf16.msra.mxu0 %v684
        %898 = vmatpush.bf16.msra.mxu0 %v668
        %899 = vmatpush.bf16.msra.mxu0 %v652
        %900 = vmatpush.bf16.msra.mxu0 %v636
        %901 = vmatmul.bf16.gmra.mxu0 %v777
        %v902 = vpop.f32.mrf.mxu0
        %v903 = vadd.f32 %v413, %v902
        %v904 = vpop.f32.mrf.mxu0
        %905 = vdwg.mxu0
        %906 = vmatpush.bf16.msra.mxu0 0
        %907 = vmatpush.bf16.msra.mxu0 0
        %908 = vmatpush.bf16.msra.mxu0 0
        %909 = vmatpush.bf16.msra.mxu0 %v799
        %910 = vmatpush.bf16.msra.mxu0 %v685
        %911 = vmatpush.bf16.msra.mxu0 %v669
        %912 = vmatpush.bf16.msra.mxu0 %v653
        %913 = vmatpush.bf16.msra.mxu0 %v637
        %914 = vmatmul.bf16.gmra.mxu0 %v777
        %v915 = vpop.f32.mrf.mxu0
        %v916 = vadd.f32 %v413, %v915
        %v917 = vpop.f32.mrf.mxu0
        %918 = vdwg.mxu0
        %919 = vmatpush.bf16.msra.mxu0 0
        %920 = vmatpush.bf16.msra.mxu0 0
        %921 = vmatpush.bf16.msra.mxu0 0
        %922 = vmatpush.bf16.msra.mxu0 %v802
        %923 = vmatpush.bf16.msra.mxu0 %v686
        %924 = vmatpush.bf16.msra.mxu0 %v670
        %925 = vmatpush.bf16.msra.mxu0 %v654
        %926 = vmatpush.bf16.msra.mxu0 %v638
        %927 = vmatmul.bf16.gmra.mxu0 %v777
        %v928 = vpop.f32.mrf.mxu0
        %v929 = vadd.f32 %v413, %v928
        %v930 = vpop.f32.mrf.mxu0
        %931 = vdwg.mxu0
        %932 = vmatpush.bf16.msra.mxu0 0
        %933 = vmatpush.bf16.msra.mxu0 0
        %934 = vmatpush.bf16.msra.mxu0 0
        %935 = vmatpush.bf16.msra.mxu0 %v805
        %936 = vmatpush.bf16.msra.mxu0 %v687
        %937 = vmatpush.bf16.msra.mxu0 %v671
        %938 = vmatpush.bf16.msra.mxu0 %v655
        %939 = vmatpush.bf16.msra.mxu0 %v639
        %940 = vmatmul.bf16.gmra.mxu0 %v777
        %v941 = vpop.f32.mrf.mxu0
        %v942 = vadd.f32 %v413, %v941
        %v943 = vpop.f32.mrf.mxu0
        %944 = vdwg.mxu0
        %945 = vmatpush.bf16.msra.mxu0 0
        %946 = vmatpush.bf16.msra.mxu0 0
        %947 = vmatpush.bf16.msra.mxu0 0
        %948 = vmatpush.bf16.msra.mxu0 %v808
        %949 = vmatpush.bf16.msra.mxu0 %v688
        %950 = vmatpush.bf16.msra.mxu0 %v672
        %951 = vmatpush.bf16.msra.mxu0 %v656
        %952 = vmatpush.bf16.msra.mxu0 %v640
        %953 = vmatmul.bf16.gmra.mxu0 %v777
        %v954 = vpop.f32.mrf.mxu0
        %v955 = vadd.f32 %v413, %v954
        %v956 = vpop.f32.mrf.mxu0
        %957 = vdwg.mxu0
        %958 = vmatpush.bf16.msra.mxu0 0
        %959 = vmatpush.bf16.msra.mxu0 0
        %960 = vmatpush.bf16.msra.mxu0 0
        %961 = vmatpush.bf16.msra.mxu0 %v811
        %962 = vmatpush.bf16.msra.mxu0 %v689
        %963 = vmatpush.bf16.msra.mxu0 %v673
        %964 = vmatpush.bf16.msra.mxu0 %v657
        %965 = vmatpush.bf16.msra.mxu0 %v641
        %966 = vmatmul.bf16.gmra.mxu0 %v777
        %v967 = vpop.f32.mrf.mxu0
        %v968 = vadd.f32 %v413, %v967
        %v969 = vpop.f32.mrf.mxu0
        %970 = vdwg.mxu0
        %971 = vmatpush.bf16.msra.mxu0 0
        %972 = vmatpush.bf16.msra.mxu0 0
        %973 = vmatpush.bf16.msra.mxu0 0
        %974 = vmatpush.bf16.msra.mxu0 %v814
        %975 = vmatpush.bf16.msra.mxu0 %v690
        %976 = vmatpush.bf16.msra.mxu0 %v674
        %977 = vmatpush.bf16.msra.mxu0 %v658
        %978 = vmatpush.bf16.msra.mxu0 %v642
        %979 = vmatmul.bf16.gmra.mxu0 %v777
        %v980 = vpop.f32.mrf.mxu0
        %v981 = vadd.f32 %v413, %v980
        %v982 = vpop.f32.mrf.mxu0
        %983 = vdwg.mxu0
        %984 = vmatpush.bf16.msra.mxu0 0
        %985 = vmatpush.bf16.msra.mxu0 0
        %986 = vmatpush.bf16.msra.mxu0 0
        %987 = vmatpush.bf16.msra.mxu0 %v817
        %988 = vmatpush.bf16.msra.mxu0 %v691
        %989 = vmatpush.bf16.msra.mxu0 %v675
        %990 = vmatpush.bf16.msra.mxu0 %v659
        %991 = vmatpush.bf16.msra.mxu0 %v643
        %992 = vmatmul.bf16.gmra.mxu0 %v777
        %v993 = vpop.f32.mrf.mxu0
        %v994 = vadd.f32 %v413, %v993
        %v995 = vpop.f32.mrf.mxu0
        %996 = vdwg.mxu0
        %997 = vmatpush.bf16.msra.mxu0 0
        %998 = vmatpush.bf16.msra.mxu0 0
        %999 = vmatpush.bf16.msra.mxu0 0
        %1000 = vmatpush.bf16.msra.mxu0 %v820
        %1001 = vmatpush.bf16.msra.mxu0 %v692
        %1002 = vmatpush.bf16.msra.mxu0 %v676
        %1003 = vmatpush.bf16.msra.mxu0 %v660
        %1004 = vmatpush.bf16.msra.mxu0 %v644
        %1005 = vmatmul.bf16.gmra.mxu0 %v777
        %v1006 = vpop.f32.mrf.mxu0
        %v1007 = vadd.f32 %v413, %v1006
        %v1008 = vpop.f32.mrf.mxu0
        %1009 = vdwg.mxu0
        %1010 = vmatpush.bf16.msra.mxu0 0
        %1011 = vmatpush.bf16.msra.mxu0 0
        %1012 = vmatpush.bf16.msra.mxu0 0
        %1013 = vmatpush.bf16.msra.mxu0 %v823
        %1014 = vmatpush.bf16.msra.mxu0 %v693
        %1015 = vmatpush.bf16.msra.mxu0 %v677
        %1016 = vmatpush.bf16.msra.mxu0 %v661
        %1017 = vmatpush.bf16.msra.mxu0 %v645
        %1018 = vmatmul.bf16.gmra.mxu0 %v777
        %v1019 = vpop.f32.mrf.mxu0
        %v1020 = vadd.f32 %v413, %v1019
        %v1021 = vpop.f32.mrf.mxu0
        %1022 = vdwg.mxu0
        %1023 = vmatpush.bf16.msra.mxu0 0
        %1024 = vmatpush.bf16.msra.mxu0 0
        %1025 = vmatpush.bf16.msra.mxu0 0
        %1026 = vmatpush.bf16.msra.mxu0 %v826
        %1027 = vmatpush.bf16.msra.mxu0 %v694
        %1028 = vmatpush.bf16.msra.mxu0 %v678
        %1029 = vmatpush.bf16.msra.mxu0 %v662
        %1030 = vmatpush.bf16.msra.mxu0 %v646
        %1031 = vmatmul.bf16.gmra.mxu0 %v777
        %v1032 = vpop.f32.mrf.mxu0
        %v1033 = vadd.f32 %v413, %v1032
        %v1034 = vpop.f32.mrf.mxu0
        %1035 = vdwg.mxu0
        %v1036 = vmax.f32 %v838, 0.0
        %v1037 = vmax.f32 %v851, 0.0
        %v1038 = vmax.f32 %v864, 0.0
        %v1039 = vmax.f32 %v877, 0.0
        %v1040 = vmax.f32 %v890, 0.0
        %v1041 = vmax.f32 %v903, 0.0
        %v1042 = vmax.f32 %v916, 0.0
        %v1043 = vmax.f32 %v929, 0.0
        %v1044 = vmax.f32 %v942, 0.0
        %v1045 = vmax.f32 %v955, 0.0
        %v1046 = vmax.f32 %v968, 0.0
        %v1047 = vmax.f32 %v981, 0.0
        %v1048 = vmax.f32 %v994, 0.0
        %v1049 = vmax.f32 %v1007, 0.0
        %v1050 = vmax.f32 %v1020, 0.0
        %v1051 = vmax.f32 %v1033, 0.0
        %v1052 = vpack.c.bf16 %v1037, %v1036
        %v1053 = vpack.c.bf16 %v1039, %v1038
        %v1054 = vpack.c.bf16 %v1041, %v1040
        %v1055 = vpack.c.bf16 %v1043, %v1042
        %v1056 = vpack.c.bf16 %v1045, %v1044
        %v1057 = vpack.c.bf16 %v1047, %v1046
        %v1058 = vpack.c.bf16 %v1049, %v1048
        %v1059 = vpack.c.bf16 %v1051, %v1050
        %1060 = vst [vmem:[%s333] sm:$0xff] %v1052
        %1061 = vst [vmem:[%s333 + $0x8] sm:$0xff] %v1053
        %1062 = vst [vmem:[%s333 + $0x10] sm:$0xff] %v1054
        %1063 = vst [vmem:[%s333 + $0x18] sm:$0xff] %v1055
        %1064 = vst [vmem:[%s333 + $0x20] sm:$0xff] %v1056
        %1065 = vst [vmem:[%s333 + $0x28] sm:$0xff] %v1057
        %1066 = vst [vmem:[%s333 + $0x30] sm:$0xff] %v1058
        %1067 = vst [vmem:[%s333 + $0x38] sm:$0xff] %v1059
        %s1068 = smul.u32 16, %s14
        %p1069 = scmp.lt.s32.totalorder %s1068, 63
        %s1070 = scalar_select %p1069, %s1068, 63
        %s1071 = smul.addr %s1070, 4
        %s1072 = scalar_lea.vmem %s3, %s1071
        // Predicated region
        $region56: #{segmentation_net_forward.29} parent=50 // pred_check
          %p1073 = pneg %p100
        $region57: #{segmentation_net_forward.29} parent=50 // pred_check_branch
          %1075 = sbr.rel (%p1073) target = $region59
        $region58: #{segmentation_net_forward.29} parent=50 // pred_region
          %s1076 = smul.u32 16, %s14
        $region59: #{segmentation_net_forward.29} parent=50 // pred_fallthru
          _
      $region51: #{segmentation_net_forward.29} parent=5 // pred_fallthru
        _
      %p1077 = scmp.le.s32.totalorder 2, %s9
      // Predicated region
      $region60: #{segmentation_net_forward.29} parent=5 // pred_check
        %p1078 = pneg %p1077
      $region61: #{segmentation_net_forward.29} parent=5 // pred_check_branch
        %1080 = sbr.rel (%p1078) target = $region63
      $region62: #{segmentation_net_forward.29} parent=5 // pred_region
        %s1081 = ssub.s32 %s9, 2
        // Predicated region
        $region64: #{segmentation_net_forward.29} parent=62 // pred_check
          %p1082 = pneg %p106
        $region65: #{segmentation_net_forward.29} parent=62 // pred_check_branch
          %1084 = sbr.rel (%p1082) target = $region67
        $region66: #{segmentation_net_forward.29} parent=62 // pred_region
          %s1085 = smul.u32 16, %s15
          %p1086 = scmp.lt.s32.totalorder %s1085, 63
          %s1087 = scalar_select %p1086, %s1085, 63
          %s1088 = smul.addr %s1087, 4
          %s1089 = scalar_lea.vmem %s3, %s1088
        $region67: #{segmentation_net_forward.29} parent=62 // pred_fallthru
          _
      $region63: #{segmentation_net_forward.29} parent=5 // pred_fallthru
        _
    $region6: #{segmentation_net_forward.29} parent=1 // loop_footer
      %s13 = sadd.s32 1, %s9
    $region7: #{segmentation_net_forward.29} parent=1 // loop_footer_branch
      %8 = sbr.rel target = $region3
    $region8: #{segmentation_net_forward.29} parent=1 // loop_exit
      _

// kernel: segmentation_net_forward.31
$region0: #{segmentation_net_forward.31}
  #allocation0 [shape = 'u32[]', space=smem, size = 0x4, offset = 0x4, fixed_abs, tag = 'smem constant byte address 0x4 - core index']
  #allocation1 [shape = 'u32[72,128]{1,0:T(1,128)}', space=vmem, size = 0x9000, scoped, tag = 'internal scratch']
  #allocation2 [shape = 'f32[1,1]{1,0:T(1,128)S(1)}', space=vmem, size = 0x200, scoped, tag = 'scoped memory for segmentation_net_forward.31']
  %s0 = inlined_call_operand.vmem [shape: bf16[72,8192], index: 0, kind: input, shape index: {}]
  %s1 = inlined_call_operand.vmem [shape: bf16[1,72], index: 1, kind: input, shape index: {}]
  %s2 = inlined_call_operand.<no memory space> [shape: f32[1,1], index: 2, kind: input, shape index: {}]
  %s3 = inlined_call_operand.vmem [shape: f32[1,8192], index: 3, kind: output, shape index: {}]
  %s4 = sld [smem:[#allocation0]]
  $region68: #{segmentation_net_forward.31} parent=0
    _
  %s6 = ssub.s32 1, %s4
  %s7 = scalar_select 0, %s6, %s4
  %v8 = vstv %s2
  %9 = vst [vmem:[#allocation2] sm:$0x1] %v8
  $region1: #{segmentation_net_forward.31} parent=0
    #allocation3 [shape = 'u8[589824]{0}', space=vmem, size = 0x90000, scoped, tag = 'input window, operand 0']
    loop: start=0, step=1, limit=6
    $region2: #{segmentation_net_forward.31} parent=1 // loop_pre_header
      _
    $region3: #{segmentation_net_forward.31} parent=1 // loop_header
      %s11 = sphi 0, %s15
      %p12 = scmp.ge.s32.totalorder %s11, 6
      %s21 = sphi 0, %s23
      %s24 = sphi 0, %s21
      %s25 = sphi 0, %s24
      %s41 = sphi 0, %s25
      %s45 = sphi 0, %s45
      %s47 = sphi 0, %s45
      %s48 = sphi 0, %s47
      %s62 = sphi 0, %s48
      %s66 = sphi 0, %s66
      %s68 = sphi 0, %s66
      %s69 = sphi 0, %s68
      %s83 = sphi 0, %s69
      %s89 = sphi 0, %s91
      %s92 = sphi 0, %s89
      %s93 = sphi 0, %s92
      %s109 = sphi 0, %s93
    $region4: #{segmentation_net_forward.31} parent=1 // loop_header_branch
      %14 = sbr.rel (%p12) target = $region8
    $region5: #{segmentation_net_forward.31} parent=1 // loop_body
      %s16 = ssub.s32 %s11, 1
      %s17 = ssub.s32 %s11, 2
      %s18 = sadd.s32 %s11, 1
      %s19 = ssub.s32 %s11, %s18
      %p20 = scmp.eq.s32.totalorder %s19, 0
      %s22 = sadd.s32 %s21, 1
      %s23 = scalar_select %p20, %s21, %s22
      %p26 = pneg %p20
      %p27 = scmp.eq.s32.totalorder %s11, 3
      %p28 = por %p26, %p27
      %p29 = scmp.ne.s32.totalorder %s21, %s24
      %p30 = scmp.eq.s32.totalorder %s11, 0
      %p31 = por %p29, %p30
      %p32 = scmp.ne.s32.totalorder %s21, %s24
      %p33 = scmp.eq.s32.totalorder %s16, 3
      %p34 = por %p32, %p33
      %p35 = scmp.ne.s32.totalorder %s24, %s25
      %p36 = scmp.eq.s32.totalorder %s16, 0
      %p37 = por %p35, %p36
      %p38 = scmp.ne.s32.totalorder %s24, %s25
      %p39 = scmp.eq.s32.totalorder %s17, 3
      %p40 = por %p38, %p39
      %p42 = scmp.ne.s32.totalorder %s25, %s41
      %p43 = scmp.eq.s32.totalorder %s17, 0
      %p44 = por %p42, %p43
      %s46 = sadd.s32 %s45, 1
      %p49 = scmp.eq.s32.totalorder %s11, 3
      %p50 = scmp.ne.s32.totalorder %s45, %s47
      %p51 = scmp.eq.s32.totalorder %s11, 0
      %p52 = por %p50, %p51
      %p53 = scmp.ne.s32.totalorder %s45, %s47
      %p54 = scmp.eq.s32.totalorder %s16, 3
      %p55 = por %p53, %p54
      %p56 = scmp.ne.s32.totalorder %s47, %s48
      %p57 = scmp.eq.s32.totalorder %s16, 0
      %p58 = por %p56, %p57
      %p59 = scmp.ne.s32.totalorder %s47, %s48
      %p60 = scmp.eq.s32.totalorder %s17, 3
      %p61 = por %p59, %p60
      %p63 = scmp.ne.s32.totalorder %s48, %s62
      %p64 = scmp.eq.s32.totalorder %s17, 0
      %p65 = por %p63, %p64
      %s67 = sadd.s32 %s66, 1
      %p70 = scmp.eq.s32.totalorder %s11, 3
      %p71 = scmp.ne.s32.totalorder %s66, %s68
      %p72 = scmp.eq.s32.totalorder %s11, 0
      %p73 = por %p71, %p72
      %p74 = scmp.ne.s32.totalorder %s66, %s68
      %p75 = scmp.eq.s32.totalorder %s16, 3
      %p76 = por %p74, %p75
      %p77 = scmp.ne.s32.totalorder %s68, %s69
      %p78 = scmp.eq.s32.totalorder %s16, 0
      %p79 = por %p77, %p78
      %p80 = scmp.ne.s32.totalorder %s68, %s69
      %p81 = scmp.eq.s32.totalorder %s17, 3
      %p82 = por %p80, %p81
      %p84 = scmp.ne.s32.totalorder %s69, %s83
      %p85 = scmp.eq.s32.totalorder %s17, 0
      %p86 = por %p84, %p85
      %s87 = ssub.s32 %s11, %s18
      %p88 = scmp.eq.s32.totalorder %s87, 0
      %s90 = sadd.s32 %s89, 1
      %s91 = scalar_select %p88, %s89, %s90
      %p94 = pneg %p88
      %p95 = scmp.eq.s32.totalorder %s11, 3
      %p96 = por %p94, %p95
      %p97 = scmp.ne.s32.totalorder %s89, %s92
      %p98 = scmp.eq.s32.totalorder %s11, 0
      %p99 = por %p97, %p98
      %p100 = scmp.ne.s32.totalorder %s89, %s92
      %p101 = scmp.eq.s32.totalorder %s16, 3
      %p102 = por %p100, %p101
      %p103 = scmp.ne.s32.totalorder %s92, %s93
      %p104 = scmp.eq.s32.totalorder %s16, 0
      %p105 = por %p103, %p104
      %p106 = scmp.ne.s32.totalorder %s92, %s93
      %p107 = scmp.eq.s32.totalorder %s17, 3
      %p108 = por %p106, %p107
      %p110 = scmp.ne.s32.totalorder %s93, %s109
      %p111 = scmp.eq.s32.totalorder %s17, 0
      %p112 = por %p110, %p111
      %p113 = scmp.le.s32.totalorder 1, %s11
      %p114 = scmp.lt.s32.totalorder %s11, 5
      %p115 = pnand %p113, %p114
      %p116 = pneg %p115
      // Predicated region
      $region9: #{segmentation_net_forward.31} parent=5 // pred_check
        _
      $region10: #{segmentation_net_forward.31} parent=5 // pred_check_branch
        %118 = sbr.rel (%p115) target = $region12
      $region11: #{segmentation_net_forward.31} parent=5 // pred_region
        %s119 = ssub.s32 %s11, 1
        // Predicated region
        $region13: #{segmentation_net_forward.31} parent=11 // pred_check
          %p120 = pneg %p58
        $region14: #{segmentation_net_forward.31} parent=11 // pred_check_branch
          %122 = sbr.rel (%p120) target = $region16
        $region15: #{segmentation_net_forward.31} parent=11 // pred_region
          _
        $region16: #{segmentation_net_forward.31} parent=11 // pred_fallthru
          _
        // Predicated region
        $region17: #{segmentation_net_forward.31} parent=11 // pred_check
          %p123 = pneg %p79
        $region18: #{segmentation_net_forward.31} parent=11 // pred_check_branch
          %125 = sbr.rel (%p123) target = $region20
        $region19: #{segmentation_net_forward.31} parent=11 // pred_region
          _
        $region20: #{segmentation_net_forward.31} parent=11 // pred_fallthru
          _
      $region12: #{segmentation_net_forward.31} parent=5 // pred_fallthru
        _
      %p126 = scmp.lt.s32.totalorder %s11, 4
      // Predicated region
      $region21: #{segmentation_net_forward.31} parent=5 // pred_check
        %p127 = pneg %p126
      $region22: #{segmentation_net_forward.31} parent=5 // pred_check_branch
        %129 = sbr.rel (%p127) target = $region24
      $region23: #{segmentation_net_forward.31} parent=5 // pred_region
        // Predicated region
        $region25: #{segmentation_net_forward.31} parent=23 // pred_check
          %p130 = pneg %p31
        $region26: #{segmentation_net_forward.31} parent=23 // pred_check_branch
          %132 = sbr.rel (%p130) target = $region28
        $region27: #{segmentation_net_forward.31} parent=23 // pred_region
          %s133 = sand.u32 %s21, 1
          %s134 = sand.u32 %s21, 1
          %s135 = smul.addr %s134, 576
          %s136 = scalar_lea.vmem [#allocation3], %s135
          %s137 = smul.u32 16, %s11
          %s138 = smul.addr %s137, 4
          %s139 = scalar_lea.vmem %s0, %s138
          // Predicated region
          $region29: #{segmentation_net_forward.31} parent=27 // pred_check
            _
          $region30: #{segmentation_net_forward.31} parent=27 // pred_check_branch
            %141 = sbr.rel (0) target = $region32
          $region31: #{segmentation_net_forward.31} parent=27 // pred_region
            // Predicated region
            $region33: #{segmentation_net_forward.31} parent=31 // pred_check
              _
            $region34: #{segmentation_net_forward.31} parent=31 // pred_check_branch
              %143 = sbr.rel (0) target = $region36
            $region35: #{segmentation_net_forward.31} parent=31 // pred_region
              loop: start=0, step=1, limit=1
              $region37: #{segmentation_net_forward.31} parent=35 // loop_pre_header
                _
              $region38: #{segmentation_net_forward.31} parent=35 // loop_header
                %s145 = sphi 0, %s149
                %p146 = scmp.ge.s32.totalorder %s145, 1
                %s150 = sphi %s139, %s139
                %s151 = sphi %s136, %s136
              $region39: #{segmentation_net_forward.31} parent=35 // loop_header_branch
                %148 = sbr.rel (%p146) target = $region43
              $region40: #{segmentation_net_forward.31} parent=35 // loop_body
                %v152 = vld [vmem:[%s150] sm:$0xff]
                %153 = vst [vmem:[%s151] sm:$0xff] %v152
                %v154 = vld [vmem:[%s150 + $0x8] sm:$0xff]
                %155 = vst [vmem:[%s151 + $0x8] sm:$0xff] %v154
                %v156 = vld [vmem:[%s150 + $0x10] sm:$0xff]
                %157 = vst [vmem:[%s151 + $0x10] sm:$0xff] %v156
                %v158 = vld [vmem:[%s150 + $0x18] sm:$0xff]
                %159 = vst [vmem:[%s151 + $0x18] sm:$0xff] %v158
                %v160 = vld [vmem:[%s150 + $0x20] sm:$0xff]
                %161 = vst [vmem:[%s151 + $0x20] sm:$0xff] %v160
                %v162 = vld [vmem:[%s150 + $0x28] sm:$0xff]
                %163 = vst [vmem:[%s151 + $0x28] sm:$0xff] %v162
                %v164 = vld [vmem:[%s150 + $0x30] sm:$0xff]
                %165 = vst [vmem:[%s151 + $0x30] sm:$0xff] %v164
                %v166 = vld [vmem:[%s150 + $0x38] sm:$0xff]
                %167 = vst [vmem:[%s151 + $0x38] sm:$0xff] %v166
                %v168 = vld [vmem:[%s150 + $0x100] sm:$0xff]
                %169 = vst [vmem:[%s151 + $0x40] sm:$0xff] %v168
                %v170 = vld [vmem:[%s150 + $0x108] sm:$0xff]
                %171 = vst [vmem:[%s151 + $0x48] sm:$0xff] %v170
                %v172 = vld [vmem:[%s150 + $0x110] sm:$0xff]
                %173 = vst [vmem:[%s151 + $0x50] sm:$0xff] %v172
                %v174 = vld [vmem:[%s150 + $0x118] sm:$0xff]
                %175 = vst [vmem:[%s151 + $0x58] sm:$0xff] %v174
                %v176 = vld [vmem:[%s150 + $0x120] sm:$0xff]
                %177 = vst [vmem:[%s151 + $0x60] sm:$0xff] %v176
                %v178 = vld [vmem:[%s150 + $0x128] sm:$0xff]
                %179 = vst [vmem:[%s151 + $0x68] sm:$0xff] %v178
                %v180 = vld [vmem:[%s150 + $0x130] sm:$0xff]
                %181 = vst [vmem:[%s151 + $0x70] sm:$0xff] %v180
                %v182 = vld [vmem:[%s150 + $0x138] sm:$0xff]
                %183 = vst [vmem:[%s151 + $0x78] sm:$0xff] %v182
                %v184 = vld [vmem:[%s150 + $0x200] sm:$0xff]
                %185 = vst [vmem:[%s151 + $0x80] sm:$0xff] %v184
                %v186 = vld [vmem:[%s150 + $0x208] sm:$0xff]
                %187 = vst [vmem:[%s151 + $0x88] sm:$0xff] %v186
                %v188 = vld [vmem:[%s150 + $0x210] sm:$0xff]
                %189 = vst [vmem:[%s151 + $0x90] sm:$0xff] %v188
                %v190 = vld [vmem:[%s150 + $0x218] sm:$0xff]
                %191 = vst [vmem:[%s151 + $0x98] sm:$0xff] %v190
                %v192 = vld [vmem:[%s150 + $0x220] sm:$0xff]
                %193 = vst [vmem:[%s151 + $0xa0] sm:$0xff] %v192
                %v194 = vld [vmem:[%s150 + $0x228] sm:$0xff]
                %195 = vst [vmem:[%s151 + $0xa8] sm:$0xff] %v194
                %v196 = vld [vmem:[%s150 + $0x230] sm:$0xff]
                %197 = vst [vmem:[%s151 + $0xb0] sm:$0xff] %v196
                %v198 = vld [vmem:[%s150 + $0x238] sm:$0xff]
                %199 = vst [vmem:[%s151 + $0xb8] sm:$0xff] %v198
                %v200 = vld [vmem:[%s150 + $0x300] sm:$0xff]
                %201 = vst [vmem:[%s151 + $0xc0] sm:$0xff] %v200
                %v202 = vld [vmem:[%s150 + $0x308] sm:$0xff]
                %203 = vst [vmem:[%s151 + $0xc8] sm:$0xff] %v202
                %v204 = vld [vmem:[%s150 + $0x310] sm:$0xff]
                %205 = vst [vmem:[%s151 + $0xd0] sm:$0xff] %v204
                %v206 = vld [vmem:[%s150 + $0x318] sm:$0xff]
                %207 = vst [vmem:[%s151 + $0xd8] sm:$0xff] %v206
                %v208 = vld [vmem:[%s150 + $0x320] sm:$0xff]
                %209 = vst [vmem:[%s151 + $0xe0] sm:$0xff] %v208
                %v210 = vld [vmem:[%s150 + $0x328] sm:$0xff]
                %211 = vst [vmem:[%s151 + $0xe8] sm:$0xff] %v210
                %v212 = vld [vmem:[%s150 + $0x330] sm:$0xff]
                %213 = vst [vmem:[%s151 + $0xf0] sm:$0xff] %v212
                %v214 = vld [vmem:[%s150 + $0x338] sm:$0xff]
                %215 = vst [vmem:[%s151 + $0xf8] sm:$0xff] %v214
                %v216 = vld [vmem:[%s150 + $0x400] sm:$0xff]
                %217 = vst [vmem:[%s151 + $0x100] sm:$0xff] %v216
                %v218 = vld [vmem:[%s150 + $0x408] sm:$0xff]
                %219 = vst [vmem:[%s151 + $0x108] sm:$0xff] %v218
                %v220 = vld [vmem:[%s150 + $0x410] sm:$0xff]
                %221 = vst [vmem:[%s151 + $0x110] sm:$0xff] %v220
                %v222 = vld [vmem:[%s150 + $0x418] sm:$0xff]
                %223 = vst [vmem:[%s151 + $0x118] sm:$0xff] %v222
                %v224 = vld [vmem:[%s150 + $0x420] sm:$0xff]
                %225 = vst [vmem:[%s151 + $0x120] sm:$0xff] %v224
                %v226 = vld [vmem:[%s150 + $0x428] sm:$0xff]
                %227 = vst [vmem:[%s151 + $0x128] sm:$0xff] %v226
                %v228 = vld [vmem:[%s150 + $0x430] sm:$0xff]
                %229 = vst [vmem:[%s151 + $0x130] sm:$0xff] %v228
                %v230 = vld [vmem:[%s150 + $0x438] sm:$0xff]
                %231 = vst [vmem:[%s151 + $0x138] sm:$0xff] %v230
                %v232 = vld [vmem:[%s150 + $0x500] sm:$0xff]
                %233 = vst [vmem:[%s151 + $0x140] sm:$0xff] %v232
                %v234 = vld [vmem:[%s150 + $0x508] sm:$0xff]
                %235 = vst [vmem:[%s151 + $0x148] sm:$0xff] %v234
                %v236 = vld [vmem:[%s150 + $0x510] sm:$0xff]
                %237 = vst [vmem:[%s151 + $0x150] sm:$0xff] %v236
                %v238 = vld [vmem:[%s150 + $0x518] sm:$0xff]
                %239 = vst [vmem:[%s151 + $0x158] sm:$0xff] %v238
                %v240 = vld [vmem:[%s150 + $0x520] sm:$0xff]
                %241 = vst [vmem:[%s151 + $0x160] sm:$0xff] %v240
                %v242 = vld [vmem:[%s150 + $0x528] sm:$0xff]
                %243 = vst [vmem:[%s151 + $0x168] sm:$0xff] %v242
                %v244 = vld [vmem:[%s150 + $0x530] sm:$0xff]
                %245 = vst [vmem:[%s151 + $0x170] sm:$0xff] %v244
                %v246 = vld [vmem:[%s150 + $0x538] sm:$0xff]
                %247 = vst [vmem:[%s151 + $0x178] sm:$0xff] %v246
                %v248 = vld [vmem:[%s150 + $0x600] sm:$0xff]
                %249 = vst [vmem:[%s151 + $0x180] sm:$0xff] %v248
                %v250 = vld [vmem:[%s150 + $0x608] sm:$0xff]
                %251 = vst [vmem:[%s151 + $0x188] sm:$0xff] %v250
                %v252 = vld [vmem:[%s150 + $0x610] sm:$0xff]
                %253 = vst [vmem:[%s151 + $0x190] sm:$0xff] %v252
                %v254 = vld [vmem:[%s150 + $0x618] sm:$0xff]
                %255 = vst [vmem:[%s151 + $0x198] sm:$0xff] %v254
                %v256 = vld [vmem:[%s150 + $0x620] sm:$0xff]
                %257 = vst [vmem:[%s151 + $0x1a0] sm:$0xff] %v256
                %v258 = vld [vmem:[%s150 + $0x628] sm:$0xff]
                %259 = vst [vmem:[%s151 + $0x1a8] sm:$0xff] %v258
                %v260 = vld [vmem:[%s150 + $0x630] sm:$0xff]
                %261 = vst [vmem:[%s151 + $0x1b0] sm:$0xff] %v260
                %v262 = vld [vmem:[%s150 + $0x638] sm:$0xff]
                %263 = vst [vmem:[%s151 + $0x1b8] sm:$0xff] %v262
                %v264 = vld [vmem:[%s150 + $0x700] sm:$0xff]
                %265 = vst [vmem:[%s151 + $0x1c0] sm:$0xff] %v264
                %v266 = vld [vmem:[%s150 + $0x708] sm:$0xff]
                %267 = vst [vmem:[%s151 + $0x1c8] sm:$0xff] %v266
                %v268 = vld [vmem:[%s150 + $0x710] sm:$0xff]
                %269 = vst [vmem:[%s151 + $0x1d0] sm:$0xff] %v268
                %v270 = vld [vmem:[%s150 + $0x718] sm:$0xff]
                %271 = vst [vmem:[%s151 + $0x1d8] sm:$0xff] %v270
                %v272 = vld [vmem:[%s150 + $0x720] sm:$0xff]
                %273 = vst [vmem:[%s151 + $0x1e0] sm:$0xff] %v272
                %v274 = vld [vmem:[%s150 + $0x728] sm:$0xff]
                %275 = vst [vmem:[%s151 + $0x1e8] sm:$0xff] %v274
                %v276 = vld [vmem:[%s150 + $0x730] sm:$0xff]
                %277 = vst [vmem:[%s151 + $0x1f0] sm:$0xff] %v276
                %v278 = vld [vmem:[%s150 + $0x738] sm:$0xff]
                %279 = vst [vmem:[%s151 + $0x1f8] sm:$0xff] %v278
                %v280 = vld [vmem:[%s150 + $0x800] sm:$0xff]
                %281 = vst [vmem:[%s151 + $0x200] sm:$0xff] %v280
                %v282 = vld [vmem:[%s150 + $0x808] sm:$0xff]
                %283 = vst [vmem:[%s151 + $0x208] sm:$0xff] %v282
                %v284 = vld [vmem:[%s150 + $0x810] sm:$0xff]
                %285 = vst [vmem:[%s151 + $0x210] sm:$0xff] %v284
                %v286 = vld [vmem:[%s150 + $0x818] sm:$0xff]
                %287 = vst [vmem:[%s151 + $0x218] sm:$0xff] %v286
                %v288 = vld [vmem:[%s150 + $0x820] sm:$0xff]
                %289 = vst [vmem:[%s151 + $0x220] sm:$0xff] %v288
                %v290 = vld [vmem:[%s150 + $0x828] sm:$0xff]
                %291 = vst [vmem:[%s151 + $0x228] sm:$0xff] %v290
                %v292 = vld [vmem:[%s150 + $0x830] sm:$0xff]
                %293 = vst [vmem:[%s151 + $0x230] sm:$0xff] %v292
                %v294 = vld [vmem:[%s150 + $0x838] sm:$0xff]
                %295 = vst [vmem:[%s151 + $0x238] sm:$0xff] %v294
              $region41: #{segmentation_net_forward.31} parent=35 // loop_footer
                %s149 = sadd.s32 1, %s145
              $region42: #{segmentation_net_forward.31} parent=35 // loop_footer_branch
                %144 = sbr.rel target = $region38
              $region43: #{segmentation_net_forward.31} parent=35 // loop_exit
                _
            $region36: #{segmentation_net_forward.31} parent=31 // pred_fallthru
              _
            // Predicated region
            $region44: #{segmentation_net_forward.31} parent=31 // pred_check
              _
            $region45: #{segmentation_net_forward.31} parent=31 // pred_check_branch
              %297 = sbr.rel target = $region47
            $region46: #{segmentation_net_forward.31} parent=31 // pred_region
              _
            $region47: #{segmentation_net_forward.31} parent=31 // pred_fallthru
              _
          $region32: #{segmentation_net_forward.31} parent=27 // pred_fallthru
            _
          %298 = vnop
        $region28: #{segmentation_net_forward.31} parent=23 // pred_fallthru
          _
      $region24: #{segmentation_net_forward.31} parent=5 // pred_fallthru
        _
      %p299 = scmp.le.s32.totalorder 1, %s11
      %p300 = scmp.lt.s32.totalorder %s11, 5
      %p301 = pnand %p299, %p300
      %p302 = pneg %p301
      // Predicated region
      $region48: #{segmentation_net_forward.31} parent=5 // pred_check
        _
      $region49: #{segmentation_net_forward.31} parent=5 // pred_check_branch
        %304 = sbr.rel (%p301) target = $region51
      $region50: #{segmentation_net_forward.31} parent=5 // pred_region
        %s305 = ssub.s32 %s11, 1
        %s306 = sand.u32 %s24, 1
        %s307 = sand.u32 %s24, 1
        %s308 = smul.addr %s307, 576
        %s309 = scalar_lea.vmem [#allocation3], %s308
        // Predicated region
        $region52: #{segmentation_net_forward.31} parent=50 // pred_check
          %p310 = pneg %p37
        $region53: #{segmentation_net_forward.31} parent=50 // pred_check_branch
          %312 = sbr.rel (%p310) target = $region55
        $region54: #{segmentation_net_forward.31} parent=50 // pred_region
          _
        $region55: #{segmentation_net_forward.31} parent=50 // pred_fallthru
          _
        %s313 = sand.u32 %s24, 1
        %s314 = sand.u32 %s24, 1
        %s315 = smul.addr %s314, 576
        %s316 = scalar_lea.vmem [#allocation3], %s315
        %p317 = pneg %p37
        %p318 = pneg %p34
        %p319 = pneg %p58
        %p320 = pneg %p55
        %p321 = pneg %p79
        %p322 = pneg %p76
        %p323 = pneg %p105
        %p324 = pneg %p102
        %s325 = smul.u32 16, %s16
        %p326 = scmp.lt.s32.totalorder %s325, 63
        %s327 = scalar_select %p326, %s325, 63
        %s328 = scalar_lea.vmem %s3, %s327
        %s329 = smul.u32 16, %s16
        %s330 = smul.u32 16, %s16
        %p331 = scmp.lt.s32.totalorder %s330, 63
        %s332 = scalar_select %p331, %s330, 63
        %s333 = scalar_lea.vmem %s3, %s332
        %s334 = smul.u32 16, %s16
        %v336 = vld [vmem:[%s1] sm:$0x1]
        %v337 = vld [vmem:[%s309] sm:$0xff]
        %v338 = vld [vmem:[%s309 + $0x8] sm:$0xff]
        %v339 = vld [vmem:[%s309 + $0x10] sm:$0xff]
        %v340 = vld [vmem:[%s309 + $0x18] sm:$0xff]
        %v341 = vld [vmem:[%s309 + $0x20] sm:$0xff]
        %v342 = vld [vmem:[%s309 + $0x28] sm:$0xff]
        %v343 = vld [vmem:[%s309 + $0x30] sm:$0xff]
        %v344 = vld [vmem:[%s309 + $0x38] sm:$0xff]
        %v345 = vld [vmem:[%s309 + $0x40] sm:$0xff]
        %v346 = vld [vmem:[%s309 + $0x48] sm:$0xff]
        %v347 = vld [vmem:[%s309 + $0x50] sm:$0xff]
        %v348 = vld [vmem:[%s309 + $0x58] sm:$0xff]
        %v349 = vld [vmem:[%s309 + $0x60] sm:$0xff]
        %v350 = vld [vmem:[%s309 + $0x68] sm:$0xff]
        %v351 = vld [vmem:[%s309 + $0x70] sm:$0xff]
        %v352 = vld [vmem:[%s309 + $0x78] sm:$0xff]
        %v353 = vld [vmem:[%s309 + $0x80] sm:$0xff]
        %v354 = vld [vmem:[%s309 + $0x88] sm:$0xff]
        %v355 = vld [vmem:[%s309 + $0x90] sm:$0xff]
        %v356 = vld [vmem:[%s309 + $0x98] sm:$0xff]
        %v357 = vld [vmem:[%s309 + $0xa0] sm:$0xff]
        %v358 = vld [vmem:[%s309 + $0xa8] sm:$0xff]
        %v359 = vld [vmem:[%s309 + $0xb0] sm:$0xff]
        %v360 = vld [vmem:[%s309 + $0xb8] sm:$0xff]
        %v361 = vld [vmem:[%s309 + $0xc0] sm:$0xff]
        %v362 = vld [vmem:[%s309 + $0xc8] sm:$0xff]
        %v363 = vld [vmem:[%s309 + $0xd0] sm:$0xff]
        %v364 = vld [vmem:[%s309 + $0xd8] sm:$0xff]
        %v365 = vld [vmem:[%s309 + $0xe0] sm:$0xff]
        %v366 = vld [vmem:[%s309 + $0xe8] sm:$0xff]
        %v367 = vld [vmem:[%s309 + $0xf0] sm:$0xff]
        %v368 = vld [vmem:[%s309 + $0xf8] sm:$0xff]
        %v369 = vld [vmem:[%s309 + $0x100] sm:$0xff]
        %v370 = vld [vmem:[%s309 + $0x108] sm:$0xff]
        %v371 = vld [vmem:[%s309 + $0x110] sm:$0xff]
        %v372 = vld [vmem:[%s309 + $0x118] sm:$0xff]
        %v373 = vld [vmem:[%s309 + $0x120] sm:$0xff]
        %v374 = vld [vmem:[%s309 + $0x128] sm:$0xff]
        %v375 = vld [vmem:[%s309 + $0x130] sm:$0xff]
        %v376 = vld [vmem:[%s309 + $0x138] sm:$0xff]
        %v377 = vld [vmem:[%s309 + $0x140] sm:$0xff]
        %v378 = vld [vmem:[%s309 + $0x148] sm:$0xff]
        %v379 = vld [vmem:[%s309 + $0x150] sm:$0xff]
        %v380 = vld [vmem:[%s309 + $0x158] sm:$0xff]
        %v381 = vld [vmem:[%s309 + $0x160] sm:$0xff]
        %v382 = vld [vmem:[%s309 + $0x168] sm:$0xff]
        %v383 = vld [vmem:[%s309 + $0x170] sm:$0xff]
        %v384 = vld [vmem:[%s309 + $0x178] sm:$0xff]
        %v385 = vld [vmem:[%s309 + $0x180] sm:$0xff]
        %v386 = vld [vmem:[%s309 + $0x188] sm:$0xff]
        %v387 = vld [vmem:[%s309 + $0x190] sm:$0xff]
        %v388 = vld [vmem:[%s309 + $0x198] sm:$0xff]
        %v389 = vld [vmem:[%s309 + $0x1a0] sm:$0xff]
        %v390 = vld [vmem:[%s309 + $0x1a8] sm:$0xff]
        %v391 = vld [vmem:[%s309 + $0x1b0] sm:$0xff]
        %v392 = vld [vmem:[%s309 + $0x1b8] sm:$0xff]
        %v393 = vld [vmem:[%s309 + $0x1c0] sm:$0xff]
        %v394 = vld [vmem:[%s309 + $0x1c8] sm:$0xff]
        %v395 = vld [vmem:[%s309 + $0x1d0] sm:$0xff]
        %v396 = vld [vmem:[%s309 + $0x1d8] sm:$0xff]
        %v397 = vld [vmem:[%s309 + $0x1e0] sm:$0xff]
        %v398 = vld [vmem:[%s309 + $0x1e8] sm:$0xff]
        %v399 = vld [vmem:[%s309 + $0x1f0] sm:$0xff]
        %v400 = vld [vmem:[%s309 + $0x1f8] sm:$0xff]
        %v401 = vld [vmem:[%s309 + $0x200] sm:$0xff]
        %v402 = vld [vmem:[%s309 + $0x208] sm:$0xff]
        %v403 = vld [vmem:[%s309 + $0x210] sm:$0xff]
        %v404 = vld [vmem:[%s309 + $0x218] sm:$0xff]
        %v405 = vld [vmem:[%s309 + $0x220] sm:$0xff]
        %v406 = vld [vmem:[%s309 + $0x228] sm:$0xff]
        %v407 = vld [vmem:[%s309 + $0x230] sm:$0xff]
        %v408 = vld [vmem:[%s309 + $0x238] sm:$0xff]
        %v409 = vld [vmem:[#allocation2] sm:$0x1]
        %411 = vset.pattern.permute.xlu0 0
        %412 = vperm.xlu0 %411, %v409
        %v413 = vpop.permute.xlu0 %412
        %v415 = vperm.slane %v413, 0
        %v488 = vunpack.c.l.b16 %v337
        %v489 = vunpack.c.h.b16 %v337
        %v490 = vunpack.c.l.b16 %v338
        %v491 = vunpack.c.h.b16 %v338
        %v492 = vunpack.c.l.b16 %v339
        %v493 = vunpack.c.h.b16 %v339
        %v494 = vunpack.c.l.b16 %v340
        %v495 = vunpack.c.h.b16 %v340
        %v496 = vunpack.c.l.b16 %v341
        %v497 = vunpack.c.h.b16 %v341
        %v498 = vunpack.c.l.b16 %v342
        %v499 = vunpack.c.h.b16 %v342
        %v500 = vunpack.c.l.b16 %v343
        %v501 = vunpack.c.h.b16 %v343
        %v502 = vunpack.c.l.b16 %v344
        %v503 = vunpack.c.h.b16 %v344
        %v504 = vunpack.c.l.b16 %v345
        %v505 = vunpack.c.h.b16 %v345
        %v506 = vunpack.c.l.b16 %v346
        %v507 = vunpack.c.h.b16 %v346
        %v508 = vunpack.c.l.b16 %v347
        %v509 = vunpack.c.h.b16 %v347
        %v510 = vunpack.c.l.b16 %v348
        %v511 = vunpack.c.h.b16 %v348
        %v512 = vunpack.c.l.b16 %v349
        %v513 = vunpack.c.h.b16 %v349
        %v514 = vunpack.c.l.b16 %v350
        %v515 = vunpack.c.h.b16 %v350
        %v516 = vunpack.c.l.b16 %v351
        %v517 = vunpack.c.h.b16 %v351
        %v518 = vunpack.c.l.b16 %v352
        %v519 = vunpack.c.h.b16 %v352
        %v520 = vunpack.c.l.b16 %v353
        %v521 = vunpack.c.h.b16 %v353
        %v522 = vunpack.c.l.b16 %v354
        %v523 = vunpack.c.h.b16 %v354
        %v524 = vunpack.c.l.b16 %v355
        %v525 = vunpack.c.h.b16 %v355
        %v526 = vunpack.c.l.b16 %v356
        %v527 = vunpack.c.h.b16 %v356
        %v528 = vunpack.c.l.b16 %v357
        %v529 = vunpack.c.h.b16 %v357
        %v530 = vunpack.c.l.b16 %v358
        %v531 = vunpack.c.h.b16 %v358
        %v532 = vunpack.c.l.b16 %v359
        %v533 = vunpack.c.h.b16 %v359
        %v534 = vunpack.c.l.b16 %v360
        %v535 = vunpack.c.h.b16 %v360
        %v536 = vunpack.c.l.b16 %v361
        %v537 = vunpack.c.h.b16 %v361
        %v538 = vunpack.c.l.b16 %v362
        %v539 = vunpack.c.h.b16 %v362
        %v540 = vunpack.c.l.b16 %v363
        %v541 = vunpack.c.h.b16 %v363
        %v542 = vunpack.c.l.b16 %v364
        %v543 = vunpack.c.h.b16 %v364
        %v544 = vunpack.c.l.b16 %v365
        %v545 = vunpack.c.h.b16 %v365
        %v546 = vunpack.c.l.b16 %v366
        %v547 = vunpack.c.h.b16 %v366
        %v548 = vunpack.c.l.b16 %v367
        %v549 = vunpack.c.h.b16 %v367
        %v550 = vunpack.c.l.b16 %v368
        %v551 = vunpack.c.h.b16 %v368
        %v552 = vunpack.c.l.b16 %v369
        %v553 = vunpack.c.h.b16 %v369
        %v554 = vunpack.c.l.b16 %v370
        %v555 = vunpack.c.h.b16 %v370
        %v556 = vunpack.c.l.b16 %v371
        %v557 = vunpack.c.h.b16 %v371
        %v558 = vunpack.c.l.b16 %v372
        %v559 = vunpack.c.h.b16 %v372
        %v560 = vunpack.c.l.b16 %v373
        %v561 = vunpack.c.h.b16 %v373
        %v562 = vunpack.c.l.b16 %v374
        %v563 = vunpack.c.h.b16 %v374
        %v564 = vunpack.c.l.b16 %v375
        %v565 = vunpack.c.h.b16 %v375
        %v566 = vunpack.c.l.b16 %v376
        %v567 = vunpack.c.h.b16 %v376
        %v568 = vunpack.c.l.b16 %v377
        %v569 = vunpack.c.h.b16 %v377
        %v570 = vunpack.c.l.b16 %v378
        %v571 = vunpack.c.h.b16 %v378
        %v572 = vunpack.c.l.b16 %v379
        %v573 = vunpack.c.h.b16 %v379
        %v574 = vunpack.c.l.b16 %v380
        %v575 = vunpack.c.h.b16 %v380
        %v576 = vunpack.c.l.b16 %v381
        %v577 = vunpack.c.h.b16 %v381
        %v578 = vunpack.c.l.b16 %v382
        %v579 = vunpack.c.h.b16 %v382
        %v580 = vunpack.c.l.b16 %v383
        %v581 = vunpack.c.h.b16 %v383
        %v582 = vunpack.c.l.b16 %v384
        %v583 = vunpack.c.h.b16 %v384
        %v584 = vunpack.c.l.b16 %v385
        %v585 = vunpack.c.h.b16 %v385
        %v586 = vunpack.c.l.b16 %v386
        %v587 = vunpack.c.h.b16 %v386
        %v588 = vunpack.c.l.b16 %v387
        %v589 = vunpack.c.h.b16 %v387
        %v590 = vunpack.c.l.b16 %v388
        %v591 = vunpack.c.h.b16 %v388
        %v592 = vunpack.c.l.b16 %v389
        %v593 = vunpack.c.h.b16 %v389
        %v594 = vunpack.c.l.b16 %v390
        %v595 = vunpack.c.h.b16 %v390
        %v596 = vunpack.c.l.b16 %v391
        %v597 = vunpack.c.h.b16 %v391
        %v598 = vunpack.c.l.b16 %v392
        %v599 = vunpack.c.h.b16 %v392
        %v600 = vunpack.c.l.b16 %v393
        %v601 = vunpack.c.h.b16 %v393
        %v602 = vunpack.c.l.b16 %v394
        %v603 = vunpack.c.h.b16 %v394
        %v604 = vunpack.c.l.b16 %v395
        %v605 = vunpack.c.h.b16 %v395
        %v606 = vunpack.c.l.b16 %v396
        %v607 = vunpack.c.h.b16 %v396
        %v608 = vunpack.c.l.b16 %v397
        %v609 = vunpack.c.h.b16 %v397
        %v610 = vunpack.c.l.b16 %v398
        %v611 = vunpack.c.h.b16 %v398
        %v612 = vunpack.c.l.b16 %v399
        %v613 = vunpack.c.h.b16 %v399
        %v614 = vunpack.c.l.b16 %v400
        %v615 = vunpack.c.h.b16 %v400
        %v616 = vunpack.c.l.b16 %v401
        %v617 = vunpack.c.h.b16 %v401
        %v618 = vunpack.c.l.b16 %v402
        %v619 = vunpack.c.h.b16 %v402
        %v620 = vunpack.c.l.b16 %v403
        %v621 = vunpack.c.h.b16 %v403
        %v622 = vunpack.c.l.b16 %v404
        %v623 = vunpack.c.h.b16 %v404
        %v624 = vunpack.c.l.b16 %v405
        %v625 = vunpack.c.h.b16 %v405
        %v626 = vunpack.c.l.b16 %v406
        %v627 = vunpack.c.h.b16 %v406
        %v628 = vunpack.c.l.b16 %v407
        %v629 = vunpack.c.h.b16 %v407
        %v630 = vunpack.c.l.b16 %v408
        %v631 = vunpack.c.h.b16 %v408
        %v632 = vpack.c.b16 %v504, %v488
        %v633 = vpack.c.b16 %v505, %v489
        %v634 = vpack.c.b16 %v506, %v490
        %v635 = vpack.c.b16 %v507, %v491
        %v636 = vpack.c.b16 %v508, %v492
        %v637 = vpack.c.b16 %v509, %v493
        %v638 = vpack.c.b16 %v510, %v494
        %v639 = vpack.c.b16 %v511, %v495
        %v640 = vpack.c.b16 %v512, %v496
        %v641 = vpack.c.b16 %v513, %v497
        %v642 = vpack.c.b16 %v514, %v498
        %v643 = vpack.c.b16 %v515, %v499
        %v644 = vpack.c.b16 %v516, %v500
        %v645 = vpack.c.b16 %v517, %v501
        %v646 = vpack.c.b16 %v518, %v502
        %v647 = vpack.c.b16 %v519, %v503
        %v648 = vpack.c.b16 %v536, %v520
        %v649 = vpack.c.b16 %v537, %v521
        %v650 = vpack.c.b16 %v538, %v522
        %v651 = vpack.c.b16 %v539, %v523
        %v652 = vpack.c.b16 %v540, %v524
        %v653 = vpack.c.b16 %v541, %v525
        %v654 = vpack.c.b16 %v542, %v526
        %v655 = vpack.c.b16 %v543, %v527
        %v656 = vpack.c.b16 %v544, %v528
        %v657 = vpack.c.b16 %v545, %v529
        %v658 = vpack.c.b16 %v546, %v530
        %v659 = vpack.c.b16 %v547, %v531
        %v660 = vpack.c.b16 %v548, %v532
        %v661 = vpack.c.b16 %v549, %v533
        %v662 = vpack.c.b16 %v550, %v534
        %v663 = vpack.c.b16 %v551, %v535
        %v664 = vpack.c.b16 %v568, %v552
        %v665 = vpack.c.b16 %v569, %v553
        %v666 = vpack.c.b16 %v570, %v554
        %v667 = vpack.c.b16 %v571, %v555
        %v668 = vpack.c.b16 %v572, %v556
        %v669 = vpack.c.b16 %v573, %v557
        %v670 = vpack.c.b16 %v574, %v558
        %v671 = vpack.c.b16 %v575, %v559
        %v672 = vpack.c.b16 %v576, %v560
        %v673 = vpack.c.b16 %v577, %v561
        %v674 = vpack.c.b16 %v578, %v562
        %v675 = vpack.c.b16 %v579, %v563
        %v676 = vpack.c.b16 %v580, %v564
        %v677 = vpack.c.b16 %v581, %v565
        %v678 = vpack.c.b16 %v582, %v566
        %v679 = vpack.c.b16 %v583, %v567
        %v680 = vpack.c.b16 %v600, %v584
        %v681 = vpack.c.b16 %v601, %v585
        %v682 = vpack.c.b16 %v602, %v586
        %v683 = vpack.c.b16 %v603, %v587
        %v684 = vpack.c.b16 %v604, %v588
        %v685 = vpack.c.b16 %v605, %v589
        %v686 = vpack.c.b16 %v606, %v590
        %v687 = vpack.c.b16 %v607, %v591
        %v688 = vpack.c.b16 %v608, %v592
        %v689 = vpack.c.b16 %v609, %v593
        %v690 = vpack.c.b16 %v610, %v594
        %v691 = vpack.c.b16 %v611, %v595
        %v692 = vpack.c.b16 %v612, %v596
        %v693 = vpack.c.b16 %v613, %v597
        %v694 = vpack.c.b16 %v614, %v598
        %v695 = vpack.c.b16 %v615, %v599
        %v696 = vpack.c.b16 %v616, %v616
        %v697 = vpack.c.b16 %v617, %v617
        %v698 = vpack.c.b16 %v618, %v618
        %v699 = vpack.c.b16 %v619, %v619
        %v700 = vpack.c.b16 %v620, %v620
        %v701 = vpack.c.b16 %v621, %v621
        %v702 = vpack.c.b16 %v622, %v622
        %v703 = vpack.c.b16 %v623, %v623
        %v704 = vpack.c.b16 %v624, %v624
        %v705 = vpack.c.b16 %v625, %v625
        %v706 = vpack.c.b16 %v626, %v626
        %v707 = vpack.c.b16 %v627, %v627
        %v708 = vpack.c.b16 %v628, %v628
        %v709 = vpack.c.b16 %v629, %v629
        %v710 = vpack.c.b16 %v630, %v630
        %v711 = vpack.c.b16 %v631, %v631
        %vm776 = vcmask 588800
        %v778 = vsel %vm776, %v336, 0
        %vm780 = vcmask 1043456
        %v782 = vsel %vm780, %v696, 0
        %v785 = vsel %vm780, %v697, 0
        %v788 = vsel %vm780, %v698, 0
        %v791 = vsel %vm780, %v699, 0
        %v794 = vsel %vm780, %v700, 0
        %v797 = vsel %vm780, %v701, 0
        %v800 = vsel %vm780, %v702, 0
        %v803 = vsel %vm780, %v703, 0
        %v806 = vsel %vm780, %v704, 0
        %v809 = vsel %vm780, %v705, 0
        %v812 = vsel %vm780, %v706, 0
        %v815 = vsel %vm780, %v707, 0
        %v818 = vsel %vm780, %v708, 0
        %v821 = vsel %vm780, %v709, 0
        %v824 = vsel %vm780, %v710, 0
        %v827 = vsel %vm780, %v711, 0
        %829 = vmatpush.bf16.msra.mxu0 0
        %830 = vmatpush.bf16.msra.mxu0 0
        %831 = vmatpush.bf16.msra.mxu0 0
        %832 = vmatpush.bf16.msra.mxu0 %v782
        %833 = vmatpush.bf16.msra.mxu0 %v680
        %834 = vmatpush.bf16.msra.mxu0 %v664
        %835 = vmatpush.bf16.msra.mxu0 %v648
        %836 = vmatpush.bf16.msra.mxu0 %v632
        %837 = vmatmul.bf16.gmra.mxu0 %v778
        %v838 = vpop.f32.mrf.mxu0
        %v839 = vadd.f32 %v415, %v838
        %v840 = vpop.f32.mrf.mxu0
        %841 = vdwg.mxu0
        %842 = vmatpush.bf16.msra.mxu0 0
        %843 = vmatpush.bf16.msra.mxu0 0
        %844 = vmatpush.bf16.msra.mxu0 0
        %845 = vmatpush.bf16.msra.mxu0 %v785
        %846 = vmatpush.bf16.msra.mxu0 %v681
        %847 = vmatpush.bf16.msra.mxu0 %v665
        %848 = vmatpush.bf16.msra.mxu0 %v649
        %849 = vmatpush.bf16.msra.mxu0 %v633
        %850 = vmatmul.bf16.gmra.mxu0 %v778
        %v851 = vpop.f32.mrf.mxu0
        %v852 = vadd.f32 %v415, %v851
        %v853 = vpop.f32.mrf.mxu0
        %854 = vdwg.mxu0
        %855 = vmatpush.bf16.msra.mxu0 0
        %856 = vmatpush.bf16.msra.mxu0 0
        %857 = vmatpush.bf16.msra.mxu0 0
        %858 = vmatpush.bf16.msra.mxu0 %v788
        %859 = vmatpush.bf16.msra.mxu0 %v682
        %860 = vmatpush.bf16.msra.mxu0 %v666
        %861 = vmatpush.bf16.msra.mxu0 %v650
        %862 = vmatpush.bf16.msra.mxu0 %v634
        %863 = vmatmul.bf16.gmra.mxu0 %v778
        %v864 = vpop.f32.mrf.mxu0
        %v865 = vadd.f32 %v415, %v864
        %v866 = vpop.f32.mrf.mxu0
        %867 = vdwg.mxu0
        %868 = vmatpush.bf16.msra.mxu0 0
        %869 = vmatpush.bf16.msra.mxu0 0
        %870 = vmatpush.bf16.msra.mxu0 0
        %871 = vmatpush.bf16.msra.mxu0 %v791
        %872 = vmatpush.bf16.msra.mxu0 %v683
        %873 = vmatpush.bf16.msra.mxu0 %v667
        %874 = vmatpush.bf16.msra.mxu0 %v651
        %875 = vmatpush.bf16.msra.mxu0 %v635
        %876 = vmatmul.bf16.gmra.mxu0 %v778
        %v877 = vpop.f32.mrf.mxu0
        %v878 = vadd.f32 %v415, %v877
        %v879 = vpop.f32.mrf.mxu0
        %880 = vdwg.mxu0
        %881 = vmatpush.bf16.msra.mxu0 0
        %882 = vmatpush.bf16.msra.mxu0 0
        %883 = vmatpush.bf16.msra.mxu0 0
        %884 = vmatpush.bf16.msra.mxu0 %v794
        %885 = vmatpush.bf16.msra.mxu0 %v684
        %886 = vmatpush.bf16.msra.mxu0 %v668
        %887 = vmatpush.bf16.msra.mxu0 %v652
        %888 = vmatpush.bf16.msra.mxu0 %v636
        %889 = vmatmul.bf16.gmra.mxu0 %v778
        %v890 = vpop.f32.mrf.mxu0
        %v891 = vadd.f32 %v415, %v890
        %v892 = vpop.f32.mrf.mxu0
        %893 = vdwg.mxu0
        %894 = vmatpush.bf16.msra.mxu0 0
        %895 = vmatpush.bf16.msra.mxu0 0
        %896 = vmatpush.bf16.msra.mxu0 0
        %897 = vmatpush.bf16.msra.mxu0 %v797
        %898 = vmatpush.bf16.msra.mxu0 %v685
        %899 = vmatpush.bf16.msra.mxu0 %v669
        %900 = vmatpush.bf16.msra.mxu0 %v653
        %901 = vmatpush.bf16.msra.mxu0 %v637
        %902 = vmatmul.bf16.gmra.mxu0 %v778
        %v903 = vpop.f32.mrf.mxu0
        %v904 = vadd.f32 %v415, %v903
        %v905 = vpop.f32.mrf.mxu0
        %906 = vdwg.mxu0
        %907 = vmatpush.bf16.msra.mxu0 0
        %908 = vmatpush.bf16.msra.mxu0 0
        %909 = vmatpush.bf16.msra.mxu0 0
        %910 = vmatpush.bf16.msra.mxu0 %v800
        %911 = vmatpush.bf16.msra.mxu0 %v686
        %912 = vmatpush.bf16.msra.mxu0 %v670
        %913 = vmatpush.bf16.msra.mxu0 %v654
        %914 = vmatpush.bf16.msra.mxu0 %v638
        %915 = vmatmul.bf16.gmra.mxu0 %v778
        %v916 = vpop.f32.mrf.mxu0
        %v917 = vadd.f32 %v415, %v916
        %v918 = vpop.f32.mrf.mxu0
        %919 = vdwg.mxu0
        %920 = vmatpush.bf16.msra.mxu0 0
        %921 = vmatpush.bf16.msra.mxu0 0
        %922 = vmatpush.bf16.msra.mxu0 0
        %923 = vmatpush.bf16.msra.mxu0 %v803
        %924 = vmatpush.bf16.msra.mxu0 %v687
        %925 = vmatpush.bf16.msra.mxu0 %v671
        %926 = vmatpush.bf16.msra.mxu0 %v655
        %927 = vmatpush.bf16.msra.mxu0 %v639
        %928 = vmatmul.bf16.gmra.mxu0 %v778
        %v929 = vpop.f32.mrf.mxu0
        %v930 = vadd.f32 %v415, %v929
        %v931 = vpop.f32.mrf.mxu0
        %932 = vdwg.mxu0
        %933 = vmatpush.bf16.msra.mxu0 0
        %934 = vmatpush.bf16.msra.mxu0 0
        %935 = vmatpush.bf16.msra.mxu0 0
        %936 = vmatpush.bf16.msra.mxu0 %v806
        %937 = vmatpush.bf16.msra.mxu0 %v688
        %938 = vmatpush.bf16.msra.mxu0 %v672
        %939 = vmatpush.bf16.msra.mxu0 %v656
        %940 = vmatpush.bf16.msra.mxu0 %v640
        %941 = vmatmul.bf16.gmra.mxu0 %v778
        %v942 = vpop.f32.mrf.mxu0
        %v943 = vadd.f32 %v415, %v942
        %v944 = vpop.f32.mrf.mxu0
        %945 = vdwg.mxu0
        %946 = vmatpush.bf16.msra.mxu0 0
        %947 = vmatpush.bf16.msra.mxu0 0
        %948 = vmatpush.bf16.msra.mxu0 0
        %949 = vmatpush.bf16.msra.mxu0 %v809
        %950 = vmatpush.bf16.msra.mxu0 %v689
        %951 = vmatpush.bf16.msra.mxu0 %v673
        %952 = vmatpush.bf16.msra.mxu0 %v657
        %953 = vmatpush.bf16.msra.mxu0 %v641
        %954 = vmatmul.bf16.gmra.mxu0 %v778
        %v955 = vpop.f32.mrf.mxu0
        %v956 = vadd.f32 %v415, %v955
        %v957 = vpop.f32.mrf.mxu0
        %958 = vdwg.mxu0
        %959 = vmatpush.bf16.msra.mxu0 0
        %960 = vmatpush.bf16.msra.mxu0 0
        %961 = vmatpush.bf16.msra.mxu0 0
        %962 = vmatpush.bf16.msra.mxu0 %v812
        %963 = vmatpush.bf16.msra.mxu0 %v690
        %964 = vmatpush.bf16.msra.mxu0 %v674
        %965 = vmatpush.bf16.msra.mxu0 %v658
        %966 = vmatpush.bf16.msra.mxu0 %v642
        %967 = vmatmul.bf16.gmra.mxu0 %v778
        %v968 = vpop.f32.mrf.mxu0
        %v969 = vadd.f32 %v415, %v968
        %v970 = vpop.f32.mrf.mxu0
        %971 = vdwg.mxu0
        %972 = vmatpush.bf16.msra.mxu0 0
        %973 = vmatpush.bf16.msra.mxu0 0
        %974 = vmatpush.bf16.msra.mxu0 0
        %975 = vmatpush.bf16.msra.mxu0 %v815
        %976 = vmatpush.bf16.msra.mxu0 %v691
        %977 = vmatpush.bf16.msra.mxu0 %v675
        %978 = vmatpush.bf16.msra.mxu0 %v659
        %979 = vmatpush.bf16.msra.mxu0 %v643
        %980 = vmatmul.bf16.gmra.mxu0 %v778
        %v981 = vpop.f32.mrf.mxu0
        %v982 = vadd.f32 %v415, %v981
        %v983 = vpop.f32.mrf.mxu0
        %984 = vdwg.mxu0
        %985 = vmatpush.bf16.msra.mxu0 0
        %986 = vmatpush.bf16.msra.mxu0 0
        %987 = vmatpush.bf16.msra.mxu0 0
        %988 = vmatpush.bf16.msra.mxu0 %v818
        %989 = vmatpush.bf16.msra.mxu0 %v692
        %990 = vmatpush.bf16.msra.mxu0 %v676
        %991 = vmatpush.bf16.msra.mxu0 %v660
        %992 = vmatpush.bf16.msra.mxu0 %v644
        %993 = vmatmul.bf16.gmra.mxu0 %v778
        %v994 = vpop.f32.mrf.mxu0
        %v995 = vadd.f32 %v415, %v994
        %v996 = vpop.f32.mrf.mxu0
        %997 = vdwg.mxu0
        %998 = vmatpush.bf16.msra.mxu0 0
        %999 = vmatpush.bf16.msra.mxu0 0
        %1000 = vmatpush.bf16.msra.mxu0 0
        %1001 = vmatpush.bf16.msra.mxu0 %v821
        %1002 = vmatpush.bf16.msra.mxu0 %v693
        %1003 = vmatpush.bf16.msra.mxu0 %v677
        %1004 = vmatpush.bf16.msra.mxu0 %v661
        %1005 = vmatpush.bf16.msra.mxu0 %v645
        %1006 = vmatmul.bf16.gmra.mxu0 %v778
        %v1007 = vpop.f32.mrf.mxu0
        %v1008 = vadd.f32 %v415, %v1007
        %v1009 = vpop.f32.mrf.mxu0
        %1010 = vdwg.mxu0
        %1011 = vmatpush.bf16.msra.mxu0 0
        %1012 = vmatpush.bf16.msra.mxu0 0
        %1013 = vmatpush.bf16.msra.mxu0 0
        %1014 = vmatpush.bf16.msra.mxu0 %v824
        %1015 = vmatpush.bf16.msra.mxu0 %v694
        %1016 = vmatpush.bf16.msra.mxu0 %v678
        %1017 = vmatpush.bf16.msra.mxu0 %v662
        %1018 = vmatpush.bf16.msra.mxu0 %v646
        %1019 = vmatmul.bf16.gmra.mxu0 %v778
        %v1020 = vpop.f32.mrf.mxu0
        %v1021 = vadd.f32 %v415, %v1020
        %v1022 = vpop.f32.mrf.mxu0
        %1023 = vdwg.mxu0
        %1024 = vmatpush.bf16.msra.mxu0 0
        %1025 = vmatpush.bf16.msra.mxu0 0
        %1026 = vmatpush.bf16.msra.mxu0 0
        %1027 = vmatpush.bf16.msra.mxu0 %v827
        %1028 = vmatpush.bf16.msra.mxu0 %v695
        %1029 = vmatpush.bf16.msra.mxu0 %v679
        %1030 = vmatpush.bf16.msra.mxu0 %v663
        %1031 = vmatpush.bf16.msra.mxu0 %v647
        %1032 = vmatmul.bf16.gmra.mxu0 %v778
        %v1033 = vpop.f32.mrf.mxu0
        %v1034 = vadd.f32 %v415, %v1033
        %v1035 = vpop.f32.mrf.mxu0
        %1036 = vdwg.mxu0
        %v1053 = vrot.slane %v852, 7
        %v1054 = vrot.slane %v865, 6
        %v1055 = vrot.slane %v878, 5
        %v1056 = vrot.slane %v891, 4
        %v1057 = vrot.slane %v904, 3
        %v1058 = vrot.slane %v917, 2
        %v1059 = vrot.slane %v930, 1
        %v1060 = vrot.slane %v956, 7
        %v1061 = vrot.slane %v969, 6
        %v1062 = vrot.slane %v982, 5
        %v1063 = vrot.slane %v995, 4
        %v1064 = vrot.slane %v1008, 3
        %v1065 = vrot.slane %v1021, 2
        %v1066 = vrot.slane %v1034, 1
        %vm1067 = vcmask 1040384
        %v1068 = vsel %vm1067, %v839, %v1053
        %vm1069 = vcmask 1042434
        %v1070 = vsel %vm1069, %v1054, %v1055
        %vm1071 = vcmask 1041408
        %v1072 = vsel %vm1071, %v1068, %v1070
        %vm1073 = vcmask 1044484
        %v1074 = vsel %vm1073, %v1056, %v1057
        %vm1075 = vcmask 1046534
        %v1076 = vsel %vm1075, %v1058, %v1059
        %vm1077 = vcmask 1045508
        %v1078 = vsel %vm1077, %v1074, %v1076
        %v1079 = vsel %vm780, %v1072, %v1078
        %v1080 = vsel %vm1067, %v943, %v1060
        %v1081 = vsel %vm1069, %v1061, %v1062
        %v1082 = vsel %vm1071, %v1080, %v1081
        %v1083 = vsel %vm1073, %v1063, %v1064
        %v1084 = vsel %vm1075, %v1065, %v1066
        %v1085 = vsel %vm1077, %v1083, %v1084
        %v1086 = vsel %vm780, %v1082, %v1085
        %1089 = vst [vmem:[%s333] sm:$0xff] %v1079
        %1090 = vst [vmem:[%s333 + $0x8] sm:$0xff] %v1086
        %s1091 = smul.u32 16, %s16
        %p1092 = scmp.lt.s32.totalorder %s1091, 63
        %s1093 = scalar_select %p1092, %s1091, 63
        %s1094 = scalar_lea.vmem %s3, %s1093
        // Predicated region
        $region56: #{segmentation_net_forward.31} parent=50 // pred_check
          %p1095 = pneg %p102
        $region57: #{segmentation_net_forward.31} parent=50 // pred_check_branch
          %1097 = sbr.rel (%p1095) target = $region59
        $region58: #{segmentation_net_forward.31} parent=50 // pred_region
          %s1098 = smul.u32 16, %s16
        $region59: #{segmentation_net_forward.31} parent=50 // pred_fallthru
          _
      $region51: #{segmentation_net_forward.31} parent=5 // pred_fallthru
        _
      %p1099 = scmp.le.s32.totalorder 2, %s11
      // Predicated region
      $region60: #{segmentation_net_forward.31} parent=5 // pred_check
        %p1100 = pneg %p1099
      $region61: #{segmentation_net_forward.31} parent=5 // pred_check_branch
        %1102 = sbr.rel (%p1100) target = $region63
      $region62: #{segmentation_net_forward.31} parent=5 // pred_region
        %s1103 = ssub.s32 %s11, 2
        // Predicated region
        $region64: #{segmentation_net_forward.31} parent=62 // pred_check
          %p1104 = pneg %p108
        $region65: #{segmentation_net_forward.31} parent=62 // pred_check_branch
          %1106 = sbr.rel (%p1104) target = $region67
        $region66: #{segmentation_net_forward.31} parent=62 // pred_region
          %s1107 = smul.u32 16, %s17
          %p1108 = scmp.lt.s32.totalorder %s1107, 63
          %s1109 = scalar_select %p1108, %s1107, 63
          %s1110 = scalar_lea.vmem %s3, %s1109
        $region67: #{segmentation_net_forward.31} parent=62 // pred_fallthru
          _
      $region63: #{segmentation_net_forward.31} parent=5 // pred_fallthru
        _
    $region6: #{segmentation_net_forward.31} parent=1 // loop_footer
      %s15 = sadd.s32 1, %s11
    $region7: #{segmentation_net_forward.31} parent=1 // loop_footer_branch
      %10 = sbr.rel target = $region3
    $region8: #{segmentation_net_forward.31} parent=1 // loop_exit
      _

</llo_original>
